<compile_context>
chip_gen: v5e
topology: v5e:2x2
jax: 0.10.0
libtpu: 0.0.40
codegen_flags: <defaults>
</compile_context>

<pallas_src>
import functools

import jax
import jax.numpy as jnp
from jax.experimental import pallas as pl
from jax.experimental.pallas import tpu as pltpu


# ----------------------------------------------------------------------------
# helpers: padding / layout
# ----------------------------------------------------------------------------
def _round_up(x, m):
    return (x + m - 1) // m * m


def _pick_time_chunk(S, hp, num_dirs):
    """Largest divisor of S <= a register-pressure-aware cap.

    Amortizes the ~0.35us per-grid-step overhead while bounding the fully unrolled
    per-step body (h/c/gate live values per direction) against the 64-vreg file.
    """
    # TODO(synk): pad S and mask in-kernel instead of requiring a divisor of S
    # (a prime S currently degrades to t_chunk=1, a pure-overhead perf cliff).
    width = max(1, (hp // 128) * num_dirs)
    if width <= 2:
        cap = 32
    elif width <= 4:
        cap = 16
    elif width <= 8:
        cap = 8
    else:
        cap = 4
    cap = min(cap, S)
    for c in range(cap, 0, -1):
        if S % c == 0:
            return c
    return 1


def _prep_layer_slabs(params, H, Hp, dirs, in_group=None):
    """One-time relayout of PyTorch-layout LSTM params into padded slabs.

    Returns:
      w_ih_slab [F_eff, D*4Hp]  gate-slot padded (zero cols at padded gate lanes; zero
                                rows at padded input lanes when in_group is given)
      bias_slab [D*4Hp]         b_ih + b_hh, zero at padded gate lanes
      whh       [D, Hp, 4Hp]    transposed recurrent weights, gate-slot padded (f32)
    Gate order follows PyTorch: i, f, g, o, each in its own Hp-wide 128-lane slot.
    """
    G = 4 * Hp
    wih_slabs, bias_slabs, whhs = [], [], []
    for dd in dirs:
        w_ih = params[f"w_ih_{dd}"]                                   # [4H, F]
        if in_group is not None:
            d_in, h_in = in_group                                     # features = concat of d_in groups of h_in
            w_ih = w_ih.reshape(4 * H, d_in, h_in)
            w_ih = jnp.pad(w_ih, ((0, 0), (0, 0), (0, Hp - h_in)))    # zero rows at pad lanes
            w_ih = w_ih.reshape(4 * H, d_in * Hp)
        f_eff = w_ih.shape[1]
        w = jnp.pad(w_ih.reshape(4, H, f_eff), ((0, 0), (0, Hp - H), (0, 0)))
        wih_slabs.append(jnp.transpose(w, (2, 0, 1)).reshape(f_eff, G))

        b = params[f"b_ih_{dd}"] + params[f"b_hh_{dd}"]               # fused bias
        bias_slabs.append(jnp.pad(b.reshape(4, H), ((0, 0), (0, Hp - H))).reshape(G))

        w_hh = jnp.pad(params[f"w_hh_{dd}"].reshape(4, H, H),
                       ((0, 0), (0, Hp - H), (0, Hp - H)))
        whhs.append(jnp.transpose(w_hh, (2, 0, 1)).reshape(Hp, G))    # [Hp, 4Hp]

    return (jnp.concatenate(wih_slabs, axis=-1),
            jnp.concatenate(bias_slabs, axis=-1),
            jnp.stack(whhs, 0))


# ----------------------------------------------------------------------------
# Pallas kernel: both directions of one LSTM layer fused per time chunk.
# ----------------------------------------------------------------------------
def _lstm_kernel(*refs, t_chunk, hp, num_dirs):
    if num_dirs == 2:
        (gx_f_ref, gx_r_ref, whh_hbm, h0_ref, c0_ref,
         out_f_ref, out_r_ref, hN_ref, cN_ref,
         whh_vmem, dma_sem, h_scr, c_scr) = refs
    else:
        (gx_f_ref, whh_hbm, h0_ref, c0_ref,
         out_f_ref, hN_ref, cN_ref,
         whh_vmem, dma_sem, h_scr, c_scr) = refs

    t = pl.program_id(0)

    @pl.when(t == 0)
    def _():
        # Single-buffered resident weights: exactly one HBM->VMEM DMA for the whole run.
        cp = pltpu.make_async_copy(whh_hbm, whh_vmem, dma_sem)
        cp.start()
        cp.wait()
        h_scr[...] = h0_ref[...]
        c_scr[...] = c0_ref[...]

    # Hoisted ref-reads: issued once per grid step, not once per unrolled iteration.
    w_f = whh_vmem[0]
    h_f = h_scr[0]
    c_f = c_scr[0]
    if num_dirs == 2:
        w_r = whh_vmem[1]
        h_r = h_scr[1]
        c_r = c_scr[1]

    def cell(gx, h, c, w):
        # f32 pre-activations: (bf16) gate-slab upcast + f32-accumulated (bf16) matmul.
        g = gx.astype(jnp.float32) + jnp.dot(
            h.astype(w.dtype), w, preferred_element_type=jnp.float32)
        i_g = jax.nn.sigmoid(g[:, 0 * hp:1 * hp])
        f_g = jax.nn.sigmoid(g[:, 1 * hp:2 * hp])
        g_g = jnp.tanh(g[:, 2 * hp:3 * hp])
        o_g = jax.nn.sigmoid(g[:, 3 * hp:4 * hp])
        c_new = f_g * c + i_g * g_g
        h_new = o_g * jnp.tanh(c_new)
        return h_new, c_new

    # Static in-chunk indices (Python unroll). Forward and reverse cells are emitted
    # per step so their independent serial chains interleave in the VLIW bundles.
    for tt in range(t_chunk):
        h_f, c_f = cell(gx_f_ref[tt], h_f, c_f, w_f)
        out_f_ref[tt] = h_f
        if num_dirs == 2:
            rr = t_chunk - 1 - tt                       # reverse walks its chunk backwards
            h_r, c_r = cell(gx_r_ref[rr], h_r, c_r, w_r)
            out_r_ref[rr] = h_r

    h_scr[0] = h_f
    c_scr[0] = c_f
    if num_dirs == 2:
        h_scr[1] = h_r
        c_scr[1] = c_r

    @pl.when(t == pl.num_programs(0) - 1)
    def _():
        hN_ref[0] = h_f
        cN_ref[0] = c_f
        if num_dirs == 2:
            hN_ref[1] = h_r
            cN_ref[1] = c_r


def lstm_recurrence(gx, whh, h0, c0, *, hp, t_chunk, num_dirs):
    """gx:  [S, Bp, D*4Hp] precomputed x-projection + bias (compute dtype)
       whh: [D, Hp, 4Hp]   recurrent weights (compute dtype), copied to VMEM once
       h0, c0: [D, Bp, Hp] (f32)
       Returns (out_f [S,Bp,Hp], [out_r [S,Bp,Hp]], h_n [D,Bp,Hp], c_n [D,Bp,Hp]);
       the reverse output is already in forward time order."""
    S, Bp, DG = gx.shape
    G = 4 * hp
    assert DG == num_dirs * G
    nc = S // t_chunk

    kernel = functools.partial(_lstm_kernel, t_chunk=t_chunk, hp=hp, num_dirs=num_dirs)

    state_spec = pl.BlockSpec((num_dirs, Bp, hp), lambda t: (0, 0, 0))

    in_specs = [pl.BlockSpec((t_chunk, Bp, G), lambda t: (t, 0, 0))]           # fwd gates
    inputs = [gx]
    if num_dirs == 2:
        # Reverse direction: mirrored time chunk + its own lane slab of the same array.
        # Reversal is pure DMA addressing; no jnp.flip HBM round trip.
        in_specs.append(pl.BlockSpec((t_chunk, Bp, G), lambda t: (nc - 1 - t, 0, 1)))
        inputs.append(gx)
    in_specs += [pl.BlockSpec(memory_space=pl.ANY),                            # W_hh^T (HBM)
                 state_spec, state_spec]                                       # h0, c0
    inputs += [whh, h0, c0]

    out_specs = [pl.BlockSpec((t_chunk, Bp, hp), lambda t: (t, 0, 0))]
    out_shapes = [jax.ShapeDtypeStruct((S, Bp, hp), jnp.float32)]
    if num_dirs == 2:
        out_specs.append(pl.BlockSpec((t_chunk, Bp, hp), lambda t: (nc - 1 - t, 0, 0)))
        out_shapes.append(jax.ShapeDtypeStruct((S, Bp, hp), jnp.float32))
    out_specs += [state_spec, state_spec]                                      # h_n, c_n
    out_shapes += [jax.ShapeDtypeStruct((num_dirs, Bp, hp), jnp.float32)] * 2

    scratch = [
        pltpu.VMEM((num_dirs, hp, G), whh.dtype),        # resident single-buffered W_hh^T
        pltpu.SemaphoreType.DMA(()),                     # its one-shot DMA semaphore
        pltpu.VMEM((num_dirs, Bp, hp), jnp.float32),     # h carry
        pltpu.VMEM((num_dirs, Bp, hp), jnp.float32),     # c carry
    ]

    # Raise the scoped-VMEM limit only when the footprint demands it (v5e default 16 MiB).
    gx_item = jnp.dtype(gx.dtype).itemsize
    whh_item = jnp.dtype(whh.dtype).itemsize
    est = (2 * num_dirs * t_chunk * Bp * G * gx_item     # double-buffered gate chunks
           + 2 * num_dirs * t_chunk * Bp * hp * 4        # double-buffered output chunks
           + 8 * num_dirs * Bp * hp * 4                  # h0/c0/h_n/c_n buffers
           + num_dirs * hp * G * whh_item                # resident weights (single buffer)
           + 2 * num_dirs * Bp * hp * 4)                 # carry scratch
    cparams = dict(dimension_semantics=("arbitrary",))   # single sequential time axis
    if est >= (12 << 20):
        cparams["vmem_limit_bytes"] = min(int(est * 1.5) + (4 << 20), 64 << 20)
    # TODO(synk): on v7x, optionally add a leading CORE_PARALLEL axis that splits the
    # (padded) batch across the 2 TensorCores when Bp is large.

    return pl.pallas_call(
        kernel,
        out_shape=tuple(out_shapes),
        grid_spec=pltpu.PrefetchScalarGridSpec(
            num_scalar_prefetch=0,
            grid=(nc,),
            in_specs=in_specs,
            out_specs=out_specs,
            scratch_shapes=scratch),
        compiler_params=pltpu.CompilerParams(**cparams),
    )(*inputs)


# ----------------------------------------------------------------------------
# Full forward: hoisted x-projections + two Pallas recurrences (encoder, decoder)
# ----------------------------------------------------------------------------
@functools.partial(jax.jit,
                   static_argnames=("hidden_size", "hp", "bidirectional", "compute_dtype"))
def _forward(enc_slabs, dec_slabs, batch, *, hidden_size, hp, bidirectional, compute_dtype):
    B, S, _ = batch.shape
    H = hidden_size
    D = 2 if bidirectional else 1
    Bp = _round_up(B, 8)
    t_chunk = _pick_time_chunk(S, hp, D)

    x = jnp.transpose(batch, (1, 0, 2))                  # PyTorch module's .transpose(1, 0)
    x = jnp.pad(x, ((0, 0), (0, Bp - B), (0, 0)))        # pad batch once on the small input

    h0 = jnp.zeros((D, Bp, hp), jnp.float32)
    c0 = jnp.zeros((D, Bp, hp), jnp.float32)

    def layer(x_pad, slabs, h_init, c_init):
        w_ih_slab, bias_slab, whh = slabs
        # Hoisted non-recurrent projection: ONE GEMM over all timesteps, bias folded in,
        # written directly in the padded [S, Bp, D*4Hp] kernel layout. Streamed in the
        # compute dtype (bf16 halves the largest HBM stream); padded lanes stay zero.
        gx = (jnp.einsum("sbf,fg->sbg", x_pad, w_ih_slab) + bias_slab).astype(compute_dtype)
        res = lstm_recurrence(gx, whh.astype(compute_dtype), h_init, c_init,
                              hp=hp, t_chunk=t_chunk, num_dirs=D)
        if D == 2:
            out_f, out_r, h_n, c_n = res
            return (out_f, out_r), h_n, c_n
        out_f, h_n, c_n = res
        return (out_f,), h_n, c_n

    enc_outs, h_n, c_n = layer(x, enc_slabs, h0, c0)
    # Decoder consumes the *padded* encoder output directly; its W_ih slab has zero rows
    # at the padded lanes so the contraction is exact (no slice-to-H / re-concat pass).
    dec_in = enc_outs[0] if D == 1 else jnp.concatenate(enc_outs, axis=-1)
    dec_outs, _, _ = layer(dec_in, dec_slabs, h_n, c_n)

    feats = [o[:, :B, :H] for o in dec_outs]
    out = feats[0] if D == 1 else jnp.concatenate(feats, axis=-1)
    return jnp.transpose(out, (1, 0, 2))                 # decoder output.transpose(1, 0)


# ----------------------------------------------------------------------------
# Parameters (deterministic init, PyTorch-style U(-1/sqrt(H), 1/sqrt(H)))
# ----------------------------------------------------------------------------
def init_lstm_params(key, input_size, hidden_size, bidirectional):
    k = 1.0 / jnp.sqrt(jnp.float32(hidden_size))
    names = ["w_ih_f", "w_hh_f", "b_ih_f", "b_hh_f"]
    shapes = [(4 * hidden_size, input_size), (4 * hidden_size, hidden_size),
              (4 * hidden_size,), (4 * hidden_size,)]
    if bidirectional:
        names += ["w_ih_r", "w_hh_r", "b_ih_r", "b_hh_r"]
        shapes += shapes[:4]
    keys = jax.random.split(key, len(names))
    return {n: jax.random.uniform(kk, s, jnp.float32, minval=-k, maxval=k)
            for n, s, kk in zip(names, shapes, keys)}


class BertLSTMEncoderDecoderPallas:
    """Mirrors BertLSTMEncoderDecoder.forward (num_layers=1; dropout inactive there)."""

    def __init__(self, input_size, hidden_size, bidirectional, key,
                 compute_dtype=jnp.bfloat16):
        # compute_dtype applies to the recurrent MXU dot (W_hh, h) and the streamed gate
        # slab; f32 accumulation and f32 elementwise are always kept (no bf16 VPU on v5e).
        self.hidden_size = hidden_size
        self.bidirectional = bidirectional
        self.D = 2 if bidirectional else 1
        self.compute_dtype = compute_dtype
        self.Hp = _round_up(hidden_size, 128)
        # TODO(synk): for production H < 128, pack all 4 gates into a single lane tile —
        # per-gate 128-lane slots inflate the VPU/EUP work on the serial chain by 128/H.
        k_enc, k_dec = jax.random.split(key)
        self.enc_params = init_lstm_params(k_enc, input_size, hidden_size, bidirectional)
        self.dec_params = init_lstm_params(k_dec, self.D * hidden_size, hidden_size,
                                           bidirectional)
        dirs = ("f", "r") if bidirectional else ("f",)
        # One-time relayout of the (small) weights into padded slabs so the per-call
        # wrapper never does pad/stack/concat passes over the big gate slab.
        self._enc_slabs = _prep_layer_slabs(self.enc_params, hidden_size, self.Hp, dirs)
        self._dec_slabs = _prep_layer_slabs(self.dec_params, hidden_size, self.Hp, dirs,
                                            in_group=(self.D, hidden_size))

    def __call__(self, batch):
        # batch: [B, S, input_size]
        return _forward(self._enc_slabs, self._dec_slabs, batch,
                        hidden_size=self.hidden_size, hp=self.Hp,
                        bidirectional=self.bidirectional,
                        compute_dtype=self.compute_dtype)


# ----------------------------------------------------------------------------
# Pure-JAX reference (lax.scan) for correctness checks
# ----------------------------------------------------------------------------
def _ref_dir(x, w_ih, w_hh, b_ih, b_hh, h0, c0):
    def step(carry, x_t):
        h, c = carry
        gates = x_t @ w_ih.T + b_ih + h @ w_hh.T + b_hh
        i, f, g, o = jnp.split(gates, 4, axis=-1)
        i, f, o = jax.nn.sigmoid(i), jax.nn.sigmoid(f), jax.nn.sigmoid(o)
        g = jnp.tanh(g)
        c = f * c + i * g
        h = o * jnp.tanh(c)
        return (h, c), h
    (h_n, c_n), outs = jax.lax.scan(step, (h0, c0), x)
    return outs, h_n, c_n


def _ref_layer(x, p, h0, c0, bidirectional):
    out_f, h_f, c_f = _ref_dir(x, p["w_ih_f"], p["w_hh_f"], p["b_ih_f"], p["b_hh_f"],
                               h0[0], c0[0])
    if not bidirectional:
        return out_f, h_f[None], c_f[None]
    out_r, h_r, c_r = _ref_dir(jnp.flip(x, 0), p["w_ih_r"], p["w_hh_r"],
                               p["b_ih_r"], p["b_hh_r"], h0[1], c0[1])
    return (jnp.concatenate([out_f, jnp.flip(out_r, 0)], -1),
            jnp.stack([h_f, h_r], 0), jnp.stack([c_f, c_r], 0))


def _ref_forward(model, batch):
    B = batch.shape[0]
    H, D = model.hidden_size, model.D
    x = jnp.transpose(batch, (1, 0, 2))
    h0 = jnp.zeros((D, B, H), jnp.float32)
    c0 = jnp.zeros((D, B, H), jnp.float32)
    enc_out, h_n, c_n = _ref_layer(x, model.enc_params, h0, c0, model.bidirectional)
    dec_out, _, _ = _ref_layer(enc_out, model.dec_params, h_n, c_n, model.bidirectional)
    return jnp.transpose(dec_out, (1, 0, 2))


if __name__ == "__main__":
    B, S, INPUT, HIDDEN = 2, 8, 16, 32

    key = jax.random.PRNGKey(0)
    k_param, k_data = jax.random.split(key)
    batch = jax.random.normal(k_data, (B, S, INPUT), jnp.float32)

    # --- bidirectional model (default bf16 compute dtype) ---
    model = BertLSTMEncoderDecoderPallas(INPUT, HIDDEN, True, k_param)
    ref = _ref_forward(model, batch)

    # strict check on the f32 path
    model.compute_dtype = jnp.float32
    out_f32 = jax.block_until_ready(model(batch))
    assert out_f32.shape == (B, S, 2 * HIDDEN), out_f32.shape
    err32 = float(jnp.max(jnp.abs(out_f32 - ref)))
    assert jnp.allclose(out_f32, ref, rtol=1e-4, atol=1e-4), f"f32 max abs err {err32}"

    # looser check on the default bf16 recurrent-matmul / gate-slab path
    model.compute_dtype = jnp.bfloat16
    out_bf16 = jax.block_until_ready(model(batch))
    err16 = float(jnp.max(jnp.abs(out_bf16 - ref)))
    assert err16 < 0.1, f"bf16 max abs err {err16}"

    # also exercise the unidirectional kernel path
    model_uni = BertLSTMEncoderDecoderPallas(INPUT, HIDDEN, False, k_param,
                                             compute_dtype=jnp.float32)
    out_uni = jax.block_until_ready(model_uni(batch))
    ref_uni = _ref_forward(model_uni, batch)
    assert out_uni.shape == (B, S, HIDDEN), out_uni.shape
    assert jnp.allclose(out_uni, ref_uni, rtol=1e-4, atol=1e-4)

    print("KERNEL_OK")
</pallas_src>

<mosaic_0001>
module attributes {stable_mosaic.version = 11 : i64} {
  func.func @_lstm_kernel(%arg0: i32, %arg1: memref<8x8x512xf32, #tpu.memory_space<vmem>>, %arg2: memref<8x8x512xf32, #tpu.memory_space<vmem>>, %arg3: memref<2x128x512xf32, #tpu.memory_space<any>>, %arg4: memref<2x8x128xf32, #tpu.memory_space<vmem>>, %arg5: memref<2x8x128xf32, #tpu.memory_space<vmem>>, %arg6: memref<8x8x128xf32, #tpu.memory_space<vmem>>, %arg7: memref<8x8x128xf32, #tpu.memory_space<vmem>>, %arg8: memref<2x8x128xf32, #tpu.memory_space<vmem>>, %arg9: memref<2x8x128xf32, #tpu.memory_space<vmem>>, %arg10: memref<2x128x512xf32, #tpu.memory_space<vmem>>, %arg11: memref<!tpu.dma_semaphore, #tpu.memory_space<semaphore_mem>>, %arg12: memref<2x8x128xf32, #tpu.memory_space<vmem>>, %arg13: memref<2x8x128xf32, #tpu.memory_space<vmem>>) attributes {dimension_semantics = [#tpu.dimension_semantics<arbitrary>], iteration_bounds = array<i64: 1>, scalar_prefetch = 0 : i64, scratch_operands = 4 : i64, tpu.core_type = #tpu.core_type<tc>, window_params = [{transform_indices = @transform_0, window_bounds = array<i64: 8, 8, 512>}, {transform_indices = @transform_1, window_bounds = array<i64: 8, 8, 512>}, {}, {pipeline_mode = #tpu.pipeline_mode<synchronous>, transform_indices = @transform_3, window_bounds = array<i64: 2, 8, 128>}, {pipeline_mode = #tpu.pipeline_mode<synchronous>, transform_indices = @transform_4, window_bounds = array<i64: 2, 8, 128>}, {transform_indices = @transform_5, window_bounds = array<i64: 8, 8, 128>}, {transform_indices = @transform_6, window_bounds = array<i64: 8, 8, 128>}, {pipeline_mode = #tpu.pipeline_mode<synchronous>, transform_indices = @transform_7, window_bounds = array<i64: 2, 8, 128>}, {pipeline_mode = #tpu.pipeline_mode<synchronous>, transform_indices = @transform_8, window_bounds = array<i64: 2, 8, 128>}]} {
    %c0_i32 = arith.constant 0 : i32
    %0 = arith.cmpi eq, %arg0, %c0_i32 : i32
    %1 = arith.extui %0 : i1 to i32
    %c0_i32_0 = arith.constant 0 : i32
    %2 = arith.cmpi ne, %1, %c0_i32_0 : i32
    scf.if %2 {
      tpu.enqueue_dma source(%arg3 : memref<2x128x512xf32, #tpu.memory_space<any>>) target(%arg10 : memref<2x128x512xf32, #tpu.memory_space<vmem>>) target_semaphore(%arg11 : memref<!tpu.dma_semaphore, #tpu.memory_space<semaphore_mem>>)
      tpu.wait_dma2 semaphore(%arg11 : memref<!tpu.dma_semaphore, #tpu.memory_space<semaphore_mem>>) src(%arg3 : memref<2x128x512xf32, #tpu.memory_space<any>>) dst(%arg10 : memref<2x128x512xf32, #tpu.memory_space<vmem>>)
      %c0_184 = arith.constant 0 : index
      %c0_185 = arith.constant 0 : index
      %c0_186 = arith.constant 0 : index
      %542 = vector.load %arg4[%c0_184, %c0_185, %c0_186] : memref<2x8x128xf32, #tpu.memory_space<vmem>>, vector<2x8x128xf32>
      %c0_187 = arith.constant 0 : index
      %c0_188 = arith.constant 0 : index
      %c0_189 = arith.constant 0 : index
      %543 = vector.load %arg12[%c0_187, %c0_188, %c0_189] : memref<2x8x128xf32, #tpu.memory_space<vmem>>, vector<2x8x128xf32>
      tpu.vector_store %arg12[%c0_187, %c0_188, %c0_189], %542 {strides = array<i32>} : memref<2x8x128xf32, #tpu.memory_space<vmem>>, vector<2x8x128xf32>,
      %c0_190 = arith.constant 0 : index
      %c0_191 = arith.constant 0 : index
      %c0_192 = arith.constant 0 : index
      %544 = vector.load %arg5[%c0_190, %c0_191, %c0_192] : memref<2x8x128xf32, #tpu.memory_space<vmem>>, vector<2x8x128xf32>
      %c0_193 = arith.constant 0 : index
      %c0_194 = arith.constant 0 : index
      %c0_195 = arith.constant 0 : index
      %545 = vector.load %arg13[%c0_193, %c0_194, %c0_195] : memref<2x8x128xf32, #tpu.memory_space<vmem>>, vector<2x8x128xf32>
      tpu.vector_store %arg13[%c0_193, %c0_194, %c0_195], %544 {strides = array<i32>} : memref<2x8x128xf32, #tpu.memory_space<vmem>>, vector<2x8x128xf32>,
    } else {
    }
    %c0 = arith.constant 0 : index
    %c0_1 = arith.constant 0 : index
    %c0_2 = arith.constant 0 : index
    %3 = vector.load %arg10[%c0, %c0_1, %c0_2] : memref<2x128x512xf32, #tpu.memory_space<vmem>>, vector<1x128x512xf32>
    %4 = vector.shape_cast %3 : vector<1x128x512xf32> to vector<128x512xf32>
    %c0_3 = arith.constant 0 : index
    %c0_4 = arith.constant 0 : index
    %c0_5 = arith.constant 0 : index
    %5 = vector.load %arg12[%c0_3, %c0_4, %c0_5] : memref<2x8x128xf32, #tpu.memory_space<vmem>>, vector<1x8x128xf32>
    %6 = vector.shape_cast %5 : vector<1x8x128xf32> to vector<8x128xf32>
    %c0_6 = arith.constant 0 : index
    %c0_7 = arith.constant 0 : index
    %c0_8 = arith.constant 0 : index
    %7 = vector.load %arg13[%c0_6, %c0_7, %c0_8] : memref<2x8x128xf32, #tpu.memory_space<vmem>>, vector<1x8x128xf32>
    %8 = vector.shape_cast %7 : vector<1x8x128xf32> to vector<8x128xf32>
    %c1 = arith.constant 1 : index
    %c0_9 = arith.constant 0 : index
    %c0_10 = arith.constant 0 : index
    %9 = vector.load %arg10[%c1, %c0_9, %c0_10] : memref<2x128x512xf32, #tpu.memory_space<vmem>>, vector<1x128x512xf32>
    %10 = vector.shape_cast %9 : vector<1x128x512xf32> to vector<128x512xf32>
    %c1_11 = arith.constant 1 : index
    %c0_12 = arith.constant 0 : index
    %c0_13 = arith.constant 0 : index
    %11 = vector.load %arg12[%c1_11, %c0_12, %c0_13] : memref<2x8x128xf32, #tpu.memory_space<vmem>>, vector<1x8x128xf32>
    %12 = vector.shape_cast %11 : vector<1x8x128xf32> to vector<8x128xf32>
    %c1_14 = arith.constant 1 : index
    %c0_15 = arith.constant 0 : index
    %c0_16 = arith.constant 0 : index
    %13 = vector.load %arg13[%c1_14, %c0_15, %c0_16] : memref<2x8x128xf32, #tpu.memory_space<vmem>>, vector<1x8x128xf32>
    %14 = vector.shape_cast %13 : vector<1x8x128xf32> to vector<8x128xf32>
    %c0_17 = arith.constant 0 : index
    %c0_18 = arith.constant 0 : index
    %c0_19 = arith.constant 0 : index
    %15 = vector.load %arg1[%c0_17, %c0_18, %c0_19] : memref<8x8x512xf32, #tpu.memory_space<vmem>>, vector<1x8x512xf32>
    %16 = vector.shape_cast %15 : vector<1x8x512xf32> to vector<8x512xf32>
    %cst = arith.constant dense<0.000000e+00> : vector<8x512xf32>
    %17 = tpu.matmul %6, %4, %cst {dimension_numbers = #tpu.dot_dimension_numbers<[1], [0], [0], [1], [0, 0, 1, 1], [], []>} : vector<8x128xf32>, vector<128x512xf32>, vector<8x512xf32> -> vector<8x512xf32>
    %18 = arith.addf %16, %17 : vector<8x512xf32>
    %19 = vector.extract_strided_slice %18 {offsets = [0, 0], sizes = [8, 128], strides = [1, 1]} : vector<8x512xf32> to vector<8x128xf32>
    %20 = arith.negf %19 : vector<8x128xf32>
    %21 = math.exp %20 : vector<8x128xf32>
    %cst_20 = arith.constant 1.000000e+00 : f32
    %22 = vector.broadcast %cst_20 : f32 to vector<8x128xf32>
    %23 = arith.addf %22, %21 : vector<8x128xf32>
    %24 = arith.divf %22, %23 : vector<8x128xf32>
    %25 = vector.extract_strided_slice %18 {offsets = [0, 128], sizes = [8, 128], strides = [1, 1]} : vector<8x512xf32> to vector<8x128xf32>
    %26 = arith.negf %25 : vector<8x128xf32>
    %27 = math.exp %26 : vector<8x128xf32>
    %cst_21 = arith.constant 1.000000e+00 : f32
    %28 = vector.broadcast %cst_21 : f32 to vector<8x128xf32>
    %29 = arith.addf %28, %27 : vector<8x128xf32>
    %30 = arith.divf %28, %29 : vector<8x128xf32>
    %31 = vector.extract_strided_slice %18 {offsets = [0, 256], sizes = [8, 128], strides = [1, 1]} : vector<8x512xf32> to vector<8x128xf32>
    %32 = math.tanh %31 : vector<8x128xf32>
    %33 = vector.extract_strided_slice %18 {offsets = [0, 384], sizes = [8, 128], strides = [1, 1]} : vector<8x512xf32> to vector<8x128xf32>
    %34 = arith.negf %33 : vector<8x128xf32>
    %35 = math.exp %34 : vector<8x128xf32>
    %cst_22 = arith.constant 1.000000e+00 : f32
    %36 = vector.broadcast %cst_22 : f32 to vector<8x128xf32>
    %37 = arith.addf %36, %35 : vector<8x128xf32>
    %38 = arith.divf %36, %37 : vector<8x128xf32>
    %39 = arith.mulf %30, %8 : vector<8x128xf32>
    %40 = arith.mulf %24, %32 : vector<8x128xf32>
    %41 = arith.addf %39, %40 : vector<8x128xf32>
    %42 = math.tanh %41 : vector<8x128xf32>
    %43 = arith.mulf %38, %42 : vector<8x128xf32>
    %c0_23 = arith.constant 0 : index
    %c0_24 = arith.constant 0 : index
    %c0_25 = arith.constant 0 : index
    %44 = vector.load %arg6[%c0_23, %c0_24, %c0_25] : memref<8x8x128xf32, #tpu.memory_space<vmem>>, vector<1x8x128xf32>
    %45 = vector.shape_cast %44 : vector<1x8x128xf32> to vector<8x128xf32>
    %46 = vector.shape_cast %43 : vector<8x128xf32> to vector<1x8x128xf32>
    tpu.vector_store %arg6[%c0_23, %c0_24, %c0_25], %46 {strides = array<i32>} : memref<8x8x128xf32, #tpu.memory_space<vmem>>, vector<1x8x128xf32>,
    %c7 = arith.constant 7 : index
    %c0_26 = arith.constant 0 : index
    %c0_27 = arith.constant 0 : index
    %47 = vector.load %arg2[%c7, %c0_26, %c0_27] : memref<8x8x512xf32, #tpu.memory_space<vmem>>, vector<1x8x512xf32>
    %48 = vector.shape_cast %47 : vector<1x8x512xf32> to vector<8x512xf32>
    %cst_28 = arith.constant dense<0.000000e+00> : vector<8x512xf32>
    %49 = tpu.matmul %12, %10, %cst_28 {dimension_numbers = #tpu.dot_dimension_numbers<[1], [0], [0], [1], [0, 0, 1, 1], [], []>} : vector<8x128xf32>, vector<128x512xf32>, vector<8x512xf32> -> vector<8x512xf32>
    %50 = arith.addf %48, %49 : vector<8x512xf32>
    %51 = vector.extract_strided_slice %50 {offsets = [0, 0], sizes = [8, 128], strides = [1, 1]} : vector<8x512xf32> to vector<8x128xf32>
    %52 = arith.negf %51 : vector<8x128xf32>
    %53 = math.exp %52 : vector<8x128xf32>
    %cst_29 = arith.constant 1.000000e+00 : f32
    %54 = vector.broadcast %cst_29 : f32 to vector<8x128xf32>
    %55 = arith.addf %54, %53 : vector<8x128xf32>
    %56 = arith.divf %54, %55 : vector<8x128xf32>
    %57 = vector.extract_strided_slice %50 {offsets = [0, 128], sizes = [8, 128], strides = [1, 1]} : vector<8x512xf32> to vector<8x128xf32>
    %58 = arith.negf %57 : vector<8x128xf32>
    %59 = math.exp %58 : vector<8x128xf32>
    %cst_30 = arith.constant 1.000000e+00 : f32
    %60 = vector.broadcast %cst_30 : f32 to vector<8x128xf32>
    %61 = arith.addf %60, %59 : vector<8x128xf32>
    %62 = arith.divf %60, %61 : vector<8x128xf32>
    %63 = vector.extract_strided_slice %50 {offsets = [0, 256], sizes = [8, 128], strides = [1, 1]} : vector<8x512xf32> to vector<8x128xf32>
    %64 = math.tanh %63 : vector<8x128xf32>
    %65 = vector.extract_strided_slice %50 {offsets = [0, 384], sizes = [8, 128], strides = [1, 1]} : vector<8x512xf32> to vector<8x128xf32>
    %66 = arith.negf %65 : vector<8x128xf32>
    %67 = math.exp %66 : vector<8x128xf32>
    %cst_31 = arith.constant 1.000000e+00 : f32
    %68 = vector.broadcast %cst_31 : f32 to vector<8x128xf32>
    %69 = arith.addf %68, %67 : vector<8x128xf32>
    %70 = arith.divf %68, %69 : vector<8x128xf32>
    %71 = arith.mulf %62, %14 : vector<8x128xf32>
    %72 = arith.mulf %56, %64 : vector<8x128xf32>
    %73 = arith.addf %71, %72 : vector<8x128xf32>
    %74 = math.tanh %73 : vector<8x128xf32>
    %75 = arith.mulf %70, %74 : vector<8x128xf32>
    %c7_32 = arith.constant 7 : index
    %c0_33 = arith.constant 0 : index
    %c0_34 = arith.constant 0 : index
    %76 = vector.load %arg7[%c7_32, %c0_33, %c0_34] : memref<8x8x128xf32, #tpu.memory_space<vmem>>, vector<1x8x128xf32>
    %77 = vector.shape_cast %76 : vector<1x8x128xf32> to vector<8x128xf32>
    %78 = vector.shape_cast %75 : vector<8x128xf32> to vector<1x8x128xf32>
    tpu.vector_store %arg7[%c7_32, %c0_33, %c0_34], %78 {strides = array<i32>} : memref<8x8x128xf32, #tpu.memory_space<vmem>>, vector<1x8x128xf32>,
    %c1_35 = arith.constant 1 : index
    %c0_36 = arith.constant 0 : index
    %c0_37 = arith.constant 0 : index
    %79 = vector.load %arg1[%c1_35, %c0_36, %c0_37] : memref<8x8x512xf32, #tpu.memory_space<vmem>>, vector<1x8x512xf32>
    %80 = vector.shape_cast %79 : vector<1x8x512xf32> to vector<8x512xf32>
    %cst_38 = arith.constant dense<0.000000e+00> : vector<8x512xf32>
    %81 = tpu.matmul %43, %4, %cst_38 {dimension_numbers = #tpu.dot_dimension_numbers<[1], [0], [0], [1], [0, 0, 1, 1], [], []>} : vector<8x128xf32>, vector<128x512xf32>, vector<8x512xf32> -> vector<8x512xf32>
    %82 = arith.addf %80, %81 : vector<8x512xf32>
    %83 = vector.extract_strided_slice %82 {offsets = [0, 0], sizes = [8, 128], strides = [1, 1]} : vector<8x512xf32> to vector<8x128xf32>
    %84 = arith.negf %83 : vector<8x128xf32>
    %85 = math.exp %84 : vector<8x128xf32>
    %cst_39 = arith.constant 1.000000e+00 : f32
    %86 = vector.broadcast %cst_39 : f32 to vector<8x128xf32>
    %87 = arith.addf %86, %85 : vector<8x128xf32>
    %88 = arith.divf %86, %87 : vector<8x128xf32>
    %89 = vector.extract_strided_slice %82 {offsets = [0, 128], sizes = [8, 128], strides = [1, 1]} : vector<8x512xf32> to vector<8x128xf32>
    %90 = arith.negf %89 : vector<8x128xf32>
    %91 = math.exp %90 : vector<8x128xf32>
    %cst_40 = arith.constant 1.000000e+00 : f32
    %92 = vector.broadcast %cst_40 : f32 to vector<8x128xf32>
    %93 = arith.addf %92, %91 : vector<8x128xf32>
    %94 = arith.divf %92, %93 : vector<8x128xf32>
    %95 = vector.extract_strided_slice %82 {offsets = [0, 256], sizes = [8, 128], strides = [1, 1]} : vector<8x512xf32> to vector<8x128xf32>
    %96 = math.tanh %95 : vector<8x128xf32>
    %97 = vector.extract_strided_slice %82 {offsets = [0, 384], sizes = [8, 128], strides = [1, 1]} : vector<8x512xf32> to vector<8x128xf32>
    %98 = arith.negf %97 : vector<8x128xf32>
    %99 = math.exp %98 : vector<8x128xf32>
    %cst_41 = arith.constant 1.000000e+00 : f32
    %100 = vector.broadcast %cst_41 : f32 to vector<8x128xf32>
    %101 = arith.addf %100, %99 : vector<8x128xf32>
    %102 = arith.divf %100, %101 : vector<8x128xf32>
    %103 = arith.mulf %94, %41 : vector<8x128xf32>
    %104 = arith.mulf %88, %96 : vector<8x128xf32>
    %105 = arith.addf %103, %104 : vector<8x128xf32>
    %106 = math.tanh %105 : vector<8x128xf32>
    %107 = arith.mulf %102, %106 : vector<8x128xf32>
    %c1_42 = arith.constant 1 : index
    %c0_43 = arith.constant 0 : index
    %c0_44 = arith.constant 0 : index
    %108 = vector.load %arg6[%c1_42, %c0_43, %c0_44] : memref<8x8x128xf32, #tpu.memory_space<vmem>>, vector<1x8x128xf32>
    %109 = vector.shape_cast %108 : vector<1x8x128xf32> to vector<8x128xf32>
    %110 = vector.shape_cast %107 : vector<8x128xf32> to vector<1x8x128xf32>
    tpu.vector_store %arg6[%c1_42, %c0_43, %c0_44], %110 {strides = array<i32>} : memref<8x8x128xf32, #tpu.memory_space<vmem>>, vector<1x8x128xf32>,
    %c6 = arith.constant 6 : index
    %c0_45 = arith.constant 0 : index
    %c0_46 = arith.constant 0 : index
    %111 = vector.load %arg2[%c6, %c0_45, %c0_46] : memref<8x8x512xf32, #tpu.memory_space<vmem>>, vector<1x8x512xf32>
    %112 = vector.shape_cast %111 : vector<1x8x512xf32> to vector<8x512xf32>
    %cst_47 = arith.constant dense<0.000000e+00> : vector<8x512xf32>
    %113 = tpu.matmul %75, %10, %cst_47 {dimension_numbers = #tpu.dot_dimension_numbers<[1], [0], [0], [1], [0, 0, 1, 1], [], []>} : vector<8x128xf32>, vector<128x512xf32>, vector<8x512xf32> -> vector<8x512xf32>
    %114 = arith.addf %112, %113 : vector<8x512xf32>
    %115 = vector.extract_strided_slice %114 {offsets = [0, 0], sizes = [8, 128], strides = [1, 1]} : vector<8x512xf32> to vector<8x128xf32>
    %116 = arith.negf %115 : vector<8x128xf32>
    %117 = math.exp %116 : vector<8x128xf32>
    %cst_48 = arith.constant 1.000000e+00 : f32
    %118 = vector.broadcast %cst_48 : f32 to vector<8x128xf32>
    %119 = arith.addf %118, %117 : vector<8x128xf32>
    %120 = arith.divf %118, %119 : vector<8x128xf32>
    %121 = vector.extract_strided_slice %114 {offsets = [0, 128], sizes = [8, 128], strides = [1, 1]} : vector<8x512xf32> to vector<8x128xf32>
    %122 = arith.negf %121 : vector<8x128xf32>
    %123 = math.exp %122 : vector<8x128xf32>
    %cst_49 = arith.constant 1.000000e+00 : f32
    %124 = vector.broadcast %cst_49 : f32 to vector<8x128xf32>
    %125 = arith.addf %124, %123 : vector<8x128xf32>
    %126 = arith.divf %124, %125 : vector<8x128xf32>
    %127 = vector.extract_strided_slice %114 {offsets = [0, 256], sizes = [8, 128], strides = [1, 1]} : vector<8x512xf32> to vector<8x128xf32>
    %128 = math.tanh %127 : vector<8x128xf32>
    %129 = vector.extract_strided_slice %114 {offsets = [0, 384], sizes = [8, 128], strides = [1, 1]} : vector<8x512xf32> to vector<8x128xf32>
    %130 = arith.negf %129 : vector<8x128xf32>
    %131 = math.exp %130 : vector<8x128xf32>
    %cst_50 = arith.constant 1.000000e+00 : f32
    %132 = vector.broadcast %cst_50 : f32 to vector<8x128xf32>
    %133 = arith.addf %132, %131 : vector<8x128xf32>
    %134 = arith.divf %132, %133 : vector<8x128xf32>
    %135 = arith.mulf %126, %73 : vector<8x128xf32>
    %136 = arith.mulf %120, %128 : vector<8x128xf32>
    %137 = arith.addf %135, %136 : vector<8x128xf32>
    %138 = math.tanh %137 : vector<8x128xf32>
    %139 = arith.mulf %134, %138 : vector<8x128xf32>
    %c6_51 = arith.constant 6 : index
    %c0_52 = arith.constant 0 : index
    %c0_53 = arith.constant 0 : index
    %140 = vector.load %arg7[%c6_51, %c0_52, %c0_53] : memref<8x8x128xf32, #tpu.memory_space<vmem>>, vector<1x8x128xf32>
    %141 = vector.shape_cast %140 : vector<1x8x128xf32> to vector<8x128xf32>
    %142 = vector.shape_cast %139 : vector<8x128xf32> to vector<1x8x128xf32>
    tpu.vector_store %arg7[%c6_51, %c0_52, %c0_53], %142 {strides = array<i32>} : memref<8x8x128xf32, #tpu.memory_space<vmem>>, vector<1x8x128xf32>,
    %c2 = arith.constant 2 : index
    %c0_54 = arith.constant 0 : index
    %c0_55 = arith.constant 0 : index
    %143 = vector.load %arg1[%c2, %c0_54, %c0_55] : memref<8x8x512xf32, #tpu.memory_space<vmem>>, vector<1x8x512xf32>
    %144 = vector.shape_cast %143 : vector<1x8x512xf32> to vector<8x512xf32>
    %cst_56 = arith.constant dense<0.000000e+00> : vector<8x512xf32>
    %145 = tpu.matmul %107, %4, %cst_56 {dimension_numbers = #tpu.dot_dimension_numbers<[1], [0], [0], [1], [0, 0, 1, 1], [], []>} : vector<8x128xf32>, vector<128x512xf32>, vector<8x512xf32> -> vector<8x512xf32>
    %146 = arith.addf %144, %145 : vector<8x512xf32>
    %147 = vector.extract_strided_slice %146 {offsets = [0, 0], sizes = [8, 128], strides = [1, 1]} : vector<8x512xf32> to vector<8x128xf32>
    %148 = arith.negf %147 : vector<8x128xf32>
    %149 = math.exp %148 : vector<8x128xf32>
    %cst_57 = arith.constant 1.000000e+00 : f32
    %150 = vector.broadcast %cst_57 : f32 to vector<8x128xf32>
    %151 = arith.addf %150, %149 : vector<8x128xf32>
    %152 = arith.divf %150, %151 : vector<8x128xf32>
    %153 = vector.extract_strided_slice %146 {offsets = [0, 128], sizes = [8, 128], strides = [1, 1]} : vector<8x512xf32> to vector<8x128xf32>
    %154 = arith.negf %153 : vector<8x128xf32>
    %155 = math.exp %154 : vector<8x128xf32>
    %cst_58 = arith.constant 1.000000e+00 : f32
    %156 = vector.broadcast %cst_58 : f32 to vector<8x128xf32>
    %157 = arith.addf %156, %155 : vector<8x128xf32>
    %158 = arith.divf %156, %157 : vector<8x128xf32>
    %159 = vector.extract_strided_slice %146 {offsets = [0, 256], sizes = [8, 128], strides = [1, 1]} : vector<8x512xf32> to vector<8x128xf32>
    %160 = math.tanh %159 : vector<8x128xf32>
    %161 = vector.extract_strided_slice %146 {offsets = [0, 384], sizes = [8, 128], strides = [1, 1]} : vector<8x512xf32> to vector<8x128xf32>
    %162 = arith.negf %161 : vector<8x128xf32>
    %163 = math.exp %162 : vector<8x128xf32>
    %cst_59 = arith.constant 1.000000e+00 : f32
    %164 = vector.broadcast %cst_59 : f32 to vector<8x128xf32>
    %165 = arith.addf %164, %163 : vector<8x128xf32>
    %166 = arith.divf %164, %165 : vector<8x128xf32>
    %167 = arith.mulf %158, %105 : vector<8x128xf32>
    %168 = arith.mulf %152, %160 : vector<8x128xf32>
    %169 = arith.addf %167, %168 : vector<8x128xf32>
    %170 = math.tanh %169 : vector<8x128xf32>
    %171 = arith.mulf %166, %170 : vector<8x128xf32>
    %c2_60 = arith.constant 2 : index
    %c0_61 = arith.constant 0 : index
    %c0_62 = arith.constant 0 : index
    %172 = vector.load %arg6[%c2_60, %c0_61, %c0_62] : memref<8x8x128xf32, #tpu.memory_space<vmem>>, vector<1x8x128xf32>
    %173 = vector.shape_cast %172 : vector<1x8x128xf32> to vector<8x128xf32>
    %174 = vector.shape_cast %171 : vector<8x128xf32> to vector<1x8x128xf32>
    tpu.vector_store %arg6[%c2_60, %c0_61, %c0_62], %174 {strides = array<i32>} : memref<8x8x128xf32, #tpu.memory_space<vmem>>, vector<1x8x128xf32>,
    %c5 = arith.constant 5 : index
    %c0_63 = arith.constant 0 : index
    %c0_64 = arith.constant 0 : index
    %175 = vector.load %arg2[%c5, %c0_63, %c0_64] : memref<8x8x512xf32, #tpu.memory_space<vmem>>, vector<1x8x512xf32>
    %176 = vector.shape_cast %175 : vector<1x8x512xf32> to vector<8x512xf32>
    %cst_65 = arith.constant dense<0.000000e+00> : vector<8x512xf32>
    %177 = tpu.matmul %139, %10, %cst_65 {dimension_numbers = #tpu.dot_dimension_numbers<[1], [0], [0], [1], [0, 0, 1, 1], [], []>} : vector<8x128xf32>, vector<128x512xf32>, vector<8x512xf32> -> vector<8x512xf32>
    %178 = arith.addf %176, %177 : vector<8x512xf32>
    %179 = vector.extract_strided_slice %178 {offsets = [0, 0], sizes = [8, 128], strides = [1, 1]} : vector<8x512xf32> to vector<8x128xf32>
    %180 = arith.negf %179 : vector<8x128xf32>
    %181 = math.exp %180 : vector<8x128xf32>
    %cst_66 = arith.constant 1.000000e+00 : f32
    %182 = vector.broadcast %cst_66 : f32 to vector<8x128xf32>
    %183 = arith.addf %182, %181 : vector<8x128xf32>
    %184 = arith.divf %182, %183 : vector<8x128xf32>
    %185 = vector.extract_strided_slice %178 {offsets = [0, 128], sizes = [8, 128], strides = [1, 1]} : vector<8x512xf32> to vector<8x128xf32>
    %186 = arith.negf %185 : vector<8x128xf32>
    %187 = math.exp %186 : vector<8x128xf32>
    %cst_67 = arith.constant 1.000000e+00 : f32
    %188 = vector.broadcast %cst_67 : f32 to vector<8x128xf32>
    %189 = arith.addf %188, %187 : vector<8x128xf32>
    %190 = arith.divf %188, %189 : vector<8x128xf32>
    %191 = vector.extract_strided_slice %178 {offsets = [0, 256], sizes = [8, 128], strides = [1, 1]} : vector<8x512xf32> to vector<8x128xf32>
    %192 = math.tanh %191 : vector<8x128xf32>
    %193 = vector.extract_strided_slice %178 {offsets = [0, 384], sizes = [8, 128], strides = [1, 1]} : vector<8x512xf32> to vector<8x128xf32>
    %194 = arith.negf %193 : vector<8x128xf32>
    %195 = math.exp %194 : vector<8x128xf32>
    %cst_68 = arith.constant 1.000000e+00 : f32
    %196 = vector.broadcast %cst_68 : f32 to vector<8x128xf32>
    %197 = arith.addf %196, %195 : vector<8x128xf32>
    %198 = arith.divf %196, %197 : vector<8x128xf32>
    %199 = arith.mulf %190, %137 : vector<8x128xf32>
    %200 = arith.mulf %184, %192 : vector<8x128xf32>
    %201 = arith.addf %199, %200 : vector<8x128xf32>
    %202 = math.tanh %201 : vector<8x128xf32>
    %203 = arith.mulf %198, %202 : vector<8x128xf32>
    %c5_69 = arith.constant 5 : index
    %c0_70 = arith.constant 0 : index
    %c0_71 = arith.constant 0 : index
    %204 = vector.load %arg7[%c5_69, %c0_70, %c0_71] : memref<8x8x128xf32, #tpu.memory_space<vmem>>, vector<1x8x128xf32>
    %205 = vector.shape_cast %204 : vector<1x8x128xf32> to vector<8x128xf32>
    %206 = vector.shape_cast %203 : vector<8x128xf32> to vector<1x8x128xf32>
    tpu.vector_store %arg7[%c5_69, %c0_70, %c0_71], %206 {strides = array<i32>} : memref<8x8x128xf32, #tpu.memory_space<vmem>>, vector<1x8x128xf32>,
    %c3 = arith.constant 3 : index
    %c0_72 = arith.constant 0 : index
    %c0_73 = arith.constant 0 : index
    %207 = vector.load %arg1[%c3, %c0_72, %c0_73] : memref<8x8x512xf32, #tpu.memory_space<vmem>>, vector<1x8x512xf32>
    %208 = vector.shape_cast %207 : vector<1x8x512xf32> to vector<8x512xf32>
    %cst_74 = arith.constant dense<0.000000e+00> : vector<8x512xf32>
    %209 = tpu.matmul %171, %4, %cst_74 {dimension_numbers = #tpu.dot_dimension_numbers<[1], [0], [0], [1], [0, 0, 1, 1], [], []>} : vector<8x128xf32>, vector<128x512xf32>, vector<8x512xf32> -> vector<8x512xf32>
    %210 = arith.addf %208, %209 : vector<8x512xf32>
    %211 = vector.extract_strided_slice %210 {offsets = [0, 0], sizes = [8, 128], strides = [1, 1]} : vector<8x512xf32> to vector<8x128xf32>
    %212 = arith.negf %211 : vector<8x128xf32>
    %213 = math.exp %212 : vector<8x128xf32>
    %cst_75 = arith.constant 1.000000e+00 : f32
    %214 = vector.broadcast %cst_75 : f32 to vector<8x128xf32>
    %215 = arith.addf %214, %213 : vector<8x128xf32>
    %216 = arith.divf %214, %215 : vector<8x128xf32>
    %217 = vector.extract_strided_slice %210 {offsets = [0, 128], sizes = [8, 128], strides = [1, 1]} : vector<8x512xf32> to vector<8x128xf32>
    %218 = arith.negf %217 : vector<8x128xf32>
    %219 = math.exp %218 : vector<8x128xf32>
    %cst_76 = arith.constant 1.000000e+00 : f32
    %220 = vector.broadcast %cst_76 : f32 to vector<8x128xf32>
    %221 = arith.addf %220, %219 : vector<8x128xf32>
    %222 = arith.divf %220, %221 : vector<8x128xf32>
    %223 = vector.extract_strided_slice %210 {offsets = [0, 256], sizes = [8, 128], strides = [1, 1]} : vector<8x512xf32> to vector<8x128xf32>
    %224 = math.tanh %223 : vector<8x128xf32>
    %225 = vector.extract_strided_slice %210 {offsets = [0, 384], sizes = [8, 128], strides = [1, 1]} : vector<8x512xf32> to vector<8x128xf32>
    %226 = arith.negf %225 : vector<8x128xf32>
    %227 = math.exp %226 : vector<8x128xf32>
    %cst_77 = arith.constant 1.000000e+00 : f32
    %228 = vector.broadcast %cst_77 : f32 to vector<8x128xf32>
    %229 = arith.addf %228, %227 : vector<8x128xf32>
    %230 = arith.divf %228, %229 : vector<8x128xf32>
    %231 = arith.mulf %222, %169 : vector<8x128xf32>
    %232 = arith.mulf %216, %224 : vector<8x128xf32>
    %233 = arith.addf %231, %232 : vector<8x128xf32>
    %234 = math.tanh %233 : vector<8x128xf32>
    %235 = arith.mulf %230, %234 : vector<8x128xf32>
    %c3_78 = arith.constant 3 : index
    %c0_79 = arith.constant 0 : index
    %c0_80 = arith.constant 0 : index
    %236 = vector.load %arg6[%c3_78, %c0_79, %c0_80] : memref<8x8x128xf32, #tpu.memory_space<vmem>>, vector<1x8x128xf32>
    %237 = vector.shape_cast %236 : vector<1x8x128xf32> to vector<8x128xf32>
    %238 = vector.shape_cast %235 : vector<8x128xf32> to vector<1x8x128xf32>
    tpu.vector_store %arg6[%c3_78, %c0_79, %c0_80], %238 {strides = array<i32>} : memref<8x8x128xf32, #tpu.memory_space<vmem>>, vector<1x8x128xf32>,
    %c4 = arith.constant 4 : index
    %c0_81 = arith.constant 0 : index
    %c0_82 = arith.constant 0 : index
    %239 = vector.load %arg2[%c4, %c0_81, %c0_82] : memref<8x8x512xf32, #tpu.memory_space<vmem>>, vector<1x8x512xf32>
    %240 = vector.shape_cast %239 : vector<1x8x512xf32> to vector<8x512xf32>
    %cst_83 = arith.constant dense<0.000000e+00> : vector<8x512xf32>
    %241 = tpu.matmul %203, %10, %cst_83 {dimension_numbers = #tpu.dot_dimension_numbers<[1], [0], [0], [1], [0, 0, 1, 1], [], []>} : vector<8x128xf32>, vector<128x512xf32>, vector<8x512xf32> -> vector<8x512xf32>
    %242 = arith.addf %240, %241 : vector<8x512xf32>
    %243 = vector.extract_strided_slice %242 {offsets = [0, 0], sizes = [8, 128], strides = [1, 1]} : vector<8x512xf32> to vector<8x128xf32>
    %244 = arith.negf %243 : vector<8x128xf32>
    %245 = math.exp %244 : vector<8x128xf32>
    %cst_84 = arith.constant 1.000000e+00 : f32
    %246 = vector.broadcast %cst_84 : f32 to vector<8x128xf32>
    %247 = arith.addf %246, %245 : vector<8x128xf32>
    %248 = arith.divf %246, %247 : vector<8x128xf32>
    %249 = vector.extract_strided_slice %242 {offsets = [0, 128], sizes = [8, 128], strides = [1, 1]} : vector<8x512xf32> to vector<8x128xf32>
    %250 = arith.negf %249 : vector<8x128xf32>
    %251 = math.exp %250 : vector<8x128xf32>
    %cst_85 = arith.constant 1.000000e+00 : f32
    %252 = vector.broadcast %cst_85 : f32 to vector<8x128xf32>
    %253 = arith.addf %252, %251 : vector<8x128xf32>
    %254 = arith.divf %252, %253 : vector<8x128xf32>
    %255 = vector.extract_strided_slice %242 {offsets = [0, 256], sizes = [8, 128], strides = [1, 1]} : vector<8x512xf32> to vector<8x128xf32>
    %256 = math.tanh %255 : vector<8x128xf32>
    %257 = vector.extract_strided_slice %242 {offsets = [0, 384], sizes = [8, 128], strides = [1, 1]} : vector<8x512xf32> to vector<8x128xf32>
    %258 = arith.negf %257 : vector<8x128xf32>
    %259 = math.exp %258 : vector<8x128xf32>
    %cst_86 = arith.constant 1.000000e+00 : f32
    %260 = vector.broadcast %cst_86 : f32 to vector<8x128xf32>
    %261 = arith.addf %260, %259 : vector<8x128xf32>
    %262 = arith.divf %260, %261 : vector<8x128xf32>
    %263 = arith.mulf %254, %201 : vector<8x128xf32>
    %264 = arith.mulf %248, %256 : vector<8x128xf32>
    %265 = arith.addf %263, %264 : vector<8x128xf32>
    %266 = math.tanh %265 : vector<8x128xf32>
    %267 = arith.mulf %262, %266 : vector<8x128xf32>
    %c4_87 = arith.constant 4 : index
    %c0_88 = arith.constant 0 : index
    %c0_89 = arith.constant 0 : index
    %268 = vector.load %arg7[%c4_87, %c0_88, %c0_89] : memref<8x8x128xf32, #tpu.memory_space<vmem>>, vector<1x8x128xf32>
    %269 = vector.shape_cast %268 : vector<1x8x128xf32> to vector<8x128xf32>
    %270 = vector.shape_cast %267 : vector<8x128xf32> to vector<1x8x128xf32>
    tpu.vector_store %arg7[%c4_87, %c0_88, %c0_89], %270 {strides = array<i32>} : memref<8x8x128xf32, #tpu.memory_space<vmem>>, vector<1x8x128xf32>,
    %c4_90 = arith.constant 4 : index
    %c0_91 = arith.constant 0 : index
    %c0_92 = arith.constant 0 : index
    %271 = vector.load %arg1[%c4_90, %c0_91, %c0_92] : memref<8x8x512xf32, #tpu.memory_space<vmem>>, vector<1x8x512xf32>
    %272 = vector.shape_cast %271 : vector<1x8x512xf32> to vector<8x512xf32>
    %cst_93 = arith.constant dense<0.000000e+00> : vector<8x512xf32>
    %273 = tpu.matmul %235, %4, %cst_93 {dimension_numbers = #tpu.dot_dimension_numbers<[1], [0], [0], [1], [0, 0, 1, 1], [], []>} : vector<8x128xf32>, vector<128x512xf32>, vector<8x512xf32> -> vector<8x512xf32>
    %274 = arith.addf %272, %273 : vector<8x512xf32>
    %275 = vector.extract_strided_slice %274 {offsets = [0, 0], sizes = [8, 128], strides = [1, 1]} : vector<8x512xf32> to vector<8x128xf32>
    %276 = arith.negf %275 : vector<8x128xf32>
    %277 = math.exp %276 : vector<8x128xf32>
    %cst_94 = arith.constant 1.000000e+00 : f32
    %278 = vector.broadcast %cst_94 : f32 to vector<8x128xf32>
    %279 = arith.addf %278, %277 : vector<8x128xf32>
    %280 = arith.divf %278, %279 : vector<8x128xf32>
    %281 = vector.extract_strided_slice %274 {offsets = [0, 128], sizes = [8, 128], strides = [1, 1]} : vector<8x512xf32> to vector<8x128xf32>
    %282 = arith.negf %281 : vector<8x128xf32>
    %283 = math.exp %282 : vector<8x128xf32>
    %cst_95 = arith.constant 1.000000e+00 : f32
    %284 = vector.broadcast %cst_95 : f32 to vector<8x128xf32>
    %285 = arith.addf %284, %283 : vector<8x128xf32>
    %286 = arith.divf %284, %285 : vector<8x128xf32>
    %287 = vector.extract_strided_slice %274 {offsets = [0, 256], sizes = [8, 128], strides = [1, 1]} : vector<8x512xf32> to vector<8x128xf32>
    %288 = math.tanh %287 : vector<8x128xf32>
    %289 = vector.extract_strided_slice %274 {offsets = [0, 384], sizes = [8, 128], strides = [1, 1]} : vector<8x512xf32> to vector<8x128xf32>
    %290 = arith.negf %289 : vector<8x128xf32>
    %291 = math.exp %290 : vector<8x128xf32>
    %cst_96 = arith.constant 1.000000e+00 : f32
    %292 = vector.broadcast %cst_96 : f32 to vector<8x128xf32>
    %293 = arith.addf %292, %291 : vector<8x128xf32>
    %294 = arith.divf %292, %293 : vector<8x128xf32>
    %295 = arith.mulf %286, %233 : vector<8x128xf32>
    %296 = arith.mulf %280, %288 : vector<8x128xf32>
    %297 = arith.addf %295, %296 : vector<8x128xf32>
    %298 = math.tanh %297 : vector<8x128xf32>
    %299 = arith.mulf %294, %298 : vector<8x128xf32>
    %c4_97 = arith.constant 4 : index
    %c0_98 = arith.constant 0 : index
    %c0_99 = arith.constant 0 : index
    %300 = vector.load %arg6[%c4_97, %c0_98, %c0_99] : memref<8x8x128xf32, #tpu.memory_space<vmem>>, vector<1x8x128xf32>
    %301 = vector.shape_cast %300 : vector<1x8x128xf32> to vector<8x128xf32>
    %302 = vector.shape_cast %299 : vector<8x128xf32> to vector<1x8x128xf32>
    tpu.vector_store %arg6[%c4_97, %c0_98, %c0_99], %302 {strides = array<i32>} : memref<8x8x128xf32, #tpu.memory_space<vmem>>, vector<1x8x128xf32>,
    %c3_100 = arith.constant 3 : index
    %c0_101 = arith.constant 0 : index
    %c0_102 = arith.constant 0 : index
    %303 = vector.load %arg2[%c3_100, %c0_101, %c0_102] : memref<8x8x512xf32, #tpu.memory_space<vmem>>, vector<1x8x512xf32>
    %304 = vector.shape_cast %303 : vector<1x8x512xf32> to vector<8x512xf32>
    %cst_103 = arith.constant dense<0.000000e+00> : vector<8x512xf32>
    %305 = tpu.matmul %267, %10, %cst_103 {dimension_numbers = #tpu.dot_dimension_numbers<[1], [0], [0], [1], [0, 0, 1, 1], [], []>} : vector<8x128xf32>, vector<128x512xf32>, vector<8x512xf32> -> vector<8x512xf32>
    %306 = arith.addf %304, %305 : vector<8x512xf32>
    %307 = vector.extract_strided_slice %306 {offsets = [0, 0], sizes = [8, 128], strides = [1, 1]} : vector<8x512xf32> to vector<8x128xf32>
    %308 = arith.negf %307 : vector<8x128xf32>
    %309 = math.exp %308 : vector<8x128xf32>
    %cst_104 = arith.constant 1.000000e+00 : f32
    %310 = vector.broadcast %cst_104 : f32 to vector<8x128xf32>
    %311 = arith.addf %310, %309 : vector<8x128xf32>
    %312 = arith.divf %310, %311 : vector<8x128xf32>
    %313 = vector.extract_strided_slice %306 {offsets = [0, 128], sizes = [8, 128], strides = [1, 1]} : vector<8x512xf32> to vector<8x128xf32>
    %314 = arith.negf %313 : vector<8x128xf32>
    %315 = math.exp %314 : vector<8x128xf32>
    %cst_105 = arith.constant 1.000000e+00 : f32
    %316 = vector.broadcast %cst_105 : f32 to vector<8x128xf32>
    %317 = arith.addf %316, %315 : vector<8x128xf32>
    %318 = arith.divf %316, %317 : vector<8x128xf32>
    %319 = vector.extract_strided_slice %306 {offsets = [0, 256], sizes = [8, 128], strides = [1, 1]} : vector<8x512xf32> to vector<8x128xf32>
    %320 = math.tanh %319 : vector<8x128xf32>
    %321 = vector.extract_strided_slice %306 {offsets = [0, 384], sizes = [8, 128], strides = [1, 1]} : vector<8x512xf32> to vector<8x128xf32>
    %322 = arith.negf %321 : vector<8x128xf32>
    %323 = math.exp %322 : vector<8x128xf32>
    %cst_106 = arith.constant 1.000000e+00 : f32
    %324 = vector.broadcast %cst_106 : f32 to vector<8x128xf32>
    %325 = arith.addf %324, %323 : vector<8x128xf32>
    %326 = arith.divf %324, %325 : vector<8x128xf32>
    %327 = arith.mulf %318, %265 : vector<8x128xf32>
    %328 = arith.mulf %312, %320 : vector<8x128xf32>
    %329 = arith.addf %327, %328 : vector<8x128xf32>
    %330 = math.tanh %329 : vector<8x128xf32>
    %331 = arith.mulf %326, %330 : vector<8x128xf32>
    %c3_107 = arith.constant 3 : index
    %c0_108 = arith.constant 0 : index
    %c0_109 = arith.constant 0 : index
    %332 = vector.load %arg7[%c3_107, %c0_108, %c0_109] : memref<8x8x128xf32, #tpu.memory_space<vmem>>, vector<1x8x128xf32>
    %333 = vector.shape_cast %332 : vector<1x8x128xf32> to vector<8x128xf32>
    %334 = vector.shape_cast %331 : vector<8x128xf32> to vector<1x8x128xf32>
    tpu.vector_store %arg7[%c3_107, %c0_108, %c0_109], %334 {strides = array<i32>} : memref<8x8x128xf32, #tpu.memory_space<vmem>>, vector<1x8x128xf32>,
    %c5_110 = arith.constant 5 : index
    %c0_111 = arith.constant 0 : index
    %c0_112 = arith.constant 0 : index
    %335 = vector.load %arg1[%c5_110, %c0_111, %c0_112] : memref<8x8x512xf32, #tpu.memory_space<vmem>>, vector<1x8x512xf32>
    %336 = vector.shape_cast %335 : vector<1x8x512xf32> to vector<8x512xf32>
    %cst_113 = arith.constant dense<0.000000e+00> : vector<8x512xf32>
    %337 = tpu.matmul %299, %4, %cst_113 {dimension_numbers = #tpu.dot_dimension_numbers<[1], [0], [0], [1], [0, 0, 1, 1], [], []>} : vector<8x128xf32>, vector<128x512xf32>, vector<8x512xf32> -> vector<8x512xf32>
    %338 = arith.addf %336, %337 : vector<8x512xf32>
    %339 = vector.extract_strided_slice %338 {offsets = [0, 0], sizes = [8, 128], strides = [1, 1]} : vector<8x512xf32> to vector<8x128xf32>
    %340 = arith.negf %339 : vector<8x128xf32>
    %341 = math.exp %340 : vector<8x128xf32>
    %cst_114 = arith.constant 1.000000e+00 : f32
    %342 = vector.broadcast %cst_114 : f32 to vector<8x128xf32>
    %343 = arith.addf %342, %341 : vector<8x128xf32>
    %344 = arith.divf %342, %343 : vector<8x128xf32>
    %345 = vector.extract_strided_slice %338 {offsets = [0, 128], sizes = [8, 128], strides = [1, 1]} : vector<8x512xf32> to vector<8x128xf32>
    %346 = arith.negf %345 : vector<8x128xf32>
    %347 = math.exp %346 : vector<8x128xf32>
    %cst_115 = arith.constant 1.000000e+00 : f32
    %348 = vector.broadcast %cst_115 : f32 to vector<8x128xf32>
    %349 = arith.addf %348, %347 : vector<8x128xf32>
    %350 = arith.divf %348, %349 : vector<8x128xf32>
    %351 = vector.extract_strided_slice %338 {offsets = [0, 256], sizes = [8, 128], strides = [1, 1]} : vector<8x512xf32> to vector<8x128xf32>
    %352 = math.tanh %351 : vector<8x128xf32>
    %353 = vector.extract_strided_slice %338 {offsets = [0, 384], sizes = [8, 128], strides = [1, 1]} : vector<8x512xf32> to vector<8x128xf32>
    %354 = arith.negf %353 : vector<8x128xf32>
    %355 = math.exp %354 : vector<8x128xf32>
    %cst_116 = arith.constant 1.000000e+00 : f32
    %356 = vector.broadcast %cst_116 : f32 to vector<8x128xf32>
    %357 = arith.addf %356, %355 : vector<8x128xf32>
    %358 = arith.divf %356, %357 : vector<8x128xf32>
    %359 = arith.mulf %350, %297 : vector<8x128xf32>
    %360 = arith.mulf %344, %352 : vector<8x128xf32>
    %361 = arith.addf %359, %360 : vector<8x128xf32>
    %362 = math.tanh %361 : vector<8x128xf32>
    %363 = arith.mulf %358, %362 : vector<8x128xf32>
    %c5_117 = arith.constant 5 : index
    %c0_118 = arith.constant 0 : index
    %c0_119 = arith.constant 0 : index
    %364 = vector.load %arg6[%c5_117, %c0_118, %c0_119] : memref<8x8x128xf32, #tpu.memory_space<vmem>>, vector<1x8x128xf32>
    %365 = vector.shape_cast %364 : vector<1x8x128xf32> to vector<8x128xf32>
    %366 = vector.shape_cast %363 : vector<8x128xf32> to vector<1x8x128xf32>
    tpu.vector_store %arg6[%c5_117, %c0_118, %c0_119], %366 {strides = array<i32>} : memref<8x8x128xf32, #tpu.memory_space<vmem>>, vector<1x8x128xf32>,
    %c2_120 = arith.constant 2 : index
    %c0_121 = arith.constant 0 : index
    %c0_122 = arith.constant 0 : index
    %367 = vector.load %arg2[%c2_120, %c0_121, %c0_122] : memref<8x8x512xf32, #tpu.memory_space<vmem>>, vector<1x8x512xf32>
    %368 = vector.shape_cast %367 : vector<1x8x512xf32> to vector<8x512xf32>
    %cst_123 = arith.constant dense<0.000000e+00> : vector<8x512xf32>
    %369 = tpu.matmul %331, %10, %cst_123 {dimension_numbers = #tpu.dot_dimension_numbers<[1], [0], [0], [1], [0, 0, 1, 1], [], []>} : vector<8x128xf32>, vector<128x512xf32>, vector<8x512xf32> -> vector<8x512xf32>
    %370 = arith.addf %368, %369 : vector<8x512xf32>
    %371 = vector.extract_strided_slice %370 {offsets = [0, 0], sizes = [8, 128], strides = [1, 1]} : vector<8x512xf32> to vector<8x128xf32>
    %372 = arith.negf %371 : vector<8x128xf32>
    %373 = math.exp %372 : vector<8x128xf32>
    %cst_124 = arith.constant 1.000000e+00 : f32
    %374 = vector.broadcast %cst_124 : f32 to vector<8x128xf32>
    %375 = arith.addf %374, %373 : vector<8x128xf32>
    %376 = arith.divf %374, %375 : vector<8x128xf32>
    %377 = vector.extract_strided_slice %370 {offsets = [0, 128], sizes = [8, 128], strides = [1, 1]} : vector<8x512xf32> to vector<8x128xf32>
    %378 = arith.negf %377 : vector<8x128xf32>
    %379 = math.exp %378 : vector<8x128xf32>
    %cst_125 = arith.constant 1.000000e+00 : f32
    %380 = vector.broadcast %cst_125 : f32 to vector<8x128xf32>
    %381 = arith.addf %380, %379 : vector<8x128xf32>
    %382 = arith.divf %380, %381 : vector<8x128xf32>
    %383 = vector.extract_strided_slice %370 {offsets = [0, 256], sizes = [8, 128], strides = [1, 1]} : vector<8x512xf32> to vector<8x128xf32>
    %384 = math.tanh %383 : vector<8x128xf32>
    %385 = vector.extract_strided_slice %370 {offsets = [0, 384], sizes = [8, 128], strides = [1, 1]} : vector<8x512xf32> to vector<8x128xf32>
    %386 = arith.negf %385 : vector<8x128xf32>
    %387 = math.exp %386 : vector<8x128xf32>
    %cst_126 = arith.constant 1.000000e+00 : f32
    %388 = vector.broadcast %cst_126 : f32 to vector<8x128xf32>
    %389 = arith.addf %388, %387 : vector<8x128xf32>
    %390 = arith.divf %388, %389 : vector<8x128xf32>
    %391 = arith.mulf %382, %329 : vector<8x128xf32>
    %392 = arith.mulf %376, %384 : vector<8x128xf32>
    %393 = arith.addf %391, %392 : vector<8x128xf32>
    %394 = math.tanh %393 : vector<8x128xf32>
    %395 = arith.mulf %390, %394 : vector<8x128xf32>
    %c2_127 = arith.constant 2 : index
    %c0_128 = arith.constant 0 : index
    %c0_129 = arith.constant 0 : index
    %396 = vector.load %arg7[%c2_127, %c0_128, %c0_129] : memref<8x8x128xf32, #tpu.memory_space<vmem>>, vector<1x8x128xf32>
    %397 = vector.shape_cast %396 : vector<1x8x128xf32> to vector<8x128xf32>
    %398 = vector.shape_cast %395 : vector<8x128xf32> to vector<1x8x128xf32>
    tpu.vector_store %arg7[%c2_127, %c0_128, %c0_129], %398 {strides = array<i32>} : memref<8x8x128xf32, #tpu.memory_space<vmem>>, vector<1x8x128xf32>,
    %c6_130 = arith.constant 6 : index
    %c0_131 = arith.constant 0 : index
    %c0_132 = arith.constant 0 : index
    %399 = vector.load %arg1[%c6_130, %c0_131, %c0_132] : memref<8x8x512xf32, #tpu.memory_space<vmem>>, vector<1x8x512xf32>
    %400 = vector.shape_cast %399 : vector<1x8x512xf32> to vector<8x512xf32>
    %cst_133 = arith.constant dense<0.000000e+00> : vector<8x512xf32>
    %401 = tpu.matmul %363, %4, %cst_133 {dimension_numbers = #tpu.dot_dimension_numbers<[1], [0], [0], [1], [0, 0, 1, 1], [], []>} : vector<8x128xf32>, vector<128x512xf32>, vector<8x512xf32> -> vector<8x512xf32>
    %402 = arith.addf %400, %401 : vector<8x512xf32>
    %403 = vector.extract_strided_slice %402 {offsets = [0, 0], sizes = [8, 128], strides = [1, 1]} : vector<8x512xf32> to vector<8x128xf32>
    %404 = arith.negf %403 : vector<8x128xf32>
    %405 = math.exp %404 : vector<8x128xf32>
    %cst_134 = arith.constant 1.000000e+00 : f32
    %406 = vector.broadcast %cst_134 : f32 to vector<8x128xf32>
    %407 = arith.addf %406, %405 : vector<8x128xf32>
    %408 = arith.divf %406, %407 : vector<8x128xf32>
    %409 = vector.extract_strided_slice %402 {offsets = [0, 128], sizes = [8, 128], strides = [1, 1]} : vector<8x512xf32> to vector<8x128xf32>
    %410 = arith.negf %409 : vector<8x128xf32>
    %411 = math.exp %410 : vector<8x128xf32>
    %cst_135 = arith.constant 1.000000e+00 : f32
    %412 = vector.broadcast %cst_135 : f32 to vector<8x128xf32>
    %413 = arith.addf %412, %411 : vector<8x128xf32>
    %414 = arith.divf %412, %413 : vector<8x128xf32>
    %415 = vector.extract_strided_slice %402 {offsets = [0, 256], sizes = [8, 128], strides = [1, 1]} : vector<8x512xf32> to vector<8x128xf32>
    %416 = math.tanh %415 : vector<8x128xf32>
    %417 = vector.extract_strided_slice %402 {offsets = [0, 384], sizes = [8, 128], strides = [1, 1]} : vector<8x512xf32> to vector<8x128xf32>
    %418 = arith.negf %417 : vector<8x128xf32>
    %419 = math.exp %418 : vector<8x128xf32>
    %cst_136 = arith.constant 1.000000e+00 : f32
    %420 = vector.broadcast %cst_136 : f32 to vector<8x128xf32>
    %421 = arith.addf %420, %419 : vector<8x128xf32>
    %422 = arith.divf %420, %421 : vector<8x128xf32>
    %423 = arith.mulf %414, %361 : vector<8x128xf32>
    %424 = arith.mulf %408, %416 : vector<8x128xf32>
    %425 = arith.addf %423, %424 : vector<8x128xf32>
    %426 = math.tanh %425 : vector<8x128xf32>
    %427 = arith.mulf %422, %426 : vector<8x128xf32>
    %c6_137 = arith.constant 6 : index
    %c0_138 = arith.constant 0 : index
    %c0_139 = arith.constant 0 : index
    %428 = vector.load %arg6[%c6_137, %c0_138, %c0_139] : memref<8x8x128xf32, #tpu.memory_space<vmem>>, vector<1x8x128xf32>
    %429 = vector.shape_cast %428 : vector<1x8x128xf32> to vector<8x128xf32>
    %430 = vector.shape_cast %427 : vector<8x128xf32> to vector<1x8x128xf32>
    tpu.vector_store %arg6[%c6_137, %c0_138, %c0_139], %430 {strides = array<i32>} : memref<8x8x128xf32, #tpu.memory_space<vmem>>, vector<1x8x128xf32>,
    %c1_140 = arith.constant 1 : index
    %c0_141 = arith.constant 0 : index
    %c0_142 = arith.constant 0 : index
    %431 = vector.load %arg2[%c1_140, %c0_141, %c0_142] : memref<8x8x512xf32, #tpu.memory_space<vmem>>, vector<1x8x512xf32>
    %432 = vector.shape_cast %431 : vector<1x8x512xf32> to vector<8x512xf32>
    %cst_143 = arith.constant dense<0.000000e+00> : vector<8x512xf32>
    %433 = tpu.matmul %395, %10, %cst_143 {dimension_numbers = #tpu.dot_dimension_numbers<[1], [0], [0], [1], [0, 0, 1, 1], [], []>} : vector<8x128xf32>, vector<128x512xf32>, vector<8x512xf32> -> vector<8x512xf32>
    %434 = arith.addf %432, %433 : vector<8x512xf32>
    %435 = vector.extract_strided_slice %434 {offsets = [0, 0], sizes = [8, 128], strides = [1, 1]} : vector<8x512xf32> to vector<8x128xf32>
    %436 = arith.negf %435 : vector<8x128xf32>
    %437 = math.exp %436 : vector<8x128xf32>
    %cst_144 = arith.constant 1.000000e+00 : f32
    %438 = vector.broadcast %cst_144 : f32 to vector<8x128xf32>
    %439 = arith.addf %438, %437 : vector<8x128xf32>
    %440 = arith.divf %438, %439 : vector<8x128xf32>
    %441 = vector.extract_strided_slice %434 {offsets = [0, 128], sizes = [8, 128], strides = [1, 1]} : vector<8x512xf32> to vector<8x128xf32>
    %442 = arith.negf %441 : vector<8x128xf32>
    %443 = math.exp %442 : vector<8x128xf32>
    %cst_145 = arith.constant 1.000000e+00 : f32
    %444 = vector.broadcast %cst_145 : f32 to vector<8x128xf32>
    %445 = arith.addf %444, %443 : vector<8x128xf32>
    %446 = arith.divf %444, %445 : vector<8x128xf32>
    %447 = vector.extract_strided_slice %434 {offsets = [0, 256], sizes = [8, 128], strides = [1, 1]} : vector<8x512xf32> to vector<8x128xf32>
    %448 = math.tanh %447 : vector<8x128xf32>
    %449 = vector.extract_strided_slice %434 {offsets = [0, 384], sizes = [8, 128], strides = [1, 1]} : vector<8x512xf32> to vector<8x128xf32>
    %450 = arith.negf %449 : vector<8x128xf32>
    %451 = math.exp %450 : vector<8x128xf32>
    %cst_146 = arith.constant 1.000000e+00 : f32
    %452 = vector.broadcast %cst_146 : f32 to vector<8x128xf32>
    %453 = arith.addf %452, %451 : vector<8x128xf32>
    %454 = arith.divf %452, %453 : vector<8x128xf32>
    %455 = arith.mulf %446, %393 : vector<8x128xf32>
    %456 = arith.mulf %440, %448 : vector<8x128xf32>
    %457 = arith.addf %455, %456 : vector<8x128xf32>
    %458 = math.tanh %457 : vector<8x128xf32>
    %459 = arith.mulf %454, %458 : vector<8x128xf32>
    %c1_147 = arith.constant 1 : index
    %c0_148 = arith.constant 0 : index
    %c0_149 = arith.constant 0 : index
    %460 = vector.load %arg7[%c1_147, %c0_148, %c0_149] : memref<8x8x128xf32, #tpu.memory_space<vmem>>, vector<1x8x128xf32>
    %461 = vector.shape_cast %460 : vector<1x8x128xf32> to vector<8x128xf32>
    %462 = vector.shape_cast %459 : vector<8x128xf32> to vector<1x8x128xf32>
    tpu.vector_store %arg7[%c1_147, %c0_148, %c0_149], %462 {strides = array<i32>} : memref<8x8x128xf32, #tpu.memory_space<vmem>>, vector<1x8x128xf32>,
    %c7_150 = arith.constant 7 : index
    %c0_151 = arith.constant 0 : index
    %c0_152 = arith.constant 0 : index
    %463 = vector.load %arg1[%c7_150, %c0_151, %c0_152] : memref<8x8x512xf32, #tpu.memory_space<vmem>>, vector<1x8x512xf32>
    %464 = vector.shape_cast %463 : vector<1x8x512xf32> to vector<8x512xf32>
    %cst_153 = arith.constant dense<0.000000e+00> : vector<8x512xf32>
    %465 = tpu.matmul %427, %4, %cst_153 {dimension_numbers = #tpu.dot_dimension_numbers<[1], [0], [0], [1], [0, 0, 1, 1], [], []>} : vector<8x128xf32>, vector<128x512xf32>, vector<8x512xf32> -> vector<8x512xf32>
    %466 = arith.addf %464, %465 : vector<8x512xf32>
    %467 = vector.extract_strided_slice %466 {offsets = [0, 0], sizes = [8, 128], strides = [1, 1]} : vector<8x512xf32> to vector<8x128xf32>
    %468 = arith.negf %467 : vector<8x128xf32>
    %469 = math.exp %468 : vector<8x128xf32>
    %cst_154 = arith.constant 1.000000e+00 : f32
    %470 = vector.broadcast %cst_154 : f32 to vector<8x128xf32>
    %471 = arith.addf %470, %469 : vector<8x128xf32>
    %472 = arith.divf %470, %471 : vector<8x128xf32>
    %473 = vector.extract_strided_slice %466 {offsets = [0, 128], sizes = [8, 128], strides = [1, 1]} : vector<8x512xf32> to vector<8x128xf32>
    %474 = arith.negf %473 : vector<8x128xf32>
    %475 = math.exp %474 : vector<8x128xf32>
    %cst_155 = arith.constant 1.000000e+00 : f32
    %476 = vector.broadcast %cst_155 : f32 to vector<8x128xf32>
    %477 = arith.addf %476, %475 : vector<8x128xf32>
    %478 = arith.divf %476, %477 : vector<8x128xf32>
    %479 = vector.extract_strided_slice %466 {offsets = [0, 256], sizes = [8, 128], strides = [1, 1]} : vector<8x512xf32> to vector<8x128xf32>
    %480 = math.tanh %479 : vector<8x128xf32>
    %481 = vector.extract_strided_slice %466 {offsets = [0, 384], sizes = [8, 128], strides = [1, 1]} : vector<8x512xf32> to vector<8x128xf32>
    %482 = arith.negf %481 : vector<8x128xf32>
    %483 = math.exp %482 : vector<8x128xf32>
    %cst_156 = arith.constant 1.000000e+00 : f32
    %484 = vector.broadcast %cst_156 : f32 to vector<8x128xf32>
    %485 = arith.addf %484, %483 : vector<8x128xf32>
    %486 = arith.divf %484, %485 : vector<8x128xf32>
    %487 = arith.mulf %478, %425 : vector<8x128xf32>
    %488 = arith.mulf %472, %480 : vector<8x128xf32>
    %489 = arith.addf %487, %488 : vector<8x128xf32>
    %490 = math.tanh %489 : vector<8x128xf32>
    %491 = arith.mulf %486, %490 : vector<8x128xf32>
    %c7_157 = arith.constant 7 : index
    %c0_158 = arith.constant 0 : index
    %c0_159 = arith.constant 0 : index
    %492 = vector.load %arg6[%c7_157, %c0_158, %c0_159] : memref<8x8x128xf32, #tpu.memory_space<vmem>>, vector<1x8x128xf32>
    %493 = vector.shape_cast %492 : vector<1x8x128xf32> to vector<8x128xf32>
    %494 = vector.shape_cast %491 : vector<8x128xf32> to vector<1x8x128xf32>
    tpu.vector_store %arg6[%c7_157, %c0_158, %c0_159], %494 {strides = array<i32>} : memref<8x8x128xf32, #tpu.memory_space<vmem>>, vector<1x8x128xf32>,
    %c0_160 = arith.constant 0 : index
    %c0_161 = arith.constant 0 : index
    %c0_162 = arith.constant 0 : index
    %495 = vector.load %arg2[%c0_160, %c0_161, %c0_162] : memref<8x8x512xf32, #tpu.memory_space<vmem>>, vector<1x8x512xf32>
    %496 = vector.shape_cast %495 : vector<1x8x512xf32> to vector<8x512xf32>
    %cst_163 = arith.constant dense<0.000000e+00> : vector<8x512xf32>
    %497 = tpu.matmul %459, %10, %cst_163 {dimension_numbers = #tpu.dot_dimension_numbers<[1], [0], [0], [1], [0, 0, 1, 1], [], []>} : vector<8x128xf32>, vector<128x512xf32>, vector<8x512xf32> -> vector<8x512xf32>
    %498 = arith.addf %496, %497 : vector<8x512xf32>
    %499 = vector.extract_strided_slice %498 {offsets = [0, 0], sizes = [8, 128], strides = [1, 1]} : vector<8x512xf32> to vector<8x128xf32>
    %500 = arith.negf %499 : vector<8x128xf32>
    %501 = math.exp %500 : vector<8x128xf32>
    %cst_164 = arith.constant 1.000000e+00 : f32
    %502 = vector.broadcast %cst_164 : f32 to vector<8x128xf32>
    %503 = arith.addf %502, %501 : vector<8x128xf32>
    %504 = arith.divf %502, %503 : vector<8x128xf32>
    %505 = vector.extract_strided_slice %498 {offsets = [0, 128], sizes = [8, 128], strides = [1, 1]} : vector<8x512xf32> to vector<8x128xf32>
    %506 = arith.negf %505 : vector<8x128xf32>
    %507 = math.exp %506 : vector<8x128xf32>
    %cst_165 = arith.constant 1.000000e+00 : f32
    %508 = vector.broadcast %cst_165 : f32 to vector<8x128xf32>
    %509 = arith.addf %508, %507 : vector<8x128xf32>
    %510 = arith.divf %508, %509 : vector<8x128xf32>
    %511 = vector.extract_strided_slice %498 {offsets = [0, 256], sizes = [8, 128], strides = [1, 1]} : vector<8x512xf32> to vector<8x128xf32>
    %512 = math.tanh %511 : vector<8x128xf32>
    %513 = vector.extract_strided_slice %498 {offsets = [0, 384], sizes = [8, 128], strides = [1, 1]} : vector<8x512xf32> to vector<8x128xf32>
    %514 = arith.negf %513 : vector<8x128xf32>
    %515 = math.exp %514 : vector<8x128xf32>
    %cst_166 = arith.constant 1.000000e+00 : f32
    %516 = vector.broadcast %cst_166 : f32 to vector<8x128xf32>
    %517 = arith.addf %516, %515 : vector<8x128xf32>
    %518 = arith.divf %516, %517 : vector<8x128xf32>
    %519 = arith.mulf %510, %457 : vector<8x128xf32>
    %520 = arith.mulf %504, %512 : vector<8x128xf32>
    %521 = arith.addf %519, %520 : vector<8x128xf32>
    %522 = math.tanh %521 : vector<8x128xf32>
    %523 = arith.mulf %518, %522 : vector<8x128xf32>
    %c0_167 = arith.constant 0 : index
    %c0_168 = arith.constant 0 : index
    %c0_169 = arith.constant 0 : index
    %524 = vector.load %arg7[%c0_167, %c0_168, %c0_169] : memref<8x8x128xf32, #tpu.memory_space<vmem>>, vector<1x8x128xf32>
    %525 = vector.shape_cast %524 : vector<1x8x128xf32> to vector<8x128xf32>
    %526 = vector.shape_cast %523 : vector<8x128xf32> to vector<1x8x128xf32>
    tpu.vector_store %arg7[%c0_167, %c0_168, %c0_169], %526 {strides = array<i32>} : memref<8x8x128xf32, #tpu.memory_space<vmem>>, vector<1x8x128xf32>,
    %c0_170 = arith.constant 0 : index
    %c0_171 = arith.constant 0 : index
    %c0_172 = arith.constant 0 : index
    %527 = vector.load %arg12[%c0_170, %c0_171, %c0_172] : memref<2x8x128xf32, #tpu.memory_space<vmem>>, vector<1x8x128xf32>
    %528 = vector.shape_cast %527 : vector<1x8x128xf32> to vector<8x128xf32>
    %529 = vector.shape_cast %491 : vector<8x128xf32> to vector<1x8x128xf32>
    tpu.vector_store %arg12[%c0_170, %c0_171, %c0_172], %529 {strides = array<i32>} : memref<2x8x128xf32, #tpu.memory_space<vmem>>, vector<1x8x128xf32>,
    %c0_173 = arith.constant 0 : index
    %c0_174 = arith.constant 0 : index
    %c0_175 = arith.constant 0 : index
    %530 = vector.load %arg13[%c0_173, %c0_174, %c0_175] : memref<2x8x128xf32, #tpu.memory_space<vmem>>, vector<1x8x128xf32>
    %531 = vector.shape_cast %530 : vector<1x8x128xf32> to vector<8x128xf32>
    %532 = vector.shape_cast %489 : vector<8x128xf32> to vector<1x8x128xf32>
    tpu.vector_store %arg13[%c0_173, %c0_174, %c0_175], %532 {strides = array<i32>} : memref<2x8x128xf32, #tpu.memory_space<vmem>>, vector<1x8x128xf32>,
    %c1_176 = arith.constant 1 : index
    %c0_177 = arith.constant 0 : index
    %c0_178 = arith.constant 0 : index
    %533 = vector.load %arg12[%c1_176, %c0_177, %c0_178] : memref<2x8x128xf32, #tpu.memory_space<vmem>>, vector<1x8x128xf32>
    %534 = vector.shape_cast %533 : vector<1x8x128xf32> to vector<8x128xf32>
    %535 = vector.shape_cast %523 : vector<8x128xf32> to vector<1x8x128xf32>
    tpu.vector_store %arg12[%c1_176, %c0_177, %c0_178], %535 {strides = array<i32>} : memref<2x8x128xf32, #tpu.memory_space<vmem>>, vector<1x8x128xf32>,
    %c1_179 = arith.constant 1 : index
    %c0_180 = arith.constant 0 : index
    %c0_181 = arith.constant 0 : index
    %536 = vector.load %arg13[%c1_179, %c0_180, %c0_181] : memref<2x8x128xf32, #tpu.memory_space<vmem>>, vector<1x8x128xf32>
    %537 = vector.shape_cast %536 : vector<1x8x128xf32> to vector<8x128xf32>
    %538 = vector.shape_cast %521 : vector<8x128xf32> to vector<1x8x128xf32>
    tpu.vector_store %arg13[%c1_179, %c0_180, %c0_181], %538 {strides = array<i32>} : memref<2x8x128xf32, #tpu.memory_space<vmem>>, vector<1x8x128xf32>,
    %c0_i32_182 = arith.constant 0 : i32
    %539 = arith.cmpi eq, %arg0, %c0_i32_182 : i32
    %540 = arith.extui %539 : i1 to i32
    %c0_i32_183 = arith.constant 0 : i32
    %541 = arith.cmpi ne, %540, %c0_i32_183 : i32
    scf.if %541 {
      %c0_184 = arith.constant 0 : index
      %c0_185 = arith.constant 0 : index
      %c0_186 = arith.constant 0 : index
      %542 = vector.load %arg8[%c0_184, %c0_185, %c0_186] : memref<2x8x128xf32, #tpu.memory_space<vmem>>, vector<1x8x128xf32>
      %543 = vector.shape_cast %542 : vector<1x8x128xf32> to vector<8x128xf32>
      %544 = vector.shape_cast %491 : vector<8x128xf32> to vector<1x8x128xf32>
      tpu.vector_store %arg8[%c0_184, %c0_185, %c0_186], %544 {strides = array<i32>} : memref<2x8x128xf32, #tpu.memory_space<vmem>>, vector<1x8x128xf32>,
      %c0_187 = arith.constant 0 : index
      %c0_188 = arith.constant 0 : index
      %c0_189 = arith.constant 0 : index
      %545 = vector.load %arg9[%c0_187, %c0_188, %c0_189] : memref<2x8x128xf32, #tpu.memory_space<vmem>>, vector<1x8x128xf32>
      %546 = vector.shape_cast %545 : vector<1x8x128xf32> to vector<8x128xf32>
      %547 = vector.shape_cast %489 : vector<8x128xf32> to vector<1x8x128xf32>
      tpu.vector_store %arg9[%c0_187, %c0_188, %c0_189], %547 {strides = array<i32>} : memref<2x8x128xf32, #tpu.memory_space<vmem>>, vector<1x8x128xf32>,
      %c1_190 = arith.constant 1 : index
      %c0_191 = arith.constant 0 : index
      %c0_192 = arith.constant 0 : index
      %548 = vector.load %arg8[%c1_190, %c0_191, %c0_192] : memref<2x8x128xf32, #tpu.memory_space<vmem>>, vector<1x8x128xf32>
      %549 = vector.shape_cast %548 : vector<1x8x128xf32> to vector<8x128xf32>
      %550 = vector.shape_cast %523 : vector<8x128xf32> to vector<1x8x128xf32>
      tpu.vector_store %arg8[%c1_190, %c0_191, %c0_192], %550 {strides = array<i32>} : memref<2x8x128xf32, #tpu.memory_space<vmem>>, vector<1x8x128xf32>,
      %c1_193 = arith.constant 1 : index
      %c0_194 = arith.constant 0 : index
      %c0_195 = arith.constant 0 : index
      %551 = vector.load %arg9[%c1_193, %c0_194, %c0_195] : memref<2x8x128xf32, #tpu.memory_space<vmem>>, vector<1x8x128xf32>
      %552 = vector.shape_cast %551 : vector<1x8x128xf32> to vector<8x128xf32>
      %553 = vector.shape_cast %521 : vector<8x128xf32> to vector<1x8x128xf32>
      tpu.vector_store %arg9[%c1_193, %c0_194, %c0_195], %553 {strides = array<i32>} : memref<2x8x128xf32, #tpu.memory_space<vmem>>, vector<1x8x128xf32>,
    } else {
    }
    return
  }
  func.func @transform_0(%arg0: i32) -> (i32, i32, i32) {
    %c0_i32 = arith.constant 0 : i32
    %c0_i32_0 = arith.constant 0 : i32
    %c0_i32_1 = arith.constant 0 : i32
    return %arg0, %c0_i32, %c0_i32_0 : i32, i32, i32
  }
  func.func @transform_1(%arg0: i32) -> (i32, i32, i32) {
    %c0_i32 = arith.constant 0 : i32
    %0 = arith.subi %c0_i32, %arg0 : i32
    %c0_i32_0 = arith.constant 0 : i32
    %c1_i32 = arith.constant 1 : i32
    %c0_i32_1 = arith.constant 0 : i32
    return %0, %c0_i32_0, %c1_i32 : i32, i32, i32
  }
  func.func @transform_3(%arg0: i32) -> (i32, i32, i32) {
    %c0_i32 = arith.constant 0 : i32
    %c0_i32_0 = arith.constant 0 : i32
    %c0_i32_1 = arith.constant 0 : i32
    %c0_i32_2 = arith.constant 0 : i32
    return %c0_i32, %c0_i32_0, %c0_i32_1 : i32, i32, i32
  }
  func.func @transform_4(%arg0: i32) -> (i32, i32, i32) {
    %c0_i32 = arith.constant 0 : i32
    %c0_i32_0 = arith.constant 0 : i32
    %c0_i32_1 = arith.constant 0 : i32
    %c0_i32_2 = arith.constant 0 : i32
    return %c0_i32, %c0_i32_0, %c0_i32_1 : i32, i32, i32
  }
  func.func @transform_5(%arg0: i32) -> (i32, i32, i32) {
    %c0_i32 = arith.constant 0 : i32
    %c0_i32_0 = arith.constant 0 : i32
    %c0_i32_1 = arith.constant 0 : i32
    return %arg0, %c0_i32, %c0_i32_0 : i32, i32, i32
  }
  func.func @transform_6(%arg0: i32) -> (i32, i32, i32) {
    %c0_i32 = arith.constant 0 : i32
    %0 = arith.subi %c0_i32, %arg0 : i32
    %c0_i32_0 = arith.constant 0 : i32
    %c0_i32_1 = arith.constant 0 : i32
    %c0_i32_2 = arith.constant 0 : i32
    return %0, %c0_i32_0, %c0_i32_1 : i32, i32, i32
  }
  func.func @transform_7(%arg0: i32) -> (i32, i32, i32) {
    %c0_i32 = arith.constant 0 : i32
    %c0_i32_0 = arith.constant 0 : i32
    %c0_i32_1 = arith.constant 0 : i32
    %c0_i32_2 = arith.constant 0 : i32
    return %c0_i32, %c0_i32_0, %c0_i32_1 : i32, i32, i32
  }
  func.func @transform_8(%arg0: i32) -> (i32, i32, i32) {
    %c0_i32 = arith.constant 0 : i32
    %c0_i32_0 = arith.constant 0 : i32
    %c0_i32_1 = arith.constant 0 : i32
    %c0_i32_2 = arith.constant 0 : i32
    return %c0_i32, %c0_i32_0, %c0_i32_1 : i32, i32, i32
  }
}

module attributes {stable_mosaic.version = 11 : i64} {
  func.func @_lstm_kernel(%arg0: i32, %arg1: memref<8x8x512xf32, #tpu.memory_space<vmem>>, %arg2: memref<8x8x512xf32, #tpu.memory_space<vmem>>, %arg3: memref<2x128x512xf32, #tpu.memory_space<any>>, %arg4: memref<2x8x128xf32, #tpu.memory_space<vmem>>, %arg5: memref<2x8x128xf32, #tpu.memory_space<vmem>>, %arg6: memref<8x8x128xf32, #tpu.memory_space<vmem>>, %arg7: memref<8x8x128xf32, #tpu.memory_space<vmem>>, %arg8: memref<2x8x128xf32, #tpu.memory_space<vmem>>, %arg9: memref<2x8x128xf32, #tpu.memory_space<vmem>>, %arg10: memref<2x128x512xf32, #tpu.memory_space<vmem>>, %arg11: memref<!tpu.dma_semaphore, #tpu.memory_space<semaphore_mem>>, %arg12: memref<2x8x128xf32, #tpu.memory_space<vmem>>, %arg13: memref<2x8x128xf32, #tpu.memory_space<vmem>>) attributes {dimension_semantics = [#tpu.dimension_semantics<arbitrary>], iteration_bounds = array<i64: 1>, scalar_prefetch = 0 : i64, scratch_operands = 4 : i64, tpu.core_type = #tpu.core_type<tc>, window_params = [{transform_indices = @transform_0, window_bounds = array<i64: 8, 8, 512>}, {transform_indices = @transform_1, window_bounds = array<i64: 8, 8, 512>}, {}, {pipeline_mode = #tpu.pipeline_mode<synchronous>, transform_indices = @transform_3, window_bounds = array<i64: 2, 8, 128>}, {pipeline_mode = #tpu.pipeline_mode<synchronous>, transform_indices = @transform_4, window_bounds = array<i64: 2, 8, 128>}, {transform_indices = @transform_5, window_bounds = array<i64: 8, 8, 128>}, {transform_indices = @transform_6, window_bounds = array<i64: 8, 8, 128>}, {pipeline_mode = #tpu.pipeline_mode<synchronous>, transform_indices = @transform_7, window_bounds = array<i64: 2, 8, 128>}, {pipeline_mode = #tpu.pipeline_mode<synchronous>, transform_indices = @transform_8, window_bounds = array<i64: 2, 8, 128>}]} {
    %c0_i32 = arith.constant 0 : i32
    %0 = arith.cmpi eq, %arg0, %c0_i32 : i32
    %1 = arith.extui %0 : i1 to i32
    %c0_i32_0 = arith.constant 0 : i32
    %2 = arith.cmpi ne, %1, %c0_i32_0 : i32
    scf.if %2 {
      tpu.enqueue_dma source(%arg3 : memref<2x128x512xf32, #tpu.memory_space<any>>) target(%arg10 : memref<2x128x512xf32, #tpu.memory_space<vmem>>) target_semaphore(%arg11 : memref<!tpu.dma_semaphore, #tpu.memory_space<semaphore_mem>>)
      tpu.wait_dma2 semaphore(%arg11 : memref<!tpu.dma_semaphore, #tpu.memory_space<semaphore_mem>>) src(%arg3 : memref<2x128x512xf32, #tpu.memory_space<any>>) dst(%arg10 : memref<2x128x512xf32, #tpu.memory_space<vmem>>)
      %c0_184 = arith.constant 0 : index
      %c0_185 = arith.constant 0 : index
      %c0_186 = arith.constant 0 : index
      %542 = vector.load %arg4[%c0_184, %c0_185, %c0_186] : memref<2x8x128xf32, #tpu.memory_space<vmem>>, vector<2x8x128xf32>
      %c0_187 = arith.constant 0 : index
      %c0_188 = arith.constant 0 : index
      %c0_189 = arith.constant 0 : index
      %543 = vector.load %arg12[%c0_187, %c0_188, %c0_189] : memref<2x8x128xf32, #tpu.memory_space<vmem>>, vector<2x8x128xf32>
      tpu.vector_store %arg12[%c0_187, %c0_188, %c0_189], %542 {strides = array<i32>} : memref<2x8x128xf32, #tpu.memory_space<vmem>>, vector<2x8x128xf32>,
      %c0_190 = arith.constant 0 : index
      %c0_191 = arith.constant 0 : index
      %c0_192 = arith.constant 0 : index
      %544 = vector.load %arg5[%c0_190, %c0_191, %c0_192] : memref<2x8x128xf32, #tpu.memory_space<vmem>>, vector<2x8x128xf32>
      %c0_193 = arith.constant 0 : index
      %c0_194 = arith.constant 0 : index
      %c0_195 = arith.constant 0 : index
      %545 = vector.load %arg13[%c0_193, %c0_194, %c0_195] : memref<2x8x128xf32, #tpu.memory_space<vmem>>, vector<2x8x128xf32>
      tpu.vector_store %arg13[%c0_193, %c0_194, %c0_195], %544 {strides = array<i32>} : memref<2x8x128xf32, #tpu.memory_space<vmem>>, vector<2x8x128xf32>,
    } else {
    }
    %c0 = arith.constant 0 : index
    %c0_1 = arith.constant 0 : index
    %c0_2 = arith.constant 0 : index
    %3 = vector.load %arg10[%c0, %c0_1, %c0_2] : memref<2x128x512xf32, #tpu.memory_space<vmem>>, vector<1x128x512xf32>
    %4 = vector.shape_cast %3 : vector<1x128x512xf32> to vector<128x512xf32>
    %c0_3 = arith.constant 0 : index
    %c0_4 = arith.constant 0 : index
    %c0_5 = arith.constant 0 : index
    %5 = vector.load %arg12[%c0_3, %c0_4, %c0_5] : memref<2x8x128xf32, #tpu.memory_space<vmem>>, vector<1x8x128xf32>
    %6 = vector.shape_cast %5 : vector<1x8x128xf32> to vector<8x128xf32>
    %c0_6 = arith.constant 0 : index
    %c0_7 = arith.constant 0 : index
    %c0_8 = arith.constant 0 : index
    %7 = vector.load %arg13[%c0_6, %c0_7, %c0_8] : memref<2x8x128xf32, #tpu.memory_space<vmem>>, vector<1x8x128xf32>
    %8 = vector.shape_cast %7 : vector<1x8x128xf32> to vector<8x128xf32>
    %c1 = arith.constant 1 : index
    %c0_9 = arith.constant 0 : index
    %c0_10 = arith.constant 0 : index
    %9 = vector.load %arg10[%c1, %c0_9, %c0_10] : memref<2x128x512xf32, #tpu.memory_space<vmem>>, vector<1x128x512xf32>
    %10 = vector.shape_cast %9 : vector<1x128x512xf32> to vector<128x512xf32>
    %c1_11 = arith.constant 1 : index
    %c0_12 = arith.constant 0 : index
    %c0_13 = arith.constant 0 : index
    %11 = vector.load %arg12[%c1_11, %c0_12, %c0_13] : memref<2x8x128xf32, #tpu.memory_space<vmem>>, vector<1x8x128xf32>
    %12 = vector.shape_cast %11 : vector<1x8x128xf32> to vector<8x128xf32>
    %c1_14 = arith.constant 1 : index
    %c0_15 = arith.constant 0 : index
    %c0_16 = arith.constant 0 : index
    %13 = vector.load %arg13[%c1_14, %c0_15, %c0_16] : memref<2x8x128xf32, #tpu.memory_space<vmem>>, vector<1x8x128xf32>
    %14 = vector.shape_cast %13 : vector<1x8x128xf32> to vector<8x128xf32>
    %c0_17 = arith.constant 0 : index
    %c0_18 = arith.constant 0 : index
    %c0_19 = arith.constant 0 : index
    %15 = vector.load %arg1[%c0_17, %c0_18, %c0_19] : memref<8x8x512xf32, #tpu.memory_space<vmem>>, vector<1x8x512xf32>
    %16 = vector.shape_cast %15 : vector<1x8x512xf32> to vector<8x512xf32>
    %cst = arith.constant dense<0.000000e+00> : vector<8x512xf32>
    %17 = tpu.matmul %6, %4, %cst {dimension_numbers = #tpu.dot_dimension_numbers<[1], [0], [0], [1], [0, 0, 1, 1], [], []>} : vector<8x128xf32>, vector<128x512xf32>, vector<8x512xf32> -> vector<8x512xf32>
    %18 = arith.addf %16, %17 : vector<8x512xf32>
    %19 = vector.extract_strided_slice %18 {offsets = [0, 0], sizes = [8, 128], strides = [1, 1]} : vector<8x512xf32> to vector<8x128xf32>
    %20 = arith.negf %19 : vector<8x128xf32>
    %21 = math.exp %20 : vector<8x128xf32>
    %cst_20 = arith.constant 1.000000e+00 : f32
    %22 = vector.broadcast %cst_20 : f32 to vector<8x128xf32>
    %23 = arith.addf %22, %21 : vector<8x128xf32>
    %24 = arith.divf %22, %23 : vector<8x128xf32>
    %25 = vector.extract_strided_slice %18 {offsets = [0, 128], sizes = [8, 128], strides = [1, 1]} : vector<8x512xf32> to vector<8x128xf32>
    %26 = arith.negf %25 : vector<8x128xf32>
    %27 = math.exp %26 : vector<8x128xf32>
    %cst_21 = arith.constant 1.000000e+00 : f32
    %28 = vector.broadcast %cst_21 : f32 to vector<8x128xf32>
    %29 = arith.addf %28, %27 : vector<8x128xf32>
    %30 = arith.divf %28, %29 : vector<8x128xf32>
    %31 = vector.extract_strided_slice %18 {offsets = [0, 256], sizes = [8, 128], strides = [1, 1]} : vector<8x512xf32> to vector<8x128xf32>
    %32 = math.tanh %31 : vector<8x128xf32>
    %33 = vector.extract_strided_slice %18 {offsets = [0, 384], sizes = [8, 128], strides = [1, 1]} : vector<8x512xf32> to vector<8x128xf32>
    %34 = arith.negf %33 : vector<8x128xf32>
    %35 = math.exp %34 : vector<8x128xf32>
    %cst_22 = arith.constant 1.000000e+00 : f32
    %36 = vector.broadcast %cst_22 : f32 to vector<8x128xf32>
    %37 = arith.addf %36, %35 : vector<8x128xf32>
    %38 = arith.divf %36, %37 : vector<8x128xf32>
    %39 = arith.mulf %30, %8 : vector<8x128xf32>
    %40 = arith.mulf %24, %32 : vector<8x128xf32>
    %41 = arith.addf %39, %40 : vector<8x128xf32>
    %42 = math.tanh %41 : vector<8x128xf32>
    %43 = arith.mulf %38, %42 : vector<8x128xf32>
    %c0_23 = arith.constant 0 : index
    %c0_24 = arith.constant 0 : index
    %c0_25 = arith.constant 0 : index
    %44 = vector.load %arg6[%c0_23, %c0_24, %c0_25] : memref<8x8x128xf32, #tpu.memory_space<vmem>>, vector<1x8x128xf32>
    %45 = vector.shape_cast %44 : vector<1x8x128xf32> to vector<8x128xf32>
    %46 = vector.shape_cast %43 : vector<8x128xf32> to vector<1x8x128xf32>
    tpu.vector_store %arg6[%c0_23, %c0_24, %c0_25], %46 {strides = array<i32>} : memref<8x8x128xf32, #tpu.memory_space<vmem>>, vector<1x8x128xf32>,
    %c7 = arith.constant 7 : index
    %c0_26 = arith.constant 0 : index
    %c0_27 = arith.constant 0 : index
    %47 = vector.load %arg2[%c7, %c0_26, %c0_27] : memref<8x8x512xf32, #tpu.memory_space<vmem>>, vector<1x8x512xf32>
    %48 = vector.shape_cast %47 : vector<1x8x512xf32> to vector<8x512xf32>
    %cst_28 = arith.constant dense<0.000000e+00> : vector<8x512xf32>
    %49 = tpu.matmul %12, %10, %cst_28 {dimension_numbers = #tpu.dot_dimension_numbers<[1], [0], [0], [1], [0, 0, 1, 1], [], []>} : vector<8x128xf32>, vector<128x512xf32>, vector<8x512xf32> -> vector<8x512xf32>
    %50 = arith.addf %48, %49 : vector<8x512xf32>
    %51 = vector.extract_strided_slice %50 {offsets = [0, 0], sizes = [8, 128], strides = [1, 1]} : vector<8x512xf32> to vector<8x128xf32>
    %52 = arith.negf %51 : vector<8x128xf32>
    %53 = math.exp %52 : vector<8x128xf32>
    %cst_29 = arith.constant 1.000000e+00 : f32
    %54 = vector.broadcast %cst_29 : f32 to vector<8x128xf32>
    %55 = arith.addf %54, %53 : vector<8x128xf32>
    %56 = arith.divf %54, %55 : vector<8x128xf32>
    %57 = vector.extract_strided_slice %50 {offsets = [0, 128], sizes = [8, 128], strides = [1, 1]} : vector<8x512xf32> to vector<8x128xf32>
    %58 = arith.negf %57 : vector<8x128xf32>
    %59 = math.exp %58 : vector<8x128xf32>
    %cst_30 = arith.constant 1.000000e+00 : f32
    %60 = vector.broadcast %cst_30 : f32 to vector<8x128xf32>
    %61 = arith.addf %60, %59 : vector<8x128xf32>
    %62 = arith.divf %60, %61 : vector<8x128xf32>
    %63 = vector.extract_strided_slice %50 {offsets = [0, 256], sizes = [8, 128], strides = [1, 1]} : vector<8x512xf32> to vector<8x128xf32>
    %64 = math.tanh %63 : vector<8x128xf32>
    %65 = vector.extract_strided_slice %50 {offsets = [0, 384], sizes = [8, 128], strides = [1, 1]} : vector<8x512xf32> to vector<8x128xf32>
    %66 = arith.negf %65 : vector<8x128xf32>
    %67 = math.exp %66 : vector<8x128xf32>
    %cst_31 = arith.constant 1.000000e+00 : f32
    %68 = vector.broadcast %cst_31 : f32 to vector<8x128xf32>
    %69 = arith.addf %68, %67 : vector<8x128xf32>
    %70 = arith.divf %68, %69 : vector<8x128xf32>
    %71 = arith.mulf %62, %14 : vector<8x128xf32>
    %72 = arith.mulf %56, %64 : vector<8x128xf32>
    %73 = arith.addf %71, %72 : vector<8x128xf32>
    %74 = math.tanh %73 : vector<8x128xf32>
    %75 = arith.mulf %70, %74 : vector<8x128xf32>
    %c7_32 = arith.constant 7 : index
    %c0_33 = arith.constant 0 : index
    %c0_34 = arith.constant 0 : index
    %76 = vector.load %arg7[%c7_32, %c0_33, %c0_34] : memref<8x8x128xf32, #tpu.memory_space<vmem>>, vector<1x8x128xf32>
    %77 = vector.shape_cast %76 : vector<1x8x128xf32> to vector<8x128xf32>
    %78 = vector.shape_cast %75 : vector<8x128xf32> to vector<1x8x128xf32>
    tpu.vector_store %arg7[%c7_32, %c0_33, %c0_34], %78 {strides = array<i32>} : memref<8x8x128xf32, #tpu.memory_space<vmem>>, vector<1x8x128xf32>,
    %c1_35 = arith.constant 1 : index
    %c0_36 = arith.constant 0 : index
    %c0_37 = arith.constant 0 : index
    %79 = vector.load %arg1[%c1_35, %c0_36, %c0_37] : memref<8x8x512xf32, #tpu.memory_space<vmem>>, vector<1x8x512xf32>
    %80 = vector.shape_cast %79 : vector<1x8x512xf32> to vector<8x512xf32>
    %cst_38 = arith.constant dense<0.000000e+00> : vector<8x512xf32>
    %81 = tpu.matmul %43, %4, %cst_38 {dimension_numbers = #tpu.dot_dimension_numbers<[1], [0], [0], [1], [0, 0, 1, 1], [], []>} : vector<8x128xf32>, vector<128x512xf32>, vector<8x512xf32> -> vector<8x512xf32>
    %82 = arith.addf %80, %81 : vector<8x512xf32>
    %83 = vector.extract_strided_slice %82 {offsets = [0, 0], sizes = [8, 128], strides = [1, 1]} : vector<8x512xf32> to vector<8x128xf32>
    %84 = arith.negf %83 : vector<8x128xf32>
    %85 = math.exp %84 : vector<8x128xf32>
    %cst_39 = arith.constant 1.000000e+00 : f32
    %86 = vector.broadcast %cst_39 : f32 to vector<8x128xf32>
    %87 = arith.addf %86, %85 : vector<8x128xf32>
    %88 = arith.divf %86, %87 : vector<8x128xf32>
    %89 = vector.extract_strided_slice %82 {offsets = [0, 128], sizes = [8, 128], strides = [1, 1]} : vector<8x512xf32> to vector<8x128xf32>
    %90 = arith.negf %89 : vector<8x128xf32>
    %91 = math.exp %90 : vector<8x128xf32>
    %cst_40 = arith.constant 1.000000e+00 : f32
    %92 = vector.broadcast %cst_40 : f32 to vector<8x128xf32>
    %93 = arith.addf %92, %91 : vector<8x128xf32>
    %94 = arith.divf %92, %93 : vector<8x128xf32>
    %95 = vector.extract_strided_slice %82 {offsets = [0, 256], sizes = [8, 128], strides = [1, 1]} : vector<8x512xf32> to vector<8x128xf32>
    %96 = math.tanh %95 : vector<8x128xf32>
    %97 = vector.extract_strided_slice %82 {offsets = [0, 384], sizes = [8, 128], strides = [1, 1]} : vector<8x512xf32> to vector<8x128xf32>
    %98 = arith.negf %97 : vector<8x128xf32>
    %99 = math.exp %98 : vector<8x128xf32>
    %cst_41 = arith.constant 1.000000e+00 : f32
    %100 = vector.broadcast %cst_41 : f32 to vector<8x128xf32>
    %101 = arith.addf %100, %99 : vector<8x128xf32>
    %102 = arith.divf %100, %101 : vector<8x128xf32>
    %103 = arith.mulf %94, %41 : vector<8x128xf32>
    %104 = arith.mulf %88, %96 : vector<8x128xf32>
    %105 = arith.addf %103, %104 : vector<8x128xf32>
    %106 = math.tanh %105 : vector<8x128xf32>
    %107 = arith.mulf %102, %106 : vector<8x128xf32>
    %c1_42 = arith.constant 1 : index
    %c0_43 = arith.constant 0 : index
    %c0_44 = arith.constant 0 : index
    %108 = vector.load %arg6[%c1_42, %c0_43, %c0_44] : memref<8x8x128xf32, #tpu.memory_space<vmem>>, vector<1x8x128xf32>
    %109 = vector.shape_cast %108 : vector<1x8x128xf32> to vector<8x128xf32>
    %110 = vector.shape_cast %107 : vector<8x128xf32> to vector<1x8x128xf32>
    tpu.vector_store %arg6[%c1_42, %c0_43, %c0_44], %110 {strides = array<i32>} : memref<8x8x128xf32, #tpu.memory_space<vmem>>, vector<1x8x128xf32>,
    %c6 = arith.constant 6 : index
    %c0_45 = arith.constant 0 : index
    %c0_46 = arith.constant 0 : index
    %111 = vector.load %arg2[%c6, %c0_45, %c0_46] : memref<8x8x512xf32, #tpu.memory_space<vmem>>, vector<1x8x512xf32>
    %112 = vector.shape_cast %111 : vector<1x8x512xf32> to vector<8x512xf32>
    %cst_47 = arith.constant dense<0.000000e+00> : vector<8x512xf32>
    %113 = tpu.matmul %75, %10, %cst_47 {dimension_numbers = #tpu.dot_dimension_numbers<[1], [0], [0], [1], [0, 0, 1, 1], [], []>} : vector<8x128xf32>, vector<128x512xf32>, vector<8x512xf32> -> vector<8x512xf32>
    %114 = arith.addf %112, %113 : vector<8x512xf32>
    %115 = vector.extract_strided_slice %114 {offsets = [0, 0], sizes = [8, 128], strides = [1, 1]} : vector<8x512xf32> to vector<8x128xf32>
    %116 = arith.negf %115 : vector<8x128xf32>
    %117 = math.exp %116 : vector<8x128xf32>
    %cst_48 = arith.constant 1.000000e+00 : f32
    %118 = vector.broadcast %cst_48 : f32 to vector<8x128xf32>
    %119 = arith.addf %118, %117 : vector<8x128xf32>
    %120 = arith.divf %118, %119 : vector<8x128xf32>
    %121 = vector.extract_strided_slice %114 {offsets = [0, 128], sizes = [8, 128], strides = [1, 1]} : vector<8x512xf32> to vector<8x128xf32>
    %122 = arith.negf %121 : vector<8x128xf32>
    %123 = math.exp %122 : vector<8x128xf32>
    %cst_49 = arith.constant 1.000000e+00 : f32
    %124 = vector.broadcast %cst_49 : f32 to vector<8x128xf32>
    %125 = arith.addf %124, %123 : vector<8x128xf32>
    %126 = arith.divf %124, %125 : vector<8x128xf32>
    %127 = vector.extract_strided_slice %114 {offsets = [0, 256], sizes = [8, 128], strides = [1, 1]} : vector<8x512xf32> to vector<8x128xf32>
    %128 = math.tanh %127 : vector<8x128xf32>
    %129 = vector.extract_strided_slice %114 {offsets = [0, 384], sizes = [8, 128], strides = [1, 1]} : vector<8x512xf32> to vector<8x128xf32>
    %130 = arith.negf %129 : vector<8x128xf32>
    %131 = math.exp %130 : vector<8x128xf32>
    %cst_50 = arith.constant 1.000000e+00 : f32
    %132 = vector.broadcast %cst_50 : f32 to vector<8x128xf32>
    %133 = arith.addf %132, %131 : vector<8x128xf32>
    %134 = arith.divf %132, %133 : vector<8x128xf32>
    %135 = arith.mulf %126, %73 : vector<8x128xf32>
    %136 = arith.mulf %120, %128 : vector<8x128xf32>
    %137 = arith.addf %135, %136 : vector<8x128xf32>
    %138 = math.tanh %137 : vector<8x128xf32>
    %139 = arith.mulf %134, %138 : vector<8x128xf32>
    %c6_51 = arith.constant 6 : index
    %c0_52 = arith.constant 0 : index
    %c0_53 = arith.constant 0 : index
    %140 = vector.load %arg7[%c6_51, %c0_52, %c0_53] : memref<8x8x128xf32, #tpu.memory_space<vmem>>, vector<1x8x128xf32>
    %141 = vector.shape_cast %140 : vector<1x8x128xf32> to vector<8x128xf32>
    %142 = vector.shape_cast %139 : vector<8x128xf32> to vector<1x8x128xf32>
    tpu.vector_store %arg7[%c6_51, %c0_52, %c0_53], %142 {strides = array<i32>} : memref<8x8x128xf32, #tpu.memory_space<vmem>>, vector<1x8x128xf32>,
    %c2 = arith.constant 2 : index
    %c0_54 = arith.constant 0 : index
    %c0_55 = arith.constant 0 : index
    %143 = vector.load %arg1[%c2, %c0_54, %c0_55] : memref<8x8x512xf32, #tpu.memory_space<vmem>>, vector<1x8x512xf32>
    %144 = vector.shape_cast %143 : vector<1x8x512xf32> to vector<8x512xf32>
    %cst_56 = arith.constant dense<0.000000e+00> : vector<8x512xf32>
    %145 = tpu.matmul %107, %4, %cst_56 {dimension_numbers = #tpu.dot_dimension_numbers<[1], [0], [0], [1], [0, 0, 1, 1], [], []>} : vector<8x128xf32>, vector<128x512xf32>, vector<8x512xf32> -> vector<8x512xf32>
    %146 = arith.addf %144, %145 : vector<8x512xf32>
    %147 = vector.extract_strided_slice %146 {offsets = [0, 0], sizes = [8, 128], strides = [1, 1]} : vector<8x512xf32> to vector<8x128xf32>
    %148 = arith.negf %147 : vector<8x128xf32>
    %149 = math.exp %148 : vector<8x128xf32>
    %cst_57 = arith.constant 1.000000e+00 : f32
    %150 = vector.broadcast %cst_57 : f32 to vector<8x128xf32>
    %151 = arith.addf %150, %149 : vector<8x128xf32>
    %152 = arith.divf %150, %151 : vector<8x128xf32>
    %153 = vector.extract_strided_slice %146 {offsets = [0, 128], sizes = [8, 128], strides = [1, 1]} : vector<8x512xf32> to vector<8x128xf32>
    %154 = arith.negf %153 : vector<8x128xf32>
    %155 = math.exp %154 : vector<8x128xf32>
    %cst_58 = arith.constant 1.000000e+00 : f32
    %156 = vector.broadcast %cst_58 : f32 to vector<8x128xf32>
    %157 = arith.addf %156, %155 : vector<8x128xf32>
    %158 = arith.divf %156, %157 : vector<8x128xf32>
    %159 = vector.extract_strided_slice %146 {offsets = [0, 256], sizes = [8, 128], strides = [1, 1]} : vector<8x512xf32> to vector<8x128xf32>
    %160 = math.tanh %159 : vector<8x128xf32>
    %161 = vector.extract_strided_slice %146 {offsets = [0, 384], sizes = [8, 128], strides = [1, 1]} : vector<8x512xf32> to vector<8x128xf32>
    %162 = arith.negf %161 : vector<8x128xf32>
    %163 = math.exp %162 : vector<8x128xf32>
    %cst_59 = arith.constant 1.000000e+00 : f32
    %164 = vector.broadcast %cst_59 : f32 to vector<8x128xf32>
    %165 = arith.addf %164, %163 : vector<8x128xf32>
    %166 = arith.divf %164, %165 : vector<8x128xf32>
    %167 = arith.mulf %158, %105 : vector<8x128xf32>
    %168 = arith.mulf %152, %160 : vector<8x128xf32>
    %169 = arith.addf %167, %168 : vector<8x128xf32>
    %170 = math.tanh %169 : vector<8x128xf32>
    %171 = arith.mulf %166, %170 : vector<8x128xf32>
    %c2_60 = arith.constant 2 : index
    %c0_61 = arith.constant 0 : index
    %c0_62 = arith.constant 0 : index
    %172 = vector.load %arg6[%c2_60, %c0_61, %c0_62] : memref<8x8x128xf32, #tpu.memory_space<vmem>>, vector<1x8x128xf32>
    %173 = vector.shape_cast %172 : vector<1x8x128xf32> to vector<8x128xf32>
    %174 = vector.shape_cast %171 : vector<8x128xf32> to vector<1x8x128xf32>
    tpu.vector_store %arg6[%c2_60, %c0_61, %c0_62], %174 {strides = array<i32>} : memref<8x8x128xf32, #tpu.memory_space<vmem>>, vector<1x8x128xf32>,
    %c5 = arith.constant 5 : index
    %c0_63 = arith.constant 0 : index
    %c0_64 = arith.constant 0 : index
    %175 = vector.load %arg2[%c5, %c0_63, %c0_64] : memref<8x8x512xf32, #tpu.memory_space<vmem>>, vector<1x8x512xf32>
    %176 = vector.shape_cast %175 : vector<1x8x512xf32> to vector<8x512xf32>
    %cst_65 = arith.constant dense<0.000000e+00> : vector<8x512xf32>
    %177 = tpu.matmul %139, %10, %cst_65 {dimension_numbers = #tpu.dot_dimension_numbers<[1], [0], [0], [1], [0, 0, 1, 1], [], []>} : vector<8x128xf32>, vector<128x512xf32>, vector<8x512xf32> -> vector<8x512xf32>
    %178 = arith.addf %176, %177 : vector<8x512xf32>
    %179 = vector.extract_strided_slice %178 {offsets = [0, 0], sizes = [8, 128], strides = [1, 1]} : vector<8x512xf32> to vector<8x128xf32>
    %180 = arith.negf %179 : vector<8x128xf32>
    %181 = math.exp %180 : vector<8x128xf32>
    %cst_66 = arith.constant 1.000000e+00 : f32
    %182 = vector.broadcast %cst_66 : f32 to vector<8x128xf32>
    %183 = arith.addf %182, %181 : vector<8x128xf32>
    %184 = arith.divf %182, %183 : vector<8x128xf32>
    %185 = vector.extract_strided_slice %178 {offsets = [0, 128], sizes = [8, 128], strides = [1, 1]} : vector<8x512xf32> to vector<8x128xf32>
    %186 = arith.negf %185 : vector<8x128xf32>
    %187 = math.exp %186 : vector<8x128xf32>
    %cst_67 = arith.constant 1.000000e+00 : f32
    %188 = vector.broadcast %cst_67 : f32 to vector<8x128xf32>
    %189 = arith.addf %188, %187 : vector<8x128xf32>
    %190 = arith.divf %188, %189 : vector<8x128xf32>
    %191 = vector.extract_strided_slice %178 {offsets = [0, 256], sizes = [8, 128], strides = [1, 1]} : vector<8x512xf32> to vector<8x128xf32>
    %192 = math.tanh %191 : vector<8x128xf32>
    %193 = vector.extract_strided_slice %178 {offsets = [0, 384], sizes = [8, 128], strides = [1, 1]} : vector<8x512xf32> to vector<8x128xf32>
    %194 = arith.negf %193 : vector<8x128xf32>
    %195 = math.exp %194 : vector<8x128xf32>
    %cst_68 = arith.constant 1.000000e+00 : f32
    %196 = vector.broadcast %cst_68 : f32 to vector<8x128xf32>
    %197 = arith.addf %196, %195 : vector<8x128xf32>
    %198 = arith.divf %196, %197 : vector<8x128xf32>
    %199 = arith.mulf %190, %137 : vector<8x128xf32>
    %200 = arith.mulf %184, %192 : vector<8x128xf32>
    %201 = arith.addf %199, %200 : vector<8x128xf32>
    %202 = math.tanh %201 : vector<8x128xf32>
    %203 = arith.mulf %198, %202 : vector<8x128xf32>
    %c5_69 = arith.constant 5 : index
    %c0_70 = arith.constant 0 : index
    %c0_71 = arith.constant 0 : index
    %204 = vector.load %arg7[%c5_69, %c0_70, %c0_71] : memref<8x8x128xf32, #tpu.memory_space<vmem>>, vector<1x8x128xf32>
    %205 = vector.shape_cast %204 : vector<1x8x128xf32> to vector<8x128xf32>
    %206 = vector.shape_cast %203 : vector<8x128xf32> to vector<1x8x128xf32>
    tpu.vector_store %arg7[%c5_69, %c0_70, %c0_71], %206 {strides = array<i32>} : memref<8x8x128xf32, #tpu.memory_space<vmem>>, vector<1x8x128xf32>,
    %c3 = arith.constant 3 : index
    %c0_72 = arith.constant 0 : index
    %c0_73 = arith.constant 0 : index
    %207 = vector.load %arg1[%c3, %c0_72, %c0_73] : memref<8x8x512xf32, #tpu.memory_space<vmem>>, vector<1x8x512xf32>
    %208 = vector.shape_cast %207 : vector<1x8x512xf32> to vector<8x512xf32>
    %cst_74 = arith.constant dense<0.000000e+00> : vector<8x512xf32>
    %209 = tpu.matmul %171, %4, %cst_74 {dimension_numbers = #tpu.dot_dimension_numbers<[1], [0], [0], [1], [0, 0, 1, 1], [], []>} : vector<8x128xf32>, vector<128x512xf32>, vector<8x512xf32> -> vector<8x512xf32>
    %210 = arith.addf %208, %209 : vector<8x512xf32>
    %211 = vector.extract_strided_slice %210 {offsets = [0, 0], sizes = [8, 128], strides = [1, 1]} : vector<8x512xf32> to vector<8x128xf32>
    %212 = arith.negf %211 : vector<8x128xf32>
    %213 = math.exp %212 : vector<8x128xf32>
    %cst_75 = arith.constant 1.000000e+00 : f32
    %214 = vector.broadcast %cst_75 : f32 to vector<8x128xf32>
    %215 = arith.addf %214, %213 : vector<8x128xf32>
    %216 = arith.divf %214, %215 : vector<8x128xf32>
    %217 = vector.extract_strided_slice %210 {offsets = [0, 128], sizes = [8, 128], strides = [1, 1]} : vector<8x512xf32> to vector<8x128xf32>
    %218 = arith.negf %217 : vector<8x128xf32>
    %219 = math.exp %218 : vector<8x128xf32>
    %cst_76 = arith.constant 1.000000e+00 : f32
    %220 = vector.broadcast %cst_76 : f32 to vector<8x128xf32>
    %221 = arith.addf %220, %219 : vector<8x128xf32>
    %222 = arith.divf %220, %221 : vector<8x128xf32>
    %223 = vector.extract_strided_slice %210 {offsets = [0, 256], sizes = [8, 128], strides = [1, 1]} : vector<8x512xf32> to vector<8x128xf32>
    %224 = math.tanh %223 : vector<8x128xf32>
    %225 = vector.extract_strided_slice %210 {offsets = [0, 384], sizes = [8, 128], strides = [1, 1]} : vector<8x512xf32> to vector<8x128xf32>
    %226 = arith.negf %225 : vector<8x128xf32>
    %227 = math.exp %226 : vector<8x128xf32>
    %cst_77 = arith.constant 1.000000e+00 : f32
    %228 = vector.broadcast %cst_77 : f32 to vector<8x128xf32>
    %229 = arith.addf %228, %227 : vector<8x128xf32>
    %230 = arith.divf %228, %229 : vector<8x128xf32>
    %231 = arith.mulf %222, %169 : vector<8x128xf32>
    %232 = arith.mulf %216, %224 : vector<8x128xf32>
    %233 = arith.addf %231, %232 : vector<8x128xf32>
    %234 = math.tanh %233 : vector<8x128xf32>
    %235 = arith.mulf %230, %234 : vector<8x128xf32>
    %c3_78 = arith.constant 3 : index
    %c0_79 = arith.constant 0 : index
    %c0_80 = arith.constant 0 : index
    %236 = vector.load %arg6[%c3_78, %c0_79, %c0_80] : memref<8x8x128xf32, #tpu.memory_space<vmem>>, vector<1x8x128xf32>
    %237 = vector.shape_cast %236 : vector<1x8x128xf32> to vector<8x128xf32>
    %238 = vector.shape_cast %235 : vector<8x128xf32> to vector<1x8x128xf32>
    tpu.vector_store %arg6[%c3_78, %c0_79, %c0_80], %238 {strides = array<i32>} : memref<8x8x128xf32, #tpu.memory_space<vmem>>, vector<1x8x128xf32>,
    %c4 = arith.constant 4 : index
    %c0_81 = arith.constant 0 : index
    %c0_82 = arith.constant 0 : index
    %239 = vector.load %arg2[%c4, %c0_81, %c0_82] : memref<8x8x512xf32, #tpu.memory_space<vmem>>, vector<1x8x512xf32>
    %240 = vector.shape_cast %239 : vector<1x8x512xf32> to vector<8x512xf32>
    %cst_83 = arith.constant dense<0.000000e+00> : vector<8x512xf32>
    %241 = tpu.matmul %203, %10, %cst_83 {dimension_numbers = #tpu.dot_dimension_numbers<[1], [0], [0], [1], [0, 0, 1, 1], [], []>} : vector<8x128xf32>, vector<128x512xf32>, vector<8x512xf32> -> vector<8x512xf32>
    %242 = arith.addf %240, %241 : vector<8x512xf32>
    %243 = vector.extract_strided_slice %242 {offsets = [0, 0], sizes = [8, 128], strides = [1, 1]} : vector<8x512xf32> to vector<8x128xf32>
    %244 = arith.negf %243 : vector<8x128xf32>
    %245 = math.exp %244 : vector<8x128xf32>
    %cst_84 = arith.constant 1.000000e+00 : f32
    %246 = vector.broadcast %cst_84 : f32 to vector<8x128xf32>
    %247 = arith.addf %246, %245 : vector<8x128xf32>
    %248 = arith.divf %246, %247 : vector<8x128xf32>
    %249 = vector.extract_strided_slice %242 {offsets = [0, 128], sizes = [8, 128], strides = [1, 1]} : vector<8x512xf32> to vector<8x128xf32>
    %250 = arith.negf %249 : vector<8x128xf32>
    %251 = math.exp %250 : vector<8x128xf32>
    %cst_85 = arith.constant 1.000000e+00 : f32
    %252 = vector.broadcast %cst_85 : f32 to vector<8x128xf32>
    %253 = arith.addf %252, %251 : vector<8x128xf32>
    %254 = arith.divf %252, %253 : vector<8x128xf32>
    %255 = vector.extract_strided_slice %242 {offsets = [0, 256], sizes = [8, 128], strides = [1, 1]} : vector<8x512xf32> to vector<8x128xf32>
    %256 = math.tanh %255 : vector<8x128xf32>
    %257 = vector.extract_strided_slice %242 {offsets = [0, 384], sizes = [8, 128], strides = [1, 1]} : vector<8x512xf32> to vector<8x128xf32>
    %258 = arith.negf %257 : vector<8x128xf32>
    %259 = math.exp %258 : vector<8x128xf32>
    %cst_86 = arith.constant 1.000000e+00 : f32
    %260 = vector.broadcast %cst_86 : f32 to vector<8x128xf32>
    %261 = arith.addf %260, %259 : vector<8x128xf32>
    %262 = arith.divf %260, %261 : vector<8x128xf32>
    %263 = arith.mulf %254, %201 : vector<8x128xf32>
    %264 = arith.mulf %248, %256 : vector<8x128xf32>
    %265 = arith.addf %263, %264 : vector<8x128xf32>
    %266 = math.tanh %265 : vector<8x128xf32>
    %267 = arith.mulf %262, %266 : vector<8x128xf32>
    %c4_87 = arith.constant 4 : index
    %c0_88 = arith.constant 0 : index
    %c0_89 = arith.constant 0 : index
    %268 = vector.load %arg7[%c4_87, %c0_88, %c0_89] : memref<8x8x128xf32, #tpu.memory_space<vmem>>, vector<1x8x128xf32>
    %269 = vector.shape_cast %268 : vector<1x8x128xf32> to vector<8x128xf32>
    %270 = vector.shape_cast %267 : vector<8x128xf32> to vector<1x8x128xf32>
    tpu.vector_store %arg7[%c4_87, %c0_88, %c0_89], %270 {strides = array<i32>} : memref<8x8x128xf32, #tpu.memory_space<vmem>>, vector<1x8x128xf32>,
    %c4_90 = arith.constant 4 : index
    %c0_91 = arith.constant 0 : index
    %c0_92 = arith.constant 0 : index
    %271 = vector.load %arg1[%c4_90, %c0_91, %c0_92] : memref<8x8x512xf32, #tpu.memory_space<vmem>>, vector<1x8x512xf32>
    %272 = vector.shape_cast %271 : vector<1x8x512xf32> to vector<8x512xf32>
    %cst_93 = arith.constant dense<0.000000e+00> : vector<8x512xf32>
    %273 = tpu.matmul %235, %4, %cst_93 {dimension_numbers = #tpu.dot_dimension_numbers<[1], [0], [0], [1], [0, 0, 1, 1], [], []>} : vector<8x128xf32>, vector<128x512xf32>, vector<8x512xf32> -> vector<8x512xf32>
    %274 = arith.addf %272, %273 : vector<8x512xf32>
    %275 = vector.extract_strided_slice %274 {offsets = [0, 0], sizes = [8, 128], strides = [1, 1]} : vector<8x512xf32> to vector<8x128xf32>
    %276 = arith.negf %275 : vector<8x128xf32>
    %277 = math.exp %276 : vector<8x128xf32>
    %cst_94 = arith.constant 1.000000e+00 : f32
    %278 = vector.broadcast %cst_94 : f32 to vector<8x128xf32>
    %279 = arith.addf %278, %277 : vector<8x128xf32>
    %280 = arith.divf %278, %279 : vector<8x128xf32>
    %281 = vector.extract_strided_slice %274 {offsets = [0, 128], sizes = [8, 128], strides = [1, 1]} : vector<8x512xf32> to vector<8x128xf32>
    %282 = arith.negf %281 : vector<8x128xf32>
    %283 = math.exp %282 : vector<8x128xf32>
    %cst_95 = arith.constant 1.000000e+00 : f32
    %284 = vector.broadcast %cst_95 : f32 to vector<8x128xf32>
    %285 = arith.addf %284, %283 : vector<8x128xf32>
    %286 = arith.divf %284, %285 : vector<8x128xf32>
    %287 = vector.extract_strided_slice %274 {offsets = [0, 256], sizes = [8, 128], strides = [1, 1]} : vector<8x512xf32> to vector<8x128xf32>
    %288 = math.tanh %287 : vector<8x128xf32>
    %289 = vector.extract_strided_slice %274 {offsets = [0, 384], sizes = [8, 128], strides = [1, 1]} : vector<8x512xf32> to vector<8x128xf32>
    %290 = arith.negf %289 : vector<8x128xf32>
    %291 = math.exp %290 : vector<8x128xf32>
    %cst_96 = arith.constant 1.000000e+00 : f32
    %292 = vector.broadcast %cst_96 : f32 to vector<8x128xf32>
    %293 = arith.addf %292, %291 : vector<8x128xf32>
    %294 = arith.divf %292, %293 : vector<8x128xf32>
    %295 = arith.mulf %286, %233 : vector<8x128xf32>
    %296 = arith.mulf %280, %288 : vector<8x128xf32>
    %297 = arith.addf %295, %296 : vector<8x128xf32>
    %298 = math.tanh %297 : vector<8x128xf32>
    %299 = arith.mulf %294, %298 : vector<8x128xf32>
    %c4_97 = arith.constant 4 : index
    %c0_98 = arith.constant 0 : index
    %c0_99 = arith.constant 0 : index
    %300 = vector.load %arg6[%c4_97, %c0_98, %c0_99] : memref<8x8x128xf32, #tpu.memory_space<vmem>>, vector<1x8x128xf32>
    %301 = vector.shape_cast %300 : vector<1x8x128xf32> to vector<8x128xf32>
    %302 = vector.shape_cast %299 : vector<8x128xf32> to vector<1x8x128xf32>
    tpu.vector_store %arg6[%c4_97, %c0_98, %c0_99], %302 {strides = array<i32>} : memref<8x8x128xf32, #tpu.memory_space<vmem>>, vector<1x8x128xf32>,
    %c3_100 = arith.constant 3 : index
    %c0_101 = arith.constant 0 : index
    %c0_102 = arith.constant 0 : index
    %303 = vector.load %arg2[%c3_100, %c0_101, %c0_102] : memref<8x8x512xf32, #tpu.memory_space<vmem>>, vector<1x8x512xf32>
    %304 = vector.shape_cast %303 : vector<1x8x512xf32> to vector<8x512xf32>
    %cst_103 = arith.constant dense<0.000000e+00> : vector<8x512xf32>
    %305 = tpu.matmul %267, %10, %cst_103 {dimension_numbers = #tpu.dot_dimension_numbers<[1], [0], [0], [1], [0, 0, 1, 1], [], []>} : vector<8x128xf32>, vector<128x512xf32>, vector<8x512xf32> -> vector<8x512xf32>
    %306 = arith.addf %304, %305 : vector<8x512xf32>
    %307 = vector.extract_strided_slice %306 {offsets = [0, 0], sizes = [8, 128], strides = [1, 1]} : vector<8x512xf32> to vector<8x128xf32>
    %308 = arith.negf %307 : vector<8x128xf32>
    %309 = math.exp %308 : vector<8x128xf32>
    %cst_104 = arith.constant 1.000000e+00 : f32
    %310 = vector.broadcast %cst_104 : f32 to vector<8x128xf32>
    %311 = arith.addf %310, %309 : vector<8x128xf32>
    %312 = arith.divf %310, %311 : vector<8x128xf32>
    %313 = vector.extract_strided_slice %306 {offsets = [0, 128], sizes = [8, 128], strides = [1, 1]} : vector<8x512xf32> to vector<8x128xf32>
    %314 = arith.negf %313 : vector<8x128xf32>
    %315 = math.exp %314 : vector<8x128xf32>
    %cst_105 = arith.constant 1.000000e+00 : f32
    %316 = vector.broadcast %cst_105 : f32 to vector<8x128xf32>
    %317 = arith.addf %316, %315 : vector<8x128xf32>
    %318 = arith.divf %316, %317 : vector<8x128xf32>
    %319 = vector.extract_strided_slice %306 {offsets = [0, 256], sizes = [8, 128], strides = [1, 1]} : vector<8x512xf32> to vector<8x128xf32>
    %320 = math.tanh %319 : vector<8x128xf32>
    %321 = vector.extract_strided_slice %306 {offsets = [0, 384], sizes = [8, 128], strides = [1, 1]} : vector<8x512xf32> to vector<8x128xf32>
    %322 = arith.negf %321 : vector<8x128xf32>
    %323 = math.exp %322 : vector<8x128xf32>
    %cst_106 = arith.constant 1.000000e+00 : f32
    %324 = vector.broadcast %cst_106 : f32 to vector<8x128xf32>
    %325 = arith.addf %324, %323 : vector<8x128xf32>
    %326 = arith.divf %324, %325 : vector<8x128xf32>
    %327 = arith.mulf %318, %265 : vector<8x128xf32>
    %328 = arith.mulf %312, %320 : vector<8x128xf32>
    %329 = arith.addf %327, %328 : vector<8x128xf32>
    %330 = math.tanh %329 : vector<8x128xf32>
    %331 = arith.mulf %326, %330 : vector<8x128xf32>
    %c3_107 = arith.constant 3 : index
    %c0_108 = arith.constant 0 : index
    %c0_109 = arith.constant 0 : index
    %332 = vector.load %arg7[%c3_107, %c0_108, %c0_109] : memref<8x8x128xf32, #tpu.memory_space<vmem>>, vector<1x8x128xf32>
    %333 = vector.shape_cast %332 : vector<1x8x128xf32> to vector<8x128xf32>
    %334 = vector.shape_cast %331 : vector<8x128xf32> to vector<1x8x128xf32>
    tpu.vector_store %arg7[%c3_107, %c0_108, %c0_109], %334 {strides = array<i32>} : memref<8x8x128xf32, #tpu.memory_space<vmem>>, vector<1x8x128xf32>,
    %c5_110 = arith.constant 5 : index
    %c0_111 = arith.constant 0 : index
    %c0_112 = arith.constant 0 : index
    %335 = vector.load %arg1[%c5_110, %c0_111, %c0_112] : memref<8x8x512xf32, #tpu.memory_space<vmem>>, vector<1x8x512xf32>
    %336 = vector.shape_cast %335 : vector<1x8x512xf32> to vector<8x512xf32>
    %cst_113 = arith.constant dense<0.000000e+00> : vector<8x512xf32>
    %337 = tpu.matmul %299, %4, %cst_113 {dimension_numbers = #tpu.dot_dimension_numbers<[1], [0], [0], [1], [0, 0, 1, 1], [], []>} : vector<8x128xf32>, vector<128x512xf32>, vector<8x512xf32> -> vector<8x512xf32>
    %338 = arith.addf %336, %337 : vector<8x512xf32>
    %339 = vector.extract_strided_slice %338 {offsets = [0, 0], sizes = [8, 128], strides = [1, 1]} : vector<8x512xf32> to vector<8x128xf32>
    %340 = arith.negf %339 : vector<8x128xf32>
    %341 = math.exp %340 : vector<8x128xf32>
    %cst_114 = arith.constant 1.000000e+00 : f32
    %342 = vector.broadcast %cst_114 : f32 to vector<8x128xf32>
    %343 = arith.addf %342, %341 : vector<8x128xf32>
    %344 = arith.divf %342, %343 : vector<8x128xf32>
    %345 = vector.extract_strided_slice %338 {offsets = [0, 128], sizes = [8, 128], strides = [1, 1]} : vector<8x512xf32> to vector<8x128xf32>
    %346 = arith.negf %345 : vector<8x128xf32>
    %347 = math.exp %346 : vector<8x128xf32>
    %cst_115 = arith.constant 1.000000e+00 : f32
    %348 = vector.broadcast %cst_115 : f32 to vector<8x128xf32>
    %349 = arith.addf %348, %347 : vector<8x128xf32>
    %350 = arith.divf %348, %349 : vector<8x128xf32>
    %351 = vector.extract_strided_slice %338 {offsets = [0, 256], sizes = [8, 128], strides = [1, 1]} : vector<8x512xf32> to vector<8x128xf32>
    %352 = math.tanh %351 : vector<8x128xf32>
    %353 = vector.extract_strided_slice %338 {offsets = [0, 384], sizes = [8, 128], strides = [1, 1]} : vector<8x512xf32> to vector<8x128xf32>
    %354 = arith.negf %353 : vector<8x128xf32>
    %355 = math.exp %354 : vector<8x128xf32>
    %cst_116 = arith.constant 1.000000e+00 : f32
    %356 = vector.broadcast %cst_116 : f32 to vector<8x128xf32>
    %357 = arith.addf %356, %355 : vector<8x128xf32>
    %358 = arith.divf %356, %357 : vector<8x128xf32>
    %359 = arith.mulf %350, %297 : vector<8x128xf32>
    %360 = arith.mulf %344, %352 : vector<8x128xf32>
    %361 = arith.addf %359, %360 : vector<8x128xf32>
    %362 = math.tanh %361 : vector<8x128xf32>
    %363 = arith.mulf %358, %362 : vector<8x128xf32>
    %c5_117 = arith.constant 5 : index
    %c0_118 = arith.constant 0 : index
    %c0_119 = arith.constant 0 : index
    %364 = vector.load %arg6[%c5_117, %c0_118, %c0_119] : memref<8x8x128xf32, #tpu.memory_space<vmem>>, vector<1x8x128xf32>
    %365 = vector.shape_cast %364 : vector<1x8x128xf32> to vector<8x128xf32>
    %366 = vector.shape_cast %363 : vector<8x128xf32> to vector<1x8x128xf32>
    tpu.vector_store %arg6[%c5_117, %c0_118, %c0_119], %366 {strides = array<i32>} : memref<8x8x128xf32, #tpu.memory_space<vmem>>, vector<1x8x128xf32>,
    %c2_120 = arith.constant 2 : index
    %c0_121 = arith.constant 0 : index
    %c0_122 = arith.constant 0 : index
    %367 = vector.load %arg2[%c2_120, %c0_121, %c0_122] : memref<8x8x512xf32, #tpu.memory_space<vmem>>, vector<1x8x512xf32>
    %368 = vector.shape_cast %367 : vector<1x8x512xf32> to vector<8x512xf32>
    %cst_123 = arith.constant dense<0.000000e+00> : vector<8x512xf32>
    %369 = tpu.matmul %331, %10, %cst_123 {dimension_numbers = #tpu.dot_dimension_numbers<[1], [0], [0], [1], [0, 0, 1, 1], [], []>} : vector<8x128xf32>, vector<128x512xf32>, vector<8x512xf32> -> vector<8x512xf32>
    %370 = arith.addf %368, %369 : vector<8x512xf32>
    %371 = vector.extract_strided_slice %370 {offsets = [0, 0], sizes = [8, 128], strides = [1, 1]} : vector<8x512xf32> to vector<8x128xf32>
    %372 = arith.negf %371 : vector<8x128xf32>
    %373 = math.exp %372 : vector<8x128xf32>
    %cst_124 = arith.constant 1.000000e+00 : f32
    %374 = vector.broadcast %cst_124 : f32 to vector<8x128xf32>
    %375 = arith.addf %374, %373 : vector<8x128xf32>
    %376 = arith.divf %374, %375 : vector<8x128xf32>
    %377 = vector.extract_strided_slice %370 {offsets = [0, 128], sizes = [8, 128], strides = [1, 1]} : vector<8x512xf32> to vector<8x128xf32>
    %378 = arith.negf %377 : vector<8x128xf32>
    %379 = math.exp %378 : vector<8x128xf32>
    %cst_125 = arith.constant 1.000000e+00 : f32
    %380 = vector.broadcast %cst_125 : f32 to vector<8x128xf32>
    %381 = arith.addf %380, %379 : vector<8x128xf32>
    %382 = arith.divf %380, %381 : vector<8x128xf32>
    %383 = vector.extract_strided_slice %370 {offsets = [0, 256], sizes = [8, 128], strides = [1, 1]} : vector<8x512xf32> to vector<8x128xf32>
    %384 = math.tanh %383 : vector<8x128xf32>
    %385 = vector.extract_strided_slice %370 {offsets = [0, 384], sizes = [8, 128], strides = [1, 1]} : vector<8x512xf32> to vector<8x128xf32>
    %386 = arith.negf %385 : vector<8x128xf32>
    %387 = math.exp %386 : vector<8x128xf32>
    %cst_126 = arith.constant 1.000000e+00 : f32
    %388 = vector.broadcast %cst_126 : f32 to vector<8x128xf32>
    %389 = arith.addf %388, %387 : vector<8x128xf32>
    %390 = arith.divf %388, %389 : vector<8x128xf32>
    %391 = arith.mulf %382, %329 : vector<8x128xf32>
    %392 = arith.mulf %376, %384 : vector<8x128xf32>
    %393 = arith.addf %391, %392 : vector<8x128xf32>
    %394 = math.tanh %393 : vector<8x128xf32>
    %395 = arith.mulf %390, %394 : vector<8x128xf32>
    %c2_127 = arith.constant 2 : index
    %c0_128 = arith.constant 0 : index
    %c0_129 = arith.constant 0 : index
    %396 = vector.load %arg7[%c2_127, %c0_128, %c0_129] : memref<8x8x128xf32, #tpu.memory_space<vmem>>, vector<1x8x128xf32>
    %397 = vector.shape_cast %396 : vector<1x8x128xf32> to vector<8x128xf32>
    %398 = vector.shape_cast %395 : vector<8x128xf32> to vector<1x8x128xf32>
    tpu.vector_store %arg7[%c2_127, %c0_128, %c0_129], %398 {strides = array<i32>} : memref<8x8x128xf32, #tpu.memory_space<vmem>>, vector<1x8x128xf32>,
    %c6_130 = arith.constant 6 : index
    %c0_131 = arith.constant 0 : index
    %c0_132 = arith.constant 0 : index
    %399 = vector.load %arg1[%c6_130, %c0_131, %c0_132] : memref<8x8x512xf32, #tpu.memory_space<vmem>>, vector<1x8x512xf32>
    %400 = vector.shape_cast %399 : vector<1x8x512xf32> to vector<8x512xf32>
    %cst_133 = arith.constant dense<0.000000e+00> : vector<8x512xf32>
    %401 = tpu.matmul %363, %4, %cst_133 {dimension_numbers = #tpu.dot_dimension_numbers<[1], [0], [0], [1], [0, 0, 1, 1], [], []>} : vector<8x128xf32>, vector<128x512xf32>, vector<8x512xf32> -> vector<8x512xf32>
    %402 = arith.addf %400, %401 : vector<8x512xf32>
    %403 = vector.extract_strided_slice %402 {offsets = [0, 0], sizes = [8, 128], strides = [1, 1]} : vector<8x512xf32> to vector<8x128xf32>
    %404 = arith.negf %403 : vector<8x128xf32>
    %405 = math.exp %404 : vector<8x128xf32>
    %cst_134 = arith.constant 1.000000e+00 : f32
    %406 = vector.broadcast %cst_134 : f32 to vector<8x128xf32>
    %407 = arith.addf %406, %405 : vector<8x128xf32>
    %408 = arith.divf %406, %407 : vector<8x128xf32>
    %409 = vector.extract_strided_slice %402 {offsets = [0, 128], sizes = [8, 128], strides = [1, 1]} : vector<8x512xf32> to vector<8x128xf32>
    %410 = arith.negf %409 : vector<8x128xf32>
    %411 = math.exp %410 : vector<8x128xf32>
    %cst_135 = arith.constant 1.000000e+00 : f32
    %412 = vector.broadcast %cst_135 : f32 to vector<8x128xf32>
    %413 = arith.addf %412, %411 : vector<8x128xf32>
    %414 = arith.divf %412, %413 : vector<8x128xf32>
    %415 = vector.extract_strided_slice %402 {offsets = [0, 256], sizes = [8, 128], strides = [1, 1]} : vector<8x512xf32> to vector<8x128xf32>
    %416 = math.tanh %415 : vector<8x128xf32>
    %417 = vector.extract_strided_slice %402 {offsets = [0, 384], sizes = [8, 128], strides = [1, 1]} : vector<8x512xf32> to vector<8x128xf32>
    %418 = arith.negf %417 : vector<8x128xf32>
    %419 = math.exp %418 : vector<8x128xf32>
    %cst_136 = arith.constant 1.000000e+00 : f32
    %420 = vector.broadcast %cst_136 : f32 to vector<8x128xf32>
    %421 = arith.addf %420, %419 : vector<8x128xf32>
    %422 = arith.divf %420, %421 : vector<8x128xf32>
    %423 = arith.mulf %414, %361 : vector<8x128xf32>
    %424 = arith.mulf %408, %416 : vector<8x128xf32>
    %425 = arith.addf %423, %424 : vector<8x128xf32>
    %426 = math.tanh %425 : vector<8x128xf32>
    %427 = arith.mulf %422, %426 : vector<8x128xf32>
    %c6_137 = arith.constant 6 : index
    %c0_138 = arith.constant 0 : index
    %c0_139 = arith.constant 0 : index
    %428 = vector.load %arg6[%c6_137, %c0_138, %c0_139] : memref<8x8x128xf32, #tpu.memory_space<vmem>>, vector<1x8x128xf32>
    %429 = vector.shape_cast %428 : vector<1x8x128xf32> to vector<8x128xf32>
    %430 = vector.shape_cast %427 : vector<8x128xf32> to vector<1x8x128xf32>
    tpu.vector_store %arg6[%c6_137, %c0_138, %c0_139], %430 {strides = array<i32>} : memref<8x8x128xf32, #tpu.memory_space<vmem>>, vector<1x8x128xf32>,
    %c1_140 = arith.constant 1 : index
    %c0_141 = arith.constant 0 : index
    %c0_142 = arith.constant 0 : index
    %431 = vector.load %arg2[%c1_140, %c0_141, %c0_142] : memref<8x8x512xf32, #tpu.memory_space<vmem>>, vector<1x8x512xf32>
    %432 = vector.shape_cast %431 : vector<1x8x512xf32> to vector<8x512xf32>
    %cst_143 = arith.constant dense<0.000000e+00> : vector<8x512xf32>
    %433 = tpu.matmul %395, %10, %cst_143 {dimension_numbers = #tpu.dot_dimension_numbers<[1], [0], [0], [1], [0, 0, 1, 1], [], []>} : vector<8x128xf32>, vector<128x512xf32>, vector<8x512xf32> -> vector<8x512xf32>
    %434 = arith.addf %432, %433 : vector<8x512xf32>
    %435 = vector.extract_strided_slice %434 {offsets = [0, 0], sizes = [8, 128], strides = [1, 1]} : vector<8x512xf32> to vector<8x128xf32>
    %436 = arith.negf %435 : vector<8x128xf32>
    %437 = math.exp %436 : vector<8x128xf32>
    %cst_144 = arith.constant 1.000000e+00 : f32
    %438 = vector.broadcast %cst_144 : f32 to vector<8x128xf32>
    %439 = arith.addf %438, %437 : vector<8x128xf32>
    %440 = arith.divf %438, %439 : vector<8x128xf32>
    %441 = vector.extract_strided_slice %434 {offsets = [0, 128], sizes = [8, 128], strides = [1, 1]} : vector<8x512xf32> to vector<8x128xf32>
    %442 = arith.negf %441 : vector<8x128xf32>
    %443 = math.exp %442 : vector<8x128xf32>
    %cst_145 = arith.constant 1.000000e+00 : f32
    %444 = vector.broadcast %cst_145 : f32 to vector<8x128xf32>
    %445 = arith.addf %444, %443 : vector<8x128xf32>
    %446 = arith.divf %444, %445 : vector<8x128xf32>
    %447 = vector.extract_strided_slice %434 {offsets = [0, 256], sizes = [8, 128], strides = [1, 1]} : vector<8x512xf32> to vector<8x128xf32>
    %448 = math.tanh %447 : vector<8x128xf32>
    %449 = vector.extract_strided_slice %434 {offsets = [0, 384], sizes = [8, 128], strides = [1, 1]} : vector<8x512xf32> to vector<8x128xf32>
    %450 = arith.negf %449 : vector<8x128xf32>
    %451 = math.exp %450 : vector<8x128xf32>
    %cst_146 = arith.constant 1.000000e+00 : f32
    %452 = vector.broadcast %cst_146 : f32 to vector<8x128xf32>
    %453 = arith.addf %452, %451 : vector<8x128xf32>
    %454 = arith.divf %452, %453 : vector<8x128xf32>
    %455 = arith.mulf %446, %393 : vector<8x128xf32>
    %456 = arith.mulf %440, %448 : vector<8x128xf32>
    %457 = arith.addf %455, %456 : vector<8x128xf32>
    %458 = math.tanh %457 : vector<8x128xf32>
    %459 = arith.mulf %454, %458 : vector<8x128xf32>
    %c1_147 = arith.constant 1 : index
    %c0_148 = arith.constant 0 : index
    %c0_149 = arith.constant 0 : index
    %460 = vector.load %arg7[%c1_147, %c0_148, %c0_149] : memref<8x8x128xf32, #tpu.memory_space<vmem>>, vector<1x8x128xf32>
    %461 = vector.shape_cast %460 : vector<1x8x128xf32> to vector<8x128xf32>
    %462 = vector.shape_cast %459 : vector<8x128xf32> to vector<1x8x128xf32>
    tpu.vector_store %arg7[%c1_147, %c0_148, %c0_149], %462 {strides = array<i32>} : memref<8x8x128xf32, #tpu.memory_space<vmem>>, vector<1x8x128xf32>,
    %c7_150 = arith.constant 7 : index
    %c0_151 = arith.constant 0 : index
    %c0_152 = arith.constant 0 : index
    %463 = vector.load %arg1[%c7_150, %c0_151, %c0_152] : memref<8x8x512xf32, #tpu.memory_space<vmem>>, vector<1x8x512xf32>
    %464 = vector.shape_cast %463 : vector<1x8x512xf32> to vector<8x512xf32>
    %cst_153 = arith.constant dense<0.000000e+00> : vector<8x512xf32>
    %465 = tpu.matmul %427, %4, %cst_153 {dimension_numbers = #tpu.dot_dimension_numbers<[1], [0], [0], [1], [0, 0, 1, 1], [], []>} : vector<8x128xf32>, vector<128x512xf32>, vector<8x512xf32> -> vector<8x512xf32>
    %466 = arith.addf %464, %465 : vector<8x512xf32>
    %467 = vector.extract_strided_slice %466 {offsets = [0, 0], sizes = [8, 128], strides = [1, 1]} : vector<8x512xf32> to vector<8x128xf32>
    %468 = arith.negf %467 : vector<8x128xf32>
    %469 = math.exp %468 : vector<8x128xf32>
    %cst_154 = arith.constant 1.000000e+00 : f32
    %470 = vector.broadcast %cst_154 : f32 to vector<8x128xf32>
    %471 = arith.addf %470, %469 : vector<8x128xf32>
    %472 = arith.divf %470, %471 : vector<8x128xf32>
    %473 = vector.extract_strided_slice %466 {offsets = [0, 128], sizes = [8, 128], strides = [1, 1]} : vector<8x512xf32> to vector<8x128xf32>
    %474 = arith.negf %473 : vector<8x128xf32>
    %475 = math.exp %474 : vector<8x128xf32>
    %cst_155 = arith.constant 1.000000e+00 : f32
    %476 = vector.broadcast %cst_155 : f32 to vector<8x128xf32>
    %477 = arith.addf %476, %475 : vector<8x128xf32>
    %478 = arith.divf %476, %477 : vector<8x128xf32>
    %479 = vector.extract_strided_slice %466 {offsets = [0, 256], sizes = [8, 128], strides = [1, 1]} : vector<8x512xf32> to vector<8x128xf32>
    %480 = math.tanh %479 : vector<8x128xf32>
    %481 = vector.extract_strided_slice %466 {offsets = [0, 384], sizes = [8, 128], strides = [1, 1]} : vector<8x512xf32> to vector<8x128xf32>
    %482 = arith.negf %481 : vector<8x128xf32>
    %483 = math.exp %482 : vector<8x128xf32>
    %cst_156 = arith.constant 1.000000e+00 : f32
    %484 = vector.broadcast %cst_156 : f32 to vector<8x128xf32>
    %485 = arith.addf %484, %483 : vector<8x128xf32>
    %486 = arith.divf %484, %485 : vector<8x128xf32>
    %487 = arith.mulf %478, %425 : vector<8x128xf32>
    %488 = arith.mulf %472, %480 : vector<8x128xf32>
    %489 = arith.addf %487, %488 : vector<8x128xf32>
    %490 = math.tanh %489 : vector<8x128xf32>
    %491 = arith.mulf %486, %490 : vector<8x128xf32>
    %c7_157 = arith.constant 7 : index
    %c0_158 = arith.constant 0 : index
    %c0_159 = arith.constant 0 : index
    %492 = vector.load %arg6[%c7_157, %c0_158, %c0_159] : memref<8x8x128xf32, #tpu.memory_space<vmem>>, vector<1x8x128xf32>
    %493 = vector.shape_cast %492 : vector<1x8x128xf32> to vector<8x128xf32>
    %494 = vector.shape_cast %491 : vector<8x128xf32> to vector<1x8x128xf32>
    tpu.vector_store %arg6[%c7_157, %c0_158, %c0_159], %494 {strides = array<i32>} : memref<8x8x128xf32, #tpu.memory_space<vmem>>, vector<1x8x128xf32>,
    %c0_160 = arith.constant 0 : index
    %c0_161 = arith.constant 0 : index
    %c0_162 = arith.constant 0 : index
    %495 = vector.load %arg2[%c0_160, %c0_161, %c0_162] : memref<8x8x512xf32, #tpu.memory_space<vmem>>, vector<1x8x512xf32>
    %496 = vector.shape_cast %495 : vector<1x8x512xf32> to vector<8x512xf32>
    %cst_163 = arith.constant dense<0.000000e+00> : vector<8x512xf32>
    %497 = tpu.matmul %459, %10, %cst_163 {dimension_numbers = #tpu.dot_dimension_numbers<[1], [0], [0], [1], [0, 0, 1, 1], [], []>} : vector<8x128xf32>, vector<128x512xf32>, vector<8x512xf32> -> vector<8x512xf32>
    %498 = arith.addf %496, %497 : vector<8x512xf32>
    %499 = vector.extract_strided_slice %498 {offsets = [0, 0], sizes = [8, 128], strides = [1, 1]} : vector<8x512xf32> to vector<8x128xf32>
    %500 = arith.negf %499 : vector<8x128xf32>
    %501 = math.exp %500 : vector<8x128xf32>
    %cst_164 = arith.constant 1.000000e+00 : f32
    %502 = vector.broadcast %cst_164 : f32 to vector<8x128xf32>
    %503 = arith.addf %502, %501 : vector<8x128xf32>
    %504 = arith.divf %502, %503 : vector<8x128xf32>
    %505 = vector.extract_strided_slice %498 {offsets = [0, 128], sizes = [8, 128], strides = [1, 1]} : vector<8x512xf32> to vector<8x128xf32>
    %506 = arith.negf %505 : vector<8x128xf32>
    %507 = math.exp %506 : vector<8x128xf32>
    %cst_165 = arith.constant 1.000000e+00 : f32
    %508 = vector.broadcast %cst_165 : f32 to vector<8x128xf32>
    %509 = arith.addf %508, %507 : vector<8x128xf32>
    %510 = arith.divf %508, %509 : vector<8x128xf32>
    %511 = vector.extract_strided_slice %498 {offsets = [0, 256], sizes = [8, 128], strides = [1, 1]} : vector<8x512xf32> to vector<8x128xf32>
    %512 = math.tanh %511 : vector<8x128xf32>
    %513 = vector.extract_strided_slice %498 {offsets = [0, 384], sizes = [8, 128], strides = [1, 1]} : vector<8x512xf32> to vector<8x128xf32>
    %514 = arith.negf %513 : vector<8x128xf32>
    %515 = math.exp %514 : vector<8x128xf32>
    %cst_166 = arith.constant 1.000000e+00 : f32
    %516 = vector.broadcast %cst_166 : f32 to vector<8x128xf32>
    %517 = arith.addf %516, %515 : vector<8x128xf32>
    %518 = arith.divf %516, %517 : vector<8x128xf32>
    %519 = arith.mulf %510, %457 : vector<8x128xf32>
    %520 = arith.mulf %504, %512 : vector<8x128xf32>
    %521 = arith.addf %519, %520 : vector<8x128xf32>
    %522 = math.tanh %521 : vector<8x128xf32>
    %523 = arith.mulf %518, %522 : vector<8x128xf32>
    %c0_167 = arith.constant 0 : index
    %c0_168 = arith.constant 0 : index
    %c0_169 = arith.constant 0 : index
    %524 = vector.load %arg7[%c0_167, %c0_168, %c0_169] : memref<8x8x128xf32, #tpu.memory_space<vmem>>, vector<1x8x128xf32>
    %525 = vector.shape_cast %524 : vector<1x8x128xf32> to vector<8x128xf32>
    %526 = vector.shape_cast %523 : vector<8x128xf32> to vector<1x8x128xf32>
    tpu.vector_store %arg7[%c0_167, %c0_168, %c0_169], %526 {strides = array<i32>} : memref<8x8x128xf32, #tpu.memory_space<vmem>>, vector<1x8x128xf32>,
    %c0_170 = arith.constant 0 : index
    %c0_171 = arith.constant 0 : index
    %c0_172 = arith.constant 0 : index
    %527 = vector.load %arg12[%c0_170, %c0_171, %c0_172] : memref<2x8x128xf32, #tpu.memory_space<vmem>>, vector<1x8x128xf32>
    %528 = vector.shape_cast %527 : vector<1x8x128xf32> to vector<8x128xf32>
    %529 = vector.shape_cast %491 : vector<8x128xf32> to vector<1x8x128xf32>
    tpu.vector_store %arg12[%c0_170, %c0_171, %c0_172], %529 {strides = array<i32>} : memref<2x8x128xf32, #tpu.memory_space<vmem>>, vector<1x8x128xf32>,
    %c0_173 = arith.constant 0 : index
    %c0_174 = arith.constant 0 : index
    %c0_175 = arith.constant 0 : index
    %530 = vector.load %arg13[%c0_173, %c0_174, %c0_175] : memref<2x8x128xf32, #tpu.memory_space<vmem>>, vector<1x8x128xf32>
    %531 = vector.shape_cast %530 : vector<1x8x128xf32> to vector<8x128xf32>
    %532 = vector.shape_cast %489 : vector<8x128xf32> to vector<1x8x128xf32>
    tpu.vector_store %arg13[%c0_173, %c0_174, %c0_175], %532 {strides = array<i32>} : memref<2x8x128xf32, #tpu.memory_space<vmem>>, vector<1x8x128xf32>,
    %c1_176 = arith.constant 1 : index
    %c0_177 = arith.constant 0 : index
    %c0_178 = arith.constant 0 : index
    %533 = vector.load %arg12[%c1_176, %c0_177, %c0_178] : memref<2x8x128xf32, #tpu.memory_space<vmem>>, vector<1x8x128xf32>
    %534 = vector.shape_cast %533 : vector<1x8x128xf32> to vector<8x128xf32>
    %535 = vector.shape_cast %523 : vector<8x128xf32> to vector<1x8x128xf32>
    tpu.vector_store %arg12[%c1_176, %c0_177, %c0_178], %535 {strides = array<i32>} : memref<2x8x128xf32, #tpu.memory_space<vmem>>, vector<1x8x128xf32>,
    %c1_179 = arith.constant 1 : index
    %c0_180 = arith.constant 0 : index
    %c0_181 = arith.constant 0 : index
    %536 = vector.load %arg13[%c1_179, %c0_180, %c0_181] : memref<2x8x128xf32, #tpu.memory_space<vmem>>, vector<1x8x128xf32>
    %537 = vector.shape_cast %536 : vector<1x8x128xf32> to vector<8x128xf32>
    %538 = vector.shape_cast %521 : vector<8x128xf32> to vector<1x8x128xf32>
    tpu.vector_store %arg13[%c1_179, %c0_180, %c0_181], %538 {strides = array<i32>} : memref<2x8x128xf32, #tpu.memory_space<vmem>>, vector<1x8x128xf32>,
    %c0_i32_182 = arith.constant 0 : i32
    %539 = arith.cmpi eq, %arg0, %c0_i32_182 : i32
    %540 = arith.extui %539 : i1 to i32
    %c0_i32_183 = arith.constant 0 : i32
    %541 = arith.cmpi ne, %540, %c0_i32_183 : i32
    scf.if %541 {
      %c0_184 = arith.constant 0 : index
      %c0_185 = arith.constant 0 : index
      %c0_186 = arith.constant 0 : index
      %542 = vector.load %arg8[%c0_184, %c0_185, %c0_186] : memref<2x8x128xf32, #tpu.memory_space<vmem>>, vector<1x8x128xf32>
      %543 = vector.shape_cast %542 : vector<1x8x128xf32> to vector<8x128xf32>
      %544 = vector.shape_cast %491 : vector<8x128xf32> to vector<1x8x128xf32>
      tpu.vector_store %arg8[%c0_184, %c0_185, %c0_186], %544 {strides = array<i32>} : memref<2x8x128xf32, #tpu.memory_space<vmem>>, vector<1x8x128xf32>,
      %c0_187 = arith.constant 0 : index
      %c0_188 = arith.constant 0 : index
      %c0_189 = arith.constant 0 : index
      %545 = vector.load %arg9[%c0_187, %c0_188, %c0_189] : memref<2x8x128xf32, #tpu.memory_space<vmem>>, vector<1x8x128xf32>
      %546 = vector.shape_cast %545 : vector<1x8x128xf32> to vector<8x128xf32>
      %547 = vector.shape_cast %489 : vector<8x128xf32> to vector<1x8x128xf32>
      tpu.vector_store %arg9[%c0_187, %c0_188, %c0_189], %547 {strides = array<i32>} : memref<2x8x128xf32, #tpu.memory_space<vmem>>, vector<1x8x128xf32>,
      %c1_190 = arith.constant 1 : index
      %c0_191 = arith.constant 0 : index
      %c0_192 = arith.constant 0 : index
      %548 = vector.load %arg8[%c1_190, %c0_191, %c0_192] : memref<2x8x128xf32, #tpu.memory_space<vmem>>, vector<1x8x128xf32>
      %549 = vector.shape_cast %548 : vector<1x8x128xf32> to vector<8x128xf32>
      %550 = vector.shape_cast %523 : vector<8x128xf32> to vector<1x8x128xf32>
      tpu.vector_store %arg8[%c1_190, %c0_191, %c0_192], %550 {strides = array<i32>} : memref<2x8x128xf32, #tpu.memory_space<vmem>>, vector<1x8x128xf32>,
      %c1_193 = arith.constant 1 : index
      %c0_194 = arith.constant 0 : index
      %c0_195 = arith.constant 0 : index
      %551 = vector.load %arg9[%c1_193, %c0_194, %c0_195] : memref<2x8x128xf32, #tpu.memory_space<vmem>>, vector<1x8x128xf32>
      %552 = vector.shape_cast %551 : vector<1x8x128xf32> to vector<8x128xf32>
      %553 = vector.shape_cast %521 : vector<8x128xf32> to vector<1x8x128xf32>
      tpu.vector_store %arg9[%c1_193, %c0_194, %c0_195], %553 {strides = array<i32>} : memref<2x8x128xf32, #tpu.memory_space<vmem>>, vector<1x8x128xf32>,
    } else {
    }
    return
  }
  func.func @transform_0(%arg0: i32) -> (i32, i32, i32) {
    %c0_i32 = arith.constant 0 : i32
    %c0_i32_0 = arith.constant 0 : i32
    %c0_i32_1 = arith.constant 0 : i32
    return %arg0, %c0_i32, %c0_i32_0 : i32, i32, i32
  }
  func.func @transform_1(%arg0: i32) -> (i32, i32, i32) {
    %c0_i32 = arith.constant 0 : i32
    %0 = arith.subi %c0_i32, %arg0 : i32
    %c0_i32_0 = arith.constant 0 : i32
    %c1_i32 = arith.constant 1 : i32
    %c0_i32_1 = arith.constant 0 : i32
    return %0, %c0_i32_0, %c1_i32 : i32, i32, i32
  }
  func.func @transform_3(%arg0: i32) -> (i32, i32, i32) {
    %c0_i32 = arith.constant 0 : i32
    %c0_i32_0 = arith.constant 0 : i32
    %c0_i32_1 = arith.constant 0 : i32
    %c0_i32_2 = arith.constant 0 : i32
    return %c0_i32, %c0_i32_0, %c0_i32_1 : i32, i32, i32
  }
  func.func @transform_4(%arg0: i32) -> (i32, i32, i32) {
    %c0_i32 = arith.constant 0 : i32
    %c0_i32_0 = arith.constant 0 : i32
    %c0_i32_1 = arith.constant 0 : i32
    %c0_i32_2 = arith.constant 0 : i32
    return %c0_i32, %c0_i32_0, %c0_i32_1 : i32, i32, i32
  }
  func.func @transform_5(%arg0: i32) -> (i32, i32, i32) {
    %c0_i32 = arith.constant 0 : i32
    %c0_i32_0 = arith.constant 0 : i32
    %c0_i32_1 = arith.constant 0 : i32
    return %arg0, %c0_i32, %c0_i32_0 : i32, i32, i32
  }
  func.func @transform_6(%arg0: i32) -> (i32, i32, i32) {
    %c0_i32 = arith.constant 0 : i32
    %0 = arith.subi %c0_i32, %arg0 : i32
    %c0_i32_0 = arith.constant 0 : i32
    %c0_i32_1 = arith.constant 0 : i32
    %c0_i32_2 = arith.constant 0 : i32
    return %0, %c0_i32_0, %c0_i32_1 : i32, i32, i32
  }
  func.func @transform_7(%arg0: i32) -> (i32, i32, i32) {
    %c0_i32 = arith.constant 0 : i32
    %c0_i32_0 = arith.constant 0 : i32
    %c0_i32_1 = arith.constant 0 : i32
    %c0_i32_2 = arith.constant 0 : i32
    return %c0_i32, %c0_i32_0, %c0_i32_1 : i32, i32, i32
  }
  func.func @transform_8(%arg0: i32) -> (i32, i32, i32) {
    %c0_i32 = arith.constant 0 : i32
    %c0_i32_0 = arith.constant 0 : i32
    %c0_i32_1 = arith.constant 0 : i32
    %c0_i32_2 = arith.constant 0 : i32
    return %c0_i32, %c0_i32_0, %c0_i32_1 : i32, i32, i32
  }
}

</mosaic_0001>

<llo_original>
// kernel: _forward.2
$region0: #{_forward.2}
  #allocation0 [shape = 'u32[]', space=smem, size = 0x4, offset = 0x4, fixed_abs, tag = 'smem constant byte address 0x4 - core index']
  #allocation1 [shape = 'u32[72,128]{1,0:T(1,128)}', space=vmem, size = 0x9000, scoped, tag = 'internal scratch']
  #allocation2 [shape = 'f32[2,128,512]{2,1,0:T(8,128)}', space=vmem, size = 0x80000, scoped, tag = 'scratch operand']
  #allocation3 [shape = 's32[1]{0}', space=sflag, size = 0x4, scoped, tag = 'scratch operand']
  #allocation4 [shape = 'f32[2,8,128]{2,1,0:T(8,128)}', space=vmem, size = 0x2000, scoped, tag = 'scratch operand']
  #allocation5 [shape = 'f32[2,8,128]{2,1,0:T(8,128)}', space=vmem, size = 0x2000, scoped, tag = 'scratch operand']
  #allocation8 [shape = 's32[]', space=sflag, size = 0x4, offset = 0, fixed_abs, tag = 'sflag constant byte address 0x0 - dummy sync flag']
  #allocation9 [shape = 's32[]', space=sflag, size = 0x4, offset = 0, fixed_abs, tag = 'sflag constant byte address 0x0 - dummy sync flag']
  #allocation10 [shape = 'u32[]', space=smem, size = 0x4, offset = 0x44, fixed_abs, tag = 'smem constant byte address 0x44 - assertion arg 0']
  #allocation11 [shape = 'u32[]', space=smem, size = 0x4, offset = 0x48, fixed_abs, tag = 'smem constant byte address 0x48 - assertion arg 1']
  %s0 = inlined_call_operand.vmem [shape: f32[8,8,1024], index: 0, kind: input, shape index: {}, may-alias: {0,1}]
  %s1 = inlined_call_operand.vmem [shape: f32[8,8,1024], index: 1, kind: input, shape index: {}, may-alias: {0,1}]
  %s2 = inlined_call_operand.hbm [shape: f32[2,128,512], index: 2, kind: input, shape index: {}]
  %s3 = inlined_call_operand.vmem [shape: f32[2,8,128], index: 3, kind: input, shape index: {}, may-alias: {3,4}]
  %s4 = inlined_call_operand.vmem [shape: f32[2,8,128], index: 4, kind: input, shape index: {}, may-alias: {3,4}]
  %s5 = inlined_call_operand.vmem [shape: f32[8,8,128], index: 5, kind: output, shape index: {0}]
  %s6 = inlined_call_operand.vmem [shape: f32[8,8,128], index: 6, kind: output, shape index: {1}]
  %s7 = inlined_call_operand.vmem [shape: f32[2,8,128], index: 7, kind: output, shape index: {2}]
  %s8 = inlined_call_operand.vmem [shape: f32[2,8,128], index: 8, kind: output, shape index: {3}]
  %9 = xla_tuple %s5, %s6, %s7, %s8
  %s10 = sld [smem:[#allocation0]]
  $region108: #{_forward.2} parent=0
    _
  %s12 = ssub.s32 1, %s10
  %s13 = scalar_select 0, %s12, %s10
  $region1: #{_forward.2} parent=0
    #allocation6 [shape = 'u8[131072]{0}', space=vmem, size = 0x20000, scoped, tag = 'input window, operand 0, single buffered']
    #allocation7 [shape = 'u8[131072]{0}', space=vmem, size = 0x20000, scoped, tag = 'input window, operand 1, single buffered']
    // Predicated region
    $region2: #{_forward.2} parent=1 // pred_check
      _
    $region3: #{_forward.2} parent=1 // pred_check_branch
      %15 = sbr.rel (0) target = $region5
    $region4: #{_forward.2} parent=1 // pred_region
      // Predicated region
      $region6: #{_forward.2} parent=4 // pred_check
        _
      $region7: #{_forward.2} parent=4 // pred_check_branch
        %17 = sbr.rel (0) target = $region9
      $region8: #{_forward.2} parent=4 // pred_region
        // Predicated region
        $region10: #{_forward.2} parent=8 // pred_check
          _
        $region11: #{_forward.2} parent=8 // pred_check_branch
          %19 = sbr.rel (0) target = $region13
        $region12: #{_forward.2} parent=8 // pred_region
          loop: start=0, step=1, limit=1
          $region14: #{_forward.2} parent=12 // loop_pre_header
            _
          $region15: #{_forward.2} parent=12 // loop_header
            %s21 = sphi 0, %s25
            %p22 = scmp.ge.s32.totalorder %s21, 1
            %s26 = sphi %s0, %s0
            %s27 = sphi [#allocation6], [#allocation6]
          $region16: #{_forward.2} parent=12 // loop_header_branch
            %24 = sbr.rel (%p22) target = $region20
          $region17: #{_forward.2} parent=12 // loop_body
            %v28 = vld [vmem:[%s26] sm:$0xff]
            %29 = vst [vmem:[%s27] sm:$0xff] %v28
            %v30 = vld [vmem:[%s26 + $0x8] sm:$0xff]
            %31 = vst [vmem:[%s27 + $0x8] sm:$0xff] %v30
            %v32 = vld [vmem:[%s26 + $0x10] sm:$0xff]
            %33 = vst [vmem:[%s27 + $0x10] sm:$0xff] %v32
            %v34 = vld [vmem:[%s26 + $0x18] sm:$0xff]
            %35 = vst [vmem:[%s27 + $0x18] sm:$0xff] %v34
            %v36 = vld [vmem:[%s26 + $0x40] sm:$0xff]
            %37 = vst [vmem:[%s27 + $0x20] sm:$0xff] %v36
            %v38 = vld [vmem:[%s26 + $0x48] sm:$0xff]
            %39 = vst [vmem:[%s27 + $0x28] sm:$0xff] %v38
            %v40 = vld [vmem:[%s26 + $0x50] sm:$0xff]
            %41 = vst [vmem:[%s27 + $0x30] sm:$0xff] %v40
            %v42 = vld [vmem:[%s26 + $0x58] sm:$0xff]
            %43 = vst [vmem:[%s27 + $0x38] sm:$0xff] %v42
            %v44 = vld [vmem:[%s26 + $0x80] sm:$0xff]
            %45 = vst [vmem:[%s27 + $0x40] sm:$0xff] %v44
            %v46 = vld [vmem:[%s26 + $0x88] sm:$0xff]
            %47 = vst [vmem:[%s27 + $0x48] sm:$0xff] %v46
            %v48 = vld [vmem:[%s26 + $0x90] sm:$0xff]
            %49 = vst [vmem:[%s27 + $0x50] sm:$0xff] %v48
            %v50 = vld [vmem:[%s26 + $0x98] sm:$0xff]
            %51 = vst [vmem:[%s27 + $0x58] sm:$0xff] %v50
            %v52 = vld [vmem:[%s26 + $0xc0] sm:$0xff]
            %53 = vst [vmem:[%s27 + $0x60] sm:$0xff] %v52
            %v54 = vld [vmem:[%s26 + $0xc8] sm:$0xff]
            %55 = vst [vmem:[%s27 + $0x68] sm:$0xff] %v54
            %v56 = vld [vmem:[%s26 + $0xd0] sm:$0xff]
            %57 = vst [vmem:[%s27 + $0x70] sm:$0xff] %v56
            %v58 = vld [vmem:[%s26 + $0xd8] sm:$0xff]
            %59 = vst [vmem:[%s27 + $0x78] sm:$0xff] %v58
            %v60 = vld [vmem:[%s26 + $0x100] sm:$0xff]
            %61 = vst [vmem:[%s27 + $0x80] sm:$0xff] %v60
            %v62 = vld [vmem:[%s26 + $0x108] sm:$0xff]
            %63 = vst [vmem:[%s27 + $0x88] sm:$0xff] %v62
            %v64 = vld [vmem:[%s26 + $0x110] sm:$0xff]
            %65 = vst [vmem:[%s27 + $0x90] sm:$0xff] %v64
            %v66 = vld [vmem:[%s26 + $0x118] sm:$0xff]
            %67 = vst [vmem:[%s27 + $0x98] sm:$0xff] %v66
            %v68 = vld [vmem:[%s26 + $0x140] sm:$0xff]
            %69 = vst [vmem:[%s27 + $0xa0] sm:$0xff] %v68
            %v70 = vld [vmem:[%s26 + $0x148] sm:$0xff]
            %71 = vst [vmem:[%s27 + $0xa8] sm:$0xff] %v70
            %v72 = vld [vmem:[%s26 + $0x150] sm:$0xff]
            %73 = vst [vmem:[%s27 + $0xb0] sm:$0xff] %v72
            %v74 = vld [vmem:[%s26 + $0x158] sm:$0xff]
            %75 = vst [vmem:[%s27 + $0xb8] sm:$0xff] %v74
            %v76 = vld [vmem:[%s26 + $0x180] sm:$0xff]
            %77 = vst [vmem:[%s27 + $0xc0] sm:$0xff] %v76
            %v78 = vld [vmem:[%s26 + $0x188] sm:$0xff]
            %79 = vst [vmem:[%s27 + $0xc8] sm:$0xff] %v78
            %v80 = vld [vmem:[%s26 + $0x190] sm:$0xff]
            %81 = vst [vmem:[%s27 + $0xd0] sm:$0xff] %v80
            %v82 = vld [vmem:[%s26 + $0x198] sm:$0xff]
            %83 = vst [vmem:[%s27 + $0xd8] sm:$0xff] %v82
            %v84 = vld [vmem:[%s26 + $0x1c0] sm:$0xff]
            %85 = vst [vmem:[%s27 + $0xe0] sm:$0xff] %v84
            %v86 = vld [vmem:[%s26 + $0x1c8] sm:$0xff]
            %87 = vst [vmem:[%s27 + $0xe8] sm:$0xff] %v86
            %v88 = vld [vmem:[%s26 + $0x1d0] sm:$0xff]
            %89 = vst [vmem:[%s27 + $0xf0] sm:$0xff] %v88
            %v90 = vld [vmem:[%s26 + $0x1d8] sm:$0xff]
            %91 = vst [vmem:[%s27 + $0xf8] sm:$0xff] %v90
          $region18: #{_forward.2} parent=12 // loop_footer
            %s25 = sadd.s32 1, %s21
          $region19: #{_forward.2} parent=12 // loop_footer_branch
            %20 = sbr.rel target = $region15
          $region20: #{_forward.2} parent=12 // loop_exit
            _
        $region13: #{_forward.2} parent=8 // pred_fallthru
          _
        // Predicated region
        $region21: #{_forward.2} parent=8 // pred_check
          _
        $region22: #{_forward.2} parent=8 // pred_check_branch
          %93 = sbr.rel target = $region24
        $region23: #{_forward.2} parent=8 // pred_region
          _
        $region24: #{_forward.2} parent=8 // pred_fallthru
          _
      $region9: #{_forward.2} parent=4 // pred_fallthru
        _
      %94 = vnop
    $region5: #{_forward.2} parent=1 // pred_fallthru
      _
    // Predicated region
    $region25: #{_forward.2} parent=1 // pred_check
      _
    $region26: #{_forward.2} parent=1 // pred_check_branch
      %96 = sbr.rel (0) target = $region28
    $region27: #{_forward.2} parent=1 // pred_region
      %s97 = ssub.s32 0, 0
      %s98 = smul.u32 8, %s97
      %s99 = smul.addr %s98, 8
      %s100 = sadd.s32 4, %s99
      %s101 = smul.addr %s100, 8
      %s102 = scalar_lea.vmem %s1, %s101
      // Predicated region
      $region29: #{_forward.2} parent=27 // pred_check
        _
      $region30: #{_forward.2} parent=27 // pred_check_branch
        %104 = sbr.rel (0) target = $region32
      $region31: #{_forward.2} parent=27 // pred_region
        // Predicated region
        $region33: #{_forward.2} parent=31 // pred_check
          _
        $region34: #{_forward.2} parent=31 // pred_check_branch
          %106 = sbr.rel (0) target = $region36
        $region35: #{_forward.2} parent=31 // pred_region
          loop: start=0, step=1, limit=1
          $region37: #{_forward.2} parent=35 // loop_pre_header
            _
          $region38: #{_forward.2} parent=35 // loop_header
            %s108 = sphi 0, %s112
            %p109 = scmp.ge.s32.totalorder %s108, 1
            %s113 = sphi %s102, %s102
            %s114 = sphi [#allocation7], [#allocation7]
          $region39: #{_forward.2} parent=35 // loop_header_branch
            %111 = sbr.rel (%p109) target = $region43
          $region40: #{_forward.2} parent=35 // loop_body
            %v115 = vld [vmem:[%s113] sm:$0xff]
            %116 = vst [vmem:[%s114] sm:$0xff] %v115
            %v117 = vld [vmem:[%s113 + $0x8] sm:$0xff]
            %118 = vst [vmem:[%s114 + $0x8] sm:$0xff] %v117
            %v119 = vld [vmem:[%s113 + $0x10] sm:$0xff]
            %120 = vst [vmem:[%s114 + $0x10] sm:$0xff] %v119
            %v121 = vld [vmem:[%s113 + $0x18] sm:$0xff]
            %122 = vst [vmem:[%s114 + $0x18] sm:$0xff] %v121
            %v123 = vld [vmem:[%s113 + $0x40] sm:$0xff]
            %124 = vst [vmem:[%s114 + $0x20] sm:$0xff] %v123
            %v125 = vld [vmem:[%s113 + $0x48] sm:$0xff]
            %126 = vst [vmem:[%s114 + $0x28] sm:$0xff] %v125
            %v127 = vld [vmem:[%s113 + $0x50] sm:$0xff]
            %128 = vst [vmem:[%s114 + $0x30] sm:$0xff] %v127
            %v129 = vld [vmem:[%s113 + $0x58] sm:$0xff]
            %130 = vst [vmem:[%s114 + $0x38] sm:$0xff] %v129
            %v131 = vld [vmem:[%s113 + $0x80] sm:$0xff]
            %132 = vst [vmem:[%s114 + $0x40] sm:$0xff] %v131
            %v133 = vld [vmem:[%s113 + $0x88] sm:$0xff]
            %134 = vst [vmem:[%s114 + $0x48] sm:$0xff] %v133
            %v135 = vld [vmem:[%s113 + $0x90] sm:$0xff]
            %136 = vst [vmem:[%s114 + $0x50] sm:$0xff] %v135
            %v137 = vld [vmem:[%s113 + $0x98] sm:$0xff]
            %138 = vst [vmem:[%s114 + $0x58] sm:$0xff] %v137
            %v139 = vld [vmem:[%s113 + $0xc0] sm:$0xff]
            %140 = vst [vmem:[%s114 + $0x60] sm:$0xff] %v139
            %v141 = vld [vmem:[%s113 + $0xc8] sm:$0xff]
            %142 = vst [vmem:[%s114 + $0x68] sm:$0xff] %v141
            %v143 = vld [vmem:[%s113 + $0xd0] sm:$0xff]
            %144 = vst [vmem:[%s114 + $0x70] sm:$0xff] %v143
            %v145 = vld [vmem:[%s113 + $0xd8] sm:$0xff]
            %146 = vst [vmem:[%s114 + $0x78] sm:$0xff] %v145
            %v147 = vld [vmem:[%s113 + $0x100] sm:$0xff]
            %148 = vst [vmem:[%s114 + $0x80] sm:$0xff] %v147
            %v149 = vld [vmem:[%s113 + $0x108] sm:$0xff]
            %150 = vst [vmem:[%s114 + $0x88] sm:$0xff] %v149
            %v151 = vld [vmem:[%s113 + $0x110] sm:$0xff]
            %152 = vst [vmem:[%s114 + $0x90] sm:$0xff] %v151
            %v153 = vld [vmem:[%s113 + $0x118] sm:$0xff]
            %154 = vst [vmem:[%s114 + $0x98] sm:$0xff] %v153
            %v155 = vld [vmem:[%s113 + $0x140] sm:$0xff]
            %156 = vst [vmem:[%s114 + $0xa0] sm:$0xff] %v155
            %v157 = vld [vmem:[%s113 + $0x148] sm:$0xff]
            %158 = vst [vmem:[%s114 + $0xa8] sm:$0xff] %v157
            %v159 = vld [vmem:[%s113 + $0x150] sm:$0xff]
            %160 = vst [vmem:[%s114 + $0xb0] sm:$0xff] %v159
            %v161 = vld [vmem:[%s113 + $0x158] sm:$0xff]
            %162 = vst [vmem:[%s114 + $0xb8] sm:$0xff] %v161
            %v163 = vld [vmem:[%s113 + $0x180] sm:$0xff]
            %164 = vst [vmem:[%s114 + $0xc0] sm:$0xff] %v163
            %v165 = vld [vmem:[%s113 + $0x188] sm:$0xff]
            %166 = vst [vmem:[%s114 + $0xc8] sm:$0xff] %v165
            %v167 = vld [vmem:[%s113 + $0x190] sm:$0xff]
            %168 = vst [vmem:[%s114 + $0xd0] sm:$0xff] %v167
            %v169 = vld [vmem:[%s113 + $0x198] sm:$0xff]
            %170 = vst [vmem:[%s114 + $0xd8] sm:$0xff] %v169
            %v171 = vld [vmem:[%s113 + $0x1c0] sm:$0xff]
            %172 = vst [vmem:[%s114 + $0xe0] sm:$0xff] %v171
            %v173 = vld [vmem:[%s113 + $0x1c8] sm:$0xff]
            %174 = vst [vmem:[%s114 + $0xe8] sm:$0xff] %v173
            %v175 = vld [vmem:[%s113 + $0x1d0] sm:$0xff]
            %176 = vst [vmem:[%s114 + $0xf0] sm:$0xff] %v175
            %v177 = vld [vmem:[%s113 + $0x1d8] sm:$0xff]
            %178 = vst [vmem:[%s114 + $0xf8] sm:$0xff] %v177
          $region41: #{_forward.2} parent=35 // loop_footer
            %s112 = sadd.s32 1, %s108
          $region42: #{_forward.2} parent=35 // loop_footer_branch
            %107 = sbr.rel target = $region38
          $region43: #{_forward.2} parent=35 // loop_exit
            _
        $region36: #{_forward.2} parent=31 // pred_fallthru
          _
        // Predicated region
        $region44: #{_forward.2} parent=31 // pred_check
          _
        $region45: #{_forward.2} parent=31 // pred_check_branch
          %180 = sbr.rel target = $region47
        $region46: #{_forward.2} parent=31 // pred_region
          _
        $region47: #{_forward.2} parent=31 // pred_fallthru
          _
      $region32: #{_forward.2} parent=27 // pred_fallthru
        _
      %181 = vnop
    $region28: #{_forward.2} parent=1 // pred_fallthru
      _
    // Predicated region
    $region48: #{_forward.2} parent=1 // pred_check
      _
    $region49: #{_forward.2} parent=1 // pred_check_branch
      %183 = sbr.rel (0) target = $region51
    $region50: #{_forward.2} parent=1 // pred_region
      _
    $region51: #{_forward.2} parent=1 // pred_fallthru
      _
    // Predicated region
    $region52: #{_forward.2} parent=1 // pred_check
      _
    $region53: #{_forward.2} parent=1 // pred_check_branch
      %185 = sbr.rel (0) target = $region55
    $region54: #{_forward.2} parent=1 // pred_region
      _
    $region55: #{_forward.2} parent=1 // pred_fallthru
      _
    // Predicated region
    $region56: #{_forward.2} parent=1 // pred_check
      _
    $region57: #{_forward.2} parent=1 // pred_check_branch
      %187 = sbr.rel (0) target = $region59
    $region58: #{_forward.2} parent=1 // pred_region
      _
    $region59: #{_forward.2} parent=1 // pred_fallthru
      _
    // Predicated region
    $region60: #{_forward.2} parent=1 // pred_check
      _
    $region61: #{_forward.2} parent=1 // pred_check_branch
      %189 = sbr.rel (0) target = $region63
    $region62: #{_forward.2} parent=1 // pred_region
      _
    $region63: #{_forward.2} parent=1 // pred_fallthru
      _
    %s190 = ssub.s32 0, 0
    %s191 = smul.u32 8, %s190
    %p192 = scmp.lt.s32.totalorder %s191, 7
    %s193 = scalar_select %p192, %s191, 7
    %s194 = smul.addr %s193, 8
    %s195 = scalar_lea.vmem %s6, %s194
    %s196 = ssub.s32 0, 0
    %s197 = smul.u32 8, %s196
    %s198 = ssub.s32 0, 0
    %s199 = smul.u32 8, %s198
    %p200 = scmp.lt.s32.totalorder %s199, 7
    %s201 = scalar_select %p200, %s199, 7
    %s202 = smul.addr %s201, 8
    %s203 = scalar_lea.vmem %s6, %s202
    %s204 = ssub.s32 0, 0
    %s205 = smul.u32 8, %s204
    %p206 = scmp.eq.s32.totalorder 0, 0
    // Predicated region
    $region64: #{_forward.2} parent=1 // pred_check
      %p207 = pneg %p206
    $region65: #{_forward.2} parent=1 // pred_check_branch
      %209 = sbr.rel (%p207) target = $region67
    $region66: #{_forward.2} parent=1 // pred_region
      // Predicated region
      $region68: #{_forward.2} parent=66 // pred_check
        _
      $region69: #{_forward.2} parent=66 // pred_check_branch
        %211 = sbr.rel target = $region71
      $region70: #{_forward.2} parent=66 // pred_region
        %212 = sst [smem:[#allocation10]] [#allocation9]
        %213 = sst [smem:[#allocation11]] [#allocation8]
      $region71: #{_forward.2} parent=66 // pred_fallthru
        _
      %215 = shalt.err (0)
      %s217 = sshll.u32 %s2, 4
      %s218 = int_to_ptr.hbm [resolvable:$true] %s217
      %s219 = sshll.u32 [#allocation2], 4
      %s220 = int_to_ptr.vmem [resolvable:$true] %s219
      %222 = dma.hbm_to_vmem [thread:$0]  %s218, 16384, %s220, [#allocation3]
      %s223 = smul.u32 8, 2
      %s224 = smul.u32 %s223, 16
      %s225 = smul.u32 %s224, 4
      %s226 = sshll.u32 %s225, 4
      %227 = dma.done [#allocation3], %s226
      %v228 = vld [vmem:[%s3] sm:$0xff]
      %v229 = vld [vmem:[%s3 + $0x8] sm:$0xff]
      %230 = vst [vmem:[#allocation4] sm:$0xff] %v228
      %231 = vst [vmem:[#allocation4 + $0x8] sm:$0xff] %v229
      %v232 = vld [vmem:[%s4] sm:$0xff]
      %v233 = vld [vmem:[%s4 + $0x8] sm:$0xff]
      %234 = vst [vmem:[#allocation5] sm:$0xff] %v232
      %235 = vst [vmem:[#allocation5 + $0x8] sm:$0xff] %v233
    $region67: #{_forward.2} parent=1 // pred_fallthru
      _
    %v236 = vld [vmem:[#allocation2] sm:$0xff]
    %v237 = vld [vmem:[#allocation2 + $0x8] sm:$0xff]
    %v238 = vld [vmem:[#allocation2 + $0x10] sm:$0xff]
    %v239 = vld [vmem:[#allocation2 + $0x18] sm:$0xff]
    %v240 = vld [vmem:[#allocation2 + $0x20] sm:$0xff]
    %v241 = vld [vmem:[#allocation2 + $0x28] sm:$0xff]
    %v242 = vld [vmem:[#allocation2 + $0x30] sm:$0xff]
    %v243 = vld [vmem:[#allocation2 + $0x38] sm:$0xff]
    %v244 = vld [vmem:[#allocation2 + $0x40] sm:$0xff]
    %v245 = vld [vmem:[#allocation2 + $0x48] sm:$0xff]
    %v246 = vld [vmem:[#allocation2 + $0x50] sm:$0xff]
    %v247 = vld [vmem:[#allocation2 + $0x58] sm:$0xff]
    %v248 = vld [vmem:[#allocation2 + $0x60] sm:$0xff]
    %v249 = vld [vmem:[#allocation2 + $0x68] sm:$0xff]
    %v250 = vld [vmem:[#allocation2 + $0x70] sm:$0xff]
    %v251 = vld [vmem:[#allocation2 + $0x78] sm:$0xff]
    %v252 = vld [vmem:[#allocation2 + $0x80] sm:$0xff]
    %v253 = vld [vmem:[#allocation2 + $0x88] sm:$0xff]
    %v254 = vld [vmem:[#allocation2 + $0x90] sm:$0xff]
    %v255 = vld [vmem:[#allocation2 + $0x98] sm:$0xff]
    %v256 = vld [vmem:[#allocation2 + $0xa0] sm:$0xff]
    %v257 = vld [vmem:[#allocation2 + $0xa8] sm:$0xff]
    %v258 = vld [vmem:[#allocation2 + $0xb0] sm:$0xff]
    %v259 = vld [vmem:[#allocation2 + $0xb8] sm:$0xff]
    %v260 = vld [vmem:[#allocation2 + $0xc0] sm:$0xff]
    %v261 = vld [vmem:[#allocation2 + $0xc8] sm:$0xff]
    %v262 = vld [vmem:[#allocation2 + $0xd0] sm:$0xff]
    %v263 = vld [vmem:[#allocation2 + $0xd8] sm:$0xff]
    %v264 = vld [vmem:[#allocation2 + $0xe0] sm:$0xff]
    %v265 = vld [vmem:[#allocation2 + $0xe8] sm:$0xff]
    %v266 = vld [vmem:[#allocation2 + $0xf0] sm:$0xff]
    %v267 = vld [vmem:[#allocation2 + $0xf8] sm:$0xff]
    %v268 = vld [vmem:[#allocation2 + $0x100] sm:$0xff]
    %v269 = vld [vmem:[#allocation2 + $0x108] sm:$0xff]
    %v270 = vld [vmem:[#allocation2 + $0x110] sm:$0xff]
    %v271 = vld [vmem:[#allocation2 + $0x118] sm:$0xff]
    %v272 = vld [vmem:[#allocation2 + $0x120] sm:$0xff]
    %v273 = vld [vmem:[#allocation2 + $0x128] sm:$0xff]
    %v274 = vld [vmem:[#allocation2 + $0x130] sm:$0xff]
    %v275 = vld [vmem:[#allocation2 + $0x138] sm:$0xff]
    %v276 = vld [vmem:[#allocation2 + $0x140] sm:$0xff]
    %v277 = vld [vmem:[#allocation2 + $0x148] sm:$0xff]
    %v278 = vld [vmem:[#allocation2 + $0x150] sm:$0xff]
    %v279 = vld [vmem:[#allocation2 + $0x158] sm:$0xff]
    %v280 = vld [vmem:[#allocation2 + $0x160] sm:$0xff]
    %v281 = vld [vmem:[#allocation2 + $0x168] sm:$0xff]
    %v282 = vld [vmem:[#allocation2 + $0x170] sm:$0xff]
    %v283 = vld [vmem:[#allocation2 + $0x178] sm:$0xff]
    %v284 = vld [vmem:[#allocation2 + $0x180] sm:$0xff]
    %v285 = vld [vmem:[#allocation2 + $0x188] sm:$0xff]
    %v286 = vld [vmem:[#allocation2 + $0x190] sm:$0xff]
    %v287 = vld [vmem:[#allocation2 + $0x198] sm:$0xff]
    %v288 = vld [vmem:[#allocation2 + $0x1a0] sm:$0xff]
    %v289 = vld [vmem:[#allocation2 + $0x1a8] sm:$0xff]
    %v290 = vld [vmem:[#allocation2 + $0x1b0] sm:$0xff]
    %v291 = vld [vmem:[#allocation2 + $0x1b8] sm:$0xff]
    %v292 = vld [vmem:[#allocation2 + $0x1c0] sm:$0xff]
    %v293 = vld [vmem:[#allocation2 + $0x1c8] sm:$0xff]
    %v294 = vld [vmem:[#allocation2 + $0x1d0] sm:$0xff]
    %v295 = vld [vmem:[#allocation2 + $0x1d8] sm:$0xff]
    %v296 = vld [vmem:[#allocation2 + $0x1e0] sm:$0xff]
    %v297 = vld [vmem:[#allocation2 + $0x1e8] sm:$0xff]
    %v298 = vld [vmem:[#allocation2 + $0x1f0] sm:$0xff]
    %v299 = vld [vmem:[#allocation2 + $0x1f8] sm:$0xff]
    %v300 = vld [vmem:[#allocation4] sm:$0xff]
    %v301 = vld [vmem:[#allocation5] sm:$0xff]
    %s302 = scalar_lea.vmem [#allocation2], 512
    %v303 = vld [vmem:[%s302] sm:$0xff]
    %v304 = vld [vmem:[%s302 + $0x8] sm:$0xff]
    %v305 = vld [vmem:[%s302 + $0x10] sm:$0xff]
    %v306 = vld [vmem:[%s302 + $0x18] sm:$0xff]
    %v307 = vld [vmem:[%s302 + $0x20] sm:$0xff]
    %v308 = vld [vmem:[%s302 + $0x28] sm:$0xff]
    %v309 = vld [vmem:[%s302 + $0x30] sm:$0xff]
    %v310 = vld [vmem:[%s302 + $0x38] sm:$0xff]
    %v311 = vld [vmem:[%s302 + $0x40] sm:$0xff]
    %v312 = vld [vmem:[%s302 + $0x48] sm:$0xff]
    %v313 = vld [vmem:[%s302 + $0x50] sm:$0xff]
    %v314 = vld [vmem:[%s302 + $0x58] sm:$0xff]
    %v315 = vld [vmem:[%s302 + $0x60] sm:$0xff]
    %v316 = vld [vmem:[%s302 + $0x68] sm:$0xff]
    %v317 = vld [vmem:[%s302 + $0x70] sm:$0xff]
    %v318 = vld [vmem:[%s302 + $0x78] sm:$0xff]
    %v319 = vld [vmem:[%s302 + $0x80] sm:$0xff]
    %v320 = vld [vmem:[%s302 + $0x88] sm:$0xff]
    %v321 = vld [vmem:[%s302 + $0x90] sm:$0xff]
    %v322 = vld [vmem:[%s302 + $0x98] sm:$0xff]
    %v323 = vld [vmem:[%s302 + $0xa0] sm:$0xff]
    %v324 = vld [vmem:[%s302 + $0xa8] sm:$0xff]
    %v325 = vld [vmem:[%s302 + $0xb0] sm:$0xff]
    %v326 = vld [vmem:[%s302 + $0xb8] sm:$0xff]
    %v327 = vld [vmem:[%s302 + $0xc0] sm:$0xff]
    %v328 = vld [vmem:[%s302 + $0xc8] sm:$0xff]
    %v329 = vld [vmem:[%s302 + $0xd0] sm:$0xff]
    %v330 = vld [vmem:[%s302 + $0xd8] sm:$0xff]
    %v331 = vld [vmem:[%s302 + $0xe0] sm:$0xff]
    %v332 = vld [vmem:[%s302 + $0xe8] sm:$0xff]
    %v333 = vld [vmem:[%s302 + $0xf0] sm:$0xff]
    %v334 = vld [vmem:[%s302 + $0xf8] sm:$0xff]
    %v335 = vld [vmem:[%s302 + $0x100] sm:$0xff]
    %v336 = vld [vmem:[%s302 + $0x108] sm:$0xff]
    %v337 = vld [vmem:[%s302 + $0x110] sm:$0xff]
    %v338 = vld [vmem:[%s302 + $0x118] sm:$0xff]
    %v339 = vld [vmem:[%s302 + $0x120] sm:$0xff]
    %v340 = vld [vmem:[%s302 + $0x128] sm:$0xff]
    %v341 = vld [vmem:[%s302 + $0x130] sm:$0xff]
    %v342 = vld [vmem:[%s302 + $0x138] sm:$0xff]
    %v343 = vld [vmem:[%s302 + $0x140] sm:$0xff]
    %v344 = vld [vmem:[%s302 + $0x148] sm:$0xff]
    %v345 = vld [vmem:[%s302 + $0x150] sm:$0xff]
    %v346 = vld [vmem:[%s302 + $0x158] sm:$0xff]
    %v347 = vld [vmem:[%s302 + $0x160] sm:$0xff]
    %v348 = vld [vmem:[%s302 + $0x168] sm:$0xff]
    %v349 = vld [vmem:[%s302 + $0x170] sm:$0xff]
    %v350 = vld [vmem:[%s302 + $0x178] sm:$0xff]
    %v351 = vld [vmem:[%s302 + $0x180] sm:$0xff]
    %v352 = vld [vmem:[%s302 + $0x188] sm:$0xff]
    %v353 = vld [vmem:[%s302 + $0x190] sm:$0xff]
    %v354 = vld [vmem:[%s302 + $0x198] sm:$0xff]
    %v355 = vld [vmem:[%s302 + $0x1a0] sm:$0xff]
    %v356 = vld [vmem:[%s302 + $0x1a8] sm:$0xff]
    %v357 = vld [vmem:[%s302 + $0x1b0] sm:$0xff]
    %v358 = vld [vmem:[%s302 + $0x1b8] sm:$0xff]
    %v359 = vld [vmem:[%s302 + $0x1c0] sm:$0xff]
    %v360 = vld [vmem:[%s302 + $0x1c8] sm:$0xff]
    %v361 = vld [vmem:[%s302 + $0x1d0] sm:$0xff]
    %v362 = vld [vmem:[%s302 + $0x1d8] sm:$0xff]
    %v363 = vld [vmem:[%s302 + $0x1e0] sm:$0xff]
    %v364 = vld [vmem:[%s302 + $0x1e8] sm:$0xff]
    %v365 = vld [vmem:[%s302 + $0x1f0] sm:$0xff]
    %v366 = vld [vmem:[%s302 + $0x1f8] sm:$0xff]
    %s367 = scalar_lea.vmem [#allocation4], 8
    %v368 = vld [vmem:[%s367] sm:$0xff]
    %s369 = scalar_lea.vmem [#allocation5], 8
    %v370 = vld [vmem:[%s369] sm:$0xff]
    %v371 = vld [vmem:[#allocation6] sm:$0xff]
    %v372 = vld [vmem:[#allocation6 + $0x8] sm:$0xff]
    %v373 = vld [vmem:[#allocation6 + $0x10] sm:$0xff]
    %v374 = vld [vmem:[#allocation6 + $0x18] sm:$0xff]
    %375 = vmatpush.msra.mxu0 %v296
    %376 = vmatpush.msra.mxu0 %v292
    %377 = vmatpush.msra.mxu0 %v288
    %378 = vmatpush.msra.mxu0 %v284
    %379 = vmatpush.msra.mxu0 %v280
    %380 = vmatpush.msra.mxu0 %v276
    %381 = vmatpush.msra.mxu0 %v272
    %382 = vmatpush.msra.mxu0 %v268
    %383 = vmatpush.msra.mxu0 %v264
    %384 = vmatpush.msra.mxu0 %v260
    %385 = vmatpush.msra.mxu0 %v256
    %386 = vmatpush.msra.mxu0 %v252
    %387 = vmatpush.msra.mxu0 %v248
    %388 = vmatpush.msra.mxu0 %v244
    %389 = vmatpush.msra.mxu0 %v240
    %390 = vmatpush.msra.mxu0 %v236
    %391 = vmatmul.f32.gmra.mxu0 %v300
    %v392 = vpop.f32.mrf.mxu0
    %v393 = vadd.f32 0.0, %v392
    %394 = vdwg.mxu0
    %395 = vmatpush.msra.mxu0 %v297
    %396 = vmatpush.msra.mxu0 %v293
    %397 = vmatpush.msra.mxu0 %v289
    %398 = vmatpush.msra.mxu0 %v285
    %399 = vmatpush.msra.mxu0 %v281
    %400 = vmatpush.msra.mxu0 %v277
    %401 = vmatpush.msra.mxu0 %v273
    %402 = vmatpush.msra.mxu0 %v269
    %403 = vmatpush.msra.mxu0 %v265
    %404 = vmatpush.msra.mxu0 %v261
    %405 = vmatpush.msra.mxu0 %v257
    %406 = vmatpush.msra.mxu0 %v253
    %407 = vmatpush.msra.mxu0 %v249
    %408 = vmatpush.msra.mxu0 %v245
    %409 = vmatpush.msra.mxu0 %v241
    %410 = vmatpush.msra.mxu0 %v237
    %411 = vmatmul.f32.gmra.mxu0 %v300
    %v412 = vpop.f32.mrf.mxu0
    %v413 = vadd.f32 0.0, %v412
    %414 = vdwg.mxu0
    %415 = vmatpush.msra.mxu0 %v298
    %416 = vmatpush.msra.mxu0 %v294
    %417 = vmatpush.msra.mxu0 %v290
    %418 = vmatpush.msra.mxu0 %v286
    %419 = vmatpush.msra.mxu0 %v282
    %420 = vmatpush.msra.mxu0 %v278
    %421 = vmatpush.msra.mxu0 %v274
    %422 = vmatpush.msra.mxu0 %v270
    %423 = vmatpush.msra.mxu0 %v266
    %424 = vmatpush.msra.mxu0 %v262
    %425 = vmatpush.msra.mxu0 %v258
    %426 = vmatpush.msra.mxu0 %v254
    %427 = vmatpush.msra.mxu0 %v250
    %428 = vmatpush.msra.mxu0 %v246
    %429 = vmatpush.msra.mxu0 %v242
    %430 = vmatpush.msra.mxu0 %v238
    %431 = vmatmul.f32.gmra.mxu0 %v300
    %v432 = vpop.f32.mrf.mxu0
    %v433 = vadd.f32 0.0, %v432
    %434 = vdwg.mxu0
    %435 = vmatpush.msra.mxu0 %v299
    %436 = vmatpush.msra.mxu0 %v295
    %437 = vmatpush.msra.mxu0 %v291
    %438 = vmatpush.msra.mxu0 %v287
    %439 = vmatpush.msra.mxu0 %v283
    %440 = vmatpush.msra.mxu0 %v279
    %441 = vmatpush.msra.mxu0 %v275
    %442 = vmatpush.msra.mxu0 %v271
    %443 = vmatpush.msra.mxu0 %v267
    %444 = vmatpush.msra.mxu0 %v263
    %445 = vmatpush.msra.mxu0 %v259
    %446 = vmatpush.msra.mxu0 %v255
    %447 = vmatpush.msra.mxu0 %v251
    %448 = vmatpush.msra.mxu0 %v247
    %449 = vmatpush.msra.mxu0 %v243
    %450 = vmatpush.msra.mxu0 %v239
    %451 = vmatmul.f32.gmra.mxu0 %v300
    %v452 = vpop.f32.mrf.mxu0
    %v453 = vadd.f32 0.0, %v452
    %454 = vdwg.mxu0
    %v455 = vadd.f32 %v371, %v393
    %v456 = vadd.f32 %v372, %v413
    %v457 = vadd.f32 %v373, %v433
    %v458 = vadd.f32 %v374, %v453
    %v459 = vxor.u32 %v455, 2147483648
    %v460 = vmul.f32 %v459, 1.442695
    %v461 = vpow.pop %v460
    %v462 = vadd.f32 %v461, 1.0
    %v463 = vrcp.pop %v462
    %v464 = vmul.f32 %v462, %v463
    %v465 = vsub.f32 1.0, %v464
    %v466 = vmul.f32 %v463, %v465
    %v467 = vadd.f32 %v463, %v466
    %vm468 = vweird.f32 %v462
    %vm469 = vweird.f32 %v463
    %vm470 = vmor %vm468, %vm469
    %v471 = vsel %vm470, %v463, %v467
    %v472 = vand.u32 2147483647, %v462
    %vm473 = vcmp.eq.f32.partialorder %v472, 8.507059e+37
    %v474 = vand.u32 %v462, 2147483648
    %v475 = vor.u32 1.1754944e-38, %v474
    %v476 = vsel %vm473, %v475, %v471
    %v477 = vmul.f32 1.0, %v476
    %v478 = vxor.u32 %v456, 2147483648
    %v479 = vmul.f32 %v478, 1.442695
    %v480 = vpow.pop %v479
    %v481 = vadd.f32 %v480, 1.0
    %v482 = vrcp.pop %v481
    %v483 = vmul.f32 %v481, %v482
    %v484 = vsub.f32 1.0, %v483
    %v485 = vmul.f32 %v482, %v484
    %v486 = vadd.f32 %v482, %v485
    %vm487 = vweird.f32 %v481
    %vm488 = vweird.f32 %v482
    %vm489 = vmor %vm487, %vm488
    %v490 = vsel %vm489, %v482, %v486
    %v491 = vand.u32 2147483647, %v481
    %vm492 = vcmp.eq.f32.partialorder %v491, 8.507059e+37
    %v493 = vand.u32 %v481, 2147483648
    %v494 = vor.u32 1.1754944e-38, %v493
    %v495 = vsel %vm492, %v494, %v490
    %v496 = vmul.f32 1.0, %v495
    %v497 = vtanh.pop %v457
    %v498 = vxor.u32 %v458, 2147483648
    %v499 = vmul.f32 %v498, 1.442695
    %v500 = vpow.pop %v499
    %v501 = vadd.f32 %v500, 1.0
    %v502 = vrcp.pop %v501
    %v503 = vmul.f32 %v501, %v502
    %v504 = vsub.f32 1.0, %v503
    %v505 = vmul.f32 %v502, %v504
    %v506 = vadd.f32 %v502, %v505
    %vm507 = vweird.f32 %v501
    %vm508 = vweird.f32 %v502
    %vm509 = vmor %vm507, %vm508
    %v510 = vsel %vm509, %v502, %v506
    %v511 = vand.u32 2147483647, %v501
    %vm512 = vcmp.eq.f32.partialorder %v511, 8.507059e+37
    %v513 = vand.u32 %v501, 2147483648
    %v514 = vor.u32 1.1754944e-38, %v513
    %v515 = vsel %vm512, %v514, %v510
    %v516 = vmul.f32 1.0, %v515
    %v517 = vmul.f32 %v496, %v301
    %v518 = vmul.f32 %v477, %v497
    %v519 = vadd.f32 %v517, %v518
    %v520 = vtanh.pop %v519
    %v521 = vmul.f32 %v516, %v520
    %522 = vst [vmem:[%s5] sm:$0xff] %v521
    %s523 = scalar_lea.vmem [#allocation7], 224
    %v524 = vld [vmem:[%s523] sm:$0xff]
    %v525 = vld [vmem:[%s523 + $0x8] sm:$0xff]
    %v526 = vld [vmem:[%s523 + $0x10] sm:$0xff]
    %v527 = vld [vmem:[%s523 + $0x18] sm:$0xff]
    %528 = vmatpush.msra.mxu0 %v363
    %529 = vmatpush.msra.mxu0 %v359
    %530 = vmatpush.msra.mxu0 %v355
    %531 = vmatpush.msra.mxu0 %v351
    %532 = vmatpush.msra.mxu0 %v347
    %533 = vmatpush.msra.mxu0 %v343
    %534 = vmatpush.msra.mxu0 %v339
    %535 = vmatpush.msra.mxu0 %v335
    %536 = vmatpush.msra.mxu0 %v331
    %537 = vmatpush.msra.mxu0 %v327
    %538 = vmatpush.msra.mxu0 %v323
    %539 = vmatpush.msra.mxu0 %v319
    %540 = vmatpush.msra.mxu0 %v315
    %541 = vmatpush.msra.mxu0 %v311
    %542 = vmatpush.msra.mxu0 %v307
    %543 = vmatpush.msra.mxu0 %v303
    %544 = vmatmul.f32.gmra.mxu0 %v368
    %v545 = vpop.f32.mrf.mxu0
    %v546 = vadd.f32 0.0, %v545
    %547 = vdwg.mxu0
    %548 = vmatpush.msra.mxu0 %v364
    %549 = vmatpush.msra.mxu0 %v360
    %550 = vmatpush.msra.mxu0 %v356
    %551 = vmatpush.msra.mxu0 %v352
    %552 = vmatpush.msra.mxu0 %v348
    %553 = vmatpush.msra.mxu0 %v344
    %554 = vmatpush.msra.mxu0 %v340
    %555 = vmatpush.msra.mxu0 %v336
    %556 = vmatpush.msra.mxu0 %v332
    %557 = vmatpush.msra.mxu0 %v328
    %558 = vmatpush.msra.mxu0 %v324
    %559 = vmatpush.msra.mxu0 %v320
    %560 = vmatpush.msra.mxu0 %v316
    %561 = vmatpush.msra.mxu0 %v312
    %562 = vmatpush.msra.mxu0 %v308
    %563 = vmatpush.msra.mxu0 %v304
    %564 = vmatmul.f32.gmra.mxu0 %v368
    %v565 = vpop.f32.mrf.mxu0
    %v566 = vadd.f32 0.0, %v565
    %567 = vdwg.mxu0
    %568 = vmatpush.msra.mxu0 %v365
    %569 = vmatpush.msra.mxu0 %v361
    %570 = vmatpush.msra.mxu0 %v357
    %571 = vmatpush.msra.mxu0 %v353
    %572 = vmatpush.msra.mxu0 %v349
    %573 = vmatpush.msra.mxu0 %v345
    %574 = vmatpush.msra.mxu0 %v341
    %575 = vmatpush.msra.mxu0 %v337
    %576 = vmatpush.msra.mxu0 %v333
    %577 = vmatpush.msra.mxu0 %v329
    %578 = vmatpush.msra.mxu0 %v325
    %579 = vmatpush.msra.mxu0 %v321
    %580 = vmatpush.msra.mxu0 %v317
    %581 = vmatpush.msra.mxu0 %v313
    %582 = vmatpush.msra.mxu0 %v309
    %583 = vmatpush.msra.mxu0 %v305
    %584 = vmatmul.f32.gmra.mxu0 %v368
    %v585 = vpop.f32.mrf.mxu0
    %v586 = vadd.f32 0.0, %v585
    %587 = vdwg.mxu0
    %588 = vmatpush.msra.mxu0 %v366
    %589 = vmatpush.msra.mxu0 %v362
    %590 = vmatpush.msra.mxu0 %v358
    %591 = vmatpush.msra.mxu0 %v354
    %592 = vmatpush.msra.mxu0 %v350
    %593 = vmatpush.msra.mxu0 %v346
    %594 = vmatpush.msra.mxu0 %v342
    %595 = vmatpush.msra.mxu0 %v338
    %596 = vmatpush.msra.mxu0 %v334
    %597 = vmatpush.msra.mxu0 %v330
    %598 = vmatpush.msra.mxu0 %v326
    %599 = vmatpush.msra.mxu0 %v322
    %600 = vmatpush.msra.mxu0 %v318
    %601 = vmatpush.msra.mxu0 %v314
    %602 = vmatpush.msra.mxu0 %v310
    %603 = vmatpush.msra.mxu0 %v306
    %604 = vmatmul.f32.gmra.mxu0 %v368
    %v605 = vpop.f32.mrf.mxu0
    %v606 = vadd.f32 0.0, %v605
    %607 = vdwg.mxu0
    %v608 = vadd.f32 %v524, %v546
    %v609 = vadd.f32 %v525, %v566
    %v610 = vadd.f32 %v526, %v586
    %v611 = vadd.f32 %v527, %v606
    %v612 = vxor.u32 %v608, 2147483648
    %v613 = vmul.f32 %v612, 1.442695
    %v614 = vpow.pop %v613
    %v615 = vadd.f32 %v614, 1.0
    %v616 = vrcp.pop %v615
    %v617 = vmul.f32 %v615, %v616
    %v618 = vsub.f32 1.0, %v617
    %v619 = vmul.f32 %v616, %v618
    %v620 = vadd.f32 %v616, %v619
    %vm621 = vweird.f32 %v615
    %vm622 = vweird.f32 %v616
    %vm623 = vmor %vm621, %vm622
    %v624 = vsel %vm623, %v616, %v620
    %v625 = vand.u32 2147483647, %v615
    %vm626 = vcmp.eq.f32.partialorder %v625, 8.507059e+37
    %v627 = vand.u32 %v615, 2147483648
    %v628 = vor.u32 1.1754944e-38, %v627
    %v629 = vsel %vm626, %v628, %v624
    %v630 = vmul.f32 1.0, %v629
    %v631 = vxor.u32 %v609, 2147483648
    %v632 = vmul.f32 %v631, 1.442695
    %v633 = vpow.pop %v632
    %v634 = vadd.f32 %v633, 1.0
    %v635 = vrcp.pop %v634
    %v636 = vmul.f32 %v634, %v635
    %v637 = vsub.f32 1.0, %v636
    %v638 = vmul.f32 %v635, %v637
    %v639 = vadd.f32 %v635, %v638
    %vm640 = vweird.f32 %v634
    %vm641 = vweird.f32 %v635
    %vm642 = vmor %vm640, %vm641
    %v643 = vsel %vm642, %v635, %v639
    %v644 = vand.u32 2147483647, %v634
    %vm645 = vcmp.eq.f32.partialorder %v644, 8.507059e+37
    %v646 = vand.u32 %v634, 2147483648
    %v647 = vor.u32 1.1754944e-38, %v646
    %v648 = vsel %vm645, %v647, %v643
    %v649 = vmul.f32 1.0, %v648
    %v650 = vtanh.pop %v610
    %v651 = vxor.u32 %v611, 2147483648
    %v652 = vmul.f32 %v651, 1.442695
    %v653 = vpow.pop %v652
    %v654 = vadd.f32 %v653, 1.0
    %v655 = vrcp.pop %v654
    %v656 = vmul.f32 %v654, %v655
    %v657 = vsub.f32 1.0, %v656
    %v658 = vmul.f32 %v655, %v657
    %v659 = vadd.f32 %v655, %v658
    %vm660 = vweird.f32 %v654
    %vm661 = vweird.f32 %v655
    %vm662 = vmor %vm660, %vm661
    %v663 = vsel %vm662, %v655, %v659
    %v664 = vand.u32 2147483647, %v654
    %vm665 = vcmp.eq.f32.partialorder %v664, 8.507059e+37
    %v666 = vand.u32 %v654, 2147483648
    %v667 = vor.u32 1.1754944e-38, %v666
    %v668 = vsel %vm665, %v667, %v663
    %v669 = vmul.f32 1.0, %v668
    %v670 = vmul.f32 %v649, %v370
    %v671 = vmul.f32 %v630, %v650
    %v672 = vadd.f32 %v670, %v671
    %v673 = vtanh.pop %v672
    %v674 = vmul.f32 %v669, %v673
    %s675 = scalar_lea.vmem %s203, 56
    %676 = vst [vmem:[%s675] sm:$0xff] %v674
    %s677 = scalar_lea.vmem [#allocation6], 32
    %v678 = vld [vmem:[%s677] sm:$0xff]
    %v679 = vld [vmem:[%s677 + $0x8] sm:$0xff]
    %v680 = vld [vmem:[%s677 + $0x10] sm:$0xff]
    %v681 = vld [vmem:[%s677 + $0x18] sm:$0xff]
    %682 = vmatpush.msra.mxu0 %v296
    %683 = vmatpush.msra.mxu0 %v292
    %684 = vmatpush.msra.mxu0 %v288
    %685 = vmatpush.msra.mxu0 %v284
    %686 = vmatpush.msra.mxu0 %v280
    %687 = vmatpush.msra.mxu0 %v276
    %688 = vmatpush.msra.mxu0 %v272
    %689 = vmatpush.msra.mxu0 %v268
    %690 = vmatpush.msra.mxu0 %v264
    %691 = vmatpush.msra.mxu0 %v260
    %692 = vmatpush.msra.mxu0 %v256
    %693 = vmatpush.msra.mxu0 %v252
    %694 = vmatpush.msra.mxu0 %v248
    %695 = vmatpush.msra.mxu0 %v244
    %696 = vmatpush.msra.mxu0 %v240
    %697 = vmatpush.msra.mxu0 %v236
    %698 = vmatmul.f32.gmra.mxu0 %v521
    %v699 = vpop.f32.mrf.mxu0
    %v700 = vadd.f32 0.0, %v699
    %701 = vdwg.mxu0
    %702 = vmatpush.msra.mxu0 %v297
    %703 = vmatpush.msra.mxu0 %v293
    %704 = vmatpush.msra.mxu0 %v289
    %705 = vmatpush.msra.mxu0 %v285
    %706 = vmatpush.msra.mxu0 %v281
    %707 = vmatpush.msra.mxu0 %v277
    %708 = vmatpush.msra.mxu0 %v273
    %709 = vmatpush.msra.mxu0 %v269
    %710 = vmatpush.msra.mxu0 %v265
    %711 = vmatpush.msra.mxu0 %v261
    %712 = vmatpush.msra.mxu0 %v257
    %713 = vmatpush.msra.mxu0 %v253
    %714 = vmatpush.msra.mxu0 %v249
    %715 = vmatpush.msra.mxu0 %v245
    %716 = vmatpush.msra.mxu0 %v241
    %717 = vmatpush.msra.mxu0 %v237
    %718 = vmatmul.f32.gmra.mxu0 %v521
    %v719 = vpop.f32.mrf.mxu0
    %v720 = vadd.f32 0.0, %v719
    %721 = vdwg.mxu0
    %722 = vmatpush.msra.mxu0 %v298
    %723 = vmatpush.msra.mxu0 %v294
    %724 = vmatpush.msra.mxu0 %v290
    %725 = vmatpush.msra.mxu0 %v286
    %726 = vmatpush.msra.mxu0 %v282
    %727 = vmatpush.msra.mxu0 %v278
    %728 = vmatpush.msra.mxu0 %v274
    %729 = vmatpush.msra.mxu0 %v270
    %730 = vmatpush.msra.mxu0 %v266
    %731 = vmatpush.msra.mxu0 %v262
    %732 = vmatpush.msra.mxu0 %v258
    %733 = vmatpush.msra.mxu0 %v254
    %734 = vmatpush.msra.mxu0 %v250
    %735 = vmatpush.msra.mxu0 %v246
    %736 = vmatpush.msra.mxu0 %v242
    %737 = vmatpush.msra.mxu0 %v238
    %738 = vmatmul.f32.gmra.mxu0 %v521
    %v739 = vpop.f32.mrf.mxu0
    %v740 = vadd.f32 0.0, %v739
    %741 = vdwg.mxu0
    %742 = vmatpush.msra.mxu0 %v299
    %743 = vmatpush.msra.mxu0 %v295
    %744 = vmatpush.msra.mxu0 %v291
    %745 = vmatpush.msra.mxu0 %v287
    %746 = vmatpush.msra.mxu0 %v283
    %747 = vmatpush.msra.mxu0 %v279
    %748 = vmatpush.msra.mxu0 %v275
    %749 = vmatpush.msra.mxu0 %v271
    %750 = vmatpush.msra.mxu0 %v267
    %751 = vmatpush.msra.mxu0 %v263
    %752 = vmatpush.msra.mxu0 %v259
    %753 = vmatpush.msra.mxu0 %v255
    %754 = vmatpush.msra.mxu0 %v251
    %755 = vmatpush.msra.mxu0 %v247
    %756 = vmatpush.msra.mxu0 %v243
    %757 = vmatpush.msra.mxu0 %v239
    %758 = vmatmul.f32.gmra.mxu0 %v521
    %v759 = vpop.f32.mrf.mxu0
    %v760 = vadd.f32 0.0, %v759
    %761 = vdwg.mxu0
    %v762 = vadd.f32 %v678, %v700
    %v763 = vadd.f32 %v679, %v720
    %v764 = vadd.f32 %v680, %v740
    %v765 = vadd.f32 %v681, %v760
    %v766 = vxor.u32 %v762, 2147483648
    %v767 = vmul.f32 %v766, 1.442695
    %v768 = vpow.pop %v767
    %v769 = vadd.f32 %v768, 1.0
    %v770 = vrcp.pop %v769
    %v771 = vmul.f32 %v769, %v770
    %v772 = vsub.f32 1.0, %v771
    %v773 = vmul.f32 %v770, %v772
    %v774 = vadd.f32 %v770, %v773
    %vm775 = vweird.f32 %v769
    %vm776 = vweird.f32 %v770
    %vm777 = vmor %vm775, %vm776
    %v778 = vsel %vm777, %v770, %v774
    %v779 = vand.u32 2147483647, %v769
    %vm780 = vcmp.eq.f32.partialorder %v779, 8.507059e+37
    %v781 = vand.u32 %v769, 2147483648
    %v782 = vor.u32 1.1754944e-38, %v781
    %v783 = vsel %vm780, %v782, %v778
    %v784 = vmul.f32 1.0, %v783
    %v785 = vxor.u32 %v763, 2147483648
    %v786 = vmul.f32 %v785, 1.442695
    %v787 = vpow.pop %v786
    %v788 = vadd.f32 %v787, 1.0
    %v789 = vrcp.pop %v788
    %v790 = vmul.f32 %v788, %v789
    %v791 = vsub.f32 1.0, %v790
    %v792 = vmul.f32 %v789, %v791
    %v793 = vadd.f32 %v789, %v792
    %vm794 = vweird.f32 %v788
    %vm795 = vweird.f32 %v789
    %vm796 = vmor %vm794, %vm795
    %v797 = vsel %vm796, %v789, %v793
    %v798 = vand.u32 2147483647, %v788
    %vm799 = vcmp.eq.f32.partialorder %v798, 8.507059e+37
    %v800 = vand.u32 %v788, 2147483648
    %v801 = vor.u32 1.1754944e-38, %v800
    %v802 = vsel %vm799, %v801, %v797
    %v803 = vmul.f32 1.0, %v802
    %v804 = vtanh.pop %v764
    %v805 = vxor.u32 %v765, 2147483648
    %v806 = vmul.f32 %v805, 1.442695
    %v807 = vpow.pop %v806
    %v808 = vadd.f32 %v807, 1.0
    %v809 = vrcp.pop %v808
    %v810 = vmul.f32 %v808, %v809
    %v811 = vsub.f32 1.0, %v810
    %v812 = vmul.f32 %v809, %v811
    %v813 = vadd.f32 %v809, %v812
    %vm814 = vweird.f32 %v808
    %vm815 = vweird.f32 %v809
    %vm816 = vmor %vm814, %vm815
    %v817 = vsel %vm816, %v809, %v813
    %v818 = vand.u32 2147483647, %v808
    %vm819 = vcmp.eq.f32.partialorder %v818, 8.507059e+37
    %v820 = vand.u32 %v808, 2147483648
    %v821 = vor.u32 1.1754944e-38, %v820
    %v822 = vsel %vm819, %v821, %v817
    %v823 = vmul.f32 1.0, %v822
    %v824 = vmul.f32 %v803, %v519
    %v825 = vmul.f32 %v784, %v804
    %v826 = vadd.f32 %v824, %v825
    %v827 = vtanh.pop %v826
    %v828 = vmul.f32 %v823, %v827
    %s829 = scalar_lea.vmem %s5, 8
    %830 = vst [vmem:[%s829] sm:$0xff] %v828
    %s831 = scalar_lea.vmem [#allocation7], 192
    %v832 = vld [vmem:[%s831] sm:$0xff]
    %v833 = vld [vmem:[%s831 + $0x8] sm:$0xff]
    %v834 = vld [vmem:[%s831 + $0x10] sm:$0xff]
    %v835 = vld [vmem:[%s831 + $0x18] sm:$0xff]
    %836 = vmatpush.msra.mxu0 %v363
    %837 = vmatpush.msra.mxu0 %v359
    %838 = vmatpush.msra.mxu0 %v355
    %839 = vmatpush.msra.mxu0 %v351
    %840 = vmatpush.msra.mxu0 %v347
    %841 = vmatpush.msra.mxu0 %v343
    %842 = vmatpush.msra.mxu0 %v339
    %843 = vmatpush.msra.mxu0 %v335
    %844 = vmatpush.msra.mxu0 %v331
    %845 = vmatpush.msra.mxu0 %v327
    %846 = vmatpush.msra.mxu0 %v323
    %847 = vmatpush.msra.mxu0 %v319
    %848 = vmatpush.msra.mxu0 %v315
    %849 = vmatpush.msra.mxu0 %v311
    %850 = vmatpush.msra.mxu0 %v307
    %851 = vmatpush.msra.mxu0 %v303
    %852 = vmatmul.f32.gmra.mxu0 %v674
    %v853 = vpop.f32.mrf.mxu0
    %v854 = vadd.f32 0.0, %v853
    %855 = vdwg.mxu0
    %856 = vmatpush.msra.mxu0 %v364
    %857 = vmatpush.msra.mxu0 %v360
    %858 = vmatpush.msra.mxu0 %v356
    %859 = vmatpush.msra.mxu0 %v352
    %860 = vmatpush.msra.mxu0 %v348
    %861 = vmatpush.msra.mxu0 %v344
    %862 = vmatpush.msra.mxu0 %v340
    %863 = vmatpush.msra.mxu0 %v336
    %864 = vmatpush.msra.mxu0 %v332
    %865 = vmatpush.msra.mxu0 %v328
    %866 = vmatpush.msra.mxu0 %v324
    %867 = vmatpush.msra.mxu0 %v320
    %868 = vmatpush.msra.mxu0 %v316
    %869 = vmatpush.msra.mxu0 %v312
    %870 = vmatpush.msra.mxu0 %v308
    %871 = vmatpush.msra.mxu0 %v304
    %872 = vmatmul.f32.gmra.mxu0 %v674
    %v873 = vpop.f32.mrf.mxu0
    %v874 = vadd.f32 0.0, %v873
    %875 = vdwg.mxu0
    %876 = vmatpush.msra.mxu0 %v365
    %877 = vmatpush.msra.mxu0 %v361
    %878 = vmatpush.msra.mxu0 %v357
    %879 = vmatpush.msra.mxu0 %v353
    %880 = vmatpush.msra.mxu0 %v349
    %881 = vmatpush.msra.mxu0 %v345
    %882 = vmatpush.msra.mxu0 %v341
    %883 = vmatpush.msra.mxu0 %v337
    %884 = vmatpush.msra.mxu0 %v333
    %885 = vmatpush.msra.mxu0 %v329
    %886 = vmatpush.msra.mxu0 %v325
    %887 = vmatpush.msra.mxu0 %v321
    %888 = vmatpush.msra.mxu0 %v317
    %889 = vmatpush.msra.mxu0 %v313
    %890 = vmatpush.msra.mxu0 %v309
    %891 = vmatpush.msra.mxu0 %v305
    %892 = vmatmul.f32.gmra.mxu0 %v674
    %v893 = vpop.f32.mrf.mxu0
    %v894 = vadd.f32 0.0, %v893
    %895 = vdwg.mxu0
    %896 = vmatpush.msra.mxu0 %v366
    %897 = vmatpush.msra.mxu0 %v362
    %898 = vmatpush.msra.mxu0 %v358
    %899 = vmatpush.msra.mxu0 %v354
    %900 = vmatpush.msra.mxu0 %v350
    %901 = vmatpush.msra.mxu0 %v346
    %902 = vmatpush.msra.mxu0 %v342
    %903 = vmatpush.msra.mxu0 %v338
    %904 = vmatpush.msra.mxu0 %v334
    %905 = vmatpush.msra.mxu0 %v330
    %906 = vmatpush.msra.mxu0 %v326
    %907 = vmatpush.msra.mxu0 %v322
    %908 = vmatpush.msra.mxu0 %v318
    %909 = vmatpush.msra.mxu0 %v314
    %910 = vmatpush.msra.mxu0 %v310
    %911 = vmatpush.msra.mxu0 %v306
    %912 = vmatmul.f32.gmra.mxu0 %v674
    %v913 = vpop.f32.mrf.mxu0
    %v914 = vadd.f32 0.0, %v913
    %915 = vdwg.mxu0
    %v916 = vadd.f32 %v832, %v854
    %v917 = vadd.f32 %v833, %v874
    %v918 = vadd.f32 %v834, %v894
    %v919 = vadd.f32 %v835, %v914
    %v920 = vxor.u32 %v916, 2147483648
    %v921 = vmul.f32 %v920, 1.442695
    %v922 = vpow.pop %v921
    %v923 = vadd.f32 %v922, 1.0
    %v924 = vrcp.pop %v923
    %v925 = vmul.f32 %v923, %v924
    %v926 = vsub.f32 1.0, %v925
    %v927 = vmul.f32 %v924, %v926
    %v928 = vadd.f32 %v924, %v927
    %vm929 = vweird.f32 %v923
    %vm930 = vweird.f32 %v924
    %vm931 = vmor %vm929, %vm930
    %v932 = vsel %vm931, %v924, %v928
    %v933 = vand.u32 2147483647, %v923
    %vm934 = vcmp.eq.f32.partialorder %v933, 8.507059e+37
    %v935 = vand.u32 %v923, 2147483648
    %v936 = vor.u32 1.1754944e-38, %v935
    %v937 = vsel %vm934, %v936, %v932
    %v938 = vmul.f32 1.0, %v937
    %v939 = vxor.u32 %v917, 2147483648
    %v940 = vmul.f32 %v939, 1.442695
    %v941 = vpow.pop %v940
    %v942 = vadd.f32 %v941, 1.0
    %v943 = vrcp.pop %v942
    %v944 = vmul.f32 %v942, %v943
    %v945 = vsub.f32 1.0, %v944
    %v946 = vmul.f32 %v943, %v945
    %v947 = vadd.f32 %v943, %v946
    %vm948 = vweird.f32 %v942
    %vm949 = vweird.f32 %v943
    %vm950 = vmor %vm948, %vm949
    %v951 = vsel %vm950, %v943, %v947
    %v952 = vand.u32 2147483647, %v942
    %vm953 = vcmp.eq.f32.partialorder %v952, 8.507059e+37
    %v954 = vand.u32 %v942, 2147483648
    %v955 = vor.u32 1.1754944e-38, %v954
    %v956 = vsel %vm953, %v955, %v951
    %v957 = vmul.f32 1.0, %v956
    %v958 = vtanh.pop %v918
    %v959 = vxor.u32 %v919, 2147483648
    %v960 = vmul.f32 %v959, 1.442695
    %v961 = vpow.pop %v960
    %v962 = vadd.f32 %v961, 1.0
    %v963 = vrcp.pop %v962
    %v964 = vmul.f32 %v962, %v963
    %v965 = vsub.f32 1.0, %v964
    %v966 = vmul.f32 %v963, %v965
    %v967 = vadd.f32 %v963, %v966
    %vm968 = vweird.f32 %v962
    %vm969 = vweird.f32 %v963
    %vm970 = vmor %vm968, %vm969
    %v971 = vsel %vm970, %v963, %v967
    %v972 = vand.u32 2147483647, %v962
    %vm973 = vcmp.eq.f32.partialorder %v972, 8.507059e+37
    %v974 = vand.u32 %v962, 2147483648
    %v975 = vor.u32 1.1754944e-38, %v974
    %v976 = vsel %vm973, %v975, %v971
    %v977 = vmul.f32 1.0, %v976
    %v978 = vmul.f32 %v957, %v672
    %v979 = vmul.f32 %v938, %v958
    %v980 = vadd.f32 %v978, %v979
    %v981 = vtanh.pop %v980
    %v982 = vmul.f32 %v977, %v981
    %s983 = scalar_lea.vmem %s203, 48
    %984 = vst [vmem:[%s983] sm:$0xff] %v982
    %s985 = scalar_lea.vmem [#allocation6], 64
    %v986 = vld [vmem:[%s985] sm:$0xff]
    %v987 = vld [vmem:[%s985 + $0x8] sm:$0xff]
    %v988 = vld [vmem:[%s985 + $0x10] sm:$0xff]
    %v989 = vld [vmem:[%s985 + $0x18] sm:$0xff]
    %990 = vmatpush.msra.mxu0 %v296
    %991 = vmatpush.msra.mxu0 %v292
    %992 = vmatpush.msra.mxu0 %v288
    %993 = vmatpush.msra.mxu0 %v284
    %994 = vmatpush.msra.mxu0 %v280
    %995 = vmatpush.msra.mxu0 %v276
    %996 = vmatpush.msra.mxu0 %v272
    %997 = vmatpush.msra.mxu0 %v268
    %998 = vmatpush.msra.mxu0 %v264
    %999 = vmatpush.msra.mxu0 %v260
    %1000 = vmatpush.msra.mxu0 %v256
    %1001 = vmatpush.msra.mxu0 %v252
    %1002 = vmatpush.msra.mxu0 %v248
    %1003 = vmatpush.msra.mxu0 %v244
    %1004 = vmatpush.msra.mxu0 %v240
    %1005 = vmatpush.msra.mxu0 %v236
    %1006 = vmatmul.f32.gmra.mxu0 %v828
    %v1007 = vpop.f32.mrf.mxu0
    %v1008 = vadd.f32 0.0, %v1007
    %1009 = vdwg.mxu0
    %1010 = vmatpush.msra.mxu0 %v297
    %1011 = vmatpush.msra.mxu0 %v293
    %1012 = vmatpush.msra.mxu0 %v289
    %1013 = vmatpush.msra.mxu0 %v285
    %1014 = vmatpush.msra.mxu0 %v281
    %1015 = vmatpush.msra.mxu0 %v277
    %1016 = vmatpush.msra.mxu0 %v273
    %1017 = vmatpush.msra.mxu0 %v269
    %1018 = vmatpush.msra.mxu0 %v265
    %1019 = vmatpush.msra.mxu0 %v261
    %1020 = vmatpush.msra.mxu0 %v257
    %1021 = vmatpush.msra.mxu0 %v253
    %1022 = vmatpush.msra.mxu0 %v249
    %1023 = vmatpush.msra.mxu0 %v245
    %1024 = vmatpush.msra.mxu0 %v241
    %1025 = vmatpush.msra.mxu0 %v237
    %1026 = vmatmul.f32.gmra.mxu0 %v828
    %v1027 = vpop.f32.mrf.mxu0
    %v1028 = vadd.f32 0.0, %v1027
    %1029 = vdwg.mxu0
    %1030 = vmatpush.msra.mxu0 %v298
    %1031 = vmatpush.msra.mxu0 %v294
    %1032 = vmatpush.msra.mxu0 %v290
    %1033 = vmatpush.msra.mxu0 %v286
    %1034 = vmatpush.msra.mxu0 %v282
    %1035 = vmatpush.msra.mxu0 %v278
    %1036 = vmatpush.msra.mxu0 %v274
    %1037 = vmatpush.msra.mxu0 %v270
    %1038 = vmatpush.msra.mxu0 %v266
    %1039 = vmatpush.msra.mxu0 %v262
    %1040 = vmatpush.msra.mxu0 %v258
    %1041 = vmatpush.msra.mxu0 %v254
    %1042 = vmatpush.msra.mxu0 %v250
    %1043 = vmatpush.msra.mxu0 %v246
    %1044 = vmatpush.msra.mxu0 %v242
    %1045 = vmatpush.msra.mxu0 %v238
    %1046 = vmatmul.f32.gmra.mxu0 %v828
    %v1047 = vpop.f32.mrf.mxu0
    %v1048 = vadd.f32 0.0, %v1047
    %1049 = vdwg.mxu0
    %1050 = vmatpush.msra.mxu0 %v299
    %1051 = vmatpush.msra.mxu0 %v295
    %1052 = vmatpush.msra.mxu0 %v291
    %1053 = vmatpush.msra.mxu0 %v287
    %1054 = vmatpush.msra.mxu0 %v283
    %1055 = vmatpush.msra.mxu0 %v279
    %1056 = vmatpush.msra.mxu0 %v275
    %1057 = vmatpush.msra.mxu0 %v271
    %1058 = vmatpush.msra.mxu0 %v267
    %1059 = vmatpush.msra.mxu0 %v263
    %1060 = vmatpush.msra.mxu0 %v259
    %1061 = vmatpush.msra.mxu0 %v255
    %1062 = vmatpush.msra.mxu0 %v251
    %1063 = vmatpush.msra.mxu0 %v247
    %1064 = vmatpush.msra.mxu0 %v243
    %1065 = vmatpush.msra.mxu0 %v239
    %1066 = vmatmul.f32.gmra.mxu0 %v828
    %v1067 = vpop.f32.mrf.mxu0
    %v1068 = vadd.f32 0.0, %v1067
    %1069 = vdwg.mxu0
    %v1070 = vadd.f32 %v986, %v1008
    %v1071 = vadd.f32 %v987, %v1028
    %v1072 = vadd.f32 %v988, %v1048
    %v1073 = vadd.f32 %v989, %v1068
    %v1074 = vxor.u32 %v1070, 2147483648
    %v1075 = vmul.f32 %v1074, 1.442695
    %v1076 = vpow.pop %v1075
    %v1077 = vadd.f32 %v1076, 1.0
    %v1078 = vrcp.pop %v1077
    %v1079 = vmul.f32 %v1077, %v1078
    %v1080 = vsub.f32 1.0, %v1079
    %v1081 = vmul.f32 %v1078, %v1080
    %v1082 = vadd.f32 %v1078, %v1081
    %vm1083 = vweird.f32 %v1077
    %vm1084 = vweird.f32 %v1078
    %vm1085 = vmor %vm1083, %vm1084
    %v1086 = vsel %vm1085, %v1078, %v1082
    %v1087 = vand.u32 2147483647, %v1077
    %vm1088 = vcmp.eq.f32.partialorder %v1087, 8.507059e+37
    %v1089 = vand.u32 %v1077, 2147483648
    %v1090 = vor.u32 1.1754944e-38, %v1089
    %v1091 = vsel %vm1088, %v1090, %v1086
    %v1092 = vmul.f32 1.0, %v1091
    %v1093 = vxor.u32 %v1071, 2147483648
    %v1094 = vmul.f32 %v1093, 1.442695
    %v1095 = vpow.pop %v1094
    %v1096 = vadd.f32 %v1095, 1.0
    %v1097 = vrcp.pop %v1096
    %v1098 = vmul.f32 %v1096, %v1097
    %v1099 = vsub.f32 1.0, %v1098
    %v1100 = vmul.f32 %v1097, %v1099
    %v1101 = vadd.f32 %v1097, %v1100
    %vm1102 = vweird.f32 %v1096
    %vm1103 = vweird.f32 %v1097
    %vm1104 = vmor %vm1102, %vm1103
    %v1105 = vsel %vm1104, %v1097, %v1101
    %v1106 = vand.u32 2147483647, %v1096
    %vm1107 = vcmp.eq.f32.partialorder %v1106, 8.507059e+37
    %v1108 = vand.u32 %v1096, 2147483648
    %v1109 = vor.u32 1.1754944e-38, %v1108
    %v1110 = vsel %vm1107, %v1109, %v1105
    %v1111 = vmul.f32 1.0, %v1110
    %v1112 = vtanh.pop %v1072
    %v1113 = vxor.u32 %v1073, 2147483648
    %v1114 = vmul.f32 %v1113, 1.442695
    %v1115 = vpow.pop %v1114
    %v1116 = vadd.f32 %v1115, 1.0
    %v1117 = vrcp.pop %v1116
    %v1118 = vmul.f32 %v1116, %v1117
    %v1119 = vsub.f32 1.0, %v1118
    %v1120 = vmul.f32 %v1117, %v1119
    %v1121 = vadd.f32 %v1117, %v1120
    %vm1122 = vweird.f32 %v1116
    %vm1123 = vweird.f32 %v1117
    %vm1124 = vmor %vm1122, %vm1123
    %v1125 = vsel %vm1124, %v1117, %v1121
    %v1126 = vand.u32 2147483647, %v1116
    %vm1127 = vcmp.eq.f32.partialorder %v1126, 8.507059e+37
    %v1128 = vand.u32 %v1116, 2147483648
    %v1129 = vor.u32 1.1754944e-38, %v1128
    %v1130 = vsel %vm1127, %v1129, %v1125
    %v1131 = vmul.f32 1.0, %v1130
    %v1132 = vmul.f32 %v1111, %v826
    %v1133 = vmul.f32 %v1092, %v1112
    %v1134 = vadd.f32 %v1132, %v1133
    %v1135 = vtanh.pop %v1134
    %v1136 = vmul.f32 %v1131, %v1135
    %s1137 = scalar_lea.vmem %s5, 16
    %1138 = vst [vmem:[%s1137] sm:$0xff] %v1136
    %s1139 = scalar_lea.vmem [#allocation7], 160
    %v1140 = vld [vmem:[%s1139] sm:$0xff]
    %v1141 = vld [vmem:[%s1139 + $0x8] sm:$0xff]
    %v1142 = vld [vmem:[%s1139 + $0x10] sm:$0xff]
    %v1143 = vld [vmem:[%s1139 + $0x18] sm:$0xff]
    %1144 = vmatpush.msra.mxu0 %v363
    %1145 = vmatpush.msra.mxu0 %v359
    %1146 = vmatpush.msra.mxu0 %v355
    %1147 = vmatpush.msra.mxu0 %v351
    %1148 = vmatpush.msra.mxu0 %v347
    %1149 = vmatpush.msra.mxu0 %v343
    %1150 = vmatpush.msra.mxu0 %v339
    %1151 = vmatpush.msra.mxu0 %v335
    %1152 = vmatpush.msra.mxu0 %v331
    %1153 = vmatpush.msra.mxu0 %v327
    %1154 = vmatpush.msra.mxu0 %v323
    %1155 = vmatpush.msra.mxu0 %v319
    %1156 = vmatpush.msra.mxu0 %v315
    %1157 = vmatpush.msra.mxu0 %v311
    %1158 = vmatpush.msra.mxu0 %v307
    %1159 = vmatpush.msra.mxu0 %v303
    %1160 = vmatmul.f32.gmra.mxu0 %v982
    %v1161 = vpop.f32.mrf.mxu0
    %v1162 = vadd.f32 0.0, %v1161
    %1163 = vdwg.mxu0
    %1164 = vmatpush.msra.mxu0 %v364
    %1165 = vmatpush.msra.mxu0 %v360
    %1166 = vmatpush.msra.mxu0 %v356
    %1167 = vmatpush.msra.mxu0 %v352
    %1168 = vmatpush.msra.mxu0 %v348
    %1169 = vmatpush.msra.mxu0 %v344
    %1170 = vmatpush.msra.mxu0 %v340
    %1171 = vmatpush.msra.mxu0 %v336
    %1172 = vmatpush.msra.mxu0 %v332
    %1173 = vmatpush.msra.mxu0 %v328
    %1174 = vmatpush.msra.mxu0 %v324
    %1175 = vmatpush.msra.mxu0 %v320
    %1176 = vmatpush.msra.mxu0 %v316
    %1177 = vmatpush.msra.mxu0 %v312
    %1178 = vmatpush.msra.mxu0 %v308
    %1179 = vmatpush.msra.mxu0 %v304
    %1180 = vmatmul.f32.gmra.mxu0 %v982
    %v1181 = vpop.f32.mrf.mxu0
    %v1182 = vadd.f32 0.0, %v1181
    %1183 = vdwg.mxu0
    %1184 = vmatpush.msra.mxu0 %v365
    %1185 = vmatpush.msra.mxu0 %v361
    %1186 = vmatpush.msra.mxu0 %v357
    %1187 = vmatpush.msra.mxu0 %v353
    %1188 = vmatpush.msra.mxu0 %v349
    %1189 = vmatpush.msra.mxu0 %v345
    %1190 = vmatpush.msra.mxu0 %v341
    %1191 = vmatpush.msra.mxu0 %v337
    %1192 = vmatpush.msra.mxu0 %v333
    %1193 = vmatpush.msra.mxu0 %v329
    %1194 = vmatpush.msra.mxu0 %v325
    %1195 = vmatpush.msra.mxu0 %v321
    %1196 = vmatpush.msra.mxu0 %v317
    %1197 = vmatpush.msra.mxu0 %v313
    %1198 = vmatpush.msra.mxu0 %v309
    %1199 = vmatpush.msra.mxu0 %v305
    %1200 = vmatmul.f32.gmra.mxu0 %v982
    %v1201 = vpop.f32.mrf.mxu0
    %v1202 = vadd.f32 0.0, %v1201
    %1203 = vdwg.mxu0
    %1204 = vmatpush.msra.mxu0 %v366
    %1205 = vmatpush.msra.mxu0 %v362
    %1206 = vmatpush.msra.mxu0 %v358
    %1207 = vmatpush.msra.mxu0 %v354
    %1208 = vmatpush.msra.mxu0 %v350
    %1209 = vmatpush.msra.mxu0 %v346
    %1210 = vmatpush.msra.mxu0 %v342
    %1211 = vmatpush.msra.mxu0 %v338
    %1212 = vmatpush.msra.mxu0 %v334
    %1213 = vmatpush.msra.mxu0 %v330
    %1214 = vmatpush.msra.mxu0 %v326
    %1215 = vmatpush.msra.mxu0 %v322
    %1216 = vmatpush.msra.mxu0 %v318
    %1217 = vmatpush.msra.mxu0 %v314
    %1218 = vmatpush.msra.mxu0 %v310
    %1219 = vmatpush.msra.mxu0 %v306
    %1220 = vmatmul.f32.gmra.mxu0 %v982
    %v1221 = vpop.f32.mrf.mxu0
    %v1222 = vadd.f32 0.0, %v1221
    %1223 = vdwg.mxu0
    %v1224 = vadd.f32 %v1140, %v1162
    %v1225 = vadd.f32 %v1141, %v1182
    %v1226 = vadd.f32 %v1142, %v1202
    %v1227 = vadd.f32 %v1143, %v1222
    %v1228 = vxor.u32 %v1224, 2147483648
    %v1229 = vmul.f32 %v1228, 1.442695
    %v1230 = vpow.pop %v1229
    %v1231 = vadd.f32 %v1230, 1.0
    %v1232 = vrcp.pop %v1231
    %v1233 = vmul.f32 %v1231, %v1232
    %v1234 = vsub.f32 1.0, %v1233
    %v1235 = vmul.f32 %v1232, %v1234
    %v1236 = vadd.f32 %v1232, %v1235
    %vm1237 = vweird.f32 %v1231
    %vm1238 = vweird.f32 %v1232
    %vm1239 = vmor %vm1237, %vm1238
    %v1240 = vsel %vm1239, %v1232, %v1236
    %v1241 = vand.u32 2147483647, %v1231
    %vm1242 = vcmp.eq.f32.partialorder %v1241, 8.507059e+37
    %v1243 = vand.u32 %v1231, 2147483648
    %v1244 = vor.u32 1.1754944e-38, %v1243
    %v1245 = vsel %vm1242, %v1244, %v1240
    %v1246 = vmul.f32 1.0, %v1245
    %v1247 = vxor.u32 %v1225, 2147483648
    %v1248 = vmul.f32 %v1247, 1.442695
    %v1249 = vpow.pop %v1248
    %v1250 = vadd.f32 %v1249, 1.0
    %v1251 = vrcp.pop %v1250
    %v1252 = vmul.f32 %v1250, %v1251
    %v1253 = vsub.f32 1.0, %v1252
    %v1254 = vmul.f32 %v1251, %v1253
    %v1255 = vadd.f32 %v1251, %v1254
    %vm1256 = vweird.f32 %v1250
    %vm1257 = vweird.f32 %v1251
    %vm1258 = vmor %vm1256, %vm1257
    %v1259 = vsel %vm1258, %v1251, %v1255
    %v1260 = vand.u32 2147483647, %v1250
    %vm1261 = vcmp.eq.f32.partialorder %v1260, 8.507059e+37
    %v1262 = vand.u32 %v1250, 2147483648
    %v1263 = vor.u32 1.1754944e-38, %v1262
    %v1264 = vsel %vm1261, %v1263, %v1259
    %v1265 = vmul.f32 1.0, %v1264
    %v1266 = vtanh.pop %v1226
    %v1267 = vxor.u32 %v1227, 2147483648
    %v1268 = vmul.f32 %v1267, 1.442695
    %v1269 = vpow.pop %v1268
    %v1270 = vadd.f32 %v1269, 1.0
    %v1271 = vrcp.pop %v1270
    %v1272 = vmul.f32 %v1270, %v1271
    %v1273 = vsub.f32 1.0, %v1272
    %v1274 = vmul.f32 %v1271, %v1273
    %v1275 = vadd.f32 %v1271, %v1274
    %vm1276 = vweird.f32 %v1270
    %vm1277 = vweird.f32 %v1271
    %vm1278 = vmor %vm1276, %vm1277
    %v1279 = vsel %vm1278, %v1271, %v1275
    %v1280 = vand.u32 2147483647, %v1270
    %vm1281 = vcmp.eq.f32.partialorder %v1280, 8.507059e+37
    %v1282 = vand.u32 %v1270, 2147483648
    %v1283 = vor.u32 1.1754944e-38, %v1282
    %v1284 = vsel %vm1281, %v1283, %v1279
    %v1285 = vmul.f32 1.0, %v1284
    %v1286 = vmul.f32 %v1265, %v980
    %v1287 = vmul.f32 %v1246, %v1266
    %v1288 = vadd.f32 %v1286, %v1287
    %v1289 = vtanh.pop %v1288
    %v1290 = vmul.f32 %v1285, %v1289
    %s1291 = scalar_lea.vmem %s203, 40
    %1292 = vst [vmem:[%s1291] sm:$0xff] %v1290
    %s1293 = scalar_lea.vmem [#allocation6], 96
    %v1294 = vld [vmem:[%s1293] sm:$0xff]
    %v1295 = vld [vmem:[%s1293 + $0x8] sm:$0xff]
    %v1296 = vld [vmem:[%s1293 + $0x10] sm:$0xff]
    %v1297 = vld [vmem:[%s1293 + $0x18] sm:$0xff]
    %1298 = vmatpush.msra.mxu0 %v296
    %1299 = vmatpush.msra.mxu0 %v292
    %1300 = vmatpush.msra.mxu0 %v288
    %1301 = vmatpush.msra.mxu0 %v284
    %1302 = vmatpush.msra.mxu0 %v280
    %1303 = vmatpush.msra.mxu0 %v276
    %1304 = vmatpush.msra.mxu0 %v272
    %1305 = vmatpush.msra.mxu0 %v268
    %1306 = vmatpush.msra.mxu0 %v264
    %1307 = vmatpush.msra.mxu0 %v260
    %1308 = vmatpush.msra.mxu0 %v256
    %1309 = vmatpush.msra.mxu0 %v252
    %1310 = vmatpush.msra.mxu0 %v248
    %1311 = vmatpush.msra.mxu0 %v244
    %1312 = vmatpush.msra.mxu0 %v240
    %1313 = vmatpush.msra.mxu0 %v236
    %1314 = vmatmul.f32.gmra.mxu0 %v1136
    %v1315 = vpop.f32.mrf.mxu0
    %v1316 = vadd.f32 0.0, %v1315
    %1317 = vdwg.mxu0
    %1318 = vmatpush.msra.mxu0 %v297
    %1319 = vmatpush.msra.mxu0 %v293
    %1320 = vmatpush.msra.mxu0 %v289
    %1321 = vmatpush.msra.mxu0 %v285
    %1322 = vmatpush.msra.mxu0 %v281
    %1323 = vmatpush.msra.mxu0 %v277
    %1324 = vmatpush.msra.mxu0 %v273
    %1325 = vmatpush.msra.mxu0 %v269
    %1326 = vmatpush.msra.mxu0 %v265
    %1327 = vmatpush.msra.mxu0 %v261
    %1328 = vmatpush.msra.mxu0 %v257
    %1329 = vmatpush.msra.mxu0 %v253
    %1330 = vmatpush.msra.mxu0 %v249
    %1331 = vmatpush.msra.mxu0 %v245
    %1332 = vmatpush.msra.mxu0 %v241
    %1333 = vmatpush.msra.mxu0 %v237
    %1334 = vmatmul.f32.gmra.mxu0 %v1136
    %v1335 = vpop.f32.mrf.mxu0
    %v1336 = vadd.f32 0.0, %v1335
    %1337 = vdwg.mxu0
    %1338 = vmatpush.msra.mxu0 %v298
    %1339 = vmatpush.msra.mxu0 %v294
    %1340 = vmatpush.msra.mxu0 %v290
    %1341 = vmatpush.msra.mxu0 %v286
    %1342 = vmatpush.msra.mxu0 %v282
    %1343 = vmatpush.msra.mxu0 %v278
    %1344 = vmatpush.msra.mxu0 %v274
    %1345 = vmatpush.msra.mxu0 %v270
    %1346 = vmatpush.msra.mxu0 %v266
    %1347 = vmatpush.msra.mxu0 %v262
    %1348 = vmatpush.msra.mxu0 %v258
    %1349 = vmatpush.msra.mxu0 %v254
    %1350 = vmatpush.msra.mxu0 %v250
    %1351 = vmatpush.msra.mxu0 %v246
    %1352 = vmatpush.msra.mxu0 %v242
    %1353 = vmatpush.msra.mxu0 %v238
    %1354 = vmatmul.f32.gmra.mxu0 %v1136
    %v1355 = vpop.f32.mrf.mxu0
    %v1356 = vadd.f32 0.0, %v1355
    %1357 = vdwg.mxu0
    %1358 = vmatpush.msra.mxu0 %v299
    %1359 = vmatpush.msra.mxu0 %v295
    %1360 = vmatpush.msra.mxu0 %v291
    %1361 = vmatpush.msra.mxu0 %v287
    %1362 = vmatpush.msra.mxu0 %v283
    %1363 = vmatpush.msra.mxu0 %v279
    %1364 = vmatpush.msra.mxu0 %v275
    %1365 = vmatpush.msra.mxu0 %v271
    %1366 = vmatpush.msra.mxu0 %v267
    %1367 = vmatpush.msra.mxu0 %v263
    %1368 = vmatpush.msra.mxu0 %v259
    %1369 = vmatpush.msra.mxu0 %v255
    %1370 = vmatpush.msra.mxu0 %v251
    %1371 = vmatpush.msra.mxu0 %v247
    %1372 = vmatpush.msra.mxu0 %v243
    %1373 = vmatpush.msra.mxu0 %v239
    %1374 = vmatmul.f32.gmra.mxu0 %v1136
    %v1375 = vpop.f32.mrf.mxu0
    %v1376 = vadd.f32 0.0, %v1375
    %1377 = vdwg.mxu0
    %v1378 = vadd.f32 %v1294, %v1316
    %v1379 = vadd.f32 %v1295, %v1336
    %v1380 = vadd.f32 %v1296, %v1356
    %v1381 = vadd.f32 %v1297, %v1376
    %v1382 = vxor.u32 %v1378, 2147483648
    %v1383 = vmul.f32 %v1382, 1.442695
    %v1384 = vpow.pop %v1383
    %v1385 = vadd.f32 %v1384, 1.0
    %v1386 = vrcp.pop %v1385
    %v1387 = vmul.f32 %v1385, %v1386
    %v1388 = vsub.f32 1.0, %v1387
    %v1389 = vmul.f32 %v1386, %v1388
    %v1390 = vadd.f32 %v1386, %v1389
    %vm1391 = vweird.f32 %v1385
    %vm1392 = vweird.f32 %v1386
    %vm1393 = vmor %vm1391, %vm1392
    %v1394 = vsel %vm1393, %v1386, %v1390
    %v1395 = vand.u32 2147483647, %v1385
    %vm1396 = vcmp.eq.f32.partialorder %v1395, 8.507059e+37
    %v1397 = vand.u32 %v1385, 2147483648
    %v1398 = vor.u32 1.1754944e-38, %v1397
    %v1399 = vsel %vm1396, %v1398, %v1394
    %v1400 = vmul.f32 1.0, %v1399
    %v1401 = vxor.u32 %v1379, 2147483648
    %v1402 = vmul.f32 %v1401, 1.442695
    %v1403 = vpow.pop %v1402
    %v1404 = vadd.f32 %v1403, 1.0
    %v1405 = vrcp.pop %v1404
    %v1406 = vmul.f32 %v1404, %v1405
    %v1407 = vsub.f32 1.0, %v1406
    %v1408 = vmul.f32 %v1405, %v1407
    %v1409 = vadd.f32 %v1405, %v1408
    %vm1410 = vweird.f32 %v1404
    %vm1411 = vweird.f32 %v1405
    %vm1412 = vmor %vm1410, %vm1411
    %v1413 = vsel %vm1412, %v1405, %v1409
    %v1414 = vand.u32 2147483647, %v1404
    %vm1415 = vcmp.eq.f32.partialorder %v1414, 8.507059e+37
    %v1416 = vand.u32 %v1404, 2147483648
    %v1417 = vor.u32 1.1754944e-38, %v1416
    %v1418 = vsel %vm1415, %v1417, %v1413
    %v1419 = vmul.f32 1.0, %v1418
    %v1420 = vtanh.pop %v1380
    %v1421 = vxor.u32 %v1381, 2147483648
    %v1422 = vmul.f32 %v1421, 1.442695
    %v1423 = vpow.pop %v1422
    %v1424 = vadd.f32 %v1423, 1.0
    %v1425 = vrcp.pop %v1424
    %v1426 = vmul.f32 %v1424, %v1425
    %v1427 = vsub.f32 1.0, %v1426
    %v1428 = vmul.f32 %v1425, %v1427
    %v1429 = vadd.f32 %v1425, %v1428
    %vm1430 = vweird.f32 %v1424
    %vm1431 = vweird.f32 %v1425
    %vm1432 = vmor %vm1430, %vm1431
    %v1433 = vsel %vm1432, %v1425, %v1429
    %v1434 = vand.u32 2147483647, %v1424
    %vm1435 = vcmp.eq.f32.partialorder %v1434, 8.507059e+37
    %v1436 = vand.u32 %v1424, 2147483648
    %v1437 = vor.u32 1.1754944e-38, %v1436
    %v1438 = vsel %vm1435, %v1437, %v1433
    %v1439 = vmul.f32 1.0, %v1438
    %v1440 = vmul.f32 %v1419, %v1134
    %v1441 = vmul.f32 %v1400, %v1420
    %v1442 = vadd.f32 %v1440, %v1441
    %v1443 = vtanh.pop %v1442
    %v1444 = vmul.f32 %v1439, %v1443
    %s1445 = scalar_lea.vmem %s5, 24
    %1446 = vst [vmem:[%s1445] sm:$0xff] %v1444
    %s1447 = scalar_lea.vmem [#allocation7], 128
    %v1448 = vld [vmem:[%s1447] sm:$0xff]
    %v1449 = vld [vmem:[%s1447 + $0x8] sm:$0xff]
    %v1450 = vld [vmem:[%s1447 + $0x10] sm:$0xff]
    %v1451 = vld [vmem:[%s1447 + $0x18] sm:$0xff]
    %1452 = vmatpush.msra.mxu0 %v363
    %1453 = vmatpush.msra.mxu0 %v359
    %1454 = vmatpush.msra.mxu0 %v355
    %1455 = vmatpush.msra.mxu0 %v351
    %1456 = vmatpush.msra.mxu0 %v347
    %1457 = vmatpush.msra.mxu0 %v343
    %1458 = vmatpush.msra.mxu0 %v339
    %1459 = vmatpush.msra.mxu0 %v335
    %1460 = vmatpush.msra.mxu0 %v331
    %1461 = vmatpush.msra.mxu0 %v327
    %1462 = vmatpush.msra.mxu0 %v323
    %1463 = vmatpush.msra.mxu0 %v319
    %1464 = vmatpush.msra.mxu0 %v315
    %1465 = vmatpush.msra.mxu0 %v311
    %1466 = vmatpush.msra.mxu0 %v307
    %1467 = vmatpush.msra.mxu0 %v303
    %1468 = vmatmul.f32.gmra.mxu0 %v1290
    %v1469 = vpop.f32.mrf.mxu0
    %v1470 = vadd.f32 0.0, %v1469
    %1471 = vdwg.mxu0
    %1472 = vmatpush.msra.mxu0 %v364
    %1473 = vmatpush.msra.mxu0 %v360
    %1474 = vmatpush.msra.mxu0 %v356
    %1475 = vmatpush.msra.mxu0 %v352
    %1476 = vmatpush.msra.mxu0 %v348
    %1477 = vmatpush.msra.mxu0 %v344
    %1478 = vmatpush.msra.mxu0 %v340
    %1479 = vmatpush.msra.mxu0 %v336
    %1480 = vmatpush.msra.mxu0 %v332
    %1481 = vmatpush.msra.mxu0 %v328
    %1482 = vmatpush.msra.mxu0 %v324
    %1483 = vmatpush.msra.mxu0 %v320
    %1484 = vmatpush.msra.mxu0 %v316
    %1485 = vmatpush.msra.mxu0 %v312
    %1486 = vmatpush.msra.mxu0 %v308
    %1487 = vmatpush.msra.mxu0 %v304
    %1488 = vmatmul.f32.gmra.mxu0 %v1290
    %v1489 = vpop.f32.mrf.mxu0
    %v1490 = vadd.f32 0.0, %v1489
    %1491 = vdwg.mxu0
    %1492 = vmatpush.msra.mxu0 %v365
    %1493 = vmatpush.msra.mxu0 %v361
    %1494 = vmatpush.msra.mxu0 %v357
    %1495 = vmatpush.msra.mxu0 %v353
    %1496 = vmatpush.msra.mxu0 %v349
    %1497 = vmatpush.msra.mxu0 %v345
    %1498 = vmatpush.msra.mxu0 %v341
    %1499 = vmatpush.msra.mxu0 %v337
    %1500 = vmatpush.msra.mxu0 %v333
    %1501 = vmatpush.msra.mxu0 %v329
    %1502 = vmatpush.msra.mxu0 %v325
    %1503 = vmatpush.msra.mxu0 %v321
    %1504 = vmatpush.msra.mxu0 %v317
    %1505 = vmatpush.msra.mxu0 %v313
    %1506 = vmatpush.msra.mxu0 %v309
    %1507 = vmatpush.msra.mxu0 %v305
    %1508 = vmatmul.f32.gmra.mxu0 %v1290
    %v1509 = vpop.f32.mrf.mxu0
    %v1510 = vadd.f32 0.0, %v1509
    %1511 = vdwg.mxu0
    %1512 = vmatpush.msra.mxu0 %v366
    %1513 = vmatpush.msra.mxu0 %v362
    %1514 = vmatpush.msra.mxu0 %v358
    %1515 = vmatpush.msra.mxu0 %v354
    %1516 = vmatpush.msra.mxu0 %v350
    %1517 = vmatpush.msra.mxu0 %v346
    %1518 = vmatpush.msra.mxu0 %v342
    %1519 = vmatpush.msra.mxu0 %v338
    %1520 = vmatpush.msra.mxu0 %v334
    %1521 = vmatpush.msra.mxu0 %v330
    %1522 = vmatpush.msra.mxu0 %v326
    %1523 = vmatpush.msra.mxu0 %v322
    %1524 = vmatpush.msra.mxu0 %v318
    %1525 = vmatpush.msra.mxu0 %v314
    %1526 = vmatpush.msra.mxu0 %v310
    %1527 = vmatpush.msra.mxu0 %v306
    %1528 = vmatmul.f32.gmra.mxu0 %v1290
    %v1529 = vpop.f32.mrf.mxu0
    %v1530 = vadd.f32 0.0, %v1529
    %1531 = vdwg.mxu0
    %v1532 = vadd.f32 %v1448, %v1470
    %v1533 = vadd.f32 %v1449, %v1490
    %v1534 = vadd.f32 %v1450, %v1510
    %v1535 = vadd.f32 %v1451, %v1530
    %v1536 = vxor.u32 %v1532, 2147483648
    %v1537 = vmul.f32 %v1536, 1.442695
    %v1538 = vpow.pop %v1537
    %v1539 = vadd.f32 %v1538, 1.0
    %v1540 = vrcp.pop %v1539
    %v1541 = vmul.f32 %v1539, %v1540
    %v1542 = vsub.f32 1.0, %v1541
    %v1543 = vmul.f32 %v1540, %v1542
    %v1544 = vadd.f32 %v1540, %v1543
    %vm1545 = vweird.f32 %v1539
    %vm1546 = vweird.f32 %v1540
    %vm1547 = vmor %vm1545, %vm1546
    %v1548 = vsel %vm1547, %v1540, %v1544
    %v1549 = vand.u32 2147483647, %v1539
    %vm1550 = vcmp.eq.f32.partialorder %v1549, 8.507059e+37
    %v1551 = vand.u32 %v1539, 2147483648
    %v1552 = vor.u32 1.1754944e-38, %v1551
    %v1553 = vsel %vm1550, %v1552, %v1548
    %v1554 = vmul.f32 1.0, %v1553
    %v1555 = vxor.u32 %v1533, 2147483648
    %v1556 = vmul.f32 %v1555, 1.442695
    %v1557 = vpow.pop %v1556
    %v1558 = vadd.f32 %v1557, 1.0
    %v1559 = vrcp.pop %v1558
    %v1560 = vmul.f32 %v1558, %v1559
    %v1561 = vsub.f32 1.0, %v1560
    %v1562 = vmul.f32 %v1559, %v1561
    %v1563 = vadd.f32 %v1559, %v1562
    %vm1564 = vweird.f32 %v1558
    %vm1565 = vweird.f32 %v1559
    %vm1566 = vmor %vm1564, %vm1565
    %v1567 = vsel %vm1566, %v1559, %v1563
    %v1568 = vand.u32 2147483647, %v1558
    %vm1569 = vcmp.eq.f32.partialorder %v1568, 8.507059e+37
    %v1570 = vand.u32 %v1558, 2147483648
    %v1571 = vor.u32 1.1754944e-38, %v1570
    %v1572 = vsel %vm1569, %v1571, %v1567
    %v1573 = vmul.f32 1.0, %v1572
    %v1574 = vtanh.pop %v1534
    %v1575 = vxor.u32 %v1535, 2147483648
    %v1576 = vmul.f32 %v1575, 1.442695
    %v1577 = vpow.pop %v1576
    %v1578 = vadd.f32 %v1577, 1.0
    %v1579 = vrcp.pop %v1578
    %v1580 = vmul.f32 %v1578, %v1579
    %v1581 = vsub.f32 1.0, %v1580
    %v1582 = vmul.f32 %v1579, %v1581
    %v1583 = vadd.f32 %v1579, %v1582
    %vm1584 = vweird.f32 %v1578
    %vm1585 = vweird.f32 %v1579
    %vm1586 = vmor %vm1584, %vm1585
    %v1587 = vsel %vm1586, %v1579, %v1583
    %v1588 = vand.u32 2147483647, %v1578
    %vm1589 = vcmp.eq.f32.partialorder %v1588, 8.507059e+37
    %v1590 = vand.u32 %v1578, 2147483648
    %v1591 = vor.u32 1.1754944e-38, %v1590
    %v1592 = vsel %vm1589, %v1591, %v1587
    %v1593 = vmul.f32 1.0, %v1592
    %v1594 = vmul.f32 %v1573, %v1288
    %v1595 = vmul.f32 %v1554, %v1574
    %v1596 = vadd.f32 %v1594, %v1595
    %v1597 = vtanh.pop %v1596
    %v1598 = vmul.f32 %v1593, %v1597
    %s1599 = scalar_lea.vmem %s203, 32
    %1600 = vst [vmem:[%s1599] sm:$0xff] %v1598
    %s1601 = scalar_lea.vmem [#allocation6], 128
    %v1602 = vld [vmem:[%s1601] sm:$0xff]
    %v1603 = vld [vmem:[%s1601 + $0x8] sm:$0xff]
    %v1604 = vld [vmem:[%s1601 + $0x10] sm:$0xff]
    %v1605 = vld [vmem:[%s1601 + $0x18] sm:$0xff]
    %1606 = vmatpush.msra.mxu0 %v296
    %1607 = vmatpush.msra.mxu0 %v292
    %1608 = vmatpush.msra.mxu0 %v288
    %1609 = vmatpush.msra.mxu0 %v284
    %1610 = vmatpush.msra.mxu0 %v280
    %1611 = vmatpush.msra.mxu0 %v276
    %1612 = vmatpush.msra.mxu0 %v272
    %1613 = vmatpush.msra.mxu0 %v268
    %1614 = vmatpush.msra.mxu0 %v264
    %1615 = vmatpush.msra.mxu0 %v260
    %1616 = vmatpush.msra.mxu0 %v256
    %1617 = vmatpush.msra.mxu0 %v252
    %1618 = vmatpush.msra.mxu0 %v248
    %1619 = vmatpush.msra.mxu0 %v244
    %1620 = vmatpush.msra.mxu0 %v240
    %1621 = vmatpush.msra.mxu0 %v236
    %1622 = vmatmul.f32.gmra.mxu0 %v1444
    %v1623 = vpop.f32.mrf.mxu0
    %v1624 = vadd.f32 0.0, %v1623
    %1625 = vdwg.mxu0
    %1626 = vmatpush.msra.mxu0 %v297
    %1627 = vmatpush.msra.mxu0 %v293
    %1628 = vmatpush.msra.mxu0 %v289
    %1629 = vmatpush.msra.mxu0 %v285
    %1630 = vmatpush.msra.mxu0 %v281
    %1631 = vmatpush.msra.mxu0 %v277
    %1632 = vmatpush.msra.mxu0 %v273
    %1633 = vmatpush.msra.mxu0 %v269
    %1634 = vmatpush.msra.mxu0 %v265
    %1635 = vmatpush.msra.mxu0 %v261
    %1636 = vmatpush.msra.mxu0 %v257
    %1637 = vmatpush.msra.mxu0 %v253
    %1638 = vmatpush.msra.mxu0 %v249
    %1639 = vmatpush.msra.mxu0 %v245
    %1640 = vmatpush.msra.mxu0 %v241
    %1641 = vmatpush.msra.mxu0 %v237
    %1642 = vmatmul.f32.gmra.mxu0 %v1444
    %v1643 = vpop.f32.mrf.mxu0
    %v1644 = vadd.f32 0.0, %v1643
    %1645 = vdwg.mxu0
    %1646 = vmatpush.msra.mxu0 %v298
    %1647 = vmatpush.msra.mxu0 %v294
    %1648 = vmatpush.msra.mxu0 %v290
    %1649 = vmatpush.msra.mxu0 %v286
    %1650 = vmatpush.msra.mxu0 %v282
    %1651 = vmatpush.msra.mxu0 %v278
    %1652 = vmatpush.msra.mxu0 %v274
    %1653 = vmatpush.msra.mxu0 %v270
    %1654 = vmatpush.msra.mxu0 %v266
    %1655 = vmatpush.msra.mxu0 %v262
    %1656 = vmatpush.msra.mxu0 %v258
    %1657 = vmatpush.msra.mxu0 %v254
    %1658 = vmatpush.msra.mxu0 %v250
    %1659 = vmatpush.msra.mxu0 %v246
    %1660 = vmatpush.msra.mxu0 %v242
    %1661 = vmatpush.msra.mxu0 %v238
    %1662 = vmatmul.f32.gmra.mxu0 %v1444
    %v1663 = vpop.f32.mrf.mxu0
    %v1664 = vadd.f32 0.0, %v1663
    %1665 = vdwg.mxu0
    %1666 = vmatpush.msra.mxu0 %v299
    %1667 = vmatpush.msra.mxu0 %v295
    %1668 = vmatpush.msra.mxu0 %v291
    %1669 = vmatpush.msra.mxu0 %v287
    %1670 = vmatpush.msra.mxu0 %v283
    %1671 = vmatpush.msra.mxu0 %v279
    %1672 = vmatpush.msra.mxu0 %v275
    %1673 = vmatpush.msra.mxu0 %v271
    %1674 = vmatpush.msra.mxu0 %v267
    %1675 = vmatpush.msra.mxu0 %v263
    %1676 = vmatpush.msra.mxu0 %v259
    %1677 = vmatpush.msra.mxu0 %v255
    %1678 = vmatpush.msra.mxu0 %v251
    %1679 = vmatpush.msra.mxu0 %v247
    %1680 = vmatpush.msra.mxu0 %v243
    %1681 = vmatpush.msra.mxu0 %v239
    %1682 = vmatmul.f32.gmra.mxu0 %v1444
    %v1683 = vpop.f32.mrf.mxu0
    %v1684 = vadd.f32 0.0, %v1683
    %1685 = vdwg.mxu0
    %v1686 = vadd.f32 %v1602, %v1624
    %v1687 = vadd.f32 %v1603, %v1644
    %v1688 = vadd.f32 %v1604, %v1664
    %v1689 = vadd.f32 %v1605, %v1684
    %v1690 = vxor.u32 %v1686, 2147483648
    %v1691 = vmul.f32 %v1690, 1.442695
    %v1692 = vpow.pop %v1691
    %v1693 = vadd.f32 %v1692, 1.0
    %v1694 = vrcp.pop %v1693
    %v1695 = vmul.f32 %v1693, %v1694
    %v1696 = vsub.f32 1.0, %v1695
    %v1697 = vmul.f32 %v1694, %v1696
    %v1698 = vadd.f32 %v1694, %v1697
    %vm1699 = vweird.f32 %v1693
    %vm1700 = vweird.f32 %v1694
    %vm1701 = vmor %vm1699, %vm1700
    %v1702 = vsel %vm1701, %v1694, %v1698
    %v1703 = vand.u32 2147483647, %v1693
    %vm1704 = vcmp.eq.f32.partialorder %v1703, 8.507059e+37
    %v1705 = vand.u32 %v1693, 2147483648
    %v1706 = vor.u32 1.1754944e-38, %v1705
    %v1707 = vsel %vm1704, %v1706, %v1702
    %v1708 = vmul.f32 1.0, %v1707
    %v1709 = vxor.u32 %v1687, 2147483648
    %v1710 = vmul.f32 %v1709, 1.442695
    %v1711 = vpow.pop %v1710
    %v1712 = vadd.f32 %v1711, 1.0
    %v1713 = vrcp.pop %v1712
    %v1714 = vmul.f32 %v1712, %v1713
    %v1715 = vsub.f32 1.0, %v1714
    %v1716 = vmul.f32 %v1713, %v1715
    %v1717 = vadd.f32 %v1713, %v1716
    %vm1718 = vweird.f32 %v1712
    %vm1719 = vweird.f32 %v1713
    %vm1720 = vmor %vm1718, %vm1719
    %v1721 = vsel %vm1720, %v1713, %v1717
    %v1722 = vand.u32 2147483647, %v1712
    %vm1723 = vcmp.eq.f32.partialorder %v1722, 8.507059e+37
    %v1724 = vand.u32 %v1712, 2147483648
    %v1725 = vor.u32 1.1754944e-38, %v1724
    %v1726 = vsel %vm1723, %v1725, %v1721
    %v1727 = vmul.f32 1.0, %v1726
    %v1728 = vtanh.pop %v1688
    %v1729 = vxor.u32 %v1689, 2147483648
    %v1730 = vmul.f32 %v1729, 1.442695
    %v1731 = vpow.pop %v1730
    %v1732 = vadd.f32 %v1731, 1.0
    %v1733 = vrcp.pop %v1732
    %v1734 = vmul.f32 %v1732, %v1733
    %v1735 = vsub.f32 1.0, %v1734
    %v1736 = vmul.f32 %v1733, %v1735
    %v1737 = vadd.f32 %v1733, %v1736
    %vm1738 = vweird.f32 %v1732
    %vm1739 = vweird.f32 %v1733
    %vm1740 = vmor %vm1738, %vm1739
    %v1741 = vsel %vm1740, %v1733, %v1737
    %v1742 = vand.u32 2147483647, %v1732
    %vm1743 = vcmp.eq.f32.partialorder %v1742, 8.507059e+37
    %v1744 = vand.u32 %v1732, 2147483648
    %v1745 = vor.u32 1.1754944e-38, %v1744
    %v1746 = vsel %vm1743, %v1745, %v1741
    %v1747 = vmul.f32 1.0, %v1746
    %v1748 = vmul.f32 %v1727, %v1442
    %v1749 = vmul.f32 %v1708, %v1728
    %v1750 = vadd.f32 %v1748, %v1749
    %v1751 = vtanh.pop %v1750
    %v1752 = vmul.f32 %v1747, %v1751
    %s1753 = scalar_lea.vmem %s5, 32
    %1754 = vst [vmem:[%s1753] sm:$0xff] %v1752
    %s1755 = scalar_lea.vmem [#allocation7], 96
    %v1756 = vld [vmem:[%s1755] sm:$0xff]
    %v1757 = vld [vmem:[%s1755 + $0x8] sm:$0xff]
    %v1758 = vld [vmem:[%s1755 + $0x10] sm:$0xff]
    %v1759 = vld [vmem:[%s1755 + $0x18] sm:$0xff]
    %1760 = vmatpush.msra.mxu0 %v363
    %1761 = vmatpush.msra.mxu0 %v359
    %1762 = vmatpush.msra.mxu0 %v355
    %1763 = vmatpush.msra.mxu0 %v351
    %1764 = vmatpush.msra.mxu0 %v347
    %1765 = vmatpush.msra.mxu0 %v343
    %1766 = vmatpush.msra.mxu0 %v339
    %1767 = vmatpush.msra.mxu0 %v335
    %1768 = vmatpush.msra.mxu0 %v331
    %1769 = vmatpush.msra.mxu0 %v327
    %1770 = vmatpush.msra.mxu0 %v323
    %1771 = vmatpush.msra.mxu0 %v319
    %1772 = vmatpush.msra.mxu0 %v315
    %1773 = vmatpush.msra.mxu0 %v311
    %1774 = vmatpush.msra.mxu0 %v307
    %1775 = vmatpush.msra.mxu0 %v303
    %1776 = vmatmul.f32.gmra.mxu0 %v1598
    %v1777 = vpop.f32.mrf.mxu0
    %v1778 = vadd.f32 0.0, %v1777
    %1779 = vdwg.mxu0
    %1780 = vmatpush.msra.mxu0 %v364
    %1781 = vmatpush.msra.mxu0 %v360
    %1782 = vmatpush.msra.mxu0 %v356
    %1783 = vmatpush.msra.mxu0 %v352
    %1784 = vmatpush.msra.mxu0 %v348
    %1785 = vmatpush.msra.mxu0 %v344
    %1786 = vmatpush.msra.mxu0 %v340
    %1787 = vmatpush.msra.mxu0 %v336
    %1788 = vmatpush.msra.mxu0 %v332
    %1789 = vmatpush.msra.mxu0 %v328
    %1790 = vmatpush.msra.mxu0 %v324
    %1791 = vmatpush.msra.mxu0 %v320
    %1792 = vmatpush.msra.mxu0 %v316
    %1793 = vmatpush.msra.mxu0 %v312
    %1794 = vmatpush.msra.mxu0 %v308
    %1795 = vmatpush.msra.mxu0 %v304
    %1796 = vmatmul.f32.gmra.mxu0 %v1598
    %v1797 = vpop.f32.mrf.mxu0
    %v1798 = vadd.f32 0.0, %v1797
    %1799 = vdwg.mxu0
    %1800 = vmatpush.msra.mxu0 %v365
    %1801 = vmatpush.msra.mxu0 %v361
    %1802 = vmatpush.msra.mxu0 %v357
    %1803 = vmatpush.msra.mxu0 %v353
    %1804 = vmatpush.msra.mxu0 %v349
    %1805 = vmatpush.msra.mxu0 %v345
    %1806 = vmatpush.msra.mxu0 %v341
    %1807 = vmatpush.msra.mxu0 %v337
    %1808 = vmatpush.msra.mxu0 %v333
    %1809 = vmatpush.msra.mxu0 %v329
    %1810 = vmatpush.msra.mxu0 %v325
    %1811 = vmatpush.msra.mxu0 %v321
    %1812 = vmatpush.msra.mxu0 %v317
    %1813 = vmatpush.msra.mxu0 %v313
    %1814 = vmatpush.msra.mxu0 %v309
    %1815 = vmatpush.msra.mxu0 %v305
    %1816 = vmatmul.f32.gmra.mxu0 %v1598
    %v1817 = vpop.f32.mrf.mxu0
    %v1818 = vadd.f32 0.0, %v1817
    %1819 = vdwg.mxu0
    %1820 = vmatpush.msra.mxu0 %v366
    %1821 = vmatpush.msra.mxu0 %v362
    %1822 = vmatpush.msra.mxu0 %v358
    %1823 = vmatpush.msra.mxu0 %v354
    %1824 = vmatpush.msra.mxu0 %v350
    %1825 = vmatpush.msra.mxu0 %v346
    %1826 = vmatpush.msra.mxu0 %v342
    %1827 = vmatpush.msra.mxu0 %v338
    %1828 = vmatpush.msra.mxu0 %v334
    %1829 = vmatpush.msra.mxu0 %v330
    %1830 = vmatpush.msra.mxu0 %v326
    %1831 = vmatpush.msra.mxu0 %v322
    %1832 = vmatpush.msra.mxu0 %v318
    %1833 = vmatpush.msra.mxu0 %v314
    %1834 = vmatpush.msra.mxu0 %v310
    %1835 = vmatpush.msra.mxu0 %v306
    %1836 = vmatmul.f32.gmra.mxu0 %v1598
    %v1837 = vpop.f32.mrf.mxu0
    %v1838 = vadd.f32 0.0, %v1837
    %1839 = vdwg.mxu0
    %v1840 = vadd.f32 %v1756, %v1778
    %v1841 = vadd.f32 %v1757, %v1798
    %v1842 = vadd.f32 %v1758, %v1818
    %v1843 = vadd.f32 %v1759, %v1838
    %v1844 = vxor.u32 %v1840, 2147483648
    %v1845 = vmul.f32 %v1844, 1.442695
    %v1846 = vpow.pop %v1845
    %v1847 = vadd.f32 %v1846, 1.0
    %v1848 = vrcp.pop %v1847
    %v1849 = vmul.f32 %v1847, %v1848
    %v1850 = vsub.f32 1.0, %v1849
    %v1851 = vmul.f32 %v1848, %v1850
    %v1852 = vadd.f32 %v1848, %v1851
    %vm1853 = vweird.f32 %v1847
    %vm1854 = vweird.f32 %v1848
    %vm1855 = vmor %vm1853, %vm1854
    %v1856 = vsel %vm1855, %v1848, %v1852
    %v1857 = vand.u32 2147483647, %v1847
    %vm1858 = vcmp.eq.f32.partialorder %v1857, 8.507059e+37
    %v1859 = vand.u32 %v1847, 2147483648
    %v1860 = vor.u32 1.1754944e-38, %v1859
    %v1861 = vsel %vm1858, %v1860, %v1856
    %v1862 = vmul.f32 1.0, %v1861
    %v1863 = vxor.u32 %v1841, 2147483648
    %v1864 = vmul.f32 %v1863, 1.442695
    %v1865 = vpow.pop %v1864
    %v1866 = vadd.f32 %v1865, 1.0
    %v1867 = vrcp.pop %v1866
    %v1868 = vmul.f32 %v1866, %v1867
    %v1869 = vsub.f32 1.0, %v1868
    %v1870 = vmul.f32 %v1867, %v1869
    %v1871 = vadd.f32 %v1867, %v1870
    %vm1872 = vweird.f32 %v1866
    %vm1873 = vweird.f32 %v1867
    %vm1874 = vmor %vm1872, %vm1873
    %v1875 = vsel %vm1874, %v1867, %v1871
    %v1876 = vand.u32 2147483647, %v1866
    %vm1877 = vcmp.eq.f32.partialorder %v1876, 8.507059e+37
    %v1878 = vand.u32 %v1866, 2147483648
    %v1879 = vor.u32 1.1754944e-38, %v1878
    %v1880 = vsel %vm1877, %v1879, %v1875
    %v1881 = vmul.f32 1.0, %v1880
    %v1882 = vtanh.pop %v1842
    %v1883 = vxor.u32 %v1843, 2147483648
    %v1884 = vmul.f32 %v1883, 1.442695
    %v1885 = vpow.pop %v1884
    %v1886 = vadd.f32 %v1885, 1.0
    %v1887 = vrcp.pop %v1886
    %v1888 = vmul.f32 %v1886, %v1887
    %v1889 = vsub.f32 1.0, %v1888
    %v1890 = vmul.f32 %v1887, %v1889
    %v1891 = vadd.f32 %v1887, %v1890
    %vm1892 = vweird.f32 %v1886
    %vm1893 = vweird.f32 %v1887
    %vm1894 = vmor %vm1892, %vm1893
    %v1895 = vsel %vm1894, %v1887, %v1891
    %v1896 = vand.u32 2147483647, %v1886
    %vm1897 = vcmp.eq.f32.partialorder %v1896, 8.507059e+37
    %v1898 = vand.u32 %v1886, 2147483648
    %v1899 = vor.u32 1.1754944e-38, %v1898
    %v1900 = vsel %vm1897, %v1899, %v1895
    %v1901 = vmul.f32 1.0, %v1900
    %v1902 = vmul.f32 %v1881, %v1596
    %v1903 = vmul.f32 %v1862, %v1882
    %v1904 = vadd.f32 %v1902, %v1903
    %v1905 = vtanh.pop %v1904
    %v1906 = vmul.f32 %v1901, %v1905
    %s1907 = scalar_lea.vmem %s203, 24
    %1908 = vst [vmem:[%s1907] sm:$0xff] %v1906
    %s1909 = scalar_lea.vmem [#allocation6], 160
    %v1910 = vld [vmem:[%s1909] sm:$0xff]
    %v1911 = vld [vmem:[%s1909 + $0x8] sm:$0xff]
    %v1912 = vld [vmem:[%s1909 + $0x10] sm:$0xff]
    %v1913 = vld [vmem:[%s1909 + $0x18] sm:$0xff]
    %1914 = vmatpush.msra.mxu0 %v296
    %1915 = vmatpush.msra.mxu0 %v292
    %1916 = vmatpush.msra.mxu0 %v288
    %1917 = vmatpush.msra.mxu0 %v284
    %1918 = vmatpush.msra.mxu0 %v280
    %1919 = vmatpush.msra.mxu0 %v276
    %1920 = vmatpush.msra.mxu0 %v272
    %1921 = vmatpush.msra.mxu0 %v268
    %1922 = vmatpush.msra.mxu0 %v264
    %1923 = vmatpush.msra.mxu0 %v260
    %1924 = vmatpush.msra.mxu0 %v256
    %1925 = vmatpush.msra.mxu0 %v252
    %1926 = vmatpush.msra.mxu0 %v248
    %1927 = vmatpush.msra.mxu0 %v244
    %1928 = vmatpush.msra.mxu0 %v240
    %1929 = vmatpush.msra.mxu0 %v236
    %1930 = vmatmul.f32.gmra.mxu0 %v1752
    %v1931 = vpop.f32.mrf.mxu0
    %v1932 = vadd.f32 0.0, %v1931
    %1933 = vdwg.mxu0
    %1934 = vmatpush.msra.mxu0 %v297
    %1935 = vmatpush.msra.mxu0 %v293
    %1936 = vmatpush.msra.mxu0 %v289
    %1937 = vmatpush.msra.mxu0 %v285
    %1938 = vmatpush.msra.mxu0 %v281
    %1939 = vmatpush.msra.mxu0 %v277
    %1940 = vmatpush.msra.mxu0 %v273
    %1941 = vmatpush.msra.mxu0 %v269
    %1942 = vmatpush.msra.mxu0 %v265
    %1943 = vmatpush.msra.mxu0 %v261
    %1944 = vmatpush.msra.mxu0 %v257
    %1945 = vmatpush.msra.mxu0 %v253
    %1946 = vmatpush.msra.mxu0 %v249
    %1947 = vmatpush.msra.mxu0 %v245
    %1948 = vmatpush.msra.mxu0 %v241
    %1949 = vmatpush.msra.mxu0 %v237
    %1950 = vmatmul.f32.gmra.mxu0 %v1752
    %v1951 = vpop.f32.mrf.mxu0
    %v1952 = vadd.f32 0.0, %v1951
    %1953 = vdwg.mxu0
    %1954 = vmatpush.msra.mxu0 %v298
    %1955 = vmatpush.msra.mxu0 %v294
    %1956 = vmatpush.msra.mxu0 %v290
    %1957 = vmatpush.msra.mxu0 %v286
    %1958 = vmatpush.msra.mxu0 %v282
    %1959 = vmatpush.msra.mxu0 %v278
    %1960 = vmatpush.msra.mxu0 %v274
    %1961 = vmatpush.msra.mxu0 %v270
    %1962 = vmatpush.msra.mxu0 %v266
    %1963 = vmatpush.msra.mxu0 %v262
    %1964 = vmatpush.msra.mxu0 %v258
    %1965 = vmatpush.msra.mxu0 %v254
    %1966 = vmatpush.msra.mxu0 %v250
    %1967 = vmatpush.msra.mxu0 %v246
    %1968 = vmatpush.msra.mxu0 %v242
    %1969 = vmatpush.msra.mxu0 %v238
    %1970 = vmatmul.f32.gmra.mxu0 %v1752
    %v1971 = vpop.f32.mrf.mxu0
    %v1972 = vadd.f32 0.0, %v1971
    %1973 = vdwg.mxu0
    %1974 = vmatpush.msra.mxu0 %v299
    %1975 = vmatpush.msra.mxu0 %v295
    %1976 = vmatpush.msra.mxu0 %v291
    %1977 = vmatpush.msra.mxu0 %v287
    %1978 = vmatpush.msra.mxu0 %v283
    %1979 = vmatpush.msra.mxu0 %v279
    %1980 = vmatpush.msra.mxu0 %v275
    %1981 = vmatpush.msra.mxu0 %v271
    %1982 = vmatpush.msra.mxu0 %v267
    %1983 = vmatpush.msra.mxu0 %v263
    %1984 = vmatpush.msra.mxu0 %v259
    %1985 = vmatpush.msra.mxu0 %v255
    %1986 = vmatpush.msra.mxu0 %v251
    %1987 = vmatpush.msra.mxu0 %v247
    %1988 = vmatpush.msra.mxu0 %v243
    %1989 = vmatpush.msra.mxu0 %v239
    %1990 = vmatmul.f32.gmra.mxu0 %v1752
    %v1991 = vpop.f32.mrf.mxu0
    %v1992 = vadd.f32 0.0, %v1991
    %1993 = vdwg.mxu0
    %v1994 = vadd.f32 %v1910, %v1932
    %v1995 = vadd.f32 %v1911, %v1952
    %v1996 = vadd.f32 %v1912, %v1972
    %v1997 = vadd.f32 %v1913, %v1992
    %v1998 = vxor.u32 %v1994, 2147483648
    %v1999 = vmul.f32 %v1998, 1.442695
    %v2000 = vpow.pop %v1999
    %v2001 = vadd.f32 %v2000, 1.0
    %v2002 = vrcp.pop %v2001
    %v2003 = vmul.f32 %v2001, %v2002
    %v2004 = vsub.f32 1.0, %v2003
    %v2005 = vmul.f32 %v2002, %v2004
    %v2006 = vadd.f32 %v2002, %v2005
    %vm2007 = vweird.f32 %v2001
    %vm2008 = vweird.f32 %v2002
    %vm2009 = vmor %vm2007, %vm2008
    %v2010 = vsel %vm2009, %v2002, %v2006
    %v2011 = vand.u32 2147483647, %v2001
    %vm2012 = vcmp.eq.f32.partialorder %v2011, 8.507059e+37
    %v2013 = vand.u32 %v2001, 2147483648
    %v2014 = vor.u32 1.1754944e-38, %v2013
    %v2015 = vsel %vm2012, %v2014, %v2010
    %v2016 = vmul.f32 1.0, %v2015
    %v2017 = vxor.u32 %v1995, 2147483648
    %v2018 = vmul.f32 %v2017, 1.442695
    %v2019 = vpow.pop %v2018
    %v2020 = vadd.f32 %v2019, 1.0
    %v2021 = vrcp.pop %v2020
    %v2022 = vmul.f32 %v2020, %v2021
    %v2023 = vsub.f32 1.0, %v2022
    %v2024 = vmul.f32 %v2021, %v2023
    %v2025 = vadd.f32 %v2021, %v2024
    %vm2026 = vweird.f32 %v2020
    %vm2027 = vweird.f32 %v2021
    %vm2028 = vmor %vm2026, %vm2027
    %v2029 = vsel %vm2028, %v2021, %v2025
    %v2030 = vand.u32 2147483647, %v2020
    %vm2031 = vcmp.eq.f32.partialorder %v2030, 8.507059e+37
    %v2032 = vand.u32 %v2020, 2147483648
    %v2033 = vor.u32 1.1754944e-38, %v2032
    %v2034 = vsel %vm2031, %v2033, %v2029
    %v2035 = vmul.f32 1.0, %v2034
    %v2036 = vtanh.pop %v1996
    %v2037 = vxor.u32 %v1997, 2147483648
    %v2038 = vmul.f32 %v2037, 1.442695
    %v2039 = vpow.pop %v2038
    %v2040 = vadd.f32 %v2039, 1.0
    %v2041 = vrcp.pop %v2040
    %v2042 = vmul.f32 %v2040, %v2041
    %v2043 = vsub.f32 1.0, %v2042
    %v2044 = vmul.f32 %v2041, %v2043
    %v2045 = vadd.f32 %v2041, %v2044
    %vm2046 = vweird.f32 %v2040
    %vm2047 = vweird.f32 %v2041
    %vm2048 = vmor %vm2046, %vm2047
    %v2049 = vsel %vm2048, %v2041, %v2045
    %v2050 = vand.u32 2147483647, %v2040
    %vm2051 = vcmp.eq.f32.partialorder %v2050, 8.507059e+37
    %v2052 = vand.u32 %v2040, 2147483648
    %v2053 = vor.u32 1.1754944e-38, %v2052
    %v2054 = vsel %vm2051, %v2053, %v2049
    %v2055 = vmul.f32 1.0, %v2054
    %v2056 = vmul.f32 %v2035, %v1750
    %v2057 = vmul.f32 %v2016, %v2036
    %v2058 = vadd.f32 %v2056, %v2057
    %v2059 = vtanh.pop %v2058
    %v2060 = vmul.f32 %v2055, %v2059
    %s2061 = scalar_lea.vmem %s5, 40
    %2062 = vst [vmem:[%s2061] sm:$0xff] %v2060
    %s2063 = scalar_lea.vmem [#allocation7], 64
    %v2064 = vld [vmem:[%s2063] sm:$0xff]
    %v2065 = vld [vmem:[%s2063 + $0x8] sm:$0xff]
    %v2066 = vld [vmem:[%s2063 + $0x10] sm:$0xff]
    %v2067 = vld [vmem:[%s2063 + $0x18] sm:$0xff]
    %2068 = vmatpush.msra.mxu0 %v363
    %2069 = vmatpush.msra.mxu0 %v359
    %2070 = vmatpush.msra.mxu0 %v355
    %2071 = vmatpush.msra.mxu0 %v351
    %2072 = vmatpush.msra.mxu0 %v347
    %2073 = vmatpush.msra.mxu0 %v343
    %2074 = vmatpush.msra.mxu0 %v339
    %2075 = vmatpush.msra.mxu0 %v335
    %2076 = vmatpush.msra.mxu0 %v331
    %2077 = vmatpush.msra.mxu0 %v327
    %2078 = vmatpush.msra.mxu0 %v323
    %2079 = vmatpush.msra.mxu0 %v319
    %2080 = vmatpush.msra.mxu0 %v315
    %2081 = vmatpush.msra.mxu0 %v311
    %2082 = vmatpush.msra.mxu0 %v307
    %2083 = vmatpush.msra.mxu0 %v303
    %2084 = vmatmul.f32.gmra.mxu0 %v1906
    %v2085 = vpop.f32.mrf.mxu0
    %v2086 = vadd.f32 0.0, %v2085
    %2087 = vdwg.mxu0
    %2088 = vmatpush.msra.mxu0 %v364
    %2089 = vmatpush.msra.mxu0 %v360
    %2090 = vmatpush.msra.mxu0 %v356
    %2091 = vmatpush.msra.mxu0 %v352
    %2092 = vmatpush.msra.mxu0 %v348
    %2093 = vmatpush.msra.mxu0 %v344
    %2094 = vmatpush.msra.mxu0 %v340
    %2095 = vmatpush.msra.mxu0 %v336
    %2096 = vmatpush.msra.mxu0 %v332
    %2097 = vmatpush.msra.mxu0 %v328
    %2098 = vmatpush.msra.mxu0 %v324
    %2099 = vmatpush.msra.mxu0 %v320
    %2100 = vmatpush.msra.mxu0 %v316
    %2101 = vmatpush.msra.mxu0 %v312
    %2102 = vmatpush.msra.mxu0 %v308
    %2103 = vmatpush.msra.mxu0 %v304
    %2104 = vmatmul.f32.gmra.mxu0 %v1906
    %v2105 = vpop.f32.mrf.mxu0
    %v2106 = vadd.f32 0.0, %v2105
    %2107 = vdwg.mxu0
    %2108 = vmatpush.msra.mxu0 %v365
    %2109 = vmatpush.msra.mxu0 %v361
    %2110 = vmatpush.msra.mxu0 %v357
    %2111 = vmatpush.msra.mxu0 %v353
    %2112 = vmatpush.msra.mxu0 %v349
    %2113 = vmatpush.msra.mxu0 %v345
    %2114 = vmatpush.msra.mxu0 %v341
    %2115 = vmatpush.msra.mxu0 %v337
    %2116 = vmatpush.msra.mxu0 %v333
    %2117 = vmatpush.msra.mxu0 %v329
    %2118 = vmatpush.msra.mxu0 %v325
    %2119 = vmatpush.msra.mxu0 %v321
    %2120 = vmatpush.msra.mxu0 %v317
    %2121 = vmatpush.msra.mxu0 %v313
    %2122 = vmatpush.msra.mxu0 %v309
    %2123 = vmatpush.msra.mxu0 %v305
    %2124 = vmatmul.f32.gmra.mxu0 %v1906
    %v2125 = vpop.f32.mrf.mxu0
    %v2126 = vadd.f32 0.0, %v2125
    %2127 = vdwg.mxu0
    %2128 = vmatpush.msra.mxu0 %v366
    %2129 = vmatpush.msra.mxu0 %v362
    %2130 = vmatpush.msra.mxu0 %v358
    %2131 = vmatpush.msra.mxu0 %v354
    %2132 = vmatpush.msra.mxu0 %v350
    %2133 = vmatpush.msra.mxu0 %v346
    %2134 = vmatpush.msra.mxu0 %v342
    %2135 = vmatpush.msra.mxu0 %v338
    %2136 = vmatpush.msra.mxu0 %v334
    %2137 = vmatpush.msra.mxu0 %v330
    %2138 = vmatpush.msra.mxu0 %v326
    %2139 = vmatpush.msra.mxu0 %v322
    %2140 = vmatpush.msra.mxu0 %v318
    %2141 = vmatpush.msra.mxu0 %v314
    %2142 = vmatpush.msra.mxu0 %v310
    %2143 = vmatpush.msra.mxu0 %v306
    %2144 = vmatmul.f32.gmra.mxu0 %v1906
    %v2145 = vpop.f32.mrf.mxu0
    %v2146 = vadd.f32 0.0, %v2145
    %2147 = vdwg.mxu0
    %v2148 = vadd.f32 %v2064, %v2086
    %v2149 = vadd.f32 %v2065, %v2106
    %v2150 = vadd.f32 %v2066, %v2126
    %v2151 = vadd.f32 %v2067, %v2146
    %v2152 = vxor.u32 %v2148, 2147483648
    %v2153 = vmul.f32 %v2152, 1.442695
    %v2154 = vpow.pop %v2153
    %v2155 = vadd.f32 %v2154, 1.0
    %v2156 = vrcp.pop %v2155
    %v2157 = vmul.f32 %v2155, %v2156
    %v2158 = vsub.f32 1.0, %v2157
    %v2159 = vmul.f32 %v2156, %v2158
    %v2160 = vadd.f32 %v2156, %v2159
    %vm2161 = vweird.f32 %v2155
    %vm2162 = vweird.f32 %v2156
    %vm2163 = vmor %vm2161, %vm2162
    %v2164 = vsel %vm2163, %v2156, %v2160
    %v2165 = vand.u32 2147483647, %v2155
    %vm2166 = vcmp.eq.f32.partialorder %v2165, 8.507059e+37
    %v2167 = vand.u32 %v2155, 2147483648
    %v2168 = vor.u32 1.1754944e-38, %v2167
    %v2169 = vsel %vm2166, %v2168, %v2164
    %v2170 = vmul.f32 1.0, %v2169
    %v2171 = vxor.u32 %v2149, 2147483648
    %v2172 = vmul.f32 %v2171, 1.442695
    %v2173 = vpow.pop %v2172
    %v2174 = vadd.f32 %v2173, 1.0
    %v2175 = vrcp.pop %v2174
    %v2176 = vmul.f32 %v2174, %v2175
    %v2177 = vsub.f32 1.0, %v2176
    %v2178 = vmul.f32 %v2175, %v2177
    %v2179 = vadd.f32 %v2175, %v2178
    %vm2180 = vweird.f32 %v2174
    %vm2181 = vweird.f32 %v2175
    %vm2182 = vmor %vm2180, %vm2181
    %v2183 = vsel %vm2182, %v2175, %v2179
    %v2184 = vand.u32 2147483647, %v2174
    %vm2185 = vcmp.eq.f32.partialorder %v2184, 8.507059e+37
    %v2186 = vand.u32 %v2174, 2147483648
    %v2187 = vor.u32 1.1754944e-38, %v2186
    %v2188 = vsel %vm2185, %v2187, %v2183
    %v2189 = vmul.f32 1.0, %v2188
    %v2190 = vtanh.pop %v2150
    %v2191 = vxor.u32 %v2151, 2147483648
    %v2192 = vmul.f32 %v2191, 1.442695
    %v2193 = vpow.pop %v2192
    %v2194 = vadd.f32 %v2193, 1.0
    %v2195 = vrcp.pop %v2194
    %v2196 = vmul.f32 %v2194, %v2195
    %v2197 = vsub.f32 1.0, %v2196
    %v2198 = vmul.f32 %v2195, %v2197
    %v2199 = vadd.f32 %v2195, %v2198
    %vm2200 = vweird.f32 %v2194
    %vm2201 = vweird.f32 %v2195
    %vm2202 = vmor %vm2200, %vm2201
    %v2203 = vsel %vm2202, %v2195, %v2199
    %v2204 = vand.u32 2147483647, %v2194
    %vm2205 = vcmp.eq.f32.partialorder %v2204, 8.507059e+37
    %v2206 = vand.u32 %v2194, 2147483648
    %v2207 = vor.u32 1.1754944e-38, %v2206
    %v2208 = vsel %vm2205, %v2207, %v2203
    %v2209 = vmul.f32 1.0, %v2208
    %v2210 = vmul.f32 %v2189, %v1904
    %v2211 = vmul.f32 %v2170, %v2190
    %v2212 = vadd.f32 %v2210, %v2211
    %v2213 = vtanh.pop %v2212
    %v2214 = vmul.f32 %v2209, %v2213
    %s2215 = scalar_lea.vmem %s203, 16
    %2216 = vst [vmem:[%s2215] sm:$0xff] %v2214
    %s2217 = scalar_lea.vmem [#allocation6], 192
    %v2218 = vld [vmem:[%s2217] sm:$0xff]
    %v2219 = vld [vmem:[%s2217 + $0x8] sm:$0xff]
    %v2220 = vld [vmem:[%s2217 + $0x10] sm:$0xff]
    %v2221 = vld [vmem:[%s2217 + $0x18] sm:$0xff]
    %2222 = vmatpush.msra.mxu0 %v296
    %2223 = vmatpush.msra.mxu0 %v292
    %2224 = vmatpush.msra.mxu0 %v288
    %2225 = vmatpush.msra.mxu0 %v284
    %2226 = vmatpush.msra.mxu0 %v280
    %2227 = vmatpush.msra.mxu0 %v276
    %2228 = vmatpush.msra.mxu0 %v272
    %2229 = vmatpush.msra.mxu0 %v268
    %2230 = vmatpush.msra.mxu0 %v264
    %2231 = vmatpush.msra.mxu0 %v260
    %2232 = vmatpush.msra.mxu0 %v256
    %2233 = vmatpush.msra.mxu0 %v252
    %2234 = vmatpush.msra.mxu0 %v248
    %2235 = vmatpush.msra.mxu0 %v244
    %2236 = vmatpush.msra.mxu0 %v240
    %2237 = vmatpush.msra.mxu0 %v236
    %2238 = vmatmul.f32.gmra.mxu0 %v2060
    %v2239 = vpop.f32.mrf.mxu0
    %v2240 = vadd.f32 0.0, %v2239
    %2241 = vdwg.mxu0
    %2242 = vmatpush.msra.mxu0 %v297
    %2243 = vmatpush.msra.mxu0 %v293
    %2244 = vmatpush.msra.mxu0 %v289
    %2245 = vmatpush.msra.mxu0 %v285
    %2246 = vmatpush.msra.mxu0 %v281
    %2247 = vmatpush.msra.mxu0 %v277
    %2248 = vmatpush.msra.mxu0 %v273
    %2249 = vmatpush.msra.mxu0 %v269
    %2250 = vmatpush.msra.mxu0 %v265
    %2251 = vmatpush.msra.mxu0 %v261
    %2252 = vmatpush.msra.mxu0 %v257
    %2253 = vmatpush.msra.mxu0 %v253
    %2254 = vmatpush.msra.mxu0 %v249
    %2255 = vmatpush.msra.mxu0 %v245
    %2256 = vmatpush.msra.mxu0 %v241
    %2257 = vmatpush.msra.mxu0 %v237
    %2258 = vmatmul.f32.gmra.mxu0 %v2060
    %v2259 = vpop.f32.mrf.mxu0
    %v2260 = vadd.f32 0.0, %v2259
    %2261 = vdwg.mxu0
    %2262 = vmatpush.msra.mxu0 %v298
    %2263 = vmatpush.msra.mxu0 %v294
    %2264 = vmatpush.msra.mxu0 %v290
    %2265 = vmatpush.msra.mxu0 %v286
    %2266 = vmatpush.msra.mxu0 %v282
    %2267 = vmatpush.msra.mxu0 %v278
    %2268 = vmatpush.msra.mxu0 %v274
    %2269 = vmatpush.msra.mxu0 %v270
    %2270 = vmatpush.msra.mxu0 %v266
    %2271 = vmatpush.msra.mxu0 %v262
    %2272 = vmatpush.msra.mxu0 %v258
    %2273 = vmatpush.msra.mxu0 %v254
    %2274 = vmatpush.msra.mxu0 %v250
    %2275 = vmatpush.msra.mxu0 %v246
    %2276 = vmatpush.msra.mxu0 %v242
    %2277 = vmatpush.msra.mxu0 %v238
    %2278 = vmatmul.f32.gmra.mxu0 %v2060
    %v2279 = vpop.f32.mrf.mxu0
    %v2280 = vadd.f32 0.0, %v2279
    %2281 = vdwg.mxu0
    %2282 = vmatpush.msra.mxu0 %v299
    %2283 = vmatpush.msra.mxu0 %v295
    %2284 = vmatpush.msra.mxu0 %v291
    %2285 = vmatpush.msra.mxu0 %v287
    %2286 = vmatpush.msra.mxu0 %v283
    %2287 = vmatpush.msra.mxu0 %v279
    %2288 = vmatpush.msra.mxu0 %v275
    %2289 = vmatpush.msra.mxu0 %v271
    %2290 = vmatpush.msra.mxu0 %v267
    %2291 = vmatpush.msra.mxu0 %v263
    %2292 = vmatpush.msra.mxu0 %v259
    %2293 = vmatpush.msra.mxu0 %v255
    %2294 = vmatpush.msra.mxu0 %v251
    %2295 = vmatpush.msra.mxu0 %v247
    %2296 = vmatpush.msra.mxu0 %v243
    %2297 = vmatpush.msra.mxu0 %v239
    %2298 = vmatmul.f32.gmra.mxu0 %v2060
    %v2299 = vpop.f32.mrf.mxu0
    %v2300 = vadd.f32 0.0, %v2299
    %2301 = vdwg.mxu0
    %v2302 = vadd.f32 %v2218, %v2240
    %v2303 = vadd.f32 %v2219, %v2260
    %v2304 = vadd.f32 %v2220, %v2280
    %v2305 = vadd.f32 %v2221, %v2300
    %v2306 = vxor.u32 %v2302, 2147483648
    %v2307 = vmul.f32 %v2306, 1.442695
    %v2308 = vpow.pop %v2307
    %v2309 = vadd.f32 %v2308, 1.0
    %v2310 = vrcp.pop %v2309
    %v2311 = vmul.f32 %v2309, %v2310
    %v2312 = vsub.f32 1.0, %v2311
    %v2313 = vmul.f32 %v2310, %v2312
    %v2314 = vadd.f32 %v2310, %v2313
    %vm2315 = vweird.f32 %v2309
    %vm2316 = vweird.f32 %v2310
    %vm2317 = vmor %vm2315, %vm2316
    %v2318 = vsel %vm2317, %v2310, %v2314
    %v2319 = vand.u32 2147483647, %v2309
    %vm2320 = vcmp.eq.f32.partialorder %v2319, 8.507059e+37
    %v2321 = vand.u32 %v2309, 2147483648
    %v2322 = vor.u32 1.1754944e-38, %v2321
    %v2323 = vsel %vm2320, %v2322, %v2318
    %v2324 = vmul.f32 1.0, %v2323
    %v2325 = vxor.u32 %v2303, 2147483648
    %v2326 = vmul.f32 %v2325, 1.442695
    %v2327 = vpow.pop %v2326
    %v2328 = vadd.f32 %v2327, 1.0
    %v2329 = vrcp.pop %v2328
    %v2330 = vmul.f32 %v2328, %v2329
    %v2331 = vsub.f32 1.0, %v2330
    %v2332 = vmul.f32 %v2329, %v2331
    %v2333 = vadd.f32 %v2329, %v2332
    %vm2334 = vweird.f32 %v2328
    %vm2335 = vweird.f32 %v2329
    %vm2336 = vmor %vm2334, %vm2335
    %v2337 = vsel %vm2336, %v2329, %v2333
    %v2338 = vand.u32 2147483647, %v2328
    %vm2339 = vcmp.eq.f32.partialorder %v2338, 8.507059e+37
    %v2340 = vand.u32 %v2328, 2147483648
    %v2341 = vor.u32 1.1754944e-38, %v2340
    %v2342 = vsel %vm2339, %v2341, %v2337
    %v2343 = vmul.f32 1.0, %v2342
    %v2344 = vtanh.pop %v2304
    %v2345 = vxor.u32 %v2305, 2147483648
    %v2346 = vmul.f32 %v2345, 1.442695
    %v2347 = vpow.pop %v2346
    %v2348 = vadd.f32 %v2347, 1.0
    %v2349 = vrcp.pop %v2348
    %v2350 = vmul.f32 %v2348, %v2349
    %v2351 = vsub.f32 1.0, %v2350
    %v2352 = vmul.f32 %v2349, %v2351
    %v2353 = vadd.f32 %v2349, %v2352
    %vm2354 = vweird.f32 %v2348
    %vm2355 = vweird.f32 %v2349
    %vm2356 = vmor %vm2354, %vm2355
    %v2357 = vsel %vm2356, %v2349, %v2353
    %v2358 = vand.u32 2147483647, %v2348
    %vm2359 = vcmp.eq.f32.partialorder %v2358, 8.507059e+37
    %v2360 = vand.u32 %v2348, 2147483648
    %v2361 = vor.u32 1.1754944e-38, %v2360
    %v2362 = vsel %vm2359, %v2361, %v2357
    %v2363 = vmul.f32 1.0, %v2362
    %v2364 = vmul.f32 %v2343, %v2058
    %v2365 = vmul.f32 %v2324, %v2344
    %v2366 = vadd.f32 %v2364, %v2365
    %v2367 = vtanh.pop %v2366
    %v2368 = vmul.f32 %v2363, %v2367
    %s2369 = scalar_lea.vmem %s5, 48
    %2370 = vst [vmem:[%s2369] sm:$0xff] %v2368
    %s2371 = scalar_lea.vmem [#allocation7], 32
    %v2372 = vld [vmem:[%s2371] sm:$0xff]
    %v2373 = vld [vmem:[%s2371 + $0x8] sm:$0xff]
    %v2374 = vld [vmem:[%s2371 + $0x10] sm:$0xff]
    %v2375 = vld [vmem:[%s2371 + $0x18] sm:$0xff]
    %2376 = vmatpush.msra.mxu0 %v363
    %2377 = vmatpush.msra.mxu0 %v359
    %2378 = vmatpush.msra.mxu0 %v355
    %2379 = vmatpush.msra.mxu0 %v351
    %2380 = vmatpush.msra.mxu0 %v347
    %2381 = vmatpush.msra.mxu0 %v343
    %2382 = vmatpush.msra.mxu0 %v339
    %2383 = vmatpush.msra.mxu0 %v335
    %2384 = vmatpush.msra.mxu0 %v331
    %2385 = vmatpush.msra.mxu0 %v327
    %2386 = vmatpush.msra.mxu0 %v323
    %2387 = vmatpush.msra.mxu0 %v319
    %2388 = vmatpush.msra.mxu0 %v315
    %2389 = vmatpush.msra.mxu0 %v311
    %2390 = vmatpush.msra.mxu0 %v307
    %2391 = vmatpush.msra.mxu0 %v303
    %2392 = vmatmul.f32.gmra.mxu0 %v2214
    %v2393 = vpop.f32.mrf.mxu0
    %v2394 = vadd.f32 0.0, %v2393
    %2395 = vdwg.mxu0
    %2396 = vmatpush.msra.mxu0 %v364
    %2397 = vmatpush.msra.mxu0 %v360
    %2398 = vmatpush.msra.mxu0 %v356
    %2399 = vmatpush.msra.mxu0 %v352
    %2400 = vmatpush.msra.mxu0 %v348
    %2401 = vmatpush.msra.mxu0 %v344
    %2402 = vmatpush.msra.mxu0 %v340
    %2403 = vmatpush.msra.mxu0 %v336
    %2404 = vmatpush.msra.mxu0 %v332
    %2405 = vmatpush.msra.mxu0 %v328
    %2406 = vmatpush.msra.mxu0 %v324
    %2407 = vmatpush.msra.mxu0 %v320
    %2408 = vmatpush.msra.mxu0 %v316
    %2409 = vmatpush.msra.mxu0 %v312
    %2410 = vmatpush.msra.mxu0 %v308
    %2411 = vmatpush.msra.mxu0 %v304
    %2412 = vmatmul.f32.gmra.mxu0 %v2214
    %v2413 = vpop.f32.mrf.mxu0
    %v2414 = vadd.f32 0.0, %v2413
    %2415 = vdwg.mxu0
    %2416 = vmatpush.msra.mxu0 %v365
    %2417 = vmatpush.msra.mxu0 %v361
    %2418 = vmatpush.msra.mxu0 %v357
    %2419 = vmatpush.msra.mxu0 %v353
    %2420 = vmatpush.msra.mxu0 %v349
    %2421 = vmatpush.msra.mxu0 %v345
    %2422 = vmatpush.msra.mxu0 %v341
    %2423 = vmatpush.msra.mxu0 %v337
    %2424 = vmatpush.msra.mxu0 %v333
    %2425 = vmatpush.msra.mxu0 %v329
    %2426 = vmatpush.msra.mxu0 %v325
    %2427 = vmatpush.msra.mxu0 %v321
    %2428 = vmatpush.msra.mxu0 %v317
    %2429 = vmatpush.msra.mxu0 %v313
    %2430 = vmatpush.msra.mxu0 %v309
    %2431 = vmatpush.msra.mxu0 %v305
    %2432 = vmatmul.f32.gmra.mxu0 %v2214
    %v2433 = vpop.f32.mrf.mxu0
    %v2434 = vadd.f32 0.0, %v2433
    %2435 = vdwg.mxu0
    %2436 = vmatpush.msra.mxu0 %v366
    %2437 = vmatpush.msra.mxu0 %v362
    %2438 = vmatpush.msra.mxu0 %v358
    %2439 = vmatpush.msra.mxu0 %v354
    %2440 = vmatpush.msra.mxu0 %v350
    %2441 = vmatpush.msra.mxu0 %v346
    %2442 = vmatpush.msra.mxu0 %v342
    %2443 = vmatpush.msra.mxu0 %v338
    %2444 = vmatpush.msra.mxu0 %v334
    %2445 = vmatpush.msra.mxu0 %v330
    %2446 = vmatpush.msra.mxu0 %v326
    %2447 = vmatpush.msra.mxu0 %v322
    %2448 = vmatpush.msra.mxu0 %v318
    %2449 = vmatpush.msra.mxu0 %v314
    %2450 = vmatpush.msra.mxu0 %v310
    %2451 = vmatpush.msra.mxu0 %v306
    %2452 = vmatmul.f32.gmra.mxu0 %v2214
    %v2453 = vpop.f32.mrf.mxu0
    %v2454 = vadd.f32 0.0, %v2453
    %2455 = vdwg.mxu0
    %v2456 = vadd.f32 %v2372, %v2394
    %v2457 = vadd.f32 %v2373, %v2414
    %v2458 = vadd.f32 %v2374, %v2434
    %v2459 = vadd.f32 %v2375, %v2454
    %v2460 = vxor.u32 %v2456, 2147483648
    %v2461 = vmul.f32 %v2460, 1.442695
    %v2462 = vpow.pop %v2461
    %v2463 = vadd.f32 %v2462, 1.0
    %v2464 = vrcp.pop %v2463
    %v2465 = vmul.f32 %v2463, %v2464
    %v2466 = vsub.f32 1.0, %v2465
    %v2467 = vmul.f32 %v2464, %v2466
    %v2468 = vadd.f32 %v2464, %v2467
    %vm2469 = vweird.f32 %v2463
    %vm2470 = vweird.f32 %v2464
    %vm2471 = vmor %vm2469, %vm2470
    %v2472 = vsel %vm2471, %v2464, %v2468
    %v2473 = vand.u32 2147483647, %v2463
    %vm2474 = vcmp.eq.f32.partialorder %v2473, 8.507059e+37
    %v2475 = vand.u32 %v2463, 2147483648
    %v2476 = vor.u32 1.1754944e-38, %v2475
    %v2477 = vsel %vm2474, %v2476, %v2472
    %v2478 = vmul.f32 1.0, %v2477
    %v2479 = vxor.u32 %v2457, 2147483648
    %v2480 = vmul.f32 %v2479, 1.442695
    %v2481 = vpow.pop %v2480
    %v2482 = vadd.f32 %v2481, 1.0
    %v2483 = vrcp.pop %v2482
    %v2484 = vmul.f32 %v2482, %v2483
    %v2485 = vsub.f32 1.0, %v2484
    %v2486 = vmul.f32 %v2483, %v2485
    %v2487 = vadd.f32 %v2483, %v2486
    %vm2488 = vweird.f32 %v2482
    %vm2489 = vweird.f32 %v2483
    %vm2490 = vmor %vm2488, %vm2489
    %v2491 = vsel %vm2490, %v2483, %v2487
    %v2492 = vand.u32 2147483647, %v2482
    %vm2493 = vcmp.eq.f32.partialorder %v2492, 8.507059e+37
    %v2494 = vand.u32 %v2482, 2147483648
    %v2495 = vor.u32 1.1754944e-38, %v2494
    %v2496 = vsel %vm2493, %v2495, %v2491
    %v2497 = vmul.f32 1.0, %v2496
    %v2498 = vtanh.pop %v2458
    %v2499 = vxor.u32 %v2459, 2147483648
    %v2500 = vmul.f32 %v2499, 1.442695
    %v2501 = vpow.pop %v2500
    %v2502 = vadd.f32 %v2501, 1.0
    %v2503 = vrcp.pop %v2502
    %v2504 = vmul.f32 %v2502, %v2503
    %v2505 = vsub.f32 1.0, %v2504
    %v2506 = vmul.f32 %v2503, %v2505
    %v2507 = vadd.f32 %v2503, %v2506
    %vm2508 = vweird.f32 %v2502
    %vm2509 = vweird.f32 %v2503
    %vm2510 = vmor %vm2508, %vm2509
    %v2511 = vsel %vm2510, %v2503, %v2507
    %v2512 = vand.u32 2147483647, %v2502
    %vm2513 = vcmp.eq.f32.partialorder %v2512, 8.507059e+37
    %v2514 = vand.u32 %v2502, 2147483648
    %v2515 = vor.u32 1.1754944e-38, %v2514
    %v2516 = vsel %vm2513, %v2515, %v2511
    %v2517 = vmul.f32 1.0, %v2516
    %v2518 = vmul.f32 %v2497, %v2212
    %v2519 = vmul.f32 %v2478, %v2498
    %v2520 = vadd.f32 %v2518, %v2519
    %v2521 = vtanh.pop %v2520
    %v2522 = vmul.f32 %v2517, %v2521
    %s2523 = scalar_lea.vmem %s203, 8
    %2524 = vst [vmem:[%s2523] sm:$0xff] %v2522
    %s2525 = scalar_lea.vmem [#allocation6], 224
    %v2526 = vld [vmem:[%s2525] sm:$0xff]
    %v2527 = vld [vmem:[%s2525 + $0x8] sm:$0xff]
    %v2528 = vld [vmem:[%s2525 + $0x10] sm:$0xff]
    %v2529 = vld [vmem:[%s2525 + $0x18] sm:$0xff]
    %2530 = vmatpush.msra.mxu0 %v296
    %2531 = vmatpush.msra.mxu0 %v292
    %2532 = vmatpush.msra.mxu0 %v288
    %2533 = vmatpush.msra.mxu0 %v284
    %2534 = vmatpush.msra.mxu0 %v280
    %2535 = vmatpush.msra.mxu0 %v276
    %2536 = vmatpush.msra.mxu0 %v272
    %2537 = vmatpush.msra.mxu0 %v268
    %2538 = vmatpush.msra.mxu0 %v264
    %2539 = vmatpush.msra.mxu0 %v260
    %2540 = vmatpush.msra.mxu0 %v256
    %2541 = vmatpush.msra.mxu0 %v252
    %2542 = vmatpush.msra.mxu0 %v248
    %2543 = vmatpush.msra.mxu0 %v244
    %2544 = vmatpush.msra.mxu0 %v240
    %2545 = vmatpush.msra.mxu0 %v236
    %2546 = vmatmul.f32.gmra.mxu0 %v2368
    %v2547 = vpop.f32.mrf.mxu0
    %v2548 = vadd.f32 0.0, %v2547
    %2549 = vdwg.mxu0
    %2550 = vmatpush.msra.mxu0 %v297
    %2551 = vmatpush.msra.mxu0 %v293
    %2552 = vmatpush.msra.mxu0 %v289
    %2553 = vmatpush.msra.mxu0 %v285
    %2554 = vmatpush.msra.mxu0 %v281
    %2555 = vmatpush.msra.mxu0 %v277
    %2556 = vmatpush.msra.mxu0 %v273
    %2557 = vmatpush.msra.mxu0 %v269
    %2558 = vmatpush.msra.mxu0 %v265
    %2559 = vmatpush.msra.mxu0 %v261
    %2560 = vmatpush.msra.mxu0 %v257
    %2561 = vmatpush.msra.mxu0 %v253
    %2562 = vmatpush.msra.mxu0 %v249
    %2563 = vmatpush.msra.mxu0 %v245
    %2564 = vmatpush.msra.mxu0 %v241
    %2565 = vmatpush.msra.mxu0 %v237
    %2566 = vmatmul.f32.gmra.mxu0 %v2368
    %v2567 = vpop.f32.mrf.mxu0
    %v2568 = vadd.f32 0.0, %v2567
    %2569 = vdwg.mxu0
    %2570 = vmatpush.msra.mxu0 %v298
    %2571 = vmatpush.msra.mxu0 %v294
    %2572 = vmatpush.msra.mxu0 %v290
    %2573 = vmatpush.msra.mxu0 %v286
    %2574 = vmatpush.msra.mxu0 %v282
    %2575 = vmatpush.msra.mxu0 %v278
    %2576 = vmatpush.msra.mxu0 %v274
    %2577 = vmatpush.msra.mxu0 %v270
    %2578 = vmatpush.msra.mxu0 %v266
    %2579 = vmatpush.msra.mxu0 %v262
    %2580 = vmatpush.msra.mxu0 %v258
    %2581 = vmatpush.msra.mxu0 %v254
    %2582 = vmatpush.msra.mxu0 %v250
    %2583 = vmatpush.msra.mxu0 %v246
    %2584 = vmatpush.msra.mxu0 %v242
    %2585 = vmatpush.msra.mxu0 %v238
    %2586 = vmatmul.f32.gmra.mxu0 %v2368
    %v2587 = vpop.f32.mrf.mxu0
    %v2588 = vadd.f32 0.0, %v2587
    %2589 = vdwg.mxu0
    %2590 = vmatpush.msra.mxu0 %v299
    %2591 = vmatpush.msra.mxu0 %v295
    %2592 = vmatpush.msra.mxu0 %v291
    %2593 = vmatpush.msra.mxu0 %v287
    %2594 = vmatpush.msra.mxu0 %v283
    %2595 = vmatpush.msra.mxu0 %v279
    %2596 = vmatpush.msra.mxu0 %v275
    %2597 = vmatpush.msra.mxu0 %v271
    %2598 = vmatpush.msra.mxu0 %v267
    %2599 = vmatpush.msra.mxu0 %v263
    %2600 = vmatpush.msra.mxu0 %v259
    %2601 = vmatpush.msra.mxu0 %v255
    %2602 = vmatpush.msra.mxu0 %v251
    %2603 = vmatpush.msra.mxu0 %v247
    %2604 = vmatpush.msra.mxu0 %v243
    %2605 = vmatpush.msra.mxu0 %v239
    %2606 = vmatmul.f32.gmra.mxu0 %v2368
    %v2607 = vpop.f32.mrf.mxu0
    %v2608 = vadd.f32 0.0, %v2607
    %2609 = vdwg.mxu0
    %v2610 = vadd.f32 %v2526, %v2548
    %v2611 = vadd.f32 %v2527, %v2568
    %v2612 = vadd.f32 %v2528, %v2588
    %v2613 = vadd.f32 %v2529, %v2608
    %v2614 = vxor.u32 %v2610, 2147483648
    %v2615 = vmul.f32 %v2614, 1.442695
    %v2616 = vpow.pop %v2615
    %v2617 = vadd.f32 %v2616, 1.0
    %v2618 = vrcp.pop %v2617
    %v2619 = vmul.f32 %v2617, %v2618
    %v2620 = vsub.f32 1.0, %v2619
    %v2621 = vmul.f32 %v2618, %v2620
    %v2622 = vadd.f32 %v2618, %v2621
    %vm2623 = vweird.f32 %v2617
    %vm2624 = vweird.f32 %v2618
    %vm2625 = vmor %vm2623, %vm2624
    %v2626 = vsel %vm2625, %v2618, %v2622
    %v2627 = vand.u32 2147483647, %v2617
    %vm2628 = vcmp.eq.f32.partialorder %v2627, 8.507059e+37
    %v2629 = vand.u32 %v2617, 2147483648
    %v2630 = vor.u32 1.1754944e-38, %v2629
    %v2631 = vsel %vm2628, %v2630, %v2626
    %v2632 = vmul.f32 1.0, %v2631
    %v2633 = vxor.u32 %v2611, 2147483648
    %v2634 = vmul.f32 %v2633, 1.442695
    %v2635 = vpow.pop %v2634
    %v2636 = vadd.f32 %v2635, 1.0
    %v2637 = vrcp.pop %v2636
    %v2638 = vmul.f32 %v2636, %v2637
    %v2639 = vsub.f32 1.0, %v2638
    %v2640 = vmul.f32 %v2637, %v2639
    %v2641 = vadd.f32 %v2637, %v2640
    %vm2642 = vweird.f32 %v2636
    %vm2643 = vweird.f32 %v2637
    %vm2644 = vmor %vm2642, %vm2643
    %v2645 = vsel %vm2644, %v2637, %v2641
    %v2646 = vand.u32 2147483647, %v2636
    %vm2647 = vcmp.eq.f32.partialorder %v2646, 8.507059e+37
    %v2648 = vand.u32 %v2636, 2147483648
    %v2649 = vor.u32 1.1754944e-38, %v2648
    %v2650 = vsel %vm2647, %v2649, %v2645
    %v2651 = vmul.f32 1.0, %v2650
    %v2652 = vtanh.pop %v2612
    %v2653 = vxor.u32 %v2613, 2147483648
    %v2654 = vmul.f32 %v2653, 1.442695
    %v2655 = vpow.pop %v2654
    %v2656 = vadd.f32 %v2655, 1.0
    %v2657 = vrcp.pop %v2656
    %v2658 = vmul.f32 %v2656, %v2657
    %v2659 = vsub.f32 1.0, %v2658
    %v2660 = vmul.f32 %v2657, %v2659
    %v2661 = vadd.f32 %v2657, %v2660
    %vm2662 = vweird.f32 %v2656
    %vm2663 = vweird.f32 %v2657
    %vm2664 = vmor %vm2662, %vm2663
    %v2665 = vsel %vm2664, %v2657, %v2661
    %v2666 = vand.u32 2147483647, %v2656
    %vm2667 = vcmp.eq.f32.partialorder %v2666, 8.507059e+37
    %v2668 = vand.u32 %v2656, 2147483648
    %v2669 = vor.u32 1.1754944e-38, %v2668
    %v2670 = vsel %vm2667, %v2669, %v2665
    %v2671 = vmul.f32 1.0, %v2670
    %v2672 = vmul.f32 %v2651, %v2366
    %v2673 = vmul.f32 %v2632, %v2652
    %v2674 = vadd.f32 %v2672, %v2673
    %v2675 = vtanh.pop %v2674
    %v2676 = vmul.f32 %v2671, %v2675
    %s2677 = scalar_lea.vmem %s5, 56
    %2678 = vst [vmem:[%s2677] sm:$0xff] %v2676
    %v2679 = vld [vmem:[#allocation7] sm:$0xff]
    %v2680 = vld [vmem:[#allocation7 + $0x8] sm:$0xff]
    %v2681 = vld [vmem:[#allocation7 + $0x10] sm:$0xff]
    %v2682 = vld [vmem:[#allocation7 + $0x18] sm:$0xff]
    %2683 = vmatpush.msra.mxu0 %v363
    %2684 = vmatpush.msra.mxu0 %v359
    %2685 = vmatpush.msra.mxu0 %v355
    %2686 = vmatpush.msra.mxu0 %v351
    %2687 = vmatpush.msra.mxu0 %v347
    %2688 = vmatpush.msra.mxu0 %v343
    %2689 = vmatpush.msra.mxu0 %v339
    %2690 = vmatpush.msra.mxu0 %v335
    %2691 = vmatpush.msra.mxu0 %v331
    %2692 = vmatpush.msra.mxu0 %v327
    %2693 = vmatpush.msra.mxu0 %v323
    %2694 = vmatpush.msra.mxu0 %v319
    %2695 = vmatpush.msra.mxu0 %v315
    %2696 = vmatpush.msra.mxu0 %v311
    %2697 = vmatpush.msra.mxu0 %v307
    %2698 = vmatpush.msra.mxu0 %v303
    %2699 = vmatmul.f32.gmra.mxu0 %v2522
    %v2700 = vpop.f32.mrf.mxu0
    %v2701 = vadd.f32 0.0, %v2700
    %2702 = vdwg.mxu0
    %2703 = vmatpush.msra.mxu0 %v364
    %2704 = vmatpush.msra.mxu0 %v360
    %2705 = vmatpush.msra.mxu0 %v356
    %2706 = vmatpush.msra.mxu0 %v352
    %2707 = vmatpush.msra.mxu0 %v348
    %2708 = vmatpush.msra.mxu0 %v344
    %2709 = vmatpush.msra.mxu0 %v340
    %2710 = vmatpush.msra.mxu0 %v336
    %2711 = vmatpush.msra.mxu0 %v332
    %2712 = vmatpush.msra.mxu0 %v328
    %2713 = vmatpush.msra.mxu0 %v324
    %2714 = vmatpush.msra.mxu0 %v320
    %2715 = vmatpush.msra.mxu0 %v316
    %2716 = vmatpush.msra.mxu0 %v312
    %2717 = vmatpush.msra.mxu0 %v308
    %2718 = vmatpush.msra.mxu0 %v304
    %2719 = vmatmul.f32.gmra.mxu0 %v2522
    %v2720 = vpop.f32.mrf.mxu0
    %v2721 = vadd.f32 0.0, %v2720
    %2722 = vdwg.mxu0
    %2723 = vmatpush.msra.mxu0 %v365
    %2724 = vmatpush.msra.mxu0 %v361
    %2725 = vmatpush.msra.mxu0 %v357
    %2726 = vmatpush.msra.mxu0 %v353
    %2727 = vmatpush.msra.mxu0 %v349
    %2728 = vmatpush.msra.mxu0 %v345
    %2729 = vmatpush.msra.mxu0 %v341
    %2730 = vmatpush.msra.mxu0 %v337
    %2731 = vmatpush.msra.mxu0 %v333
    %2732 = vmatpush.msra.mxu0 %v329
    %2733 = vmatpush.msra.mxu0 %v325
    %2734 = vmatpush.msra.mxu0 %v321
    %2735 = vmatpush.msra.mxu0 %v317
    %2736 = vmatpush.msra.mxu0 %v313
    %2737 = vmatpush.msra.mxu0 %v309
    %2738 = vmatpush.msra.mxu0 %v305
    %2739 = vmatmul.f32.gmra.mxu0 %v2522
    %v2740 = vpop.f32.mrf.mxu0
    %v2741 = vadd.f32 0.0, %v2740
    %2742 = vdwg.mxu0
    %2743 = vmatpush.msra.mxu0 %v366
    %2744 = vmatpush.msra.mxu0 %v362
    %2745 = vmatpush.msra.mxu0 %v358
    %2746 = vmatpush.msra.mxu0 %v354
    %2747 = vmatpush.msra.mxu0 %v350
    %2748 = vmatpush.msra.mxu0 %v346
    %2749 = vmatpush.msra.mxu0 %v342
    %2750 = vmatpush.msra.mxu0 %v338
    %2751 = vmatpush.msra.mxu0 %v334
    %2752 = vmatpush.msra.mxu0 %v330
    %2753 = vmatpush.msra.mxu0 %v326
    %2754 = vmatpush.msra.mxu0 %v322
    %2755 = vmatpush.msra.mxu0 %v318
    %2756 = vmatpush.msra.mxu0 %v314
    %2757 = vmatpush.msra.mxu0 %v310
    %2758 = vmatpush.msra.mxu0 %v306
    %2759 = vmatmul.f32.gmra.mxu0 %v2522
    %v2760 = vpop.f32.mrf.mxu0
    %v2761 = vadd.f32 0.0, %v2760
    %2762 = vdwg.mxu0
    %v2763 = vadd.f32 %v2679, %v2701
    %v2764 = vadd.f32 %v2680, %v2721
    %v2765 = vadd.f32 %v2681, %v2741
    %v2766 = vadd.f32 %v2682, %v2761
    %v2767 = vxor.u32 %v2763, 2147483648
    %v2768 = vmul.f32 %v2767, 1.442695
    %v2769 = vpow.pop %v2768
    %v2770 = vadd.f32 %v2769, 1.0
    %v2771 = vrcp.pop %v2770
    %v2772 = vmul.f32 %v2770, %v2771
    %v2773 = vsub.f32 1.0, %v2772
    %v2774 = vmul.f32 %v2771, %v2773
    %v2775 = vadd.f32 %v2771, %v2774
    %vm2776 = vweird.f32 %v2770
    %vm2777 = vweird.f32 %v2771
    %vm2778 = vmor %vm2776, %vm2777
    %v2779 = vsel %vm2778, %v2771, %v2775
    %v2780 = vand.u32 2147483647, %v2770
    %vm2781 = vcmp.eq.f32.partialorder %v2780, 8.507059e+37
    %v2782 = vand.u32 %v2770, 2147483648
    %v2783 = vor.u32 1.1754944e-38, %v2782
    %v2784 = vsel %vm2781, %v2783, %v2779
    %v2785 = vmul.f32 1.0, %v2784
    %v2786 = vxor.u32 %v2764, 2147483648
    %v2787 = vmul.f32 %v2786, 1.442695
    %v2788 = vpow.pop %v2787
    %v2789 = vadd.f32 %v2788, 1.0
    %v2790 = vrcp.pop %v2789
    %v2791 = vmul.f32 %v2789, %v2790
    %v2792 = vsub.f32 1.0, %v2791
    %v2793 = vmul.f32 %v2790, %v2792
    %v2794 = vadd.f32 %v2790, %v2793
    %vm2795 = vweird.f32 %v2789
    %vm2796 = vweird.f32 %v2790
    %vm2797 = vmor %vm2795, %vm2796
    %v2798 = vsel %vm2797, %v2790, %v2794
    %v2799 = vand.u32 2147483647, %v2789
    %vm2800 = vcmp.eq.f32.partialorder %v2799, 8.507059e+37
    %v2801 = vand.u32 %v2789, 2147483648
    %v2802 = vor.u32 1.1754944e-38, %v2801
    %v2803 = vsel %vm2800, %v2802, %v2798
    %v2804 = vmul.f32 1.0, %v2803
    %v2805 = vtanh.pop %v2765
    %v2806 = vxor.u32 %v2766, 2147483648
    %v2807 = vmul.f32 %v2806, 1.442695
    %v2808 = vpow.pop %v2807
    %v2809 = vadd.f32 %v2808, 1.0
    %v2810 = vrcp.pop %v2809
    %v2811 = vmul.f32 %v2809, %v2810
    %v2812 = vsub.f32 1.0, %v2811
    %v2813 = vmul.f32 %v2810, %v2812
    %v2814 = vadd.f32 %v2810, %v2813
    %vm2815 = vweird.f32 %v2809
    %vm2816 = vweird.f32 %v2810
    %vm2817 = vmor %vm2815, %vm2816
    %v2818 = vsel %vm2817, %v2810, %v2814
    %v2819 = vand.u32 2147483647, %v2809
    %vm2820 = vcmp.eq.f32.partialorder %v2819, 8.507059e+37
    %v2821 = vand.u32 %v2809, 2147483648
    %v2822 = vor.u32 1.1754944e-38, %v2821
    %v2823 = vsel %vm2820, %v2822, %v2818
    %v2824 = vmul.f32 1.0, %v2823
    %v2825 = vmul.f32 %v2804, %v2520
    %v2826 = vmul.f32 %v2785, %v2805
    %v2827 = vadd.f32 %v2825, %v2826
    %v2828 = vtanh.pop %v2827
    %v2829 = vmul.f32 %v2824, %v2828
    %2830 = vst [vmem:[%s203] sm:$0xff] %v2829
    %2831 = vst [vmem:[#allocation4] sm:$0xff] %v2676
    %2832 = vst [vmem:[#allocation5] sm:$0xff] %v2674
    %2833 = vst [vmem:[%s367] sm:$0xff] %v2829
    %2834 = vst [vmem:[%s369] sm:$0xff] %v2827
    // Predicated region
    $region72: #{_forward.2} parent=1 // pred_check
      %p2835 = pneg %p206
    $region73: #{_forward.2} parent=1 // pred_check_branch
      %2837 = sbr.rel (%p2835) target = $region75
    $region74: #{_forward.2} parent=1 // pred_region
      %2838 = vst [vmem:[%s7] sm:$0xff] %v2676
      %2839 = vst [vmem:[%s8] sm:$0xff] %v2674
      %s2840 = scalar_lea.vmem %s7, 8
      %2841 = vst [vmem:[%s2840] sm:$0xff] %v2829
      %s2842 = scalar_lea.vmem %s8, 8
      %2843 = vst [vmem:[%s2842] sm:$0xff] %v2827
    $region75: #{_forward.2} parent=1 // pred_fallthru
      _
    %s2844 = ssub.s32 0, 0
    %s2845 = smul.u32 8, %s2844
    %p2846 = scmp.lt.s32.totalorder %s2845, 7
    %s2847 = scalar_select %p2846, %s2845, 7
    %s2848 = smul.addr %s2847, 8
    %s2849 = scalar_lea.vmem %s6, %s2848
    // Predicated region
    $region76: #{_forward.2} parent=1 // pred_check
      _
    $region77: #{_forward.2} parent=1 // pred_check_branch
      %2851 = sbr.rel (0) target = $region79
    $region78: #{_forward.2} parent=1 // pred_region
      _
    $region79: #{_forward.2} parent=1 // pred_fallthru
      _
    // Predicated region
    $region80: #{_forward.2} parent=1 // pred_check
      _
    $region81: #{_forward.2} parent=1 // pred_check_branch
      %2853 = sbr.rel (0) target = $region83
    $region82: #{_forward.2} parent=1 // pred_region
      %s2854 = ssub.s32 0, 0
      %s2855 = smul.u32 8, %s2854
    $region83: #{_forward.2} parent=1 // pred_fallthru
      _
    // Predicated region
    $region84: #{_forward.2} parent=1 // pred_check
      _
    $region85: #{_forward.2} parent=1 // pred_check_branch
      %2857 = sbr.rel (0) target = $region87
    $region86: #{_forward.2} parent=1 // pred_region
      _
    $region87: #{_forward.2} parent=1 // pred_fallthru
      _
    // Predicated region
    $region88: #{_forward.2} parent=1 // pred_check
      _
    $region89: #{_forward.2} parent=1 // pred_check_branch
      %2859 = sbr.rel (0) target = $region91
    $region90: #{_forward.2} parent=1 // pred_region
      _
    $region91: #{_forward.2} parent=1 // pred_fallthru
      _
    // Predicated region
    $region92: #{_forward.2} parent=1 // pred_check
      _
    $region93: #{_forward.2} parent=1 // pred_check_branch
      %2861 = sbr.rel (0) target = $region95
    $region94: #{_forward.2} parent=1 // pred_region
      _
    $region95: #{_forward.2} parent=1 // pred_fallthru
      _
    // Predicated region
    $region96: #{_forward.2} parent=1 // pred_check
      _
    $region97: #{_forward.2} parent=1 // pred_check_branch
      %2863 = sbr.rel (0) target = $region99
    $region98: #{_forward.2} parent=1 // pred_region
      %s2864 = ssub.s32 0, 0
      %s2865 = smul.u32 8, %s2864
      %p2866 = scmp.lt.s32.totalorder %s2865, 7
      %s2867 = scalar_select %p2866, %s2865, 7
      %s2868 = smul.addr %s2867, 8
      %s2869 = scalar_lea.vmem %s6, %s2868
    $region99: #{_forward.2} parent=1 // pred_fallthru
      _
    // Predicated region
    $region100: #{_forward.2} parent=1 // pred_check
      _
    $region101: #{_forward.2} parent=1 // pred_check_branch
      %2871 = sbr.rel (0) target = $region103
    $region102: #{_forward.2} parent=1 // pred_region
      _
    $region103: #{_forward.2} parent=1 // pred_fallthru
      _
    // Predicated region
    $region104: #{_forward.2} parent=1 // pred_check
      _
    $region105: #{_forward.2} parent=1 // pred_check_branch
      %2873 = sbr.rel (0) target = $region107
    $region106: #{_forward.2} parent=1 // pred_region
      _
    $region107: #{_forward.2} parent=1 // pred_fallthru
      _
  %2874 = vsyncmov [#allocation3]
  %s2875 = vpop.sfrf %2874
  %p2876 = scmp.eq.s32.totalorder %s2875, 0
  %p2877 = pneg %p2876
  %2879 = shalt.err (%p2877)

// kernel: _forward.3
$region0: #{_forward.3}
  #allocation0 [shape = 'u32[]', space=smem, size = 0x4, offset = 0x4, fixed_abs, tag = 'smem constant byte address 0x4 - core index']
  #allocation1 [shape = 'u32[72,128]{1,0:T(1,128)}', space=vmem, size = 0x9000, scoped, tag = 'internal scratch']
  #allocation2 [shape = 'f32[2,128,512]{2,1,0:T(8,128)}', space=vmem, size = 0x80000, scoped, tag = 'scratch operand']
  #allocation3 [shape = 's32[1]{0}', space=sflag, size = 0x4, scoped, tag = 'scratch operand']
  #allocation4 [shape = 'f32[2,8,128]{2,1,0:T(8,128)}', space=vmem, size = 0x2000, scoped, tag = 'scratch operand']
  #allocation5 [shape = 'f32[2,8,128]{2,1,0:T(8,128)}', space=vmem, size = 0x2000, scoped, tag = 'scratch operand']
  #allocation12 [shape = 's32[]', space=sflag, size = 0x4, offset = 0, fixed_abs, tag = 'sflag constant byte address 0x0 - dummy sync flag']
  %s0 = inlined_call_operand.vmem [shape: f32[8,8,1024], index: 0, kind: input, shape index: {}, may-alias: {0,1}]
  %s1 = inlined_call_operand.vmem [shape: f32[8,8,1024], index: 1, kind: input, shape index: {}, may-alias: {0,1}]
  %s2 = inlined_call_operand.vmem [shape: f32[2,128,512], index: 2, kind: input, shape index: {}]
  %s3 = inlined_call_operand.vmem [shape: f32[2,8,128], index: 3, kind: input, shape index: {}]
  %s4 = inlined_call_operand.vmem [shape: f32[2,8,128], index: 4, kind: input, shape index: {}]
  %s5 = inlined_call_operand.vmem [shape: f32[8,8,128], index: 5, kind: output, shape index: {0}]
  %s6 = inlined_call_operand.vmem [shape: f32[8,8,128], index: 6, kind: output, shape index: {1}]
  %s7 = inlined_call_operand.hbm [shape: f32[2,8,128], index: 7, kind: output, shape index: {2}]
  %s8 = inlined_call_operand.hbm [shape: f32[2,8,128], index: 8, kind: output, shape index: {3}]
  %9 = xla_tuple %s5, %s6, %s7, %s8
  %s10 = sld [smem:[#allocation0]]
  $region123: #{_forward.3} parent=0
    _
  %s12 = ssub.s32 1, %s10
  %s13 = scalar_select 0, %s12, %s10
  $region1: #{_forward.3} parent=0
    #allocation6 [shape = 'u8[131072]{0}', space=vmem, size = 0x20000, scoped, tag = 'input window, operand 0, single buffered']
    #allocation7 [shape = 'u8[131072]{0}', space=vmem, size = 0x20000, scoped, tag = 'input window, operand 1, single buffered']
    #allocation8 [shape = 'u8[8192]{0}', space=vmem, size = 0x2000, scoped, tag = 'output window, operand 2, single buffered']
    #allocation9 [shape = 's32[1]{0}', space=sflag, size = 0x4, scoped, tag = 'scoped memory for _forward.3']
    #allocation10 [shape = 'u8[8192]{0}', space=vmem, size = 0x2000, scoped, tag = 'output window, operand 3, single buffered']
    #allocation11 [shape = 's32[1]{0}', space=sflag, size = 0x4, scoped, tag = 'scoped memory for _forward.3']
    %14 = vsyncpa [#allocation9], 0
    %15 = vsyncpa [#allocation11], 0
    // Predicated region
    $region2: #{_forward.3} parent=1 // pred_check
      _
    $region3: #{_forward.3} parent=1 // pred_check_branch
      %17 = sbr.rel (0) target = $region5
    $region4: #{_forward.3} parent=1 // pred_region
      // Predicated region
      $region6: #{_forward.3} parent=4 // pred_check
        _
      $region7: #{_forward.3} parent=4 // pred_check_branch
        %19 = sbr.rel (0) target = $region9
      $region8: #{_forward.3} parent=4 // pred_region
        // Predicated region
        $region10: #{_forward.3} parent=8 // pred_check
          _
        $region11: #{_forward.3} parent=8 // pred_check_branch
          %21 = sbr.rel (0) target = $region13
        $region12: #{_forward.3} parent=8 // pred_region
          loop: start=0, step=1, limit=1
          $region14: #{_forward.3} parent=12 // loop_pre_header
            _
          $region15: #{_forward.3} parent=12 // loop_header
            %s23 = sphi 0, %s27
            %p24 = scmp.ge.s32.totalorder %s23, 1
            %s28 = sphi %s0, %s0
            %s29 = sphi [#allocation6], [#allocation6]
          $region16: #{_forward.3} parent=12 // loop_header_branch
            %26 = sbr.rel (%p24) target = $region20
          $region17: #{_forward.3} parent=12 // loop_body
            %v30 = vld [vmem:[%s28] sm:$0xff]
            %31 = vst [vmem:[%s29] sm:$0xff] %v30
            %v32 = vld [vmem:[%s28 + $0x8] sm:$0xff]
            %33 = vst [vmem:[%s29 + $0x8] sm:$0xff] %v32
            %v34 = vld [vmem:[%s28 + $0x10] sm:$0xff]
            %35 = vst [vmem:[%s29 + $0x10] sm:$0xff] %v34
            %v36 = vld [vmem:[%s28 + $0x18] sm:$0xff]
            %37 = vst [vmem:[%s29 + $0x18] sm:$0xff] %v36
            %v38 = vld [vmem:[%s28 + $0x40] sm:$0xff]
            %39 = vst [vmem:[%s29 + $0x20] sm:$0xff] %v38
            %v40 = vld [vmem:[%s28 + $0x48] sm:$0xff]
            %41 = vst [vmem:[%s29 + $0x28] sm:$0xff] %v40
            %v42 = vld [vmem:[%s28 + $0x50] sm:$0xff]
            %43 = vst [vmem:[%s29 + $0x30] sm:$0xff] %v42
            %v44 = vld [vmem:[%s28 + $0x58] sm:$0xff]
            %45 = vst [vmem:[%s29 + $0x38] sm:$0xff] %v44
            %v46 = vld [vmem:[%s28 + $0x80] sm:$0xff]
            %47 = vst [vmem:[%s29 + $0x40] sm:$0xff] %v46
            %v48 = vld [vmem:[%s28 + $0x88] sm:$0xff]
            %49 = vst [vmem:[%s29 + $0x48] sm:$0xff] %v48
            %v50 = vld [vmem:[%s28 + $0x90] sm:$0xff]
            %51 = vst [vmem:[%s29 + $0x50] sm:$0xff] %v50
            %v52 = vld [vmem:[%s28 + $0x98] sm:$0xff]
            %53 = vst [vmem:[%s29 + $0x58] sm:$0xff] %v52
            %v54 = vld [vmem:[%s28 + $0xc0] sm:$0xff]
            %55 = vst [vmem:[%s29 + $0x60] sm:$0xff] %v54
            %v56 = vld [vmem:[%s28 + $0xc8] sm:$0xff]
            %57 = vst [vmem:[%s29 + $0x68] sm:$0xff] %v56
            %v58 = vld [vmem:[%s28 + $0xd0] sm:$0xff]
            %59 = vst [vmem:[%s29 + $0x70] sm:$0xff] %v58
            %v60 = vld [vmem:[%s28 + $0xd8] sm:$0xff]
            %61 = vst [vmem:[%s29 + $0x78] sm:$0xff] %v60
            %v62 = vld [vmem:[%s28 + $0x100] sm:$0xff]
            %63 = vst [vmem:[%s29 + $0x80] sm:$0xff] %v62
            %v64 = vld [vmem:[%s28 + $0x108] sm:$0xff]
            %65 = vst [vmem:[%s29 + $0x88] sm:$0xff] %v64
            %v66 = vld [vmem:[%s28 + $0x110] sm:$0xff]
            %67 = vst [vmem:[%s29 + $0x90] sm:$0xff] %v66
            %v68 = vld [vmem:[%s28 + $0x118] sm:$0xff]
            %69 = vst [vmem:[%s29 + $0x98] sm:$0xff] %v68
            %v70 = vld [vmem:[%s28 + $0x140] sm:$0xff]
            %71 = vst [vmem:[%s29 + $0xa0] sm:$0xff] %v70
            %v72 = vld [vmem:[%s28 + $0x148] sm:$0xff]
            %73 = vst [vmem:[%s29 + $0xa8] sm:$0xff] %v72
            %v74 = vld [vmem:[%s28 + $0x150] sm:$0xff]
            %75 = vst [vmem:[%s29 + $0xb0] sm:$0xff] %v74
            %v76 = vld [vmem:[%s28 + $0x158] sm:$0xff]
            %77 = vst [vmem:[%s29 + $0xb8] sm:$0xff] %v76
            %v78 = vld [vmem:[%s28 + $0x180] sm:$0xff]
            %79 = vst [vmem:[%s29 + $0xc0] sm:$0xff] %v78
            %v80 = vld [vmem:[%s28 + $0x188] sm:$0xff]
            %81 = vst [vmem:[%s29 + $0xc8] sm:$0xff] %v80
            %v82 = vld [vmem:[%s28 + $0x190] sm:$0xff]
            %83 = vst [vmem:[%s29 + $0xd0] sm:$0xff] %v82
            %v84 = vld [vmem:[%s28 + $0x198] sm:$0xff]
            %85 = vst [vmem:[%s29 + $0xd8] sm:$0xff] %v84
            %v86 = vld [vmem:[%s28 + $0x1c0] sm:$0xff]
            %87 = vst [vmem:[%s29 + $0xe0] sm:$0xff] %v86
            %v88 = vld [vmem:[%s28 + $0x1c8] sm:$0xff]
            %89 = vst [vmem:[%s29 + $0xe8] sm:$0xff] %v88
            %v90 = vld [vmem:[%s28 + $0x1d0] sm:$0xff]
            %91 = vst [vmem:[%s29 + $0xf0] sm:$0xff] %v90
            %v92 = vld [vmem:[%s28 + $0x1d8] sm:$0xff]
            %93 = vst [vmem:[%s29 + $0xf8] sm:$0xff] %v92
          $region18: #{_forward.3} parent=12 // loop_footer
            %s27 = sadd.s32 1, %s23
          $region19: #{_forward.3} parent=12 // loop_footer_branch
            %22 = sbr.rel target = $region15
          $region20: #{_forward.3} parent=12 // loop_exit
            _
        $region13: #{_forward.3} parent=8 // pred_fallthru
          _
        // Predicated region
        $region21: #{_forward.3} parent=8 // pred_check
          _
        $region22: #{_forward.3} parent=8 // pred_check_branch
          %95 = sbr.rel target = $region24
        $region23: #{_forward.3} parent=8 // pred_region
          _
        $region24: #{_forward.3} parent=8 // pred_fallthru
          _
      $region9: #{_forward.3} parent=4 // pred_fallthru
        _
      %96 = vnop
    $region5: #{_forward.3} parent=1 // pred_fallthru
      _
    // Predicated region
    $region25: #{_forward.3} parent=1 // pred_check
      _
    $region26: #{_forward.3} parent=1 // pred_check_branch
      %98 = sbr.rel (0) target = $region28
    $region27: #{_forward.3} parent=1 // pred_region
      %s99 = ssub.s32 0, 0
      %s100 = smul.u32 8, %s99
      %s101 = smul.addr %s100, 8
      %s102 = sadd.s32 4, %s101
      %s103 = smul.addr %s102, 8
      %s104 = scalar_lea.vmem %s1, %s103
      // Predicated region
      $region29: #{_forward.3} parent=27 // pred_check
        _
      $region30: #{_forward.3} parent=27 // pred_check_branch
        %106 = sbr.rel (0) target = $region32
      $region31: #{_forward.3} parent=27 // pred_region
        // Predicated region
        $region33: #{_forward.3} parent=31 // pred_check
          _
        $region34: #{_forward.3} parent=31 // pred_check_branch
          %108 = sbr.rel (0) target = $region36
        $region35: #{_forward.3} parent=31 // pred_region
          loop: start=0, step=1, limit=1
          $region37: #{_forward.3} parent=35 // loop_pre_header
            _
          $region38: #{_forward.3} parent=35 // loop_header
            %s110 = sphi 0, %s114
            %p111 = scmp.ge.s32.totalorder %s110, 1
            %s115 = sphi %s104, %s104
            %s116 = sphi [#allocation7], [#allocation7]
          $region39: #{_forward.3} parent=35 // loop_header_branch
            %113 = sbr.rel (%p111) target = $region43
          $region40: #{_forward.3} parent=35 // loop_body
            %v117 = vld [vmem:[%s115] sm:$0xff]
            %118 = vst [vmem:[%s116] sm:$0xff] %v117
            %v119 = vld [vmem:[%s115 + $0x8] sm:$0xff]
            %120 = vst [vmem:[%s116 + $0x8] sm:$0xff] %v119
            %v121 = vld [vmem:[%s115 + $0x10] sm:$0xff]
            %122 = vst [vmem:[%s116 + $0x10] sm:$0xff] %v121
            %v123 = vld [vmem:[%s115 + $0x18] sm:$0xff]
            %124 = vst [vmem:[%s116 + $0x18] sm:$0xff] %v123
            %v125 = vld [vmem:[%s115 + $0x40] sm:$0xff]
            %126 = vst [vmem:[%s116 + $0x20] sm:$0xff] %v125
            %v127 = vld [vmem:[%s115 + $0x48] sm:$0xff]
            %128 = vst [vmem:[%s116 + $0x28] sm:$0xff] %v127
            %v129 = vld [vmem:[%s115 + $0x50] sm:$0xff]
            %130 = vst [vmem:[%s116 + $0x30] sm:$0xff] %v129
            %v131 = vld [vmem:[%s115 + $0x58] sm:$0xff]
            %132 = vst [vmem:[%s116 + $0x38] sm:$0xff] %v131
            %v133 = vld [vmem:[%s115 + $0x80] sm:$0xff]
            %134 = vst [vmem:[%s116 + $0x40] sm:$0xff] %v133
            %v135 = vld [vmem:[%s115 + $0x88] sm:$0xff]
            %136 = vst [vmem:[%s116 + $0x48] sm:$0xff] %v135
            %v137 = vld [vmem:[%s115 + $0x90] sm:$0xff]
            %138 = vst [vmem:[%s116 + $0x50] sm:$0xff] %v137
            %v139 = vld [vmem:[%s115 + $0x98] sm:$0xff]
            %140 = vst [vmem:[%s116 + $0x58] sm:$0xff] %v139
            %v141 = vld [vmem:[%s115 + $0xc0] sm:$0xff]
            %142 = vst [vmem:[%s116 + $0x60] sm:$0xff] %v141
            %v143 = vld [vmem:[%s115 + $0xc8] sm:$0xff]
            %144 = vst [vmem:[%s116 + $0x68] sm:$0xff] %v143
            %v145 = vld [vmem:[%s115 + $0xd0] sm:$0xff]
            %146 = vst [vmem:[%s116 + $0x70] sm:$0xff] %v145
            %v147 = vld [vmem:[%s115 + $0xd8] sm:$0xff]
            %148 = vst [vmem:[%s116 + $0x78] sm:$0xff] %v147
            %v149 = vld [vmem:[%s115 + $0x100] sm:$0xff]
            %150 = vst [vmem:[%s116 + $0x80] sm:$0xff] %v149
            %v151 = vld [vmem:[%s115 + $0x108] sm:$0xff]
            %152 = vst [vmem:[%s116 + $0x88] sm:$0xff] %v151
            %v153 = vld [vmem:[%s115 + $0x110] sm:$0xff]
            %154 = vst [vmem:[%s116 + $0x90] sm:$0xff] %v153
            %v155 = vld [vmem:[%s115 + $0x118] sm:$0xff]
            %156 = vst [vmem:[%s116 + $0x98] sm:$0xff] %v155
            %v157 = vld [vmem:[%s115 + $0x140] sm:$0xff]
            %158 = vst [vmem:[%s116 + $0xa0] sm:$0xff] %v157
            %v159 = vld [vmem:[%s115 + $0x148] sm:$0xff]
            %160 = vst [vmem:[%s116 + $0xa8] sm:$0xff] %v159
            %v161 = vld [vmem:[%s115 + $0x150] sm:$0xff]
            %162 = vst [vmem:[%s116 + $0xb0] sm:$0xff] %v161
            %v163 = vld [vmem:[%s115 + $0x158] sm:$0xff]
            %164 = vst [vmem:[%s116 + $0xb8] sm:$0xff] %v163
            %v165 = vld [vmem:[%s115 + $0x180] sm:$0xff]
            %166 = vst [vmem:[%s116 + $0xc0] sm:$0xff] %v165
            %v167 = vld [vmem:[%s115 + $0x188] sm:$0xff]
            %168 = vst [vmem:[%s116 + $0xc8] sm:$0xff] %v167
            %v169 = vld [vmem:[%s115 + $0x190] sm:$0xff]
            %170 = vst [vmem:[%s116 + $0xd0] sm:$0xff] %v169
            %v171 = vld [vmem:[%s115 + $0x198] sm:$0xff]
            %172 = vst [vmem:[%s116 + $0xd8] sm:$0xff] %v171
            %v173 = vld [vmem:[%s115 + $0x1c0] sm:$0xff]
            %174 = vst [vmem:[%s116 + $0xe0] sm:$0xff] %v173
            %v175 = vld [vmem:[%s115 + $0x1c8] sm:$0xff]
            %176 = vst [vmem:[%s116 + $0xe8] sm:$0xff] %v175
            %v177 = vld [vmem:[%s115 + $0x1d0] sm:$0xff]
            %178 = vst [vmem:[%s116 + $0xf0] sm:$0xff] %v177
            %v179 = vld [vmem:[%s115 + $0x1d8] sm:$0xff]
            %180 = vst [vmem:[%s116 + $0xf8] sm:$0xff] %v179
          $region41: #{_forward.3} parent=35 // loop_footer
            %s114 = sadd.s32 1, %s110
          $region42: #{_forward.3} parent=35 // loop_footer_branch
            %109 = sbr.rel target = $region38
          $region43: #{_forward.3} parent=35 // loop_exit
            _
        $region36: #{_forward.3} parent=31 // pred_fallthru
          _
        // Predicated region
        $region44: #{_forward.3} parent=31 // pred_check
          _
        $region45: #{_forward.3} parent=31 // pred_check_branch
          %182 = sbr.rel target = $region47
        $region46: #{_forward.3} parent=31 // pred_region
          _
        $region47: #{_forward.3} parent=31 // pred_fallthru
          _
      $region32: #{_forward.3} parent=27 // pred_fallthru
        _
      %183 = vnop
    $region28: #{_forward.3} parent=1 // pred_fallthru
      _
    // Predicated region
    $region48: #{_forward.3} parent=1 // pred_check
      _
    $region49: #{_forward.3} parent=1 // pred_check_branch
      %185 = sbr.rel (0) target = $region51
    $region50: #{_forward.3} parent=1 // pred_region
      _
    $region51: #{_forward.3} parent=1 // pred_fallthru
      _
    // Predicated region
    $region52: #{_forward.3} parent=1 // pred_check
      _
    $region53: #{_forward.3} parent=1 // pred_check_branch
      %187 = sbr.rel (0) target = $region55
    $region54: #{_forward.3} parent=1 // pred_region
      _
    $region55: #{_forward.3} parent=1 // pred_fallthru
      _
    // Predicated region
    $region56: #{_forward.3} parent=1 // pred_check
      _
    $region57: #{_forward.3} parent=1 // pred_check_branch
      %189 = sbr.rel (0) target = $region59
    $region58: #{_forward.3} parent=1 // pred_region
      _
    $region59: #{_forward.3} parent=1 // pred_fallthru
      _
    // Predicated region
    $region60: #{_forward.3} parent=1 // pred_check
      _
    $region61: #{_forward.3} parent=1 // pred_check_branch
      %191 = sbr.rel (0) target = $region63
    $region62: #{_forward.3} parent=1 // pred_region
      _
    $region63: #{_forward.3} parent=1 // pred_fallthru
      _
    %s192 = ssub.s32 0, 0
    %s193 = smul.u32 8, %s192
    %p194 = scmp.lt.s32.totalorder %s193, 7
    %s195 = scalar_select %p194, %s193, 7
    %s196 = smul.addr %s195, 8
    %s197 = scalar_lea.vmem %s6, %s196
    %s198 = ssub.s32 0, 0
    %s199 = smul.u32 8, %s198
    %s200 = ssub.s32 0, 0
    %s201 = smul.u32 8, %s200
    %p202 = scmp.lt.s32.totalorder %s201, 7
    %s203 = scalar_select %p202, %s201, 7
    %s204 = smul.addr %s203, 8
    %s205 = scalar_lea.vmem %s6, %s204
    %s206 = ssub.s32 0, 0
    %s207 = smul.u32 8, %s206
    %p208 = scmp.eq.s32.totalorder 0, 0
    // Predicated region
    $region64: #{_forward.3} parent=1 // pred_check
      %p209 = pneg %p208
    $region65: #{_forward.3} parent=1 // pred_check_branch
      %211 = sbr.rel (%p209) target = $region67
    $region66: #{_forward.3} parent=1 // pred_region
      // Predicated region
      $region68: #{_forward.3} parent=66 // pred_check
        _
      $region69: #{_forward.3} parent=66 // pred_check_branch
        %213 = sbr.rel (0) target = $region71
      $region70: #{_forward.3} parent=66 // pred_region
        loop: start=0, step=1, limit=1
        $region72: #{_forward.3} parent=70 // loop_pre_header
          _
        $region73: #{_forward.3} parent=70 // loop_header
          %s215 = sphi 0, %s219
          %p216 = scmp.ge.s32.totalorder %s215, 1
          %s220 = sphi %s2, %s2
          %s221 = sphi [#allocation2], [#allocation2]
        $region74: #{_forward.3} parent=70 // loop_header_branch
          %218 = sbr.rel (%p216) target = $region78
        $region75: #{_forward.3} parent=70 // loop_body
          %v222 = vld [vmem:[%s220] sm:$0xff]
          %223 = vst [vmem:[%s221] sm:$0xff] %v222
          %v224 = vld [vmem:[%s220 + $0x8] sm:$0xff]
          %225 = vst [vmem:[%s221 + $0x8] sm:$0xff] %v224
          %v226 = vld [vmem:[%s220 + $0x10] sm:$0xff]
          %227 = vst [vmem:[%s221 + $0x10] sm:$0xff] %v226
          %v228 = vld [vmem:[%s220 + $0x18] sm:$0xff]
          %229 = vst [vmem:[%s221 + $0x18] sm:$0xff] %v228
          %v230 = vld [vmem:[%s220 + $0x20] sm:$0xff]
          %231 = vst [vmem:[%s221 + $0x20] sm:$0xff] %v230
          %v232 = vld [vmem:[%s220 + $0x28] sm:$0xff]
          %233 = vst [vmem:[%s221 + $0x28] sm:$0xff] %v232
          %v234 = vld [vmem:[%s220 + $0x30] sm:$0xff]
          %235 = vst [vmem:[%s221 + $0x30] sm:$0xff] %v234
          %v236 = vld [vmem:[%s220 + $0x38] sm:$0xff]
          %237 = vst [vmem:[%s221 + $0x38] sm:$0xff] %v236
          %v238 = vld [vmem:[%s220 + $0x40] sm:$0xff]
          %239 = vst [vmem:[%s221 + $0x40] sm:$0xff] %v238
          %v240 = vld [vmem:[%s220 + $0x48] sm:$0xff]
          %241 = vst [vmem:[%s221 + $0x48] sm:$0xff] %v240
          %v242 = vld [vmem:[%s220 + $0x50] sm:$0xff]
          %243 = vst [vmem:[%s221 + $0x50] sm:$0xff] %v242
          %v244 = vld [vmem:[%s220 + $0x58] sm:$0xff]
          %245 = vst [vmem:[%s221 + $0x58] sm:$0xff] %v244
          %v246 = vld [vmem:[%s220 + $0x60] sm:$0xff]
          %247 = vst [vmem:[%s221 + $0x60] sm:$0xff] %v246
          %v248 = vld [vmem:[%s220 + $0x68] sm:$0xff]
          %249 = vst [vmem:[%s221 + $0x68] sm:$0xff] %v248
          %v250 = vld [vmem:[%s220 + $0x70] sm:$0xff]
          %251 = vst [vmem:[%s221 + $0x70] sm:$0xff] %v250
          %v252 = vld [vmem:[%s220 + $0x78] sm:$0xff]
          %253 = vst [vmem:[%s221 + $0x78] sm:$0xff] %v252
          %v254 = vld [vmem:[%s220 + $0x80] sm:$0xff]
          %255 = vst [vmem:[%s221 + $0x80] sm:$0xff] %v254
          %v256 = vld [vmem:[%s220 + $0x88] sm:$0xff]
          %257 = vst [vmem:[%s221 + $0x88] sm:$0xff] %v256
          %v258 = vld [vmem:[%s220 + $0x90] sm:$0xff]
          %259 = vst [vmem:[%s221 + $0x90] sm:$0xff] %v258
          %v260 = vld [vmem:[%s220 + $0x98] sm:$0xff]
          %261 = vst [vmem:[%s221 + $0x98] sm:$0xff] %v260
          %v262 = vld [vmem:[%s220 + $0xa0] sm:$0xff]
          %263 = vst [vmem:[%s221 + $0xa0] sm:$0xff] %v262
          %v264 = vld [vmem:[%s220 + $0xa8] sm:$0xff]
          %265 = vst [vmem:[%s221 + $0xa8] sm:$0xff] %v264
          %v266 = vld [vmem:[%s220 + $0xb0] sm:$0xff]
          %267 = vst [vmem:[%s221 + $0xb0] sm:$0xff] %v266
          %v268 = vld [vmem:[%s220 + $0xb8] sm:$0xff]
          %269 = vst [vmem:[%s221 + $0xb8] sm:$0xff] %v268
          %v270 = vld [vmem:[%s220 + $0xc0] sm:$0xff]
          %271 = vst [vmem:[%s221 + $0xc0] sm:$0xff] %v270
          %v272 = vld [vmem:[%s220 + $0xc8] sm:$0xff]
          %273 = vst [vmem:[%s221 + $0xc8] sm:$0xff] %v272
          %v274 = vld [vmem:[%s220 + $0xd0] sm:$0xff]
          %275 = vst [vmem:[%s221 + $0xd0] sm:$0xff] %v274
          %v276 = vld [vmem:[%s220 + $0xd8] sm:$0xff]
          %277 = vst [vmem:[%s221 + $0xd8] sm:$0xff] %v276
          %v278 = vld [vmem:[%s220 + $0xe0] sm:$0xff]
          %279 = vst [vmem:[%s221 + $0xe0] sm:$0xff] %v278
          %v280 = vld [vmem:[%s220 + $0xe8] sm:$0xff]
          %281 = vst [vmem:[%s221 + $0xe8] sm:$0xff] %v280
          %v282 = vld [vmem:[%s220 + $0xf0] sm:$0xff]
          %283 = vst [vmem:[%s221 + $0xf0] sm:$0xff] %v282
          %v284 = vld [vmem:[%s220 + $0xf8] sm:$0xff]
          %285 = vst [vmem:[%s221 + $0xf8] sm:$0xff] %v284
          %v286 = vld [vmem:[%s220 + $0x100] sm:$0xff]
          %287 = vst [vmem:[%s221 + $0x100] sm:$0xff] %v286
          %v288 = vld [vmem:[%s220 + $0x108] sm:$0xff]
          %289 = vst [vmem:[%s221 + $0x108] sm:$0xff] %v288
          %v290 = vld [vmem:[%s220 + $0x110] sm:$0xff]
          %291 = vst [vmem:[%s221 + $0x110] sm:$0xff] %v290
          %v292 = vld [vmem:[%s220 + $0x118] sm:$0xff]
          %293 = vst [vmem:[%s221 + $0x118] sm:$0xff] %v292
          %v294 = vld [vmem:[%s220 + $0x120] sm:$0xff]
          %295 = vst [vmem:[%s221 + $0x120] sm:$0xff] %v294
          %v296 = vld [vmem:[%s220 + $0x128] sm:$0xff]
          %297 = vst [vmem:[%s221 + $0x128] sm:$0xff] %v296
          %v298 = vld [vmem:[%s220 + $0x130] sm:$0xff]
          %299 = vst [vmem:[%s221 + $0x130] sm:$0xff] %v298
          %v300 = vld [vmem:[%s220 + $0x138] sm:$0xff]
          %301 = vst [vmem:[%s221 + $0x138] sm:$0xff] %v300
          %v302 = vld [vmem:[%s220 + $0x140] sm:$0xff]
          %303 = vst [vmem:[%s221 + $0x140] sm:$0xff] %v302
          %v304 = vld [vmem:[%s220 + $0x148] sm:$0xff]
          %305 = vst [vmem:[%s221 + $0x148] sm:$0xff] %v304
          %v306 = vld [vmem:[%s220 + $0x150] sm:$0xff]
          %307 = vst [vmem:[%s221 + $0x150] sm:$0xff] %v306
          %v308 = vld [vmem:[%s220 + $0x158] sm:$0xff]
          %309 = vst [vmem:[%s221 + $0x158] sm:$0xff] %v308
          %v310 = vld [vmem:[%s220 + $0x160] sm:$0xff]
          %311 = vst [vmem:[%s221 + $0x160] sm:$0xff] %v310
          %v312 = vld [vmem:[%s220 + $0x168] sm:$0xff]
          %313 = vst [vmem:[%s221 + $0x168] sm:$0xff] %v312
          %v314 = vld [vmem:[%s220 + $0x170] sm:$0xff]
          %315 = vst [vmem:[%s221 + $0x170] sm:$0xff] %v314
          %v316 = vld [vmem:[%s220 + $0x178] sm:$0xff]
          %317 = vst [vmem:[%s221 + $0x178] sm:$0xff] %v316
          %v318 = vld [vmem:[%s220 + $0x180] sm:$0xff]
          %319 = vst [vmem:[%s221 + $0x180] sm:$0xff] %v318
          %v320 = vld [vmem:[%s220 + $0x188] sm:$0xff]
          %321 = vst [vmem:[%s221 + $0x188] sm:$0xff] %v320
          %v322 = vld [vmem:[%s220 + $0x190] sm:$0xff]
          %323 = vst [vmem:[%s221 + $0x190] sm:$0xff] %v322
          %v324 = vld [vmem:[%s220 + $0x198] sm:$0xff]
          %325 = vst [vmem:[%s221 + $0x198] sm:$0xff] %v324
          %v326 = vld [vmem:[%s220 + $0x1a0] sm:$0xff]
          %327 = vst [vmem:[%s221 + $0x1a0] sm:$0xff] %v326
          %v328 = vld [vmem:[%s220 + $0x1a8] sm:$0xff]
          %329 = vst [vmem:[%s221 + $0x1a8] sm:$0xff] %v328
          %v330 = vld [vmem:[%s220 + $0x1b0] sm:$0xff]
          %331 = vst [vmem:[%s221 + $0x1b0] sm:$0xff] %v330
          %v332 = vld [vmem:[%s220 + $0x1b8] sm:$0xff]
          %333 = vst [vmem:[%s221 + $0x1b8] sm:$0xff] %v332
          %v334 = vld [vmem:[%s220 + $0x1c0] sm:$0xff]
          %335 = vst [vmem:[%s221 + $0x1c0] sm:$0xff] %v334
          %v336 = vld [vmem:[%s220 + $0x1c8] sm:$0xff]
          %337 = vst [vmem:[%s221 + $0x1c8] sm:$0xff] %v336
          %v338 = vld [vmem:[%s220 + $0x1d0] sm:$0xff]
          %339 = vst [vmem:[%s221 + $0x1d0] sm:$0xff] %v338
          %v340 = vld [vmem:[%s220 + $0x1d8] sm:$0xff]
          %341 = vst [vmem:[%s221 + $0x1d8] sm:$0xff] %v340
          %v342 = vld [vmem:[%s220 + $0x1e0] sm:$0xff]
          %343 = vst [vmem:[%s221 + $0x1e0] sm:$0xff] %v342
          %v344 = vld [vmem:[%s220 + $0x1e8] sm:$0xff]
          %345 = vst [vmem:[%s221 + $0x1e8] sm:$0xff] %v344
          %v346 = vld [vmem:[%s220 + $0x1f0] sm:$0xff]
          %347 = vst [vmem:[%s221 + $0x1f0] sm:$0xff] %v346
          %v348 = vld [vmem:[%s220 + $0x1f8] sm:$0xff]
          %349 = vst [vmem:[%s221 + $0x1f8] sm:$0xff] %v348
          %v350 = vld [vmem:[%s220 + $0x200] sm:$0xff]
          %351 = vst [vmem:[%s221 + $0x200] sm:$0xff] %v350
          %v352 = vld [vmem:[%s220 + $0x208] sm:$0xff]
          %353 = vst [vmem:[%s221 + $0x208] sm:$0xff] %v352
          %v354 = vld [vmem:[%s220 + $0x210] sm:$0xff]
          %355 = vst [vmem:[%s221 + $0x210] sm:$0xff] %v354
          %v356 = vld [vmem:[%s220 + $0x218] sm:$0xff]
          %357 = vst [vmem:[%s221 + $0x218] sm:$0xff] %v356
          %v358 = vld [vmem:[%s220 + $0x220] sm:$0xff]
          %359 = vst [vmem:[%s221 + $0x220] sm:$0xff] %v358
          %v360 = vld [vmem:[%s220 + $0x228] sm:$0xff]
          %361 = vst [vmem:[%s221 + $0x228] sm:$0xff] %v360
          %v362 = vld [vmem:[%s220 + $0x230] sm:$0xff]
          %363 = vst [vmem:[%s221 + $0x230] sm:$0xff] %v362
          %v364 = vld [vmem:[%s220 + $0x238] sm:$0xff]
          %365 = vst [vmem:[%s221 + $0x238] sm:$0xff] %v364
          %v366 = vld [vmem:[%s220 + $0x240] sm:$0xff]
          %367 = vst [vmem:[%s221 + $0x240] sm:$0xff] %v366
          %v368 = vld [vmem:[%s220 + $0x248] sm:$0xff]
          %369 = vst [vmem:[%s221 + $0x248] sm:$0xff] %v368
          %v370 = vld [vmem:[%s220 + $0x250] sm:$0xff]
          %371 = vst [vmem:[%s221 + $0x250] sm:$0xff] %v370
          %v372 = vld [vmem:[%s220 + $0x258] sm:$0xff]
          %373 = vst [vmem:[%s221 + $0x258] sm:$0xff] %v372
          %v374 = vld [vmem:[%s220 + $0x260] sm:$0xff]
          %375 = vst [vmem:[%s221 + $0x260] sm:$0xff] %v374
          %v376 = vld [vmem:[%s220 + $0x268] sm:$0xff]
          %377 = vst [vmem:[%s221 + $0x268] sm:$0xff] %v376
          %v378 = vld [vmem:[%s220 + $0x270] sm:$0xff]
          %379 = vst [vmem:[%s221 + $0x270] sm:$0xff] %v378
          %v380 = vld [vmem:[%s220 + $0x278] sm:$0xff]
          %381 = vst [vmem:[%s221 + $0x278] sm:$0xff] %v380
          %v382 = vld [vmem:[%s220 + $0x280] sm:$0xff]
          %383 = vst [vmem:[%s221 + $0x280] sm:$0xff] %v382
          %v384 = vld [vmem:[%s220 + $0x288] sm:$0xff]
          %385 = vst [vmem:[%s221 + $0x288] sm:$0xff] %v384
          %v386 = vld [vmem:[%s220 + $0x290] sm:$0xff]
          %387 = vst [vmem:[%s221 + $0x290] sm:$0xff] %v386
          %v388 = vld [vmem:[%s220 + $0x298] sm:$0xff]
          %389 = vst [vmem:[%s221 + $0x298] sm:$0xff] %v388
          %v390 = vld [vmem:[%s220 + $0x2a0] sm:$0xff]
          %391 = vst [vmem:[%s221 + $0x2a0] sm:$0xff] %v390
          %v392 = vld [vmem:[%s220 + $0x2a8] sm:$0xff]
          %393 = vst [vmem:[%s221 + $0x2a8] sm:$0xff] %v392
          %v394 = vld [vmem:[%s220 + $0x2b0] sm:$0xff]
          %395 = vst [vmem:[%s221 + $0x2b0] sm:$0xff] %v394
          %v396 = vld [vmem:[%s220 + $0x2b8] sm:$0xff]
          %397 = vst [vmem:[%s221 + $0x2b8] sm:$0xff] %v396
          %v398 = vld [vmem:[%s220 + $0x2c0] sm:$0xff]
          %399 = vst [vmem:[%s221 + $0x2c0] sm:$0xff] %v398
          %v400 = vld [vmem:[%s220 + $0x2c8] sm:$0xff]
          %401 = vst [vmem:[%s221 + $0x2c8] sm:$0xff] %v400
          %v402 = vld [vmem:[%s220 + $0x2d0] sm:$0xff]
          %403 = vst [vmem:[%s221 + $0x2d0] sm:$0xff] %v402
          %v404 = vld [vmem:[%s220 + $0x2d8] sm:$0xff]
          %405 = vst [vmem:[%s221 + $0x2d8] sm:$0xff] %v404
          %v406 = vld [vmem:[%s220 + $0x2e0] sm:$0xff]
          %407 = vst [vmem:[%s221 + $0x2e0] sm:$0xff] %v406
          %v408 = vld [vmem:[%s220 + $0x2e8] sm:$0xff]
          %409 = vst [vmem:[%s221 + $0x2e8] sm:$0xff] %v408
          %v410 = vld [vmem:[%s220 + $0x2f0] sm:$0xff]
          %411 = vst [vmem:[%s221 + $0x2f0] sm:$0xff] %v410
          %v412 = vld [vmem:[%s220 + $0x2f8] sm:$0xff]
          %413 = vst [vmem:[%s221 + $0x2f8] sm:$0xff] %v412
          %v414 = vld [vmem:[%s220 + $0x300] sm:$0xff]
          %415 = vst [vmem:[%s221 + $0x300] sm:$0xff] %v414
          %v416 = vld [vmem:[%s220 + $0x308] sm:$0xff]
          %417 = vst [vmem:[%s221 + $0x308] sm:$0xff] %v416
          %v418 = vld [vmem:[%s220 + $0x310] sm:$0xff]
          %419 = vst [vmem:[%s221 + $0x310] sm:$0xff] %v418
          %v420 = vld [vmem:[%s220 + $0x318] sm:$0xff]
          %421 = vst [vmem:[%s221 + $0x318] sm:$0xff] %v420
          %v422 = vld [vmem:[%s220 + $0x320] sm:$0xff]
          %423 = vst [vmem:[%s221 + $0x320] sm:$0xff] %v422
          %v424 = vld [vmem:[%s220 + $0x328] sm:$0xff]
          %425 = vst [vmem:[%s221 + $0x328] sm:$0xff] %v424
          %v426 = vld [vmem:[%s220 + $0x330] sm:$0xff]
          %427 = vst [vmem:[%s221 + $0x330] sm:$0xff] %v426
          %v428 = vld [vmem:[%s220 + $0x338] sm:$0xff]
          %429 = vst [vmem:[%s221 + $0x338] sm:$0xff] %v428
          %v430 = vld [vmem:[%s220 + $0x340] sm:$0xff]
          %431 = vst [vmem:[%s221 + $0x340] sm:$0xff] %v430
          %v432 = vld [vmem:[%s220 + $0x348] sm:$0xff]
          %433 = vst [vmem:[%s221 + $0x348] sm:$0xff] %v432
          %v434 = vld [vmem:[%s220 + $0x350] sm:$0xff]
          %435 = vst [vmem:[%s221 + $0x350] sm:$0xff] %v434
          %v436 = vld [vmem:[%s220 + $0x358] sm:$0xff]
          %437 = vst [vmem:[%s221 + $0x358] sm:$0xff] %v436
          %v438 = vld [vmem:[%s220 + $0x360] sm:$0xff]
          %439 = vst [vmem:[%s221 + $0x360] sm:$0xff] %v438
          %v440 = vld [vmem:[%s220 + $0x368] sm:$0xff]
          %441 = vst [vmem:[%s221 + $0x368] sm:$0xff] %v440
          %v442 = vld [vmem:[%s220 + $0x370] sm:$0xff]
          %443 = vst [vmem:[%s221 + $0x370] sm:$0xff] %v442
          %v444 = vld [vmem:[%s220 + $0x378] sm:$0xff]
          %445 = vst [vmem:[%s221 + $0x378] sm:$0xff] %v444
          %v446 = vld [vmem:[%s220 + $0x380] sm:$0xff]
          %447 = vst [vmem:[%s221 + $0x380] sm:$0xff] %v446
          %v448 = vld [vmem:[%s220 + $0x388] sm:$0xff]
          %449 = vst [vmem:[%s221 + $0x388] sm:$0xff] %v448
          %v450 = vld [vmem:[%s220 + $0x390] sm:$0xff]
          %451 = vst [vmem:[%s221 + $0x390] sm:$0xff] %v450
          %v452 = vld [vmem:[%s220 + $0x398] sm:$0xff]
          %453 = vst [vmem:[%s221 + $0x398] sm:$0xff] %v452
          %v454 = vld [vmem:[%s220 + $0x3a0] sm:$0xff]
          %455 = vst [vmem:[%s221 + $0x3a0] sm:$0xff] %v454
          %v456 = vld [vmem:[%s220 + $0x3a8] sm:$0xff]
          %457 = vst [vmem:[%s221 + $0x3a8] sm:$0xff] %v456
          %v458 = vld [vmem:[%s220 + $0x3b0] sm:$0xff]
          %459 = vst [vmem:[%s221 + $0x3b0] sm:$0xff] %v458
          %v460 = vld [vmem:[%s220 + $0x3b8] sm:$0xff]
          %461 = vst [vmem:[%s221 + $0x3b8] sm:$0xff] %v460
          %v462 = vld [vmem:[%s220 + $0x3c0] sm:$0xff]
          %463 = vst [vmem:[%s221 + $0x3c0] sm:$0xff] %v462
          %v464 = vld [vmem:[%s220 + $0x3c8] sm:$0xff]
          %465 = vst [vmem:[%s221 + $0x3c8] sm:$0xff] %v464
          %v466 = vld [vmem:[%s220 + $0x3d0] sm:$0xff]
          %467 = vst [vmem:[%s221 + $0x3d0] sm:$0xff] %v466
          %v468 = vld [vmem:[%s220 + $0x3d8] sm:$0xff]
          %469 = vst [vmem:[%s221 + $0x3d8] sm:$0xff] %v468
          %v470 = vld [vmem:[%s220 + $0x3e0] sm:$0xff]
          %471 = vst [vmem:[%s221 + $0x3e0] sm:$0xff] %v470
          %v472 = vld [vmem:[%s220 + $0x3e8] sm:$0xff]
          %473 = vst [vmem:[%s221 + $0x3e8] sm:$0xff] %v472
          %v474 = vld [vmem:[%s220 + $0x3f0] sm:$0xff]
          %475 = vst [vmem:[%s221 + $0x3f0] sm:$0xff] %v474
          %v476 = vld [vmem:[%s220 + $0x3f8] sm:$0xff]
          %477 = vst [vmem:[%s221 + $0x3f8] sm:$0xff] %v476
        $region76: #{_forward.3} parent=70 // loop_footer
          %s219 = sadd.s32 1, %s215
        $region77: #{_forward.3} parent=70 // loop_footer_branch
          %214 = sbr.rel target = $region73
        $region78: #{_forward.3} parent=70 // loop_exit
          _
      $region71: #{_forward.3} parent=66 // pred_fallthru
        _
      // Predicated region
      $region79: #{_forward.3} parent=66 // pred_check
        _
      $region80: #{_forward.3} parent=66 // pred_check_branch
        %479 = sbr.rel target = $region82
      $region81: #{_forward.3} parent=66 // pred_region
        _
      $region82: #{_forward.3} parent=66 // pred_fallthru
        _
      // Predicated region
      $region83: #{_forward.3} parent=66 // pred_check
        _
      $region84: #{_forward.3} parent=66 // pred_check_branch
        %482 = sbr.rel (0) target = $region86
      $region85: #{_forward.3} parent=66 // pred_region
        %483 = vsyncadd [#allocation3], 16384
      $region86: #{_forward.3} parent=66 // pred_fallthru
        _
      %s484 = smul.u32 8, 2
      %s485 = smul.u32 %s484, 16
      %s486 = smul.u32 %s485, 4
      %s487 = sshll.u32 %s486, 4
      %488 = dma.done [#allocation3], %s487
      %v489 = vld [vmem:[%s3] sm:$0xff]
      %v490 = vld [vmem:[%s3 + $0x8] sm:$0xff]
      %491 = vst [vmem:[#allocation4] sm:$0xff] %v489
      %492 = vst [vmem:[#allocation4 + $0x8] sm:$0xff] %v490
      %v493 = vld [vmem:[%s4] sm:$0xff]
      %v494 = vld [vmem:[%s4 + $0x8] sm:$0xff]
      %495 = vst [vmem:[#allocation5] sm:$0xff] %v493
      %496 = vst [vmem:[#allocation5 + $0x8] sm:$0xff] %v494
    $region67: #{_forward.3} parent=1 // pred_fallthru
      _
    %v497 = vld [vmem:[#allocation2] sm:$0xff]
    %v498 = vld [vmem:[#allocation2 + $0x8] sm:$0xff]
    %v499 = vld [vmem:[#allocation2 + $0x10] sm:$0xff]
    %v500 = vld [vmem:[#allocation2 + $0x18] sm:$0xff]
    %v501 = vld [vmem:[#allocation2 + $0x20] sm:$0xff]
    %v502 = vld [vmem:[#allocation2 + $0x28] sm:$0xff]
    %v503 = vld [vmem:[#allocation2 + $0x30] sm:$0xff]
    %v504 = vld [vmem:[#allocation2 + $0x38] sm:$0xff]
    %v505 = vld [vmem:[#allocation2 + $0x40] sm:$0xff]
    %v506 = vld [vmem:[#allocation2 + $0x48] sm:$0xff]
    %v507 = vld [vmem:[#allocation2 + $0x50] sm:$0xff]
    %v508 = vld [vmem:[#allocation2 + $0x58] sm:$0xff]
    %v509 = vld [vmem:[#allocation2 + $0x60] sm:$0xff]
    %v510 = vld [vmem:[#allocation2 + $0x68] sm:$0xff]
    %v511 = vld [vmem:[#allocation2 + $0x70] sm:$0xff]
    %v512 = vld [vmem:[#allocation2 + $0x78] sm:$0xff]
    %v513 = vld [vmem:[#allocation2 + $0x80] sm:$0xff]
    %v514 = vld [vmem:[#allocation2 + $0x88] sm:$0xff]
    %v515 = vld [vmem:[#allocation2 + $0x90] sm:$0xff]
    %v516 = vld [vmem:[#allocation2 + $0x98] sm:$0xff]
    %v517 = vld [vmem:[#allocation2 + $0xa0] sm:$0xff]
    %v518 = vld [vmem:[#allocation2 + $0xa8] sm:$0xff]
    %v519 = vld [vmem:[#allocation2 + $0xb0] sm:$0xff]
    %v520 = vld [vmem:[#allocation2 + $0xb8] sm:$0xff]
    %v521 = vld [vmem:[#allocation2 + $0xc0] sm:$0xff]
    %v522 = vld [vmem:[#allocation2 + $0xc8] sm:$0xff]
    %v523 = vld [vmem:[#allocation2 + $0xd0] sm:$0xff]
    %v524 = vld [vmem:[#allocation2 + $0xd8] sm:$0xff]
    %v525 = vld [vmem:[#allocation2 + $0xe0] sm:$0xff]
    %v526 = vld [vmem:[#allocation2 + $0xe8] sm:$0xff]
    %v527 = vld [vmem:[#allocation2 + $0xf0] sm:$0xff]
    %v528 = vld [vmem:[#allocation2 + $0xf8] sm:$0xff]
    %v529 = vld [vmem:[#allocation2 + $0x100] sm:$0xff]
    %v530 = vld [vmem:[#allocation2 + $0x108] sm:$0xff]
    %v531 = vld [vmem:[#allocation2 + $0x110] sm:$0xff]
    %v532 = vld [vmem:[#allocation2 + $0x118] sm:$0xff]
    %v533 = vld [vmem:[#allocation2 + $0x120] sm:$0xff]
    %v534 = vld [vmem:[#allocation2 + $0x128] sm:$0xff]
    %v535 = vld [vmem:[#allocation2 + $0x130] sm:$0xff]
    %v536 = vld [vmem:[#allocation2 + $0x138] sm:$0xff]
    %v537 = vld [vmem:[#allocation2 + $0x140] sm:$0xff]
    %v538 = vld [vmem:[#allocation2 + $0x148] sm:$0xff]
    %v539 = vld [vmem:[#allocation2 + $0x150] sm:$0xff]
    %v540 = vld [vmem:[#allocation2 + $0x158] sm:$0xff]
    %v541 = vld [vmem:[#allocation2 + $0x160] sm:$0xff]
    %v542 = vld [vmem:[#allocation2 + $0x168] sm:$0xff]
    %v543 = vld [vmem:[#allocation2 + $0x170] sm:$0xff]
    %v544 = vld [vmem:[#allocation2 + $0x178] sm:$0xff]
    %v545 = vld [vmem:[#allocation2 + $0x180] sm:$0xff]
    %v546 = vld [vmem:[#allocation2 + $0x188] sm:$0xff]
    %v547 = vld [vmem:[#allocation2 + $0x190] sm:$0xff]
    %v548 = vld [vmem:[#allocation2 + $0x198] sm:$0xff]
    %v549 = vld [vmem:[#allocation2 + $0x1a0] sm:$0xff]
    %v550 = vld [vmem:[#allocation2 + $0x1a8] sm:$0xff]
    %v551 = vld [vmem:[#allocation2 + $0x1b0] sm:$0xff]
    %v552 = vld [vmem:[#allocation2 + $0x1b8] sm:$0xff]
    %v553 = vld [vmem:[#allocation2 + $0x1c0] sm:$0xff]
    %v554 = vld [vmem:[#allocation2 + $0x1c8] sm:$0xff]
    %v555 = vld [vmem:[#allocation2 + $0x1d0] sm:$0xff]
    %v556 = vld [vmem:[#allocation2 + $0x1d8] sm:$0xff]
    %v557 = vld [vmem:[#allocation2 + $0x1e0] sm:$0xff]
    %v558 = vld [vmem:[#allocation2 + $0x1e8] sm:$0xff]
    %v559 = vld [vmem:[#allocation2 + $0x1f0] sm:$0xff]
    %v560 = vld [vmem:[#allocation2 + $0x1f8] sm:$0xff]
    %v561 = vld [vmem:[#allocation4] sm:$0xff]
    %v562 = vld [vmem:[#allocation5] sm:$0xff]
    %s563 = scalar_lea.vmem [#allocation2], 512
    %v564 = vld [vmem:[%s563] sm:$0xff]
    %v565 = vld [vmem:[%s563 + $0x8] sm:$0xff]
    %v566 = vld [vmem:[%s563 + $0x10] sm:$0xff]
    %v567 = vld [vmem:[%s563 + $0x18] sm:$0xff]
    %v568 = vld [vmem:[%s563 + $0x20] sm:$0xff]
    %v569 = vld [vmem:[%s563 + $0x28] sm:$0xff]
    %v570 = vld [vmem:[%s563 + $0x30] sm:$0xff]
    %v571 = vld [vmem:[%s563 + $0x38] sm:$0xff]
    %v572 = vld [vmem:[%s563 + $0x40] sm:$0xff]
    %v573 = vld [vmem:[%s563 + $0x48] sm:$0xff]
    %v574 = vld [vmem:[%s563 + $0x50] sm:$0xff]
    %v575 = vld [vmem:[%s563 + $0x58] sm:$0xff]
    %v576 = vld [vmem:[%s563 + $0x60] sm:$0xff]
    %v577 = vld [vmem:[%s563 + $0x68] sm:$0xff]
    %v578 = vld [vmem:[%s563 + $0x70] sm:$0xff]
    %v579 = vld [vmem:[%s563 + $0x78] sm:$0xff]
    %v580 = vld [vmem:[%s563 + $0x80] sm:$0xff]
    %v581 = vld [vmem:[%s563 + $0x88] sm:$0xff]
    %v582 = vld [vmem:[%s563 + $0x90] sm:$0xff]
    %v583 = vld [vmem:[%s563 + $0x98] sm:$0xff]
    %v584 = vld [vmem:[%s563 + $0xa0] sm:$0xff]
    %v585 = vld [vmem:[%s563 + $0xa8] sm:$0xff]
    %v586 = vld [vmem:[%s563 + $0xb0] sm:$0xff]
    %v587 = vld [vmem:[%s563 + $0xb8] sm:$0xff]
    %v588 = vld [vmem:[%s563 + $0xc0] sm:$0xff]
    %v589 = vld [vmem:[%s563 + $0xc8] sm:$0xff]
    %v590 = vld [vmem:[%s563 + $0xd0] sm:$0xff]
    %v591 = vld [vmem:[%s563 + $0xd8] sm:$0xff]
    %v592 = vld [vmem:[%s563 + $0xe0] sm:$0xff]
    %v593 = vld [vmem:[%s563 + $0xe8] sm:$0xff]
    %v594 = vld [vmem:[%s563 + $0xf0] sm:$0xff]
    %v595 = vld [vmem:[%s563 + $0xf8] sm:$0xff]
    %v596 = vld [vmem:[%s563 + $0x100] sm:$0xff]
    %v597 = vld [vmem:[%s563 + $0x108] sm:$0xff]
    %v598 = vld [vmem:[%s563 + $0x110] sm:$0xff]
    %v599 = vld [vmem:[%s563 + $0x118] sm:$0xff]
    %v600 = vld [vmem:[%s563 + $0x120] sm:$0xff]
    %v601 = vld [vmem:[%s563 + $0x128] sm:$0xff]
    %v602 = vld [vmem:[%s563 + $0x130] sm:$0xff]
    %v603 = vld [vmem:[%s563 + $0x138] sm:$0xff]
    %v604 = vld [vmem:[%s563 + $0x140] sm:$0xff]
    %v605 = vld [vmem:[%s563 + $0x148] sm:$0xff]
    %v606 = vld [vmem:[%s563 + $0x150] sm:$0xff]
    %v607 = vld [vmem:[%s563 + $0x158] sm:$0xff]
    %v608 = vld [vmem:[%s563 + $0x160] sm:$0xff]
    %v609 = vld [vmem:[%s563 + $0x168] sm:$0xff]
    %v610 = vld [vmem:[%s563 + $0x170] sm:$0xff]
    %v611 = vld [vmem:[%s563 + $0x178] sm:$0xff]
    %v612 = vld [vmem:[%s563 + $0x180] sm:$0xff]
    %v613 = vld [vmem:[%s563 + $0x188] sm:$0xff]
    %v614 = vld [vmem:[%s563 + $0x190] sm:$0xff]
    %v615 = vld [vmem:[%s563 + $0x198] sm:$0xff]
    %v616 = vld [vmem:[%s563 + $0x1a0] sm:$0xff]
    %v617 = vld [vmem:[%s563 + $0x1a8] sm:$0xff]
    %v618 = vld [vmem:[%s563 + $0x1b0] sm:$0xff]
    %v619 = vld [vmem:[%s563 + $0x1b8] sm:$0xff]
    %v620 = vld [vmem:[%s563 + $0x1c0] sm:$0xff]
    %v621 = vld [vmem:[%s563 + $0x1c8] sm:$0xff]
    %v622 = vld [vmem:[%s563 + $0x1d0] sm:$0xff]
    %v623 = vld [vmem:[%s563 + $0x1d8] sm:$0xff]
    %v624 = vld [vmem:[%s563 + $0x1e0] sm:$0xff]
    %v625 = vld [vmem:[%s563 + $0x1e8] sm:$0xff]
    %v626 = vld [vmem:[%s563 + $0x1f0] sm:$0xff]
    %v627 = vld [vmem:[%s563 + $0x1f8] sm:$0xff]
    %s628 = scalar_lea.vmem [#allocation4], 8
    %v629 = vld [vmem:[%s628] sm:$0xff]
    %s630 = scalar_lea.vmem [#allocation5], 8
    %v631 = vld [vmem:[%s630] sm:$0xff]
    %v632 = vld [vmem:[#allocation6] sm:$0xff]
    %v633 = vld [vmem:[#allocation6 + $0x8] sm:$0xff]
    %v634 = vld [vmem:[#allocation6 + $0x10] sm:$0xff]
    %v635 = vld [vmem:[#allocation6 + $0x18] sm:$0xff]
    %636 = vmatpush.msra.mxu0 %v557
    %637 = vmatpush.msra.mxu0 %v553
    %638 = vmatpush.msra.mxu0 %v549
    %639 = vmatpush.msra.mxu0 %v545
    %640 = vmatpush.msra.mxu0 %v541
    %641 = vmatpush.msra.mxu0 %v537
    %642 = vmatpush.msra.mxu0 %v533
    %643 = vmatpush.msra.mxu0 %v529
    %644 = vmatpush.msra.mxu0 %v525
    %645 = vmatpush.msra.mxu0 %v521
    %646 = vmatpush.msra.mxu0 %v517
    %647 = vmatpush.msra.mxu0 %v513
    %648 = vmatpush.msra.mxu0 %v509
    %649 = vmatpush.msra.mxu0 %v505
    %650 = vmatpush.msra.mxu0 %v501
    %651 = vmatpush.msra.mxu0 %v497
    %652 = vmatmul.f32.gmra.mxu0 %v561
    %v653 = vpop.f32.mrf.mxu0
    %v654 = vadd.f32 0.0, %v653
    %655 = vdwg.mxu0
    %656 = vmatpush.msra.mxu0 %v558
    %657 = vmatpush.msra.mxu0 %v554
    %658 = vmatpush.msra.mxu0 %v550
    %659 = vmatpush.msra.mxu0 %v546
    %660 = vmatpush.msra.mxu0 %v542
    %661 = vmatpush.msra.mxu0 %v538
    %662 = vmatpush.msra.mxu0 %v534
    %663 = vmatpush.msra.mxu0 %v530
    %664 = vmatpush.msra.mxu0 %v526
    %665 = vmatpush.msra.mxu0 %v522
    %666 = vmatpush.msra.mxu0 %v518
    %667 = vmatpush.msra.mxu0 %v514
    %668 = vmatpush.msra.mxu0 %v510
    %669 = vmatpush.msra.mxu0 %v506
    %670 = vmatpush.msra.mxu0 %v502
    %671 = vmatpush.msra.mxu0 %v498
    %672 = vmatmul.f32.gmra.mxu0 %v561
    %v673 = vpop.f32.mrf.mxu0
    %v674 = vadd.f32 0.0, %v673
    %675 = vdwg.mxu0
    %676 = vmatpush.msra.mxu0 %v559
    %677 = vmatpush.msra.mxu0 %v555
    %678 = vmatpush.msra.mxu0 %v551
    %679 = vmatpush.msra.mxu0 %v547
    %680 = vmatpush.msra.mxu0 %v543
    %681 = vmatpush.msra.mxu0 %v539
    %682 = vmatpush.msra.mxu0 %v535
    %683 = vmatpush.msra.mxu0 %v531
    %684 = vmatpush.msra.mxu0 %v527
    %685 = vmatpush.msra.mxu0 %v523
    %686 = vmatpush.msra.mxu0 %v519
    %687 = vmatpush.msra.mxu0 %v515
    %688 = vmatpush.msra.mxu0 %v511
    %689 = vmatpush.msra.mxu0 %v507
    %690 = vmatpush.msra.mxu0 %v503
    %691 = vmatpush.msra.mxu0 %v499
    %692 = vmatmul.f32.gmra.mxu0 %v561
    %v693 = vpop.f32.mrf.mxu0
    %v694 = vadd.f32 0.0, %v693
    %695 = vdwg.mxu0
    %696 = vmatpush.msra.mxu0 %v560
    %697 = vmatpush.msra.mxu0 %v556
    %698 = vmatpush.msra.mxu0 %v552
    %699 = vmatpush.msra.mxu0 %v548
    %700 = vmatpush.msra.mxu0 %v544
    %701 = vmatpush.msra.mxu0 %v540
    %702 = vmatpush.msra.mxu0 %v536
    %703 = vmatpush.msra.mxu0 %v532
    %704 = vmatpush.msra.mxu0 %v528
    %705 = vmatpush.msra.mxu0 %v524
    %706 = vmatpush.msra.mxu0 %v520
    %707 = vmatpush.msra.mxu0 %v516
    %708 = vmatpush.msra.mxu0 %v512
    %709 = vmatpush.msra.mxu0 %v508
    %710 = vmatpush.msra.mxu0 %v504
    %711 = vmatpush.msra.mxu0 %v500
    %712 = vmatmul.f32.gmra.mxu0 %v561
    %v713 = vpop.f32.mrf.mxu0
    %v714 = vadd.f32 0.0, %v713
    %715 = vdwg.mxu0
    %v716 = vadd.f32 %v632, %v654
    %v717 = vadd.f32 %v633, %v674
    %v718 = vadd.f32 %v634, %v694
    %v719 = vadd.f32 %v635, %v714
    %v720 = vxor.u32 %v716, 2147483648
    %v721 = vmul.f32 %v720, 1.442695
    %v722 = vpow.pop %v721
    %v723 = vadd.f32 %v722, 1.0
    %v724 = vrcp.pop %v723
    %v725 = vmul.f32 %v723, %v724
    %v726 = vsub.f32 1.0, %v725
    %v727 = vmul.f32 %v724, %v726
    %v728 = vadd.f32 %v724, %v727
    %vm729 = vweird.f32 %v723
    %vm730 = vweird.f32 %v724
    %vm731 = vmor %vm729, %vm730
    %v732 = vsel %vm731, %v724, %v728
    %v733 = vand.u32 2147483647, %v723
    %vm734 = vcmp.eq.f32.partialorder %v733, 8.507059e+37
    %v735 = vand.u32 %v723, 2147483648
    %v736 = vor.u32 1.1754944e-38, %v735
    %v737 = vsel %vm734, %v736, %v732
    %v738 = vmul.f32 1.0, %v737
    %v739 = vxor.u32 %v717, 2147483648
    %v740 = vmul.f32 %v739, 1.442695
    %v741 = vpow.pop %v740
    %v742 = vadd.f32 %v741, 1.0
    %v743 = vrcp.pop %v742
    %v744 = vmul.f32 %v742, %v743
    %v745 = vsub.f32 1.0, %v744
    %v746 = vmul.f32 %v743, %v745
    %v747 = vadd.f32 %v743, %v746
    %vm748 = vweird.f32 %v742
    %vm749 = vweird.f32 %v743
    %vm750 = vmor %vm748, %vm749
    %v751 = vsel %vm750, %v743, %v747
    %v752 = vand.u32 2147483647, %v742
    %vm753 = vcmp.eq.f32.partialorder %v752, 8.507059e+37
    %v754 = vand.u32 %v742, 2147483648
    %v755 = vor.u32 1.1754944e-38, %v754
    %v756 = vsel %vm753, %v755, %v751
    %v757 = vmul.f32 1.0, %v756
    %v758 = vtanh.pop %v718
    %v759 = vxor.u32 %v719, 2147483648
    %v760 = vmul.f32 %v759, 1.442695
    %v761 = vpow.pop %v760
    %v762 = vadd.f32 %v761, 1.0
    %v763 = vrcp.pop %v762
    %v764 = vmul.f32 %v762, %v763
    %v765 = vsub.f32 1.0, %v764
    %v766 = vmul.f32 %v763, %v765
    %v767 = vadd.f32 %v763, %v766
    %vm768 = vweird.f32 %v762
    %vm769 = vweird.f32 %v763
    %vm770 = vmor %vm768, %vm769
    %v771 = vsel %vm770, %v763, %v767
    %v772 = vand.u32 2147483647, %v762
    %vm773 = vcmp.eq.f32.partialorder %v772, 8.507059e+37
    %v774 = vand.u32 %v762, 2147483648
    %v775 = vor.u32 1.1754944e-38, %v774
    %v776 = vsel %vm773, %v775, %v771
    %v777 = vmul.f32 1.0, %v776
    %v778 = vmul.f32 %v757, %v562
    %v779 = vmul.f32 %v738, %v758
    %v780 = vadd.f32 %v778, %v779
    %v781 = vtanh.pop %v780
    %v782 = vmul.f32 %v777, %v781
    %783 = vst [vmem:[%s5] sm:$0xff] %v782
    %s784 = scalar_lea.vmem [#allocation7], 224
    %v785 = vld [vmem:[%s784] sm:$0xff]
    %v786 = vld [vmem:[%s784 + $0x8] sm:$0xff]
    %v787 = vld [vmem:[%s784 + $0x10] sm:$0xff]
    %v788 = vld [vmem:[%s784 + $0x18] sm:$0xff]
    %789 = vmatpush.msra.mxu0 %v624
    %790 = vmatpush.msra.mxu0 %v620
    %791 = vmatpush.msra.mxu0 %v616
    %792 = vmatpush.msra.mxu0 %v612
    %793 = vmatpush.msra.mxu0 %v608
    %794 = vmatpush.msra.mxu0 %v604
    %795 = vmatpush.msra.mxu0 %v600
    %796 = vmatpush.msra.mxu0 %v596
    %797 = vmatpush.msra.mxu0 %v592
    %798 = vmatpush.msra.mxu0 %v588
    %799 = vmatpush.msra.mxu0 %v584
    %800 = vmatpush.msra.mxu0 %v580
    %801 = vmatpush.msra.mxu0 %v576
    %802 = vmatpush.msra.mxu0 %v572
    %803 = vmatpush.msra.mxu0 %v568
    %804 = vmatpush.msra.mxu0 %v564
    %805 = vmatmul.f32.gmra.mxu0 %v629
    %v806 = vpop.f32.mrf.mxu0
    %v807 = vadd.f32 0.0, %v806
    %808 = vdwg.mxu0
    %809 = vmatpush.msra.mxu0 %v625
    %810 = vmatpush.msra.mxu0 %v621
    %811 = vmatpush.msra.mxu0 %v617
    %812 = vmatpush.msra.mxu0 %v613
    %813 = vmatpush.msra.mxu0 %v609
    %814 = vmatpush.msra.mxu0 %v605
    %815 = vmatpush.msra.mxu0 %v601
    %816 = vmatpush.msra.mxu0 %v597
    %817 = vmatpush.msra.mxu0 %v593
    %818 = vmatpush.msra.mxu0 %v589
    %819 = vmatpush.msra.mxu0 %v585
    %820 = vmatpush.msra.mxu0 %v581
    %821 = vmatpush.msra.mxu0 %v577
    %822 = vmatpush.msra.mxu0 %v573
    %823 = vmatpush.msra.mxu0 %v569
    %824 = vmatpush.msra.mxu0 %v565
    %825 = vmatmul.f32.gmra.mxu0 %v629
    %v826 = vpop.f32.mrf.mxu0
    %v827 = vadd.f32 0.0, %v826
    %828 = vdwg.mxu0
    %829 = vmatpush.msra.mxu0 %v626
    %830 = vmatpush.msra.mxu0 %v622
    %831 = vmatpush.msra.mxu0 %v618
    %832 = vmatpush.msra.mxu0 %v614
    %833 = vmatpush.msra.mxu0 %v610
    %834 = vmatpush.msra.mxu0 %v606
    %835 = vmatpush.msra.mxu0 %v602
    %836 = vmatpush.msra.mxu0 %v598
    %837 = vmatpush.msra.mxu0 %v594
    %838 = vmatpush.msra.mxu0 %v590
    %839 = vmatpush.msra.mxu0 %v586
    %840 = vmatpush.msra.mxu0 %v582
    %841 = vmatpush.msra.mxu0 %v578
    %842 = vmatpush.msra.mxu0 %v574
    %843 = vmatpush.msra.mxu0 %v570
    %844 = vmatpush.msra.mxu0 %v566
    %845 = vmatmul.f32.gmra.mxu0 %v629
    %v846 = vpop.f32.mrf.mxu0
    %v847 = vadd.f32 0.0, %v846
    %848 = vdwg.mxu0
    %849 = vmatpush.msra.mxu0 %v627
    %850 = vmatpush.msra.mxu0 %v623
    %851 = vmatpush.msra.mxu0 %v619
    %852 = vmatpush.msra.mxu0 %v615
    %853 = vmatpush.msra.mxu0 %v611
    %854 = vmatpush.msra.mxu0 %v607
    %855 = vmatpush.msra.mxu0 %v603
    %856 = vmatpush.msra.mxu0 %v599
    %857 = vmatpush.msra.mxu0 %v595
    %858 = vmatpush.msra.mxu0 %v591
    %859 = vmatpush.msra.mxu0 %v587
    %860 = vmatpush.msra.mxu0 %v583
    %861 = vmatpush.msra.mxu0 %v579
    %862 = vmatpush.msra.mxu0 %v575
    %863 = vmatpush.msra.mxu0 %v571
    %864 = vmatpush.msra.mxu0 %v567
    %865 = vmatmul.f32.gmra.mxu0 %v629
    %v866 = vpop.f32.mrf.mxu0
    %v867 = vadd.f32 0.0, %v866
    %868 = vdwg.mxu0
    %v869 = vadd.f32 %v785, %v807
    %v870 = vadd.f32 %v786, %v827
    %v871 = vadd.f32 %v787, %v847
    %v872 = vadd.f32 %v788, %v867
    %v873 = vxor.u32 %v869, 2147483648
    %v874 = vmul.f32 %v873, 1.442695
    %v875 = vpow.pop %v874
    %v876 = vadd.f32 %v875, 1.0
    %v877 = vrcp.pop %v876
    %v878 = vmul.f32 %v876, %v877
    %v879 = vsub.f32 1.0, %v878
    %v880 = vmul.f32 %v877, %v879
    %v881 = vadd.f32 %v877, %v880
    %vm882 = vweird.f32 %v876
    %vm883 = vweird.f32 %v877
    %vm884 = vmor %vm882, %vm883
    %v885 = vsel %vm884, %v877, %v881
    %v886 = vand.u32 2147483647, %v876
    %vm887 = vcmp.eq.f32.partialorder %v886, 8.507059e+37
    %v888 = vand.u32 %v876, 2147483648
    %v889 = vor.u32 1.1754944e-38, %v888
    %v890 = vsel %vm887, %v889, %v885
    %v891 = vmul.f32 1.0, %v890
    %v892 = vxor.u32 %v870, 2147483648
    %v893 = vmul.f32 %v892, 1.442695
    %v894 = vpow.pop %v893
    %v895 = vadd.f32 %v894, 1.0
    %v896 = vrcp.pop %v895
    %v897 = vmul.f32 %v895, %v896
    %v898 = vsub.f32 1.0, %v897
    %v899 = vmul.f32 %v896, %v898
    %v900 = vadd.f32 %v896, %v899
    %vm901 = vweird.f32 %v895
    %vm902 = vweird.f32 %v896
    %vm903 = vmor %vm901, %vm902
    %v904 = vsel %vm903, %v896, %v900
    %v905 = vand.u32 2147483647, %v895
    %vm906 = vcmp.eq.f32.partialorder %v905, 8.507059e+37
    %v907 = vand.u32 %v895, 2147483648
    %v908 = vor.u32 1.1754944e-38, %v907
    %v909 = vsel %vm906, %v908, %v904
    %v910 = vmul.f32 1.0, %v909
    %v911 = vtanh.pop %v871
    %v912 = vxor.u32 %v872, 2147483648
    %v913 = vmul.f32 %v912, 1.442695
    %v914 = vpow.pop %v913
    %v915 = vadd.f32 %v914, 1.0
    %v916 = vrcp.pop %v915
    %v917 = vmul.f32 %v915, %v916
    %v918 = vsub.f32 1.0, %v917
    %v919 = vmul.f32 %v916, %v918
    %v920 = vadd.f32 %v916, %v919
    %vm921 = vweird.f32 %v915
    %vm922 = vweird.f32 %v916
    %vm923 = vmor %vm921, %vm922
    %v924 = vsel %vm923, %v916, %v920
    %v925 = vand.u32 2147483647, %v915
    %vm926 = vcmp.eq.f32.partialorder %v925, 8.507059e+37
    %v927 = vand.u32 %v915, 2147483648
    %v928 = vor.u32 1.1754944e-38, %v927
    %v929 = vsel %vm926, %v928, %v924
    %v930 = vmul.f32 1.0, %v929
    %v931 = vmul.f32 %v910, %v631
    %v932 = vmul.f32 %v891, %v911
    %v933 = vadd.f32 %v931, %v932
    %v934 = vtanh.pop %v933
    %v935 = vmul.f32 %v930, %v934
    %s936 = scalar_lea.vmem %s205, 56
    %937 = vst [vmem:[%s936] sm:$0xff] %v935
    %s938 = scalar_lea.vmem [#allocation6], 32
    %v939 = vld [vmem:[%s938] sm:$0xff]
    %v940 = vld [vmem:[%s938 + $0x8] sm:$0xff]
    %v941 = vld [vmem:[%s938 + $0x10] sm:$0xff]
    %v942 = vld [vmem:[%s938 + $0x18] sm:$0xff]
    %943 = vmatpush.msra.mxu0 %v557
    %944 = vmatpush.msra.mxu0 %v553
    %945 = vmatpush.msra.mxu0 %v549
    %946 = vmatpush.msra.mxu0 %v545
    %947 = vmatpush.msra.mxu0 %v541
    %948 = vmatpush.msra.mxu0 %v537
    %949 = vmatpush.msra.mxu0 %v533
    %950 = vmatpush.msra.mxu0 %v529
    %951 = vmatpush.msra.mxu0 %v525
    %952 = vmatpush.msra.mxu0 %v521
    %953 = vmatpush.msra.mxu0 %v517
    %954 = vmatpush.msra.mxu0 %v513
    %955 = vmatpush.msra.mxu0 %v509
    %956 = vmatpush.msra.mxu0 %v505
    %957 = vmatpush.msra.mxu0 %v501
    %958 = vmatpush.msra.mxu0 %v497
    %959 = vmatmul.f32.gmra.mxu0 %v782
    %v960 = vpop.f32.mrf.mxu0
    %v961 = vadd.f32 0.0, %v960
    %962 = vdwg.mxu0
    %963 = vmatpush.msra.mxu0 %v558
    %964 = vmatpush.msra.mxu0 %v554
    %965 = vmatpush.msra.mxu0 %v550
    %966 = vmatpush.msra.mxu0 %v546
    %967 = vmatpush.msra.mxu0 %v542
    %968 = vmatpush.msra.mxu0 %v538
    %969 = vmatpush.msra.mxu0 %v534
    %970 = vmatpush.msra.mxu0 %v530
    %971 = vmatpush.msra.mxu0 %v526
    %972 = vmatpush.msra.mxu0 %v522
    %973 = vmatpush.msra.mxu0 %v518
    %974 = vmatpush.msra.mxu0 %v514
    %975 = vmatpush.msra.mxu0 %v510
    %976 = vmatpush.msra.mxu0 %v506
    %977 = vmatpush.msra.mxu0 %v502
    %978 = vmatpush.msra.mxu0 %v498
    %979 = vmatmul.f32.gmra.mxu0 %v782
    %v980 = vpop.f32.mrf.mxu0
    %v981 = vadd.f32 0.0, %v980
    %982 = vdwg.mxu0
    %983 = vmatpush.msra.mxu0 %v559
    %984 = vmatpush.msra.mxu0 %v555
    %985 = vmatpush.msra.mxu0 %v551
    %986 = vmatpush.msra.mxu0 %v547
    %987 = vmatpush.msra.mxu0 %v543
    %988 = vmatpush.msra.mxu0 %v539
    %989 = vmatpush.msra.mxu0 %v535
    %990 = vmatpush.msra.mxu0 %v531
    %991 = vmatpush.msra.mxu0 %v527
    %992 = vmatpush.msra.mxu0 %v523
    %993 = vmatpush.msra.mxu0 %v519
    %994 = vmatpush.msra.mxu0 %v515
    %995 = vmatpush.msra.mxu0 %v511
    %996 = vmatpush.msra.mxu0 %v507
    %997 = vmatpush.msra.mxu0 %v503
    %998 = vmatpush.msra.mxu0 %v499
    %999 = vmatmul.f32.gmra.mxu0 %v782
    %v1000 = vpop.f32.mrf.mxu0
    %v1001 = vadd.f32 0.0, %v1000
    %1002 = vdwg.mxu0
    %1003 = vmatpush.msra.mxu0 %v560
    %1004 = vmatpush.msra.mxu0 %v556
    %1005 = vmatpush.msra.mxu0 %v552
    %1006 = vmatpush.msra.mxu0 %v548
    %1007 = vmatpush.msra.mxu0 %v544
    %1008 = vmatpush.msra.mxu0 %v540
    %1009 = vmatpush.msra.mxu0 %v536
    %1010 = vmatpush.msra.mxu0 %v532
    %1011 = vmatpush.msra.mxu0 %v528
    %1012 = vmatpush.msra.mxu0 %v524
    %1013 = vmatpush.msra.mxu0 %v520
    %1014 = vmatpush.msra.mxu0 %v516
    %1015 = vmatpush.msra.mxu0 %v512
    %1016 = vmatpush.msra.mxu0 %v508
    %1017 = vmatpush.msra.mxu0 %v504
    %1018 = vmatpush.msra.mxu0 %v500
    %1019 = vmatmul.f32.gmra.mxu0 %v782
    %v1020 = vpop.f32.mrf.mxu0
    %v1021 = vadd.f32 0.0, %v1020
    %1022 = vdwg.mxu0
    %v1023 = vadd.f32 %v939, %v961
    %v1024 = vadd.f32 %v940, %v981
    %v1025 = vadd.f32 %v941, %v1001
    %v1026 = vadd.f32 %v942, %v1021
    %v1027 = vxor.u32 %v1023, 2147483648
    %v1028 = vmul.f32 %v1027, 1.442695
    %v1029 = vpow.pop %v1028
    %v1030 = vadd.f32 %v1029, 1.0
    %v1031 = vrcp.pop %v1030
    %v1032 = vmul.f32 %v1030, %v1031
    %v1033 = vsub.f32 1.0, %v1032
    %v1034 = vmul.f32 %v1031, %v1033
    %v1035 = vadd.f32 %v1031, %v1034
    %vm1036 = vweird.f32 %v1030
    %vm1037 = vweird.f32 %v1031
    %vm1038 = vmor %vm1036, %vm1037
    %v1039 = vsel %vm1038, %v1031, %v1035
    %v1040 = vand.u32 2147483647, %v1030
    %vm1041 = vcmp.eq.f32.partialorder %v1040, 8.507059e+37
    %v1042 = vand.u32 %v1030, 2147483648
    %v1043 = vor.u32 1.1754944e-38, %v1042
    %v1044 = vsel %vm1041, %v1043, %v1039
    %v1045 = vmul.f32 1.0, %v1044
    %v1046 = vxor.u32 %v1024, 2147483648
    %v1047 = vmul.f32 %v1046, 1.442695
    %v1048 = vpow.pop %v1047
    %v1049 = vadd.f32 %v1048, 1.0
    %v1050 = vrcp.pop %v1049
    %v1051 = vmul.f32 %v1049, %v1050
    %v1052 = vsub.f32 1.0, %v1051
    %v1053 = vmul.f32 %v1050, %v1052
    %v1054 = vadd.f32 %v1050, %v1053
    %vm1055 = vweird.f32 %v1049
    %vm1056 = vweird.f32 %v1050
    %vm1057 = vmor %vm1055, %vm1056
    %v1058 = vsel %vm1057, %v1050, %v1054
    %v1059 = vand.u32 2147483647, %v1049
    %vm1060 = vcmp.eq.f32.partialorder %v1059, 8.507059e+37
    %v1061 = vand.u32 %v1049, 2147483648
    %v1062 = vor.u32 1.1754944e-38, %v1061
    %v1063 = vsel %vm1060, %v1062, %v1058
    %v1064 = vmul.f32 1.0, %v1063
    %v1065 = vtanh.pop %v1025
    %v1066 = vxor.u32 %v1026, 2147483648
    %v1067 = vmul.f32 %v1066, 1.442695
    %v1068 = vpow.pop %v1067
    %v1069 = vadd.f32 %v1068, 1.0
    %v1070 = vrcp.pop %v1069
    %v1071 = vmul.f32 %v1069, %v1070
    %v1072 = vsub.f32 1.0, %v1071
    %v1073 = vmul.f32 %v1070, %v1072
    %v1074 = vadd.f32 %v1070, %v1073
    %vm1075 = vweird.f32 %v1069
    %vm1076 = vweird.f32 %v1070
    %vm1077 = vmor %vm1075, %vm1076
    %v1078 = vsel %vm1077, %v1070, %v1074
    %v1079 = vand.u32 2147483647, %v1069
    %vm1080 = vcmp.eq.f32.partialorder %v1079, 8.507059e+37
    %v1081 = vand.u32 %v1069, 2147483648
    %v1082 = vor.u32 1.1754944e-38, %v1081
    %v1083 = vsel %vm1080, %v1082, %v1078
    %v1084 = vmul.f32 1.0, %v1083
    %v1085 = vmul.f32 %v1064, %v780
    %v1086 = vmul.f32 %v1045, %v1065
    %v1087 = vadd.f32 %v1085, %v1086
    %v1088 = vtanh.pop %v1087
    %v1089 = vmul.f32 %v1084, %v1088
    %s1090 = scalar_lea.vmem %s5, 8
    %1091 = vst [vmem:[%s1090] sm:$0xff] %v1089
    %s1092 = scalar_lea.vmem [#allocation7], 192
    %v1093 = vld [vmem:[%s1092] sm:$0xff]
    %v1094 = vld [vmem:[%s1092 + $0x8] sm:$0xff]
    %v1095 = vld [vmem:[%s1092 + $0x10] sm:$0xff]
    %v1096 = vld [vmem:[%s1092 + $0x18] sm:$0xff]
    %1097 = vmatpush.msra.mxu0 %v624
    %1098 = vmatpush.msra.mxu0 %v620
    %1099 = vmatpush.msra.mxu0 %v616
    %1100 = vmatpush.msra.mxu0 %v612
    %1101 = vmatpush.msra.mxu0 %v608
    %1102 = vmatpush.msra.mxu0 %v604
    %1103 = vmatpush.msra.mxu0 %v600
    %1104 = vmatpush.msra.mxu0 %v596
    %1105 = vmatpush.msra.mxu0 %v592
    %1106 = vmatpush.msra.mxu0 %v588
    %1107 = vmatpush.msra.mxu0 %v584
    %1108 = vmatpush.msra.mxu0 %v580
    %1109 = vmatpush.msra.mxu0 %v576
    %1110 = vmatpush.msra.mxu0 %v572
    %1111 = vmatpush.msra.mxu0 %v568
    %1112 = vmatpush.msra.mxu0 %v564
    %1113 = vmatmul.f32.gmra.mxu0 %v935
    %v1114 = vpop.f32.mrf.mxu0
    %v1115 = vadd.f32 0.0, %v1114
    %1116 = vdwg.mxu0
    %1117 = vmatpush.msra.mxu0 %v625
    %1118 = vmatpush.msra.mxu0 %v621
    %1119 = vmatpush.msra.mxu0 %v617
    %1120 = vmatpush.msra.mxu0 %v613
    %1121 = vmatpush.msra.mxu0 %v609
    %1122 = vmatpush.msra.mxu0 %v605
    %1123 = vmatpush.msra.mxu0 %v601
    %1124 = vmatpush.msra.mxu0 %v597
    %1125 = vmatpush.msra.mxu0 %v593
    %1126 = vmatpush.msra.mxu0 %v589
    %1127 = vmatpush.msra.mxu0 %v585
    %1128 = vmatpush.msra.mxu0 %v581
    %1129 = vmatpush.msra.mxu0 %v577
    %1130 = vmatpush.msra.mxu0 %v573
    %1131 = vmatpush.msra.mxu0 %v569
    %1132 = vmatpush.msra.mxu0 %v565
    %1133 = vmatmul.f32.gmra.mxu0 %v935
    %v1134 = vpop.f32.mrf.mxu0
    %v1135 = vadd.f32 0.0, %v1134
    %1136 = vdwg.mxu0
    %1137 = vmatpush.msra.mxu0 %v626
    %1138 = vmatpush.msra.mxu0 %v622
    %1139 = vmatpush.msra.mxu0 %v618
    %1140 = vmatpush.msra.mxu0 %v614
    %1141 = vmatpush.msra.mxu0 %v610
    %1142 = vmatpush.msra.mxu0 %v606
    %1143 = vmatpush.msra.mxu0 %v602
    %1144 = vmatpush.msra.mxu0 %v598
    %1145 = vmatpush.msra.mxu0 %v594
    %1146 = vmatpush.msra.mxu0 %v590
    %1147 = vmatpush.msra.mxu0 %v586
    %1148 = vmatpush.msra.mxu0 %v582
    %1149 = vmatpush.msra.mxu0 %v578
    %1150 = vmatpush.msra.mxu0 %v574
    %1151 = vmatpush.msra.mxu0 %v570
    %1152 = vmatpush.msra.mxu0 %v566
    %1153 = vmatmul.f32.gmra.mxu0 %v935
    %v1154 = vpop.f32.mrf.mxu0
    %v1155 = vadd.f32 0.0, %v1154
    %1156 = vdwg.mxu0
    %1157 = vmatpush.msra.mxu0 %v627
    %1158 = vmatpush.msra.mxu0 %v623
    %1159 = vmatpush.msra.mxu0 %v619
    %1160 = vmatpush.msra.mxu0 %v615
    %1161 = vmatpush.msra.mxu0 %v611
    %1162 = vmatpush.msra.mxu0 %v607
    %1163 = vmatpush.msra.mxu0 %v603
    %1164 = vmatpush.msra.mxu0 %v599
    %1165 = vmatpush.msra.mxu0 %v595
    %1166 = vmatpush.msra.mxu0 %v591
    %1167 = vmatpush.msra.mxu0 %v587
    %1168 = vmatpush.msra.mxu0 %v583
    %1169 = vmatpush.msra.mxu0 %v579
    %1170 = vmatpush.msra.mxu0 %v575
    %1171 = vmatpush.msra.mxu0 %v571
    %1172 = vmatpush.msra.mxu0 %v567
    %1173 = vmatmul.f32.gmra.mxu0 %v935
    %v1174 = vpop.f32.mrf.mxu0
    %v1175 = vadd.f32 0.0, %v1174
    %1176 = vdwg.mxu0
    %v1177 = vadd.f32 %v1093, %v1115
    %v1178 = vadd.f32 %v1094, %v1135
    %v1179 = vadd.f32 %v1095, %v1155
    %v1180 = vadd.f32 %v1096, %v1175
    %v1181 = vxor.u32 %v1177, 2147483648
    %v1182 = vmul.f32 %v1181, 1.442695
    %v1183 = vpow.pop %v1182
    %v1184 = vadd.f32 %v1183, 1.0
    %v1185 = vrcp.pop %v1184
    %v1186 = vmul.f32 %v1184, %v1185
    %v1187 = vsub.f32 1.0, %v1186
    %v1188 = vmul.f32 %v1185, %v1187
    %v1189 = vadd.f32 %v1185, %v1188
    %vm1190 = vweird.f32 %v1184
    %vm1191 = vweird.f32 %v1185
    %vm1192 = vmor %vm1190, %vm1191
    %v1193 = vsel %vm1192, %v1185, %v1189
    %v1194 = vand.u32 2147483647, %v1184
    %vm1195 = vcmp.eq.f32.partialorder %v1194, 8.507059e+37
    %v1196 = vand.u32 %v1184, 2147483648
    %v1197 = vor.u32 1.1754944e-38, %v1196
    %v1198 = vsel %vm1195, %v1197, %v1193
    %v1199 = vmul.f32 1.0, %v1198
    %v1200 = vxor.u32 %v1178, 2147483648
    %v1201 = vmul.f32 %v1200, 1.442695
    %v1202 = vpow.pop %v1201
    %v1203 = vadd.f32 %v1202, 1.0
    %v1204 = vrcp.pop %v1203
    %v1205 = vmul.f32 %v1203, %v1204
    %v1206 = vsub.f32 1.0, %v1205
    %v1207 = vmul.f32 %v1204, %v1206
    %v1208 = vadd.f32 %v1204, %v1207
    %vm1209 = vweird.f32 %v1203
    %vm1210 = vweird.f32 %v1204
    %vm1211 = vmor %vm1209, %vm1210
    %v1212 = vsel %vm1211, %v1204, %v1208
    %v1213 = vand.u32 2147483647, %v1203
    %vm1214 = vcmp.eq.f32.partialorder %v1213, 8.507059e+37
    %v1215 = vand.u32 %v1203, 2147483648
    %v1216 = vor.u32 1.1754944e-38, %v1215
    %v1217 = vsel %vm1214, %v1216, %v1212
    %v1218 = vmul.f32 1.0, %v1217
    %v1219 = vtanh.pop %v1179
    %v1220 = vxor.u32 %v1180, 2147483648
    %v1221 = vmul.f32 %v1220, 1.442695
    %v1222 = vpow.pop %v1221
    %v1223 = vadd.f32 %v1222, 1.0
    %v1224 = vrcp.pop %v1223
    %v1225 = vmul.f32 %v1223, %v1224
    %v1226 = vsub.f32 1.0, %v1225
    %v1227 = vmul.f32 %v1224, %v1226
    %v1228 = vadd.f32 %v1224, %v1227
    %vm1229 = vweird.f32 %v1223
    %vm1230 = vweird.f32 %v1224
    %vm1231 = vmor %vm1229, %vm1230
    %v1232 = vsel %vm1231, %v1224, %v1228
    %v1233 = vand.u32 2147483647, %v1223
    %vm1234 = vcmp.eq.f32.partialorder %v1233, 8.507059e+37
    %v1235 = vand.u32 %v1223, 2147483648
    %v1236 = vor.u32 1.1754944e-38, %v1235
    %v1237 = vsel %vm1234, %v1236, %v1232
    %v1238 = vmul.f32 1.0, %v1237
    %v1239 = vmul.f32 %v1218, %v933
    %v1240 = vmul.f32 %v1199, %v1219
    %v1241 = vadd.f32 %v1239, %v1240
    %v1242 = vtanh.pop %v1241
    %v1243 = vmul.f32 %v1238, %v1242
    %s1244 = scalar_lea.vmem %s205, 48
    %1245 = vst [vmem:[%s1244] sm:$0xff] %v1243
    %s1246 = scalar_lea.vmem [#allocation6], 64
    %v1247 = vld [vmem:[%s1246] sm:$0xff]
    %v1248 = vld [vmem:[%s1246 + $0x8] sm:$0xff]
    %v1249 = vld [vmem:[%s1246 + $0x10] sm:$0xff]
    %v1250 = vld [vmem:[%s1246 + $0x18] sm:$0xff]
    %1251 = vmatpush.msra.mxu0 %v557
    %1252 = vmatpush.msra.mxu0 %v553
    %1253 = vmatpush.msra.mxu0 %v549
    %1254 = vmatpush.msra.mxu0 %v545
    %1255 = vmatpush.msra.mxu0 %v541
    %1256 = vmatpush.msra.mxu0 %v537
    %1257 = vmatpush.msra.mxu0 %v533
    %1258 = vmatpush.msra.mxu0 %v529
    %1259 = vmatpush.msra.mxu0 %v525
    %1260 = vmatpush.msra.mxu0 %v521
    %1261 = vmatpush.msra.mxu0 %v517
    %1262 = vmatpush.msra.mxu0 %v513
    %1263 = vmatpush.msra.mxu0 %v509
    %1264 = vmatpush.msra.mxu0 %v505
    %1265 = vmatpush.msra.mxu0 %v501
    %1266 = vmatpush.msra.mxu0 %v497
    %1267 = vmatmul.f32.gmra.mxu0 %v1089
    %v1268 = vpop.f32.mrf.mxu0
    %v1269 = vadd.f32 0.0, %v1268
    %1270 = vdwg.mxu0
    %1271 = vmatpush.msra.mxu0 %v558
    %1272 = vmatpush.msra.mxu0 %v554
    %1273 = vmatpush.msra.mxu0 %v550
    %1274 = vmatpush.msra.mxu0 %v546
    %1275 = vmatpush.msra.mxu0 %v542
    %1276 = vmatpush.msra.mxu0 %v538
    %1277 = vmatpush.msra.mxu0 %v534
    %1278 = vmatpush.msra.mxu0 %v530
    %1279 = vmatpush.msra.mxu0 %v526
    %1280 = vmatpush.msra.mxu0 %v522
    %1281 = vmatpush.msra.mxu0 %v518
    %1282 = vmatpush.msra.mxu0 %v514
    %1283 = vmatpush.msra.mxu0 %v510
    %1284 = vmatpush.msra.mxu0 %v506
    %1285 = vmatpush.msra.mxu0 %v502
    %1286 = vmatpush.msra.mxu0 %v498
    %1287 = vmatmul.f32.gmra.mxu0 %v1089
    %v1288 = vpop.f32.mrf.mxu0
    %v1289 = vadd.f32 0.0, %v1288
    %1290 = vdwg.mxu0
    %1291 = vmatpush.msra.mxu0 %v559
    %1292 = vmatpush.msra.mxu0 %v555
    %1293 = vmatpush.msra.mxu0 %v551
    %1294 = vmatpush.msra.mxu0 %v547
    %1295 = vmatpush.msra.mxu0 %v543
    %1296 = vmatpush.msra.mxu0 %v539
    %1297 = vmatpush.msra.mxu0 %v535
    %1298 = vmatpush.msra.mxu0 %v531
    %1299 = vmatpush.msra.mxu0 %v527
    %1300 = vmatpush.msra.mxu0 %v523
    %1301 = vmatpush.msra.mxu0 %v519
    %1302 = vmatpush.msra.mxu0 %v515
    %1303 = vmatpush.msra.mxu0 %v511
    %1304 = vmatpush.msra.mxu0 %v507
    %1305 = vmatpush.msra.mxu0 %v503
    %1306 = vmatpush.msra.mxu0 %v499
    %1307 = vmatmul.f32.gmra.mxu0 %v1089
    %v1308 = vpop.f32.mrf.mxu0
    %v1309 = vadd.f32 0.0, %v1308
    %1310 = vdwg.mxu0
    %1311 = vmatpush.msra.mxu0 %v560
    %1312 = vmatpush.msra.mxu0 %v556
    %1313 = vmatpush.msra.mxu0 %v552
    %1314 = vmatpush.msra.mxu0 %v548
    %1315 = vmatpush.msra.mxu0 %v544
    %1316 = vmatpush.msra.mxu0 %v540
    %1317 = vmatpush.msra.mxu0 %v536
    %1318 = vmatpush.msra.mxu0 %v532
    %1319 = vmatpush.msra.mxu0 %v528
    %1320 = vmatpush.msra.mxu0 %v524
    %1321 = vmatpush.msra.mxu0 %v520
    %1322 = vmatpush.msra.mxu0 %v516
    %1323 = vmatpush.msra.mxu0 %v512
    %1324 = vmatpush.msra.mxu0 %v508
    %1325 = vmatpush.msra.mxu0 %v504
    %1326 = vmatpush.msra.mxu0 %v500
    %1327 = vmatmul.f32.gmra.mxu0 %v1089
    %v1328 = vpop.f32.mrf.mxu0
    %v1329 = vadd.f32 0.0, %v1328
    %1330 = vdwg.mxu0
    %v1331 = vadd.f32 %v1247, %v1269
    %v1332 = vadd.f32 %v1248, %v1289
    %v1333 = vadd.f32 %v1249, %v1309
    %v1334 = vadd.f32 %v1250, %v1329
    %v1335 = vxor.u32 %v1331, 2147483648
    %v1336 = vmul.f32 %v1335, 1.442695
    %v1337 = vpow.pop %v1336
    %v1338 = vadd.f32 %v1337, 1.0
    %v1339 = vrcp.pop %v1338
    %v1340 = vmul.f32 %v1338, %v1339
    %v1341 = vsub.f32 1.0, %v1340
    %v1342 = vmul.f32 %v1339, %v1341
    %v1343 = vadd.f32 %v1339, %v1342
    %vm1344 = vweird.f32 %v1338
    %vm1345 = vweird.f32 %v1339
    %vm1346 = vmor %vm1344, %vm1345
    %v1347 = vsel %vm1346, %v1339, %v1343
    %v1348 = vand.u32 2147483647, %v1338
    %vm1349 = vcmp.eq.f32.partialorder %v1348, 8.507059e+37
    %v1350 = vand.u32 %v1338, 2147483648
    %v1351 = vor.u32 1.1754944e-38, %v1350
    %v1352 = vsel %vm1349, %v1351, %v1347
    %v1353 = vmul.f32 1.0, %v1352
    %v1354 = vxor.u32 %v1332, 2147483648
    %v1355 = vmul.f32 %v1354, 1.442695
    %v1356 = vpow.pop %v1355
    %v1357 = vadd.f32 %v1356, 1.0
    %v1358 = vrcp.pop %v1357
    %v1359 = vmul.f32 %v1357, %v1358
    %v1360 = vsub.f32 1.0, %v1359
    %v1361 = vmul.f32 %v1358, %v1360
    %v1362 = vadd.f32 %v1358, %v1361
    %vm1363 = vweird.f32 %v1357
    %vm1364 = vweird.f32 %v1358
    %vm1365 = vmor %vm1363, %vm1364
    %v1366 = vsel %vm1365, %v1358, %v1362
    %v1367 = vand.u32 2147483647, %v1357
    %vm1368 = vcmp.eq.f32.partialorder %v1367, 8.507059e+37
    %v1369 = vand.u32 %v1357, 2147483648
    %v1370 = vor.u32 1.1754944e-38, %v1369
    %v1371 = vsel %vm1368, %v1370, %v1366
    %v1372 = vmul.f32 1.0, %v1371
    %v1373 = vtanh.pop %v1333
    %v1374 = vxor.u32 %v1334, 2147483648
    %v1375 = vmul.f32 %v1374, 1.442695
    %v1376 = vpow.pop %v1375
    %v1377 = vadd.f32 %v1376, 1.0
    %v1378 = vrcp.pop %v1377
    %v1379 = vmul.f32 %v1377, %v1378
    %v1380 = vsub.f32 1.0, %v1379
    %v1381 = vmul.f32 %v1378, %v1380
    %v1382 = vadd.f32 %v1378, %v1381
    %vm1383 = vweird.f32 %v1377
    %vm1384 = vweird.f32 %v1378
    %vm1385 = vmor %vm1383, %vm1384
    %v1386 = vsel %vm1385, %v1378, %v1382
    %v1387 = vand.u32 2147483647, %v1377
    %vm1388 = vcmp.eq.f32.partialorder %v1387, 8.507059e+37
    %v1389 = vand.u32 %v1377, 2147483648
    %v1390 = vor.u32 1.1754944e-38, %v1389
    %v1391 = vsel %vm1388, %v1390, %v1386
    %v1392 = vmul.f32 1.0, %v1391
    %v1393 = vmul.f32 %v1372, %v1087
    %v1394 = vmul.f32 %v1353, %v1373
    %v1395 = vadd.f32 %v1393, %v1394
    %v1396 = vtanh.pop %v1395
    %v1397 = vmul.f32 %v1392, %v1396
    %s1398 = scalar_lea.vmem %s5, 16
    %1399 = vst [vmem:[%s1398] sm:$0xff] %v1397
    %s1400 = scalar_lea.vmem [#allocation7], 160
    %v1401 = vld [vmem:[%s1400] sm:$0xff]
    %v1402 = vld [vmem:[%s1400 + $0x8] sm:$0xff]
    %v1403 = vld [vmem:[%s1400 + $0x10] sm:$0xff]
    %v1404 = vld [vmem:[%s1400 + $0x18] sm:$0xff]
    %1405 = vmatpush.msra.mxu0 %v624
    %1406 = vmatpush.msra.mxu0 %v620
    %1407 = vmatpush.msra.mxu0 %v616
    %1408 = vmatpush.msra.mxu0 %v612
    %1409 = vmatpush.msra.mxu0 %v608
    %1410 = vmatpush.msra.mxu0 %v604
    %1411 = vmatpush.msra.mxu0 %v600
    %1412 = vmatpush.msra.mxu0 %v596
    %1413 = vmatpush.msra.mxu0 %v592
    %1414 = vmatpush.msra.mxu0 %v588
    %1415 = vmatpush.msra.mxu0 %v584
    %1416 = vmatpush.msra.mxu0 %v580
    %1417 = vmatpush.msra.mxu0 %v576
    %1418 = vmatpush.msra.mxu0 %v572
    %1419 = vmatpush.msra.mxu0 %v568
    %1420 = vmatpush.msra.mxu0 %v564
    %1421 = vmatmul.f32.gmra.mxu0 %v1243
    %v1422 = vpop.f32.mrf.mxu0
    %v1423 = vadd.f32 0.0, %v1422
    %1424 = vdwg.mxu0
    %1425 = vmatpush.msra.mxu0 %v625
    %1426 = vmatpush.msra.mxu0 %v621
    %1427 = vmatpush.msra.mxu0 %v617
    %1428 = vmatpush.msra.mxu0 %v613
    %1429 = vmatpush.msra.mxu0 %v609
    %1430 = vmatpush.msra.mxu0 %v605
    %1431 = vmatpush.msra.mxu0 %v601
    %1432 = vmatpush.msra.mxu0 %v597
    %1433 = vmatpush.msra.mxu0 %v593
    %1434 = vmatpush.msra.mxu0 %v589
    %1435 = vmatpush.msra.mxu0 %v585
    %1436 = vmatpush.msra.mxu0 %v581
    %1437 = vmatpush.msra.mxu0 %v577
    %1438 = vmatpush.msra.mxu0 %v573
    %1439 = vmatpush.msra.mxu0 %v569
    %1440 = vmatpush.msra.mxu0 %v565
    %1441 = vmatmul.f32.gmra.mxu0 %v1243
    %v1442 = vpop.f32.mrf.mxu0
    %v1443 = vadd.f32 0.0, %v1442
    %1444 = vdwg.mxu0
    %1445 = vmatpush.msra.mxu0 %v626
    %1446 = vmatpush.msra.mxu0 %v622
    %1447 = vmatpush.msra.mxu0 %v618
    %1448 = vmatpush.msra.mxu0 %v614
    %1449 = vmatpush.msra.mxu0 %v610
    %1450 = vmatpush.msra.mxu0 %v606
    %1451 = vmatpush.msra.mxu0 %v602
    %1452 = vmatpush.msra.mxu0 %v598
    %1453 = vmatpush.msra.mxu0 %v594
    %1454 = vmatpush.msra.mxu0 %v590
    %1455 = vmatpush.msra.mxu0 %v586
    %1456 = vmatpush.msra.mxu0 %v582
    %1457 = vmatpush.msra.mxu0 %v578
    %1458 = vmatpush.msra.mxu0 %v574
    %1459 = vmatpush.msra.mxu0 %v570
    %1460 = vmatpush.msra.mxu0 %v566
    %1461 = vmatmul.f32.gmra.mxu0 %v1243
    %v1462 = vpop.f32.mrf.mxu0
    %v1463 = vadd.f32 0.0, %v1462
    %1464 = vdwg.mxu0
    %1465 = vmatpush.msra.mxu0 %v627
    %1466 = vmatpush.msra.mxu0 %v623
    %1467 = vmatpush.msra.mxu0 %v619
    %1468 = vmatpush.msra.mxu0 %v615
    %1469 = vmatpush.msra.mxu0 %v611
    %1470 = vmatpush.msra.mxu0 %v607
    %1471 = vmatpush.msra.mxu0 %v603
    %1472 = vmatpush.msra.mxu0 %v599
    %1473 = vmatpush.msra.mxu0 %v595
    %1474 = vmatpush.msra.mxu0 %v591
    %1475 = vmatpush.msra.mxu0 %v587
    %1476 = vmatpush.msra.mxu0 %v583
    %1477 = vmatpush.msra.mxu0 %v579
    %1478 = vmatpush.msra.mxu0 %v575
    %1479 = vmatpush.msra.mxu0 %v571
    %1480 = vmatpush.msra.mxu0 %v567
    %1481 = vmatmul.f32.gmra.mxu0 %v1243
    %v1482 = vpop.f32.mrf.mxu0
    %v1483 = vadd.f32 0.0, %v1482
    %1484 = vdwg.mxu0
    %v1485 = vadd.f32 %v1401, %v1423
    %v1486 = vadd.f32 %v1402, %v1443
    %v1487 = vadd.f32 %v1403, %v1463
    %v1488 = vadd.f32 %v1404, %v1483
    %v1489 = vxor.u32 %v1485, 2147483648
    %v1490 = vmul.f32 %v1489, 1.442695
    %v1491 = vpow.pop %v1490
    %v1492 = vadd.f32 %v1491, 1.0
    %v1493 = vrcp.pop %v1492
    %v1494 = vmul.f32 %v1492, %v1493
    %v1495 = vsub.f32 1.0, %v1494
    %v1496 = vmul.f32 %v1493, %v1495
    %v1497 = vadd.f32 %v1493, %v1496
    %vm1498 = vweird.f32 %v1492
    %vm1499 = vweird.f32 %v1493
    %vm1500 = vmor %vm1498, %vm1499
    %v1501 = vsel %vm1500, %v1493, %v1497
    %v1502 = vand.u32 2147483647, %v1492
    %vm1503 = vcmp.eq.f32.partialorder %v1502, 8.507059e+37
    %v1504 = vand.u32 %v1492, 2147483648
    %v1505 = vor.u32 1.1754944e-38, %v1504
    %v1506 = vsel %vm1503, %v1505, %v1501
    %v1507 = vmul.f32 1.0, %v1506
    %v1508 = vxor.u32 %v1486, 2147483648
    %v1509 = vmul.f32 %v1508, 1.442695
    %v1510 = vpow.pop %v1509
    %v1511 = vadd.f32 %v1510, 1.0
    %v1512 = vrcp.pop %v1511
    %v1513 = vmul.f32 %v1511, %v1512
    %v1514 = vsub.f32 1.0, %v1513
    %v1515 = vmul.f32 %v1512, %v1514
    %v1516 = vadd.f32 %v1512, %v1515
    %vm1517 = vweird.f32 %v1511
    %vm1518 = vweird.f32 %v1512
    %vm1519 = vmor %vm1517, %vm1518
    %v1520 = vsel %vm1519, %v1512, %v1516
    %v1521 = vand.u32 2147483647, %v1511
    %vm1522 = vcmp.eq.f32.partialorder %v1521, 8.507059e+37
    %v1523 = vand.u32 %v1511, 2147483648
    %v1524 = vor.u32 1.1754944e-38, %v1523
    %v1525 = vsel %vm1522, %v1524, %v1520
    %v1526 = vmul.f32 1.0, %v1525
    %v1527 = vtanh.pop %v1487
    %v1528 = vxor.u32 %v1488, 2147483648
    %v1529 = vmul.f32 %v1528, 1.442695
    %v1530 = vpow.pop %v1529
    %v1531 = vadd.f32 %v1530, 1.0
    %v1532 = vrcp.pop %v1531
    %v1533 = vmul.f32 %v1531, %v1532
    %v1534 = vsub.f32 1.0, %v1533
    %v1535 = vmul.f32 %v1532, %v1534
    %v1536 = vadd.f32 %v1532, %v1535
    %vm1537 = vweird.f32 %v1531
    %vm1538 = vweird.f32 %v1532
    %vm1539 = vmor %vm1537, %vm1538
    %v1540 = vsel %vm1539, %v1532, %v1536
    %v1541 = vand.u32 2147483647, %v1531
    %vm1542 = vcmp.eq.f32.partialorder %v1541, 8.507059e+37
    %v1543 = vand.u32 %v1531, 2147483648
    %v1544 = vor.u32 1.1754944e-38, %v1543
    %v1545 = vsel %vm1542, %v1544, %v1540
    %v1546 = vmul.f32 1.0, %v1545
    %v1547 = vmul.f32 %v1526, %v1241
    %v1548 = vmul.f32 %v1507, %v1527
    %v1549 = vadd.f32 %v1547, %v1548
    %v1550 = vtanh.pop %v1549
    %v1551 = vmul.f32 %v1546, %v1550
    %s1552 = scalar_lea.vmem %s205, 40
    %1553 = vst [vmem:[%s1552] sm:$0xff] %v1551
    %s1554 = scalar_lea.vmem [#allocation6], 96
    %v1555 = vld [vmem:[%s1554] sm:$0xff]
    %v1556 = vld [vmem:[%s1554 + $0x8] sm:$0xff]
    %v1557 = vld [vmem:[%s1554 + $0x10] sm:$0xff]
    %v1558 = vld [vmem:[%s1554 + $0x18] sm:$0xff]
    %1559 = vmatpush.msra.mxu0 %v557
    %1560 = vmatpush.msra.mxu0 %v553
    %1561 = vmatpush.msra.mxu0 %v549
    %1562 = vmatpush.msra.mxu0 %v545
    %1563 = vmatpush.msra.mxu0 %v541
    %1564 = vmatpush.msra.mxu0 %v537
    %1565 = vmatpush.msra.mxu0 %v533
    %1566 = vmatpush.msra.mxu0 %v529
    %1567 = vmatpush.msra.mxu0 %v525
    %1568 = vmatpush.msra.mxu0 %v521
    %1569 = vmatpush.msra.mxu0 %v517
    %1570 = vmatpush.msra.mxu0 %v513
    %1571 = vmatpush.msra.mxu0 %v509
    %1572 = vmatpush.msra.mxu0 %v505
    %1573 = vmatpush.msra.mxu0 %v501
    %1574 = vmatpush.msra.mxu0 %v497
    %1575 = vmatmul.f32.gmra.mxu0 %v1397
    %v1576 = vpop.f32.mrf.mxu0
    %v1577 = vadd.f32 0.0, %v1576
    %1578 = vdwg.mxu0
    %1579 = vmatpush.msra.mxu0 %v558
    %1580 = vmatpush.msra.mxu0 %v554
    %1581 = vmatpush.msra.mxu0 %v550
    %1582 = vmatpush.msra.mxu0 %v546
    %1583 = vmatpush.msra.mxu0 %v542
    %1584 = vmatpush.msra.mxu0 %v538
    %1585 = vmatpush.msra.mxu0 %v534
    %1586 = vmatpush.msra.mxu0 %v530
    %1587 = vmatpush.msra.mxu0 %v526
    %1588 = vmatpush.msra.mxu0 %v522
    %1589 = vmatpush.msra.mxu0 %v518
    %1590 = vmatpush.msra.mxu0 %v514
    %1591 = vmatpush.msra.mxu0 %v510
    %1592 = vmatpush.msra.mxu0 %v506
    %1593 = vmatpush.msra.mxu0 %v502
    %1594 = vmatpush.msra.mxu0 %v498
    %1595 = vmatmul.f32.gmra.mxu0 %v1397
    %v1596 = vpop.f32.mrf.mxu0
    %v1597 = vadd.f32 0.0, %v1596
    %1598 = vdwg.mxu0
    %1599 = vmatpush.msra.mxu0 %v559
    %1600 = vmatpush.msra.mxu0 %v555
    %1601 = vmatpush.msra.mxu0 %v551
    %1602 = vmatpush.msra.mxu0 %v547
    %1603 = vmatpush.msra.mxu0 %v543
    %1604 = vmatpush.msra.mxu0 %v539
    %1605 = vmatpush.msra.mxu0 %v535
    %1606 = vmatpush.msra.mxu0 %v531
    %1607 = vmatpush.msra.mxu0 %v527
    %1608 = vmatpush.msra.mxu0 %v523
    %1609 = vmatpush.msra.mxu0 %v519
    %1610 = vmatpush.msra.mxu0 %v515
    %1611 = vmatpush.msra.mxu0 %v511
    %1612 = vmatpush.msra.mxu0 %v507
    %1613 = vmatpush.msra.mxu0 %v503
    %1614 = vmatpush.msra.mxu0 %v499
    %1615 = vmatmul.f32.gmra.mxu0 %v1397
    %v1616 = vpop.f32.mrf.mxu0
    %v1617 = vadd.f32 0.0, %v1616
    %1618 = vdwg.mxu0
    %1619 = vmatpush.msra.mxu0 %v560
    %1620 = vmatpush.msra.mxu0 %v556
    %1621 = vmatpush.msra.mxu0 %v552
    %1622 = vmatpush.msra.mxu0 %v548
    %1623 = vmatpush.msra.mxu0 %v544
    %1624 = vmatpush.msra.mxu0 %v540
    %1625 = vmatpush.msra.mxu0 %v536
    %1626 = vmatpush.msra.mxu0 %v532
    %1627 = vmatpush.msra.mxu0 %v528
    %1628 = vmatpush.msra.mxu0 %v524
    %1629 = vmatpush.msra.mxu0 %v520
    %1630 = vmatpush.msra.mxu0 %v516
    %1631 = vmatpush.msra.mxu0 %v512
    %1632 = vmatpush.msra.mxu0 %v508
    %1633 = vmatpush.msra.mxu0 %v504
    %1634 = vmatpush.msra.mxu0 %v500
    %1635 = vmatmul.f32.gmra.mxu0 %v1397
    %v1636 = vpop.f32.mrf.mxu0
    %v1637 = vadd.f32 0.0, %v1636
    %1638 = vdwg.mxu0
    %v1639 = vadd.f32 %v1555, %v1577
    %v1640 = vadd.f32 %v1556, %v1597
    %v1641 = vadd.f32 %v1557, %v1617
    %v1642 = vadd.f32 %v1558, %v1637
    %v1643 = vxor.u32 %v1639, 2147483648
    %v1644 = vmul.f32 %v1643, 1.442695
    %v1645 = vpow.pop %v1644
    %v1646 = vadd.f32 %v1645, 1.0
    %v1647 = vrcp.pop %v1646
    %v1648 = vmul.f32 %v1646, %v1647
    %v1649 = vsub.f32 1.0, %v1648
    %v1650 = vmul.f32 %v1647, %v1649
    %v1651 = vadd.f32 %v1647, %v1650
    %vm1652 = vweird.f32 %v1646
    %vm1653 = vweird.f32 %v1647
    %vm1654 = vmor %vm1652, %vm1653
    %v1655 = vsel %vm1654, %v1647, %v1651
    %v1656 = vand.u32 2147483647, %v1646
    %vm1657 = vcmp.eq.f32.partialorder %v1656, 8.507059e+37
    %v1658 = vand.u32 %v1646, 2147483648
    %v1659 = vor.u32 1.1754944e-38, %v1658
    %v1660 = vsel %vm1657, %v1659, %v1655
    %v1661 = vmul.f32 1.0, %v1660
    %v1662 = vxor.u32 %v1640, 2147483648
    %v1663 = vmul.f32 %v1662, 1.442695
    %v1664 = vpow.pop %v1663
    %v1665 = vadd.f32 %v1664, 1.0
    %v1666 = vrcp.pop %v1665
    %v1667 = vmul.f32 %v1665, %v1666
    %v1668 = vsub.f32 1.0, %v1667
    %v1669 = vmul.f32 %v1666, %v1668
    %v1670 = vadd.f32 %v1666, %v1669
    %vm1671 = vweird.f32 %v1665
    %vm1672 = vweird.f32 %v1666
    %vm1673 = vmor %vm1671, %vm1672
    %v1674 = vsel %vm1673, %v1666, %v1670
    %v1675 = vand.u32 2147483647, %v1665
    %vm1676 = vcmp.eq.f32.partialorder %v1675, 8.507059e+37
    %v1677 = vand.u32 %v1665, 2147483648
    %v1678 = vor.u32 1.1754944e-38, %v1677
    %v1679 = vsel %vm1676, %v1678, %v1674
    %v1680 = vmul.f32 1.0, %v1679
    %v1681 = vtanh.pop %v1641
    %v1682 = vxor.u32 %v1642, 2147483648
    %v1683 = vmul.f32 %v1682, 1.442695
    %v1684 = vpow.pop %v1683
    %v1685 = vadd.f32 %v1684, 1.0
    %v1686 = vrcp.pop %v1685
    %v1687 = vmul.f32 %v1685, %v1686
    %v1688 = vsub.f32 1.0, %v1687
    %v1689 = vmul.f32 %v1686, %v1688
    %v1690 = vadd.f32 %v1686, %v1689
    %vm1691 = vweird.f32 %v1685
    %vm1692 = vweird.f32 %v1686
    %vm1693 = vmor %vm1691, %vm1692
    %v1694 = vsel %vm1693, %v1686, %v1690
    %v1695 = vand.u32 2147483647, %v1685
    %vm1696 = vcmp.eq.f32.partialorder %v1695, 8.507059e+37
    %v1697 = vand.u32 %v1685, 2147483648
    %v1698 = vor.u32 1.1754944e-38, %v1697
    %v1699 = vsel %vm1696, %v1698, %v1694
    %v1700 = vmul.f32 1.0, %v1699
    %v1701 = vmul.f32 %v1680, %v1395
    %v1702 = vmul.f32 %v1661, %v1681
    %v1703 = vadd.f32 %v1701, %v1702
    %v1704 = vtanh.pop %v1703
    %v1705 = vmul.f32 %v1700, %v1704
    %s1706 = scalar_lea.vmem %s5, 24
    %1707 = vst [vmem:[%s1706] sm:$0xff] %v1705
    %s1708 = scalar_lea.vmem [#allocation7], 128
    %v1709 = vld [vmem:[%s1708] sm:$0xff]
    %v1710 = vld [vmem:[%s1708 + $0x8] sm:$0xff]
    %v1711 = vld [vmem:[%s1708 + $0x10] sm:$0xff]
    %v1712 = vld [vmem:[%s1708 + $0x18] sm:$0xff]
    %1713 = vmatpush.msra.mxu0 %v624
    %1714 = vmatpush.msra.mxu0 %v620
    %1715 = vmatpush.msra.mxu0 %v616
    %1716 = vmatpush.msra.mxu0 %v612
    %1717 = vmatpush.msra.mxu0 %v608
    %1718 = vmatpush.msra.mxu0 %v604
    %1719 = vmatpush.msra.mxu0 %v600
    %1720 = vmatpush.msra.mxu0 %v596
    %1721 = vmatpush.msra.mxu0 %v592
    %1722 = vmatpush.msra.mxu0 %v588
    %1723 = vmatpush.msra.mxu0 %v584
    %1724 = vmatpush.msra.mxu0 %v580
    %1725 = vmatpush.msra.mxu0 %v576
    %1726 = vmatpush.msra.mxu0 %v572
    %1727 = vmatpush.msra.mxu0 %v568
    %1728 = vmatpush.msra.mxu0 %v564
    %1729 = vmatmul.f32.gmra.mxu0 %v1551
    %v1730 = vpop.f32.mrf.mxu0
    %v1731 = vadd.f32 0.0, %v1730
    %1732 = vdwg.mxu0
    %1733 = vmatpush.msra.mxu0 %v625
    %1734 = vmatpush.msra.mxu0 %v621
    %1735 = vmatpush.msra.mxu0 %v617
    %1736 = vmatpush.msra.mxu0 %v613
    %1737 = vmatpush.msra.mxu0 %v609
    %1738 = vmatpush.msra.mxu0 %v605
    %1739 = vmatpush.msra.mxu0 %v601
    %1740 = vmatpush.msra.mxu0 %v597
    %1741 = vmatpush.msra.mxu0 %v593
    %1742 = vmatpush.msra.mxu0 %v589
    %1743 = vmatpush.msra.mxu0 %v585
    %1744 = vmatpush.msra.mxu0 %v581
    %1745 = vmatpush.msra.mxu0 %v577
    %1746 = vmatpush.msra.mxu0 %v573
    %1747 = vmatpush.msra.mxu0 %v569
    %1748 = vmatpush.msra.mxu0 %v565
    %1749 = vmatmul.f32.gmra.mxu0 %v1551
    %v1750 = vpop.f32.mrf.mxu0
    %v1751 = vadd.f32 0.0, %v1750
    %1752 = vdwg.mxu0
    %1753 = vmatpush.msra.mxu0 %v626
    %1754 = vmatpush.msra.mxu0 %v622
    %1755 = vmatpush.msra.mxu0 %v618
    %1756 = vmatpush.msra.mxu0 %v614
    %1757 = vmatpush.msra.mxu0 %v610
    %1758 = vmatpush.msra.mxu0 %v606
    %1759 = vmatpush.msra.mxu0 %v602
    %1760 = vmatpush.msra.mxu0 %v598
    %1761 = vmatpush.msra.mxu0 %v594
    %1762 = vmatpush.msra.mxu0 %v590
    %1763 = vmatpush.msra.mxu0 %v586
    %1764 = vmatpush.msra.mxu0 %v582
    %1765 = vmatpush.msra.mxu0 %v578
    %1766 = vmatpush.msra.mxu0 %v574
    %1767 = vmatpush.msra.mxu0 %v570
    %1768 = vmatpush.msra.mxu0 %v566
    %1769 = vmatmul.f32.gmra.mxu0 %v1551
    %v1770 = vpop.f32.mrf.mxu0
    %v1771 = vadd.f32 0.0, %v1770
    %1772 = vdwg.mxu0
    %1773 = vmatpush.msra.mxu0 %v627
    %1774 = vmatpush.msra.mxu0 %v623
    %1775 = vmatpush.msra.mxu0 %v619
    %1776 = vmatpush.msra.mxu0 %v615
    %1777 = vmatpush.msra.mxu0 %v611
    %1778 = vmatpush.msra.mxu0 %v607
    %1779 = vmatpush.msra.mxu0 %v603
    %1780 = vmatpush.msra.mxu0 %v599
    %1781 = vmatpush.msra.mxu0 %v595
    %1782 = vmatpush.msra.mxu0 %v591
    %1783 = vmatpush.msra.mxu0 %v587
    %1784 = vmatpush.msra.mxu0 %v583
    %1785 = vmatpush.msra.mxu0 %v579
    %1786 = vmatpush.msra.mxu0 %v575
    %1787 = vmatpush.msra.mxu0 %v571
    %1788 = vmatpush.msra.mxu0 %v567
    %1789 = vmatmul.f32.gmra.mxu0 %v1551
    %v1790 = vpop.f32.mrf.mxu0
    %v1791 = vadd.f32 0.0, %v1790
    %1792 = vdwg.mxu0
    %v1793 = vadd.f32 %v1709, %v1731
    %v1794 = vadd.f32 %v1710, %v1751
    %v1795 = vadd.f32 %v1711, %v1771
    %v1796 = vadd.f32 %v1712, %v1791
    %v1797 = vxor.u32 %v1793, 2147483648
    %v1798 = vmul.f32 %v1797, 1.442695
    %v1799 = vpow.pop %v1798
    %v1800 = vadd.f32 %v1799, 1.0
    %v1801 = vrcp.pop %v1800
    %v1802 = vmul.f32 %v1800, %v1801
    %v1803 = vsub.f32 1.0, %v1802
    %v1804 = vmul.f32 %v1801, %v1803
    %v1805 = vadd.f32 %v1801, %v1804
    %vm1806 = vweird.f32 %v1800
    %vm1807 = vweird.f32 %v1801
    %vm1808 = vmor %vm1806, %vm1807
    %v1809 = vsel %vm1808, %v1801, %v1805
    %v1810 = vand.u32 2147483647, %v1800
    %vm1811 = vcmp.eq.f32.partialorder %v1810, 8.507059e+37
    %v1812 = vand.u32 %v1800, 2147483648
    %v1813 = vor.u32 1.1754944e-38, %v1812
    %v1814 = vsel %vm1811, %v1813, %v1809
    %v1815 = vmul.f32 1.0, %v1814
    %v1816 = vxor.u32 %v1794, 2147483648
    %v1817 = vmul.f32 %v1816, 1.442695
    %v1818 = vpow.pop %v1817
    %v1819 = vadd.f32 %v1818, 1.0
    %v1820 = vrcp.pop %v1819
    %v1821 = vmul.f32 %v1819, %v1820
    %v1822 = vsub.f32 1.0, %v1821
    %v1823 = vmul.f32 %v1820, %v1822
    %v1824 = vadd.f32 %v1820, %v1823
    %vm1825 = vweird.f32 %v1819
    %vm1826 = vweird.f32 %v1820
    %vm1827 = vmor %vm1825, %vm1826
    %v1828 = vsel %vm1827, %v1820, %v1824
    %v1829 = vand.u32 2147483647, %v1819
    %vm1830 = vcmp.eq.f32.partialorder %v1829, 8.507059e+37
    %v1831 = vand.u32 %v1819, 2147483648
    %v1832 = vor.u32 1.1754944e-38, %v1831
    %v1833 = vsel %vm1830, %v1832, %v1828
    %v1834 = vmul.f32 1.0, %v1833
    %v1835 = vtanh.pop %v1795
    %v1836 = vxor.u32 %v1796, 2147483648
    %v1837 = vmul.f32 %v1836, 1.442695
    %v1838 = vpow.pop %v1837
    %v1839 = vadd.f32 %v1838, 1.0
    %v1840 = vrcp.pop %v1839
    %v1841 = vmul.f32 %v1839, %v1840
    %v1842 = vsub.f32 1.0, %v1841
    %v1843 = vmul.f32 %v1840, %v1842
    %v1844 = vadd.f32 %v1840, %v1843
    %vm1845 = vweird.f32 %v1839
    %vm1846 = vweird.f32 %v1840
    %vm1847 = vmor %vm1845, %vm1846
    %v1848 = vsel %vm1847, %v1840, %v1844
    %v1849 = vand.u32 2147483647, %v1839
    %vm1850 = vcmp.eq.f32.partialorder %v1849, 8.507059e+37
    %v1851 = vand.u32 %v1839, 2147483648
    %v1852 = vor.u32 1.1754944e-38, %v1851
    %v1853 = vsel %vm1850, %v1852, %v1848
    %v1854 = vmul.f32 1.0, %v1853
    %v1855 = vmul.f32 %v1834, %v1549
    %v1856 = vmul.f32 %v1815, %v1835
    %v1857 = vadd.f32 %v1855, %v1856
    %v1858 = vtanh.pop %v1857
    %v1859 = vmul.f32 %v1854, %v1858
    %s1860 = scalar_lea.vmem %s205, 32
    %1861 = vst [vmem:[%s1860] sm:$0xff] %v1859
    %s1862 = scalar_lea.vmem [#allocation6], 128
    %v1863 = vld [vmem:[%s1862] sm:$0xff]
    %v1864 = vld [vmem:[%s1862 + $0x8] sm:$0xff]
    %v1865 = vld [vmem:[%s1862 + $0x10] sm:$0xff]
    %v1866 = vld [vmem:[%s1862 + $0x18] sm:$0xff]
    %1867 = vmatpush.msra.mxu0 %v557
    %1868 = vmatpush.msra.mxu0 %v553
    %1869 = vmatpush.msra.mxu0 %v549
    %1870 = vmatpush.msra.mxu0 %v545
    %1871 = vmatpush.msra.mxu0 %v541
    %1872 = vmatpush.msra.mxu0 %v537
    %1873 = vmatpush.msra.mxu0 %v533
    %1874 = vmatpush.msra.mxu0 %v529
    %1875 = vmatpush.msra.mxu0 %v525
    %1876 = vmatpush.msra.mxu0 %v521
    %1877 = vmatpush.msra.mxu0 %v517
    %1878 = vmatpush.msra.mxu0 %v513
    %1879 = vmatpush.msra.mxu0 %v509
    %1880 = vmatpush.msra.mxu0 %v505
    %1881 = vmatpush.msra.mxu0 %v501
    %1882 = vmatpush.msra.mxu0 %v497
    %1883 = vmatmul.f32.gmra.mxu0 %v1705
    %v1884 = vpop.f32.mrf.mxu0
    %v1885 = vadd.f32 0.0, %v1884
    %1886 = vdwg.mxu0
    %1887 = vmatpush.msra.mxu0 %v558
    %1888 = vmatpush.msra.mxu0 %v554
    %1889 = vmatpush.msra.mxu0 %v550
    %1890 = vmatpush.msra.mxu0 %v546
    %1891 = vmatpush.msra.mxu0 %v542
    %1892 = vmatpush.msra.mxu0 %v538
    %1893 = vmatpush.msra.mxu0 %v534
    %1894 = vmatpush.msra.mxu0 %v530
    %1895 = vmatpush.msra.mxu0 %v526
    %1896 = vmatpush.msra.mxu0 %v522
    %1897 = vmatpush.msra.mxu0 %v518
    %1898 = vmatpush.msra.mxu0 %v514
    %1899 = vmatpush.msra.mxu0 %v510
    %1900 = vmatpush.msra.mxu0 %v506
    %1901 = vmatpush.msra.mxu0 %v502
    %1902 = vmatpush.msra.mxu0 %v498
    %1903 = vmatmul.f32.gmra.mxu0 %v1705
    %v1904 = vpop.f32.mrf.mxu0
    %v1905 = vadd.f32 0.0, %v1904
    %1906 = vdwg.mxu0
    %1907 = vmatpush.msra.mxu0 %v559
    %1908 = vmatpush.msra.mxu0 %v555
    %1909 = vmatpush.msra.mxu0 %v551
    %1910 = vmatpush.msra.mxu0 %v547
    %1911 = vmatpush.msra.mxu0 %v543
    %1912 = vmatpush.msra.mxu0 %v539
    %1913 = vmatpush.msra.mxu0 %v535
    %1914 = vmatpush.msra.mxu0 %v531
    %1915 = vmatpush.msra.mxu0 %v527
    %1916 = vmatpush.msra.mxu0 %v523
    %1917 = vmatpush.msra.mxu0 %v519
    %1918 = vmatpush.msra.mxu0 %v515
    %1919 = vmatpush.msra.mxu0 %v511
    %1920 = vmatpush.msra.mxu0 %v507
    %1921 = vmatpush.msra.mxu0 %v503
    %1922 = vmatpush.msra.mxu0 %v499
    %1923 = vmatmul.f32.gmra.mxu0 %v1705
    %v1924 = vpop.f32.mrf.mxu0
    %v1925 = vadd.f32 0.0, %v1924
    %1926 = vdwg.mxu0
    %1927 = vmatpush.msra.mxu0 %v560
    %1928 = vmatpush.msra.mxu0 %v556
    %1929 = vmatpush.msra.mxu0 %v552
    %1930 = vmatpush.msra.mxu0 %v548
    %1931 = vmatpush.msra.mxu0 %v544
    %1932 = vmatpush.msra.mxu0 %v540
    %1933 = vmatpush.msra.mxu0 %v536
    %1934 = vmatpush.msra.mxu0 %v532
    %1935 = vmatpush.msra.mxu0 %v528
    %1936 = vmatpush.msra.mxu0 %v524
    %1937 = vmatpush.msra.mxu0 %v520
    %1938 = vmatpush.msra.mxu0 %v516
    %1939 = vmatpush.msra.mxu0 %v512
    %1940 = vmatpush.msra.mxu0 %v508
    %1941 = vmatpush.msra.mxu0 %v504
    %1942 = vmatpush.msra.mxu0 %v500
    %1943 = vmatmul.f32.gmra.mxu0 %v1705
    %v1944 = vpop.f32.mrf.mxu0
    %v1945 = vadd.f32 0.0, %v1944
    %1946 = vdwg.mxu0
    %v1947 = vadd.f32 %v1863, %v1885
    %v1948 = vadd.f32 %v1864, %v1905
    %v1949 = vadd.f32 %v1865, %v1925
    %v1950 = vadd.f32 %v1866, %v1945
    %v1951 = vxor.u32 %v1947, 2147483648
    %v1952 = vmul.f32 %v1951, 1.442695
    %v1953 = vpow.pop %v1952
    %v1954 = vadd.f32 %v1953, 1.0
    %v1955 = vrcp.pop %v1954
    %v1956 = vmul.f32 %v1954, %v1955
    %v1957 = vsub.f32 1.0, %v1956
    %v1958 = vmul.f32 %v1955, %v1957
    %v1959 = vadd.f32 %v1955, %v1958
    %vm1960 = vweird.f32 %v1954
    %vm1961 = vweird.f32 %v1955
    %vm1962 = vmor %vm1960, %vm1961
    %v1963 = vsel %vm1962, %v1955, %v1959
    %v1964 = vand.u32 2147483647, %v1954
    %vm1965 = vcmp.eq.f32.partialorder %v1964, 8.507059e+37
    %v1966 = vand.u32 %v1954, 2147483648
    %v1967 = vor.u32 1.1754944e-38, %v1966
    %v1968 = vsel %vm1965, %v1967, %v1963
    %v1969 = vmul.f32 1.0, %v1968
    %v1970 = vxor.u32 %v1948, 2147483648
    %v1971 = vmul.f32 %v1970, 1.442695
    %v1972 = vpow.pop %v1971
    %v1973 = vadd.f32 %v1972, 1.0
    %v1974 = vrcp.pop %v1973
    %v1975 = vmul.f32 %v1973, %v1974
    %v1976 = vsub.f32 1.0, %v1975
    %v1977 = vmul.f32 %v1974, %v1976
    %v1978 = vadd.f32 %v1974, %v1977
    %vm1979 = vweird.f32 %v1973
    %vm1980 = vweird.f32 %v1974
    %vm1981 = vmor %vm1979, %vm1980
    %v1982 = vsel %vm1981, %v1974, %v1978
    %v1983 = vand.u32 2147483647, %v1973
    %vm1984 = vcmp.eq.f32.partialorder %v1983, 8.507059e+37
    %v1985 = vand.u32 %v1973, 2147483648
    %v1986 = vor.u32 1.1754944e-38, %v1985
    %v1987 = vsel %vm1984, %v1986, %v1982
    %v1988 = vmul.f32 1.0, %v1987
    %v1989 = vtanh.pop %v1949
    %v1990 = vxor.u32 %v1950, 2147483648
    %v1991 = vmul.f32 %v1990, 1.442695
    %v1992 = vpow.pop %v1991
    %v1993 = vadd.f32 %v1992, 1.0
    %v1994 = vrcp.pop %v1993
    %v1995 = vmul.f32 %v1993, %v1994
    %v1996 = vsub.f32 1.0, %v1995
    %v1997 = vmul.f32 %v1994, %v1996
    %v1998 = vadd.f32 %v1994, %v1997
    %vm1999 = vweird.f32 %v1993
    %vm2000 = vweird.f32 %v1994
    %vm2001 = vmor %vm1999, %vm2000
    %v2002 = vsel %vm2001, %v1994, %v1998
    %v2003 = vand.u32 2147483647, %v1993
    %vm2004 = vcmp.eq.f32.partialorder %v2003, 8.507059e+37
    %v2005 = vand.u32 %v1993, 2147483648
    %v2006 = vor.u32 1.1754944e-38, %v2005
    %v2007 = vsel %vm2004, %v2006, %v2002
    %v2008 = vmul.f32 1.0, %v2007
    %v2009 = vmul.f32 %v1988, %v1703
    %v2010 = vmul.f32 %v1969, %v1989
    %v2011 = vadd.f32 %v2009, %v2010
    %v2012 = vtanh.pop %v2011
    %v2013 = vmul.f32 %v2008, %v2012
    %s2014 = scalar_lea.vmem %s5, 32
    %2015 = vst [vmem:[%s2014] sm:$0xff] %v2013
    %s2016 = scalar_lea.vmem [#allocation7], 96
    %v2017 = vld [vmem:[%s2016] sm:$0xff]
    %v2018 = vld [vmem:[%s2016 + $0x8] sm:$0xff]
    %v2019 = vld [vmem:[%s2016 + $0x10] sm:$0xff]
    %v2020 = vld [vmem:[%s2016 + $0x18] sm:$0xff]
    %2021 = vmatpush.msra.mxu0 %v624
    %2022 = vmatpush.msra.mxu0 %v620
    %2023 = vmatpush.msra.mxu0 %v616
    %2024 = vmatpush.msra.mxu0 %v612
    %2025 = vmatpush.msra.mxu0 %v608
    %2026 = vmatpush.msra.mxu0 %v604
    %2027 = vmatpush.msra.mxu0 %v600
    %2028 = vmatpush.msra.mxu0 %v596
    %2029 = vmatpush.msra.mxu0 %v592
    %2030 = vmatpush.msra.mxu0 %v588
    %2031 = vmatpush.msra.mxu0 %v584
    %2032 = vmatpush.msra.mxu0 %v580
    %2033 = vmatpush.msra.mxu0 %v576
    %2034 = vmatpush.msra.mxu0 %v572
    %2035 = vmatpush.msra.mxu0 %v568
    %2036 = vmatpush.msra.mxu0 %v564
    %2037 = vmatmul.f32.gmra.mxu0 %v1859
    %v2038 = vpop.f32.mrf.mxu0
    %v2039 = vadd.f32 0.0, %v2038
    %2040 = vdwg.mxu0
    %2041 = vmatpush.msra.mxu0 %v625
    %2042 = vmatpush.msra.mxu0 %v621
    %2043 = vmatpush.msra.mxu0 %v617
    %2044 = vmatpush.msra.mxu0 %v613
    %2045 = vmatpush.msra.mxu0 %v609
    %2046 = vmatpush.msra.mxu0 %v605
    %2047 = vmatpush.msra.mxu0 %v601
    %2048 = vmatpush.msra.mxu0 %v597
    %2049 = vmatpush.msra.mxu0 %v593
    %2050 = vmatpush.msra.mxu0 %v589
    %2051 = vmatpush.msra.mxu0 %v585
    %2052 = vmatpush.msra.mxu0 %v581
    %2053 = vmatpush.msra.mxu0 %v577
    %2054 = vmatpush.msra.mxu0 %v573
    %2055 = vmatpush.msra.mxu0 %v569
    %2056 = vmatpush.msra.mxu0 %v565
    %2057 = vmatmul.f32.gmra.mxu0 %v1859
    %v2058 = vpop.f32.mrf.mxu0
    %v2059 = vadd.f32 0.0, %v2058
    %2060 = vdwg.mxu0
    %2061 = vmatpush.msra.mxu0 %v626
    %2062 = vmatpush.msra.mxu0 %v622
    %2063 = vmatpush.msra.mxu0 %v618
    %2064 = vmatpush.msra.mxu0 %v614
    %2065 = vmatpush.msra.mxu0 %v610
    %2066 = vmatpush.msra.mxu0 %v606
    %2067 = vmatpush.msra.mxu0 %v602
    %2068 = vmatpush.msra.mxu0 %v598
    %2069 = vmatpush.msra.mxu0 %v594
    %2070 = vmatpush.msra.mxu0 %v590
    %2071 = vmatpush.msra.mxu0 %v586
    %2072 = vmatpush.msra.mxu0 %v582
    %2073 = vmatpush.msra.mxu0 %v578
    %2074 = vmatpush.msra.mxu0 %v574
    %2075 = vmatpush.msra.mxu0 %v570
    %2076 = vmatpush.msra.mxu0 %v566
    %2077 = vmatmul.f32.gmra.mxu0 %v1859
    %v2078 = vpop.f32.mrf.mxu0
    %v2079 = vadd.f32 0.0, %v2078
    %2080 = vdwg.mxu0
    %2081 = vmatpush.msra.mxu0 %v627
    %2082 = vmatpush.msra.mxu0 %v623
    %2083 = vmatpush.msra.mxu0 %v619
    %2084 = vmatpush.msra.mxu0 %v615
    %2085 = vmatpush.msra.mxu0 %v611
    %2086 = vmatpush.msra.mxu0 %v607
    %2087 = vmatpush.msra.mxu0 %v603
    %2088 = vmatpush.msra.mxu0 %v599
    %2089 = vmatpush.msra.mxu0 %v595
    %2090 = vmatpush.msra.mxu0 %v591
    %2091 = vmatpush.msra.mxu0 %v587
    %2092 = vmatpush.msra.mxu0 %v583
    %2093 = vmatpush.msra.mxu0 %v579
    %2094 = vmatpush.msra.mxu0 %v575
    %2095 = vmatpush.msra.mxu0 %v571
    %2096 = vmatpush.msra.mxu0 %v567
    %2097 = vmatmul.f32.gmra.mxu0 %v1859
    %v2098 = vpop.f32.mrf.mxu0
    %v2099 = vadd.f32 0.0, %v2098
    %2100 = vdwg.mxu0
    %v2101 = vadd.f32 %v2017, %v2039
    %v2102 = vadd.f32 %v2018, %v2059
    %v2103 = vadd.f32 %v2019, %v2079
    %v2104 = vadd.f32 %v2020, %v2099
    %v2105 = vxor.u32 %v2101, 2147483648
    %v2106 = vmul.f32 %v2105, 1.442695
    %v2107 = vpow.pop %v2106
    %v2108 = vadd.f32 %v2107, 1.0
    %v2109 = vrcp.pop %v2108
    %v2110 = vmul.f32 %v2108, %v2109
    %v2111 = vsub.f32 1.0, %v2110
    %v2112 = vmul.f32 %v2109, %v2111
    %v2113 = vadd.f32 %v2109, %v2112
    %vm2114 = vweird.f32 %v2108
    %vm2115 = vweird.f32 %v2109
    %vm2116 = vmor %vm2114, %vm2115
    %v2117 = vsel %vm2116, %v2109, %v2113
    %v2118 = vand.u32 2147483647, %v2108
    %vm2119 = vcmp.eq.f32.partialorder %v2118, 8.507059e+37
    %v2120 = vand.u32 %v2108, 2147483648
    %v2121 = vor.u32 1.1754944e-38, %v2120
    %v2122 = vsel %vm2119, %v2121, %v2117
    %v2123 = vmul.f32 1.0, %v2122
    %v2124 = vxor.u32 %v2102, 2147483648
    %v2125 = vmul.f32 %v2124, 1.442695
    %v2126 = vpow.pop %v2125
    %v2127 = vadd.f32 %v2126, 1.0
    %v2128 = vrcp.pop %v2127
    %v2129 = vmul.f32 %v2127, %v2128
    %v2130 = vsub.f32 1.0, %v2129
    %v2131 = vmul.f32 %v2128, %v2130
    %v2132 = vadd.f32 %v2128, %v2131
    %vm2133 = vweird.f32 %v2127
    %vm2134 = vweird.f32 %v2128
    %vm2135 = vmor %vm2133, %vm2134
    %v2136 = vsel %vm2135, %v2128, %v2132
    %v2137 = vand.u32 2147483647, %v2127
    %vm2138 = vcmp.eq.f32.partialorder %v2137, 8.507059e+37
    %v2139 = vand.u32 %v2127, 2147483648
    %v2140 = vor.u32 1.1754944e-38, %v2139
    %v2141 = vsel %vm2138, %v2140, %v2136
    %v2142 = vmul.f32 1.0, %v2141
    %v2143 = vtanh.pop %v2103
    %v2144 = vxor.u32 %v2104, 2147483648
    %v2145 = vmul.f32 %v2144, 1.442695
    %v2146 = vpow.pop %v2145
    %v2147 = vadd.f32 %v2146, 1.0
    %v2148 = vrcp.pop %v2147
    %v2149 = vmul.f32 %v2147, %v2148
    %v2150 = vsub.f32 1.0, %v2149
    %v2151 = vmul.f32 %v2148, %v2150
    %v2152 = vadd.f32 %v2148, %v2151
    %vm2153 = vweird.f32 %v2147
    %vm2154 = vweird.f32 %v2148
    %vm2155 = vmor %vm2153, %vm2154
    %v2156 = vsel %vm2155, %v2148, %v2152
    %v2157 = vand.u32 2147483647, %v2147
    %vm2158 = vcmp.eq.f32.partialorder %v2157, 8.507059e+37
    %v2159 = vand.u32 %v2147, 2147483648
    %v2160 = vor.u32 1.1754944e-38, %v2159
    %v2161 = vsel %vm2158, %v2160, %v2156
    %v2162 = vmul.f32 1.0, %v2161
    %v2163 = vmul.f32 %v2142, %v1857
    %v2164 = vmul.f32 %v2123, %v2143
    %v2165 = vadd.f32 %v2163, %v2164
    %v2166 = vtanh.pop %v2165
    %v2167 = vmul.f32 %v2162, %v2166
    %s2168 = scalar_lea.vmem %s205, 24
    %2169 = vst [vmem:[%s2168] sm:$0xff] %v2167
    %s2170 = scalar_lea.vmem [#allocation6], 160
    %v2171 = vld [vmem:[%s2170] sm:$0xff]
    %v2172 = vld [vmem:[%s2170 + $0x8] sm:$0xff]
    %v2173 = vld [vmem:[%s2170 + $0x10] sm:$0xff]
    %v2174 = vld [vmem:[%s2170 + $0x18] sm:$0xff]
    %2175 = vmatpush.msra.mxu0 %v557
    %2176 = vmatpush.msra.mxu0 %v553
    %2177 = vmatpush.msra.mxu0 %v549
    %2178 = vmatpush.msra.mxu0 %v545
    %2179 = vmatpush.msra.mxu0 %v541
    %2180 = vmatpush.msra.mxu0 %v537
    %2181 = vmatpush.msra.mxu0 %v533
    %2182 = vmatpush.msra.mxu0 %v529
    %2183 = vmatpush.msra.mxu0 %v525
    %2184 = vmatpush.msra.mxu0 %v521
    %2185 = vmatpush.msra.mxu0 %v517
    %2186 = vmatpush.msra.mxu0 %v513
    %2187 = vmatpush.msra.mxu0 %v509
    %2188 = vmatpush.msra.mxu0 %v505
    %2189 = vmatpush.msra.mxu0 %v501
    %2190 = vmatpush.msra.mxu0 %v497
    %2191 = vmatmul.f32.gmra.mxu0 %v2013
    %v2192 = vpop.f32.mrf.mxu0
    %v2193 = vadd.f32 0.0, %v2192
    %2194 = vdwg.mxu0
    %2195 = vmatpush.msra.mxu0 %v558
    %2196 = vmatpush.msra.mxu0 %v554
    %2197 = vmatpush.msra.mxu0 %v550
    %2198 = vmatpush.msra.mxu0 %v546
    %2199 = vmatpush.msra.mxu0 %v542
    %2200 = vmatpush.msra.mxu0 %v538
    %2201 = vmatpush.msra.mxu0 %v534
    %2202 = vmatpush.msra.mxu0 %v530
    %2203 = vmatpush.msra.mxu0 %v526
    %2204 = vmatpush.msra.mxu0 %v522
    %2205 = vmatpush.msra.mxu0 %v518
    %2206 = vmatpush.msra.mxu0 %v514
    %2207 = vmatpush.msra.mxu0 %v510
    %2208 = vmatpush.msra.mxu0 %v506
    %2209 = vmatpush.msra.mxu0 %v502
    %2210 = vmatpush.msra.mxu0 %v498
    %2211 = vmatmul.f32.gmra.mxu0 %v2013
    %v2212 = vpop.f32.mrf.mxu0
    %v2213 = vadd.f32 0.0, %v2212
    %2214 = vdwg.mxu0
    %2215 = vmatpush.msra.mxu0 %v559
    %2216 = vmatpush.msra.mxu0 %v555
    %2217 = vmatpush.msra.mxu0 %v551
    %2218 = vmatpush.msra.mxu0 %v547
    %2219 = vmatpush.msra.mxu0 %v543
    %2220 = vmatpush.msra.mxu0 %v539
    %2221 = vmatpush.msra.mxu0 %v535
    %2222 = vmatpush.msra.mxu0 %v531
    %2223 = vmatpush.msra.mxu0 %v527
    %2224 = vmatpush.msra.mxu0 %v523
    %2225 = vmatpush.msra.mxu0 %v519
    %2226 = vmatpush.msra.mxu0 %v515
    %2227 = vmatpush.msra.mxu0 %v511
    %2228 = vmatpush.msra.mxu0 %v507
    %2229 = vmatpush.msra.mxu0 %v503
    %2230 = vmatpush.msra.mxu0 %v499
    %2231 = vmatmul.f32.gmra.mxu0 %v2013
    %v2232 = vpop.f32.mrf.mxu0
    %v2233 = vadd.f32 0.0, %v2232
    %2234 = vdwg.mxu0
    %2235 = vmatpush.msra.mxu0 %v560
    %2236 = vmatpush.msra.mxu0 %v556
    %2237 = vmatpush.msra.mxu0 %v552
    %2238 = vmatpush.msra.mxu0 %v548
    %2239 = vmatpush.msra.mxu0 %v544
    %2240 = vmatpush.msra.mxu0 %v540
    %2241 = vmatpush.msra.mxu0 %v536
    %2242 = vmatpush.msra.mxu0 %v532
    %2243 = vmatpush.msra.mxu0 %v528
    %2244 = vmatpush.msra.mxu0 %v524
    %2245 = vmatpush.msra.mxu0 %v520
    %2246 = vmatpush.msra.mxu0 %v516
    %2247 = vmatpush.msra.mxu0 %v512
    %2248 = vmatpush.msra.mxu0 %v508
    %2249 = vmatpush.msra.mxu0 %v504
    %2250 = vmatpush.msra.mxu0 %v500
    %2251 = vmatmul.f32.gmra.mxu0 %v2013
    %v2252 = vpop.f32.mrf.mxu0
    %v2253 = vadd.f32 0.0, %v2252
    %2254 = vdwg.mxu0
    %v2255 = vadd.f32 %v2171, %v2193
    %v2256 = vadd.f32 %v2172, %v2213
    %v2257 = vadd.f32 %v2173, %v2233
    %v2258 = vadd.f32 %v2174, %v2253
    %v2259 = vxor.u32 %v2255, 2147483648
    %v2260 = vmul.f32 %v2259, 1.442695
    %v2261 = vpow.pop %v2260
    %v2262 = vadd.f32 %v2261, 1.0
    %v2263 = vrcp.pop %v2262
    %v2264 = vmul.f32 %v2262, %v2263
    %v2265 = vsub.f32 1.0, %v2264
    %v2266 = vmul.f32 %v2263, %v2265
    %v2267 = vadd.f32 %v2263, %v2266
    %vm2268 = vweird.f32 %v2262
    %vm2269 = vweird.f32 %v2263
    %vm2270 = vmor %vm2268, %vm2269
    %v2271 = vsel %vm2270, %v2263, %v2267
    %v2272 = vand.u32 2147483647, %v2262
    %vm2273 = vcmp.eq.f32.partialorder %v2272, 8.507059e+37
    %v2274 = vand.u32 %v2262, 2147483648
    %v2275 = vor.u32 1.1754944e-38, %v2274
    %v2276 = vsel %vm2273, %v2275, %v2271
    %v2277 = vmul.f32 1.0, %v2276
    %v2278 = vxor.u32 %v2256, 2147483648
    %v2279 = vmul.f32 %v2278, 1.442695
    %v2280 = vpow.pop %v2279
    %v2281 = vadd.f32 %v2280, 1.0
    %v2282 = vrcp.pop %v2281
    %v2283 = vmul.f32 %v2281, %v2282
    %v2284 = vsub.f32 1.0, %v2283
    %v2285 = vmul.f32 %v2282, %v2284
    %v2286 = vadd.f32 %v2282, %v2285
    %vm2287 = vweird.f32 %v2281
    %vm2288 = vweird.f32 %v2282
    %vm2289 = vmor %vm2287, %vm2288
    %v2290 = vsel %vm2289, %v2282, %v2286
    %v2291 = vand.u32 2147483647, %v2281
    %vm2292 = vcmp.eq.f32.partialorder %v2291, 8.507059e+37
    %v2293 = vand.u32 %v2281, 2147483648
    %v2294 = vor.u32 1.1754944e-38, %v2293
    %v2295 = vsel %vm2292, %v2294, %v2290
    %v2296 = vmul.f32 1.0, %v2295
    %v2297 = vtanh.pop %v2257
    %v2298 = vxor.u32 %v2258, 2147483648
    %v2299 = vmul.f32 %v2298, 1.442695
    %v2300 = vpow.pop %v2299
    %v2301 = vadd.f32 %v2300, 1.0
    %v2302 = vrcp.pop %v2301
    %v2303 = vmul.f32 %v2301, %v2302
    %v2304 = vsub.f32 1.0, %v2303
    %v2305 = vmul.f32 %v2302, %v2304
    %v2306 = vadd.f32 %v2302, %v2305
    %vm2307 = vweird.f32 %v2301
    %vm2308 = vweird.f32 %v2302
    %vm2309 = vmor %vm2307, %vm2308
    %v2310 = vsel %vm2309, %v2302, %v2306
    %v2311 = vand.u32 2147483647, %v2301
    %vm2312 = vcmp.eq.f32.partialorder %v2311, 8.507059e+37
    %v2313 = vand.u32 %v2301, 2147483648
    %v2314 = vor.u32 1.1754944e-38, %v2313
    %v2315 = vsel %vm2312, %v2314, %v2310
    %v2316 = vmul.f32 1.0, %v2315
    %v2317 = vmul.f32 %v2296, %v2011
    %v2318 = vmul.f32 %v2277, %v2297
    %v2319 = vadd.f32 %v2317, %v2318
    %v2320 = vtanh.pop %v2319
    %v2321 = vmul.f32 %v2316, %v2320
    %s2322 = scalar_lea.vmem %s5, 40
    %2323 = vst [vmem:[%s2322] sm:$0xff] %v2321
    %s2324 = scalar_lea.vmem [#allocation7], 64
    %v2325 = vld [vmem:[%s2324] sm:$0xff]
    %v2326 = vld [vmem:[%s2324 + $0x8] sm:$0xff]
    %v2327 = vld [vmem:[%s2324 + $0x10] sm:$0xff]
    %v2328 = vld [vmem:[%s2324 + $0x18] sm:$0xff]
    %2329 = vmatpush.msra.mxu0 %v624
    %2330 = vmatpush.msra.mxu0 %v620
    %2331 = vmatpush.msra.mxu0 %v616
    %2332 = vmatpush.msra.mxu0 %v612
    %2333 = vmatpush.msra.mxu0 %v608
    %2334 = vmatpush.msra.mxu0 %v604
    %2335 = vmatpush.msra.mxu0 %v600
    %2336 = vmatpush.msra.mxu0 %v596
    %2337 = vmatpush.msra.mxu0 %v592
    %2338 = vmatpush.msra.mxu0 %v588
    %2339 = vmatpush.msra.mxu0 %v584
    %2340 = vmatpush.msra.mxu0 %v580
    %2341 = vmatpush.msra.mxu0 %v576
    %2342 = vmatpush.msra.mxu0 %v572
    %2343 = vmatpush.msra.mxu0 %v568
    %2344 = vmatpush.msra.mxu0 %v564
    %2345 = vmatmul.f32.gmra.mxu0 %v2167
    %v2346 = vpop.f32.mrf.mxu0
    %v2347 = vadd.f32 0.0, %v2346
    %2348 = vdwg.mxu0
    %2349 = vmatpush.msra.mxu0 %v625
    %2350 = vmatpush.msra.mxu0 %v621
    %2351 = vmatpush.msra.mxu0 %v617
    %2352 = vmatpush.msra.mxu0 %v613
    %2353 = vmatpush.msra.mxu0 %v609
    %2354 = vmatpush.msra.mxu0 %v605
    %2355 = vmatpush.msra.mxu0 %v601
    %2356 = vmatpush.msra.mxu0 %v597
    %2357 = vmatpush.msra.mxu0 %v593
    %2358 = vmatpush.msra.mxu0 %v589
    %2359 = vmatpush.msra.mxu0 %v585
    %2360 = vmatpush.msra.mxu0 %v581
    %2361 = vmatpush.msra.mxu0 %v577
    %2362 = vmatpush.msra.mxu0 %v573
    %2363 = vmatpush.msra.mxu0 %v569
    %2364 = vmatpush.msra.mxu0 %v565
    %2365 = vmatmul.f32.gmra.mxu0 %v2167
    %v2366 = vpop.f32.mrf.mxu0
    %v2367 = vadd.f32 0.0, %v2366
    %2368 = vdwg.mxu0
    %2369 = vmatpush.msra.mxu0 %v626
    %2370 = vmatpush.msra.mxu0 %v622
    %2371 = vmatpush.msra.mxu0 %v618
    %2372 = vmatpush.msra.mxu0 %v614
    %2373 = vmatpush.msra.mxu0 %v610
    %2374 = vmatpush.msra.mxu0 %v606
    %2375 = vmatpush.msra.mxu0 %v602
    %2376 = vmatpush.msra.mxu0 %v598
    %2377 = vmatpush.msra.mxu0 %v594
    %2378 = vmatpush.msra.mxu0 %v590
    %2379 = vmatpush.msra.mxu0 %v586
    %2380 = vmatpush.msra.mxu0 %v582
    %2381 = vmatpush.msra.mxu0 %v578
    %2382 = vmatpush.msra.mxu0 %v574
    %2383 = vmatpush.msra.mxu0 %v570
    %2384 = vmatpush.msra.mxu0 %v566
    %2385 = vmatmul.f32.gmra.mxu0 %v2167
    %v2386 = vpop.f32.mrf.mxu0
    %v2387 = vadd.f32 0.0, %v2386
    %2388 = vdwg.mxu0
    %2389 = vmatpush.msra.mxu0 %v627
    %2390 = vmatpush.msra.mxu0 %v623
    %2391 = vmatpush.msra.mxu0 %v619
    %2392 = vmatpush.msra.mxu0 %v615
    %2393 = vmatpush.msra.mxu0 %v611
    %2394 = vmatpush.msra.mxu0 %v607
    %2395 = vmatpush.msra.mxu0 %v603
    %2396 = vmatpush.msra.mxu0 %v599
    %2397 = vmatpush.msra.mxu0 %v595
    %2398 = vmatpush.msra.mxu0 %v591
    %2399 = vmatpush.msra.mxu0 %v587
    %2400 = vmatpush.msra.mxu0 %v583
    %2401 = vmatpush.msra.mxu0 %v579
    %2402 = vmatpush.msra.mxu0 %v575
    %2403 = vmatpush.msra.mxu0 %v571
    %2404 = vmatpush.msra.mxu0 %v567
    %2405 = vmatmul.f32.gmra.mxu0 %v2167
    %v2406 = vpop.f32.mrf.mxu0
    %v2407 = vadd.f32 0.0, %v2406
    %2408 = vdwg.mxu0
    %v2409 = vadd.f32 %v2325, %v2347
    %v2410 = vadd.f32 %v2326, %v2367
    %v2411 = vadd.f32 %v2327, %v2387
    %v2412 = vadd.f32 %v2328, %v2407
    %v2413 = vxor.u32 %v2409, 2147483648
    %v2414 = vmul.f32 %v2413, 1.442695
    %v2415 = vpow.pop %v2414
    %v2416 = vadd.f32 %v2415, 1.0
    %v2417 = vrcp.pop %v2416
    %v2418 = vmul.f32 %v2416, %v2417
    %v2419 = vsub.f32 1.0, %v2418
    %v2420 = vmul.f32 %v2417, %v2419
    %v2421 = vadd.f32 %v2417, %v2420
    %vm2422 = vweird.f32 %v2416
    %vm2423 = vweird.f32 %v2417
    %vm2424 = vmor %vm2422, %vm2423
    %v2425 = vsel %vm2424, %v2417, %v2421
    %v2426 = vand.u32 2147483647, %v2416
    %vm2427 = vcmp.eq.f32.partialorder %v2426, 8.507059e+37
    %v2428 = vand.u32 %v2416, 2147483648
    %v2429 = vor.u32 1.1754944e-38, %v2428
    %v2430 = vsel %vm2427, %v2429, %v2425
    %v2431 = vmul.f32 1.0, %v2430
    %v2432 = vxor.u32 %v2410, 2147483648
    %v2433 = vmul.f32 %v2432, 1.442695
    %v2434 = vpow.pop %v2433
    %v2435 = vadd.f32 %v2434, 1.0
    %v2436 = vrcp.pop %v2435
    %v2437 = vmul.f32 %v2435, %v2436
    %v2438 = vsub.f32 1.0, %v2437
    %v2439 = vmul.f32 %v2436, %v2438
    %v2440 = vadd.f32 %v2436, %v2439
    %vm2441 = vweird.f32 %v2435
    %vm2442 = vweird.f32 %v2436
    %vm2443 = vmor %vm2441, %vm2442
    %v2444 = vsel %vm2443, %v2436, %v2440
    %v2445 = vand.u32 2147483647, %v2435
    %vm2446 = vcmp.eq.f32.partialorder %v2445, 8.507059e+37
    %v2447 = vand.u32 %v2435, 2147483648
    %v2448 = vor.u32 1.1754944e-38, %v2447
    %v2449 = vsel %vm2446, %v2448, %v2444
    %v2450 = vmul.f32 1.0, %v2449
    %v2451 = vtanh.pop %v2411
    %v2452 = vxor.u32 %v2412, 2147483648
    %v2453 = vmul.f32 %v2452, 1.442695
    %v2454 = vpow.pop %v2453
    %v2455 = vadd.f32 %v2454, 1.0
    %v2456 = vrcp.pop %v2455
    %v2457 = vmul.f32 %v2455, %v2456
    %v2458 = vsub.f32 1.0, %v2457
    %v2459 = vmul.f32 %v2456, %v2458
    %v2460 = vadd.f32 %v2456, %v2459
    %vm2461 = vweird.f32 %v2455
    %vm2462 = vweird.f32 %v2456
    %vm2463 = vmor %vm2461, %vm2462
    %v2464 = vsel %vm2463, %v2456, %v2460
    %v2465 = vand.u32 2147483647, %v2455
    %vm2466 = vcmp.eq.f32.partialorder %v2465, 8.507059e+37
    %v2467 = vand.u32 %v2455, 2147483648
    %v2468 = vor.u32 1.1754944e-38, %v2467
    %v2469 = vsel %vm2466, %v2468, %v2464
    %v2470 = vmul.f32 1.0, %v2469
    %v2471 = vmul.f32 %v2450, %v2165
    %v2472 = vmul.f32 %v2431, %v2451
    %v2473 = vadd.f32 %v2471, %v2472
    %v2474 = vtanh.pop %v2473
    %v2475 = vmul.f32 %v2470, %v2474
    %s2476 = scalar_lea.vmem %s205, 16
    %2477 = vst [vmem:[%s2476] sm:$0xff] %v2475
    %s2478 = scalar_lea.vmem [#allocation6], 192
    %v2479 = vld [vmem:[%s2478] sm:$0xff]
    %v2480 = vld [vmem:[%s2478 + $0x8] sm:$0xff]
    %v2481 = vld [vmem:[%s2478 + $0x10] sm:$0xff]
    %v2482 = vld [vmem:[%s2478 + $0x18] sm:$0xff]
    %2483 = vmatpush.msra.mxu0 %v557
    %2484 = vmatpush.msra.mxu0 %v553
    %2485 = vmatpush.msra.mxu0 %v549
    %2486 = vmatpush.msra.mxu0 %v545
    %2487 = vmatpush.msra.mxu0 %v541
    %2488 = vmatpush.msra.mxu0 %v537
    %2489 = vmatpush.msra.mxu0 %v533
    %2490 = vmatpush.msra.mxu0 %v529
    %2491 = vmatpush.msra.mxu0 %v525
    %2492 = vmatpush.msra.mxu0 %v521
    %2493 = vmatpush.msra.mxu0 %v517
    %2494 = vmatpush.msra.mxu0 %v513
    %2495 = vmatpush.msra.mxu0 %v509
    %2496 = vmatpush.msra.mxu0 %v505
    %2497 = vmatpush.msra.mxu0 %v501
    %2498 = vmatpush.msra.mxu0 %v497
    %2499 = vmatmul.f32.gmra.mxu0 %v2321
    %v2500 = vpop.f32.mrf.mxu0
    %v2501 = vadd.f32 0.0, %v2500
    %2502 = vdwg.mxu0
    %2503 = vmatpush.msra.mxu0 %v558
    %2504 = vmatpush.msra.mxu0 %v554
    %2505 = vmatpush.msra.mxu0 %v550
    %2506 = vmatpush.msra.mxu0 %v546
    %2507 = vmatpush.msra.mxu0 %v542
    %2508 = vmatpush.msra.mxu0 %v538
    %2509 = vmatpush.msra.mxu0 %v534
    %2510 = vmatpush.msra.mxu0 %v530
    %2511 = vmatpush.msra.mxu0 %v526
    %2512 = vmatpush.msra.mxu0 %v522
    %2513 = vmatpush.msra.mxu0 %v518
    %2514 = vmatpush.msra.mxu0 %v514
    %2515 = vmatpush.msra.mxu0 %v510
    %2516 = vmatpush.msra.mxu0 %v506
    %2517 = vmatpush.msra.mxu0 %v502
    %2518 = vmatpush.msra.mxu0 %v498
    %2519 = vmatmul.f32.gmra.mxu0 %v2321
    %v2520 = vpop.f32.mrf.mxu0
    %v2521 = vadd.f32 0.0, %v2520
    %2522 = vdwg.mxu0
    %2523 = vmatpush.msra.mxu0 %v559
    %2524 = vmatpush.msra.mxu0 %v555
    %2525 = vmatpush.msra.mxu0 %v551
    %2526 = vmatpush.msra.mxu0 %v547
    %2527 = vmatpush.msra.mxu0 %v543
    %2528 = vmatpush.msra.mxu0 %v539
    %2529 = vmatpush.msra.mxu0 %v535
    %2530 = vmatpush.msra.mxu0 %v531
    %2531 = vmatpush.msra.mxu0 %v527
    %2532 = vmatpush.msra.mxu0 %v523
    %2533 = vmatpush.msra.mxu0 %v519
    %2534 = vmatpush.msra.mxu0 %v515
    %2535 = vmatpush.msra.mxu0 %v511
    %2536 = vmatpush.msra.mxu0 %v507
    %2537 = vmatpush.msra.mxu0 %v503
    %2538 = vmatpush.msra.mxu0 %v499
    %2539 = vmatmul.f32.gmra.mxu0 %v2321
    %v2540 = vpop.f32.mrf.mxu0
    %v2541 = vadd.f32 0.0, %v2540
    %2542 = vdwg.mxu0
    %2543 = vmatpush.msra.mxu0 %v560
    %2544 = vmatpush.msra.mxu0 %v556
    %2545 = vmatpush.msra.mxu0 %v552
    %2546 = vmatpush.msra.mxu0 %v548
    %2547 = vmatpush.msra.mxu0 %v544
    %2548 = vmatpush.msra.mxu0 %v540
    %2549 = vmatpush.msra.mxu0 %v536
    %2550 = vmatpush.msra.mxu0 %v532
    %2551 = vmatpush.msra.mxu0 %v528
    %2552 = vmatpush.msra.mxu0 %v524
    %2553 = vmatpush.msra.mxu0 %v520
    %2554 = vmatpush.msra.mxu0 %v516
    %2555 = vmatpush.msra.mxu0 %v512
    %2556 = vmatpush.msra.mxu0 %v508
    %2557 = vmatpush.msra.mxu0 %v504
    %2558 = vmatpush.msra.mxu0 %v500
    %2559 = vmatmul.f32.gmra.mxu0 %v2321
    %v2560 = vpop.f32.mrf.mxu0
    %v2561 = vadd.f32 0.0, %v2560
    %2562 = vdwg.mxu0
    %v2563 = vadd.f32 %v2479, %v2501
    %v2564 = vadd.f32 %v2480, %v2521
    %v2565 = vadd.f32 %v2481, %v2541
    %v2566 = vadd.f32 %v2482, %v2561
    %v2567 = vxor.u32 %v2563, 2147483648
    %v2568 = vmul.f32 %v2567, 1.442695
    %v2569 = vpow.pop %v2568
    %v2570 = vadd.f32 %v2569, 1.0
    %v2571 = vrcp.pop %v2570
    %v2572 = vmul.f32 %v2570, %v2571
    %v2573 = vsub.f32 1.0, %v2572
    %v2574 = vmul.f32 %v2571, %v2573
    %v2575 = vadd.f32 %v2571, %v2574
    %vm2576 = vweird.f32 %v2570
    %vm2577 = vweird.f32 %v2571
    %vm2578 = vmor %vm2576, %vm2577
    %v2579 = vsel %vm2578, %v2571, %v2575
    %v2580 = vand.u32 2147483647, %v2570
    %vm2581 = vcmp.eq.f32.partialorder %v2580, 8.507059e+37
    %v2582 = vand.u32 %v2570, 2147483648
    %v2583 = vor.u32 1.1754944e-38, %v2582
    %v2584 = vsel %vm2581, %v2583, %v2579
    %v2585 = vmul.f32 1.0, %v2584
    %v2586 = vxor.u32 %v2564, 2147483648
    %v2587 = vmul.f32 %v2586, 1.442695
    %v2588 = vpow.pop %v2587
    %v2589 = vadd.f32 %v2588, 1.0
    %v2590 = vrcp.pop %v2589
    %v2591 = vmul.f32 %v2589, %v2590
    %v2592 = vsub.f32 1.0, %v2591
    %v2593 = vmul.f32 %v2590, %v2592
    %v2594 = vadd.f32 %v2590, %v2593
    %vm2595 = vweird.f32 %v2589
    %vm2596 = vweird.f32 %v2590
    %vm2597 = vmor %vm2595, %vm2596
    %v2598 = vsel %vm2597, %v2590, %v2594
    %v2599 = vand.u32 2147483647, %v2589
    %vm2600 = vcmp.eq.f32.partialorder %v2599, 8.507059e+37
    %v2601 = vand.u32 %v2589, 2147483648
    %v2602 = vor.u32 1.1754944e-38, %v2601
    %v2603 = vsel %vm2600, %v2602, %v2598
    %v2604 = vmul.f32 1.0, %v2603
    %v2605 = vtanh.pop %v2565
    %v2606 = vxor.u32 %v2566, 2147483648
    %v2607 = vmul.f32 %v2606, 1.442695
    %v2608 = vpow.pop %v2607
    %v2609 = vadd.f32 %v2608, 1.0
    %v2610 = vrcp.pop %v2609
    %v2611 = vmul.f32 %v2609, %v2610
    %v2612 = vsub.f32 1.0, %v2611
    %v2613 = vmul.f32 %v2610, %v2612
    %v2614 = vadd.f32 %v2610, %v2613
    %vm2615 = vweird.f32 %v2609
    %vm2616 = vweird.f32 %v2610
    %vm2617 = vmor %vm2615, %vm2616
    %v2618 = vsel %vm2617, %v2610, %v2614
    %v2619 = vand.u32 2147483647, %v2609
    %vm2620 = vcmp.eq.f32.partialorder %v2619, 8.507059e+37
    %v2621 = vand.u32 %v2609, 2147483648
    %v2622 = vor.u32 1.1754944e-38, %v2621
    %v2623 = vsel %vm2620, %v2622, %v2618
    %v2624 = vmul.f32 1.0, %v2623
    %v2625 = vmul.f32 %v2604, %v2319
    %v2626 = vmul.f32 %v2585, %v2605
    %v2627 = vadd.f32 %v2625, %v2626
    %v2628 = vtanh.pop %v2627
    %v2629 = vmul.f32 %v2624, %v2628
    %s2630 = scalar_lea.vmem %s5, 48
    %2631 = vst [vmem:[%s2630] sm:$0xff] %v2629
    %s2632 = scalar_lea.vmem [#allocation7], 32
    %v2633 = vld [vmem:[%s2632] sm:$0xff]
    %v2634 = vld [vmem:[%s2632 + $0x8] sm:$0xff]
    %v2635 = vld [vmem:[%s2632 + $0x10] sm:$0xff]
    %v2636 = vld [vmem:[%s2632 + $0x18] sm:$0xff]
    %2637 = vmatpush.msra.mxu0 %v624
    %2638 = vmatpush.msra.mxu0 %v620
    %2639 = vmatpush.msra.mxu0 %v616
    %2640 = vmatpush.msra.mxu0 %v612
    %2641 = vmatpush.msra.mxu0 %v608
    %2642 = vmatpush.msra.mxu0 %v604
    %2643 = vmatpush.msra.mxu0 %v600
    %2644 = vmatpush.msra.mxu0 %v596
    %2645 = vmatpush.msra.mxu0 %v592
    %2646 = vmatpush.msra.mxu0 %v588
    %2647 = vmatpush.msra.mxu0 %v584
    %2648 = vmatpush.msra.mxu0 %v580
    %2649 = vmatpush.msra.mxu0 %v576
    %2650 = vmatpush.msra.mxu0 %v572
    %2651 = vmatpush.msra.mxu0 %v568
    %2652 = vmatpush.msra.mxu0 %v564
    %2653 = vmatmul.f32.gmra.mxu0 %v2475
    %v2654 = vpop.f32.mrf.mxu0
    %v2655 = vadd.f32 0.0, %v2654
    %2656 = vdwg.mxu0
    %2657 = vmatpush.msra.mxu0 %v625
    %2658 = vmatpush.msra.mxu0 %v621
    %2659 = vmatpush.msra.mxu0 %v617
    %2660 = vmatpush.msra.mxu0 %v613
    %2661 = vmatpush.msra.mxu0 %v609
    %2662 = vmatpush.msra.mxu0 %v605
    %2663 = vmatpush.msra.mxu0 %v601
    %2664 = vmatpush.msra.mxu0 %v597
    %2665 = vmatpush.msra.mxu0 %v593
    %2666 = vmatpush.msra.mxu0 %v589
    %2667 = vmatpush.msra.mxu0 %v585
    %2668 = vmatpush.msra.mxu0 %v581
    %2669 = vmatpush.msra.mxu0 %v577
    %2670 = vmatpush.msra.mxu0 %v573
    %2671 = vmatpush.msra.mxu0 %v569
    %2672 = vmatpush.msra.mxu0 %v565
    %2673 = vmatmul.f32.gmra.mxu0 %v2475
    %v2674 = vpop.f32.mrf.mxu0
    %v2675 = vadd.f32 0.0, %v2674
    %2676 = vdwg.mxu0
    %2677 = vmatpush.msra.mxu0 %v626
    %2678 = vmatpush.msra.mxu0 %v622
    %2679 = vmatpush.msra.mxu0 %v618
    %2680 = vmatpush.msra.mxu0 %v614
    %2681 = vmatpush.msra.mxu0 %v610
    %2682 = vmatpush.msra.mxu0 %v606
    %2683 = vmatpush.msra.mxu0 %v602
    %2684 = vmatpush.msra.mxu0 %v598
    %2685 = vmatpush.msra.mxu0 %v594
    %2686 = vmatpush.msra.mxu0 %v590
    %2687 = vmatpush.msra.mxu0 %v586
    %2688 = vmatpush.msra.mxu0 %v582
    %2689 = vmatpush.msra.mxu0 %v578
    %2690 = vmatpush.msra.mxu0 %v574
    %2691 = vmatpush.msra.mxu0 %v570
    %2692 = vmatpush.msra.mxu0 %v566
    %2693 = vmatmul.f32.gmra.mxu0 %v2475
    %v2694 = vpop.f32.mrf.mxu0
    %v2695 = vadd.f32 0.0, %v2694
    %2696 = vdwg.mxu0
    %2697 = vmatpush.msra.mxu0 %v627
    %2698 = vmatpush.msra.mxu0 %v623
    %2699 = vmatpush.msra.mxu0 %v619
    %2700 = vmatpush.msra.mxu0 %v615
    %2701 = vmatpush.msra.mxu0 %v611
    %2702 = vmatpush.msra.mxu0 %v607
    %2703 = vmatpush.msra.mxu0 %v603
    %2704 = vmatpush.msra.mxu0 %v599
    %2705 = vmatpush.msra.mxu0 %v595
    %2706 = vmatpush.msra.mxu0 %v591
    %2707 = vmatpush.msra.mxu0 %v587
    %2708 = vmatpush.msra.mxu0 %v583
    %2709 = vmatpush.msra.mxu0 %v579
    %2710 = vmatpush.msra.mxu0 %v575
    %2711 = vmatpush.msra.mxu0 %v571
    %2712 = vmatpush.msra.mxu0 %v567
    %2713 = vmatmul.f32.gmra.mxu0 %v2475
    %v2714 = vpop.f32.mrf.mxu0
    %v2715 = vadd.f32 0.0, %v2714
    %2716 = vdwg.mxu0
    %v2717 = vadd.f32 %v2633, %v2655
    %v2718 = vadd.f32 %v2634, %v2675
    %v2719 = vadd.f32 %v2635, %v2695
    %v2720 = vadd.f32 %v2636, %v2715
    %v2721 = vxor.u32 %v2717, 2147483648
    %v2722 = vmul.f32 %v2721, 1.442695
    %v2723 = vpow.pop %v2722
    %v2724 = vadd.f32 %v2723, 1.0
    %v2725 = vrcp.pop %v2724
    %v2726 = vmul.f32 %v2724, %v2725
    %v2727 = vsub.f32 1.0, %v2726
    %v2728 = vmul.f32 %v2725, %v2727
    %v2729 = vadd.f32 %v2725, %v2728
    %vm2730 = vweird.f32 %v2724
    %vm2731 = vweird.f32 %v2725
    %vm2732 = vmor %vm2730, %vm2731
    %v2733 = vsel %vm2732, %v2725, %v2729
    %v2734 = vand.u32 2147483647, %v2724
    %vm2735 = vcmp.eq.f32.partialorder %v2734, 8.507059e+37
    %v2736 = vand.u32 %v2724, 2147483648
    %v2737 = vor.u32 1.1754944e-38, %v2736
    %v2738 = vsel %vm2735, %v2737, %v2733
    %v2739 = vmul.f32 1.0, %v2738
    %v2740 = vxor.u32 %v2718, 2147483648
    %v2741 = vmul.f32 %v2740, 1.442695
    %v2742 = vpow.pop %v2741
    %v2743 = vadd.f32 %v2742, 1.0
    %v2744 = vrcp.pop %v2743
    %v2745 = vmul.f32 %v2743, %v2744
    %v2746 = vsub.f32 1.0, %v2745
    %v2747 = vmul.f32 %v2744, %v2746
    %v2748 = vadd.f32 %v2744, %v2747
    %vm2749 = vweird.f32 %v2743
    %vm2750 = vweird.f32 %v2744
    %vm2751 = vmor %vm2749, %vm2750
    %v2752 = vsel %vm2751, %v2744, %v2748
    %v2753 = vand.u32 2147483647, %v2743
    %vm2754 = vcmp.eq.f32.partialorder %v2753, 8.507059e+37
    %v2755 = vand.u32 %v2743, 2147483648
    %v2756 = vor.u32 1.1754944e-38, %v2755
    %v2757 = vsel %vm2754, %v2756, %v2752
    %v2758 = vmul.f32 1.0, %v2757
    %v2759 = vtanh.pop %v2719
    %v2760 = vxor.u32 %v2720, 2147483648
    %v2761 = vmul.f32 %v2760, 1.442695
    %v2762 = vpow.pop %v2761
    %v2763 = vadd.f32 %v2762, 1.0
    %v2764 = vrcp.pop %v2763
    %v2765 = vmul.f32 %v2763, %v2764
    %v2766 = vsub.f32 1.0, %v2765
    %v2767 = vmul.f32 %v2764, %v2766
    %v2768 = vadd.f32 %v2764, %v2767
    %vm2769 = vweird.f32 %v2763
    %vm2770 = vweird.f32 %v2764
    %vm2771 = vmor %vm2769, %vm2770
    %v2772 = vsel %vm2771, %v2764, %v2768
    %v2773 = vand.u32 2147483647, %v2763
    %vm2774 = vcmp.eq.f32.partialorder %v2773, 8.507059e+37
    %v2775 = vand.u32 %v2763, 2147483648
    %v2776 = vor.u32 1.1754944e-38, %v2775
    %v2777 = vsel %vm2774, %v2776, %v2772
    %v2778 = vmul.f32 1.0, %v2777
    %v2779 = vmul.f32 %v2758, %v2473
    %v2780 = vmul.f32 %v2739, %v2759
    %v2781 = vadd.f32 %v2779, %v2780
    %v2782 = vtanh.pop %v2781
    %v2783 = vmul.f32 %v2778, %v2782
    %s2784 = scalar_lea.vmem %s205, 8
    %2785 = vst [vmem:[%s2784] sm:$0xff] %v2783
    %s2786 = scalar_lea.vmem [#allocation6], 224
    %v2787 = vld [vmem:[%s2786] sm:$0xff]
    %v2788 = vld [vmem:[%s2786 + $0x8] sm:$0xff]
    %v2789 = vld [vmem:[%s2786 + $0x10] sm:$0xff]
    %v2790 = vld [vmem:[%s2786 + $0x18] sm:$0xff]
    %2791 = vmatpush.msra.mxu0 %v557
    %2792 = vmatpush.msra.mxu0 %v553
    %2793 = vmatpush.msra.mxu0 %v549
    %2794 = vmatpush.msra.mxu0 %v545
    %2795 = vmatpush.msra.mxu0 %v541
    %2796 = vmatpush.msra.mxu0 %v537
    %2797 = vmatpush.msra.mxu0 %v533
    %2798 = vmatpush.msra.mxu0 %v529
    %2799 = vmatpush.msra.mxu0 %v525
    %2800 = vmatpush.msra.mxu0 %v521
    %2801 = vmatpush.msra.mxu0 %v517
    %2802 = vmatpush.msra.mxu0 %v513
    %2803 = vmatpush.msra.mxu0 %v509
    %2804 = vmatpush.msra.mxu0 %v505
    %2805 = vmatpush.msra.mxu0 %v501
    %2806 = vmatpush.msra.mxu0 %v497
    %2807 = vmatmul.f32.gmra.mxu0 %v2629
    %v2808 = vpop.f32.mrf.mxu0
    %v2809 = vadd.f32 0.0, %v2808
    %2810 = vdwg.mxu0
    %2811 = vmatpush.msra.mxu0 %v558
    %2812 = vmatpush.msra.mxu0 %v554
    %2813 = vmatpush.msra.mxu0 %v550
    %2814 = vmatpush.msra.mxu0 %v546
    %2815 = vmatpush.msra.mxu0 %v542
    %2816 = vmatpush.msra.mxu0 %v538
    %2817 = vmatpush.msra.mxu0 %v534
    %2818 = vmatpush.msra.mxu0 %v530
    %2819 = vmatpush.msra.mxu0 %v526
    %2820 = vmatpush.msra.mxu0 %v522
    %2821 = vmatpush.msra.mxu0 %v518
    %2822 = vmatpush.msra.mxu0 %v514
    %2823 = vmatpush.msra.mxu0 %v510
    %2824 = vmatpush.msra.mxu0 %v506
    %2825 = vmatpush.msra.mxu0 %v502
    %2826 = vmatpush.msra.mxu0 %v498
    %2827 = vmatmul.f32.gmra.mxu0 %v2629
    %v2828 = vpop.f32.mrf.mxu0
    %v2829 = vadd.f32 0.0, %v2828
    %2830 = vdwg.mxu0
    %2831 = vmatpush.msra.mxu0 %v559
    %2832 = vmatpush.msra.mxu0 %v555
    %2833 = vmatpush.msra.mxu0 %v551
    %2834 = vmatpush.msra.mxu0 %v547
    %2835 = vmatpush.msra.mxu0 %v543
    %2836 = vmatpush.msra.mxu0 %v539
    %2837 = vmatpush.msra.mxu0 %v535
    %2838 = vmatpush.msra.mxu0 %v531
    %2839 = vmatpush.msra.mxu0 %v527
    %2840 = vmatpush.msra.mxu0 %v523
    %2841 = vmatpush.msra.mxu0 %v519
    %2842 = vmatpush.msra.mxu0 %v515
    %2843 = vmatpush.msra.mxu0 %v511
    %2844 = vmatpush.msra.mxu0 %v507
    %2845 = vmatpush.msra.mxu0 %v503
    %2846 = vmatpush.msra.mxu0 %v499
    %2847 = vmatmul.f32.gmra.mxu0 %v2629
    %v2848 = vpop.f32.mrf.mxu0
    %v2849 = vadd.f32 0.0, %v2848
    %2850 = vdwg.mxu0
    %2851 = vmatpush.msra.mxu0 %v560
    %2852 = vmatpush.msra.mxu0 %v556
    %2853 = vmatpush.msra.mxu0 %v552
    %2854 = vmatpush.msra.mxu0 %v548
    %2855 = vmatpush.msra.mxu0 %v544
    %2856 = vmatpush.msra.mxu0 %v540
    %2857 = vmatpush.msra.mxu0 %v536
    %2858 = vmatpush.msra.mxu0 %v532
    %2859 = vmatpush.msra.mxu0 %v528
    %2860 = vmatpush.msra.mxu0 %v524
    %2861 = vmatpush.msra.mxu0 %v520
    %2862 = vmatpush.msra.mxu0 %v516
    %2863 = vmatpush.msra.mxu0 %v512
    %2864 = vmatpush.msra.mxu0 %v508
    %2865 = vmatpush.msra.mxu0 %v504
    %2866 = vmatpush.msra.mxu0 %v500
    %2867 = vmatmul.f32.gmra.mxu0 %v2629
    %v2868 = vpop.f32.mrf.mxu0
    %v2869 = vadd.f32 0.0, %v2868
    %2870 = vdwg.mxu0
    %v2871 = vadd.f32 %v2787, %v2809
    %v2872 = vadd.f32 %v2788, %v2829
    %v2873 = vadd.f32 %v2789, %v2849
    %v2874 = vadd.f32 %v2790, %v2869
    %v2875 = vxor.u32 %v2871, 2147483648
    %v2876 = vmul.f32 %v2875, 1.442695
    %v2877 = vpow.pop %v2876
    %v2878 = vadd.f32 %v2877, 1.0
    %v2879 = vrcp.pop %v2878
    %v2880 = vmul.f32 %v2878, %v2879
    %v2881 = vsub.f32 1.0, %v2880
    %v2882 = vmul.f32 %v2879, %v2881
    %v2883 = vadd.f32 %v2879, %v2882
    %vm2884 = vweird.f32 %v2878
    %vm2885 = vweird.f32 %v2879
    %vm2886 = vmor %vm2884, %vm2885
    %v2887 = vsel %vm2886, %v2879, %v2883
    %v2888 = vand.u32 2147483647, %v2878
    %vm2889 = vcmp.eq.f32.partialorder %v2888, 8.507059e+37
    %v2890 = vand.u32 %v2878, 2147483648
    %v2891 = vor.u32 1.1754944e-38, %v2890
    %v2892 = vsel %vm2889, %v2891, %v2887
    %v2893 = vmul.f32 1.0, %v2892
    %v2894 = vxor.u32 %v2872, 2147483648
    %v2895 = vmul.f32 %v2894, 1.442695
    %v2896 = vpow.pop %v2895
    %v2897 = vadd.f32 %v2896, 1.0
    %v2898 = vrcp.pop %v2897
    %v2899 = vmul.f32 %v2897, %v2898
    %v2900 = vsub.f32 1.0, %v2899
    %v2901 = vmul.f32 %v2898, %v2900
    %v2902 = vadd.f32 %v2898, %v2901
    %vm2903 = vweird.f32 %v2897
    %vm2904 = vweird.f32 %v2898
    %vm2905 = vmor %vm2903, %vm2904
    %v2906 = vsel %vm2905, %v2898, %v2902
    %v2907 = vand.u32 2147483647, %v2897
    %vm2908 = vcmp.eq.f32.partialorder %v2907, 8.507059e+37
    %v2909 = vand.u32 %v2897, 2147483648
    %v2910 = vor.u32 1.1754944e-38, %v2909
    %v2911 = vsel %vm2908, %v2910, %v2906
    %v2912 = vmul.f32 1.0, %v2911
    %v2913 = vtanh.pop %v2873
    %v2914 = vxor.u32 %v2874, 2147483648
    %v2915 = vmul.f32 %v2914, 1.442695
    %v2916 = vpow.pop %v2915
    %v2917 = vadd.f32 %v2916, 1.0
    %v2918 = vrcp.pop %v2917
    %v2919 = vmul.f32 %v2917, %v2918
    %v2920 = vsub.f32 1.0, %v2919
    %v2921 = vmul.f32 %v2918, %v2920
    %v2922 = vadd.f32 %v2918, %v2921
    %vm2923 = vweird.f32 %v2917
    %vm2924 = vweird.f32 %v2918
    %vm2925 = vmor %vm2923, %vm2924
    %v2926 = vsel %vm2925, %v2918, %v2922
    %v2927 = vand.u32 2147483647, %v2917
    %vm2928 = vcmp.eq.f32.partialorder %v2927, 8.507059e+37
    %v2929 = vand.u32 %v2917, 2147483648
    %v2930 = vor.u32 1.1754944e-38, %v2929
    %v2931 = vsel %vm2928, %v2930, %v2926
    %v2932 = vmul.f32 1.0, %v2931
    %v2933 = vmul.f32 %v2912, %v2627
    %v2934 = vmul.f32 %v2893, %v2913
    %v2935 = vadd.f32 %v2933, %v2934
    %v2936 = vtanh.pop %v2935
    %v2937 = vmul.f32 %v2932, %v2936
    %s2938 = scalar_lea.vmem %s5, 56
    %2939 = vst [vmem:[%s2938] sm:$0xff] %v2937
    %v2940 = vld [vmem:[#allocation7] sm:$0xff]
    %v2941 = vld [vmem:[#allocation7 + $0x8] sm:$0xff]
    %v2942 = vld [vmem:[#allocation7 + $0x10] sm:$0xff]
    %v2943 = vld [vmem:[#allocation7 + $0x18] sm:$0xff]
    %2944 = vmatpush.msra.mxu0 %v624
    %2945 = vmatpush.msra.mxu0 %v620
    %2946 = vmatpush.msra.mxu0 %v616
    %2947 = vmatpush.msra.mxu0 %v612
    %2948 = vmatpush.msra.mxu0 %v608
    %2949 = vmatpush.msra.mxu0 %v604
    %2950 = vmatpush.msra.mxu0 %v600
    %2951 = vmatpush.msra.mxu0 %v596
    %2952 = vmatpush.msra.mxu0 %v592
    %2953 = vmatpush.msra.mxu0 %v588
    %2954 = vmatpush.msra.mxu0 %v584
    %2955 = vmatpush.msra.mxu0 %v580
    %2956 = vmatpush.msra.mxu0 %v576
    %2957 = vmatpush.msra.mxu0 %v572
    %2958 = vmatpush.msra.mxu0 %v568
    %2959 = vmatpush.msra.mxu0 %v564
    %2960 = vmatmul.f32.gmra.mxu0 %v2783
    %v2961 = vpop.f32.mrf.mxu0
    %v2962 = vadd.f32 0.0, %v2961
    %2963 = vdwg.mxu0
    %2964 = vmatpush.msra.mxu0 %v625
    %2965 = vmatpush.msra.mxu0 %v621
    %2966 = vmatpush.msra.mxu0 %v617
    %2967 = vmatpush.msra.mxu0 %v613
    %2968 = vmatpush.msra.mxu0 %v609
    %2969 = vmatpush.msra.mxu0 %v605
    %2970 = vmatpush.msra.mxu0 %v601
    %2971 = vmatpush.msra.mxu0 %v597
    %2972 = vmatpush.msra.mxu0 %v593
    %2973 = vmatpush.msra.mxu0 %v589
    %2974 = vmatpush.msra.mxu0 %v585
    %2975 = vmatpush.msra.mxu0 %v581
    %2976 = vmatpush.msra.mxu0 %v577
    %2977 = vmatpush.msra.mxu0 %v573
    %2978 = vmatpush.msra.mxu0 %v569
    %2979 = vmatpush.msra.mxu0 %v565
    %2980 = vmatmul.f32.gmra.mxu0 %v2783
    %v2981 = vpop.f32.mrf.mxu0
    %v2982 = vadd.f32 0.0, %v2981
    %2983 = vdwg.mxu0
    %2984 = vmatpush.msra.mxu0 %v626
    %2985 = vmatpush.msra.mxu0 %v622
    %2986 = vmatpush.msra.mxu0 %v618
    %2987 = vmatpush.msra.mxu0 %v614
    %2988 = vmatpush.msra.mxu0 %v610
    %2989 = vmatpush.msra.mxu0 %v606
    %2990 = vmatpush.msra.mxu0 %v602
    %2991 = vmatpush.msra.mxu0 %v598
    %2992 = vmatpush.msra.mxu0 %v594
    %2993 = vmatpush.msra.mxu0 %v590
    %2994 = vmatpush.msra.mxu0 %v586
    %2995 = vmatpush.msra.mxu0 %v582
    %2996 = vmatpush.msra.mxu0 %v578
    %2997 = vmatpush.msra.mxu0 %v574
    %2998 = vmatpush.msra.mxu0 %v570
    %2999 = vmatpush.msra.mxu0 %v566
    %3000 = vmatmul.f32.gmra.mxu0 %v2783
    %v3001 = vpop.f32.mrf.mxu0
    %v3002 = vadd.f32 0.0, %v3001
    %3003 = vdwg.mxu0
    %3004 = vmatpush.msra.mxu0 %v627
    %3005 = vmatpush.msra.mxu0 %v623
    %3006 = vmatpush.msra.mxu0 %v619
    %3007 = vmatpush.msra.mxu0 %v615
    %3008 = vmatpush.msra.mxu0 %v611
    %3009 = vmatpush.msra.mxu0 %v607
    %3010 = vmatpush.msra.mxu0 %v603
    %3011 = vmatpush.msra.mxu0 %v599
    %3012 = vmatpush.msra.mxu0 %v595
    %3013 = vmatpush.msra.mxu0 %v591
    %3014 = vmatpush.msra.mxu0 %v587
    %3015 = vmatpush.msra.mxu0 %v583
    %3016 = vmatpush.msra.mxu0 %v579
    %3017 = vmatpush.msra.mxu0 %v575
    %3018 = vmatpush.msra.mxu0 %v571
    %3019 = vmatpush.msra.mxu0 %v567
    %3020 = vmatmul.f32.gmra.mxu0 %v2783
    %v3021 = vpop.f32.mrf.mxu0
    %v3022 = vadd.f32 0.0, %v3021
    %3023 = vdwg.mxu0
    %v3024 = vadd.f32 %v2940, %v2962
    %v3025 = vadd.f32 %v2941, %v2982
    %v3026 = vadd.f32 %v2942, %v3002
    %v3027 = vadd.f32 %v2943, %v3022
    %v3028 = vxor.u32 %v3024, 2147483648
    %v3029 = vmul.f32 %v3028, 1.442695
    %v3030 = vpow.pop %v3029
    %v3031 = vadd.f32 %v3030, 1.0
    %v3032 = vrcp.pop %v3031
    %v3033 = vmul.f32 %v3031, %v3032
    %v3034 = vsub.f32 1.0, %v3033
    %v3035 = vmul.f32 %v3032, %v3034
    %v3036 = vadd.f32 %v3032, %v3035
    %vm3037 = vweird.f32 %v3031
    %vm3038 = vweird.f32 %v3032
    %vm3039 = vmor %vm3037, %vm3038
    %v3040 = vsel %vm3039, %v3032, %v3036
    %v3041 = vand.u32 2147483647, %v3031
    %vm3042 = vcmp.eq.f32.partialorder %v3041, 8.507059e+37
    %v3043 = vand.u32 %v3031, 2147483648
    %v3044 = vor.u32 1.1754944e-38, %v3043
    %v3045 = vsel %vm3042, %v3044, %v3040
    %v3046 = vmul.f32 1.0, %v3045
    %v3047 = vxor.u32 %v3025, 2147483648
    %v3048 = vmul.f32 %v3047, 1.442695
    %v3049 = vpow.pop %v3048
    %v3050 = vadd.f32 %v3049, 1.0
    %v3051 = vrcp.pop %v3050
    %v3052 = vmul.f32 %v3050, %v3051
    %v3053 = vsub.f32 1.0, %v3052
    %v3054 = vmul.f32 %v3051, %v3053
    %v3055 = vadd.f32 %v3051, %v3054
    %vm3056 = vweird.f32 %v3050
    %vm3057 = vweird.f32 %v3051
    %vm3058 = vmor %vm3056, %vm3057
    %v3059 = vsel %vm3058, %v3051, %v3055
    %v3060 = vand.u32 2147483647, %v3050
    %vm3061 = vcmp.eq.f32.partialorder %v3060, 8.507059e+37
    %v3062 = vand.u32 %v3050, 2147483648
    %v3063 = vor.u32 1.1754944e-38, %v3062
    %v3064 = vsel %vm3061, %v3063, %v3059
    %v3065 = vmul.f32 1.0, %v3064
    %v3066 = vtanh.pop %v3026
    %v3067 = vxor.u32 %v3027, 2147483648
    %v3068 = vmul.f32 %v3067, 1.442695
    %v3069 = vpow.pop %v3068
    %v3070 = vadd.f32 %v3069, 1.0
    %v3071 = vrcp.pop %v3070
    %v3072 = vmul.f32 %v3070, %v3071
    %v3073 = vsub.f32 1.0, %v3072
    %v3074 = vmul.f32 %v3071, %v3073
    %v3075 = vadd.f32 %v3071, %v3074
    %vm3076 = vweird.f32 %v3070
    %vm3077 = vweird.f32 %v3071
    %vm3078 = vmor %vm3076, %vm3077
    %v3079 = vsel %vm3078, %v3071, %v3075
    %v3080 = vand.u32 2147483647, %v3070
    %vm3081 = vcmp.eq.f32.partialorder %v3080, 8.507059e+37
    %v3082 = vand.u32 %v3070, 2147483648
    %v3083 = vor.u32 1.1754944e-38, %v3082
    %v3084 = vsel %vm3081, %v3083, %v3079
    %v3085 = vmul.f32 1.0, %v3084
    %v3086 = vmul.f32 %v3065, %v2781
    %v3087 = vmul.f32 %v3046, %v3066
    %v3088 = vadd.f32 %v3086, %v3087
    %v3089 = vtanh.pop %v3088
    %v3090 = vmul.f32 %v3085, %v3089
    %3091 = vst [vmem:[%s205] sm:$0xff] %v3090
    %3092 = vst [vmem:[#allocation4] sm:$0xff] %v2937
    %3093 = vst [vmem:[#allocation5] sm:$0xff] %v2935
    %3094 = vst [vmem:[%s628] sm:$0xff] %v3090
    %3095 = vst [vmem:[%s630] sm:$0xff] %v3088
    // Predicated region
    $region87: #{_forward.3} parent=1 // pred_check
      %p3096 = pneg %p208
    $region88: #{_forward.3} parent=1 // pred_check_branch
      %3098 = sbr.rel (%p3096) target = $region90
    $region89: #{_forward.3} parent=1 // pred_region
      %3099 = vst [vmem:[#allocation8] sm:$0xff] %v2937
      %3100 = vst [vmem:[#allocation10] sm:$0xff] %v2935
      %s3101 = scalar_lea.vmem [#allocation8], 8
      %3102 = vst [vmem:[%s3101] sm:$0xff] %v3090
      %s3103 = scalar_lea.vmem [#allocation10], 8
      %3104 = vst [vmem:[%s3103] sm:$0xff] %v3088
    $region90: #{_forward.3} parent=1 // pred_fallthru
      _
    %s3105 = ssub.s32 0, 0
    %s3106 = smul.u32 8, %s3105
    %p3107 = scmp.lt.s32.totalorder %s3106, 7
    %s3108 = scalar_select %p3107, %s3106, 7
    %s3109 = smul.addr %s3108, 8
    %s3110 = scalar_lea.vmem %s6, %s3109
    // Predicated region
    $region91: #{_forward.3} parent=1 // pred_check
      _
    $region92: #{_forward.3} parent=1 // pred_check_branch
      %3112 = sbr.rel (0) target = $region94
    $region93: #{_forward.3} parent=1 // pred_region
      _
    $region94: #{_forward.3} parent=1 // pred_fallthru
      _
    // Predicated region
    $region95: #{_forward.3} parent=1 // pred_check
      _
    $region96: #{_forward.3} parent=1 // pred_check_branch
      %3114 = sbr.rel (0) target = $region98
    $region97: #{_forward.3} parent=1 // pred_region
      %s3115 = ssub.s32 0, 0
      %s3116 = smul.u32 8, %s3115
    $region98: #{_forward.3} parent=1 // pred_fallthru
      _
    // Predicated region
    $region99: #{_forward.3} parent=1 // pred_check
      _
    $region100: #{_forward.3} parent=1 // pred_check_branch
      %3118 = sbr.rel (0) target = $region102
    $region101: #{_forward.3} parent=1 // pred_region
      %3120 = vsyncadd [#allocation9], 0
      %s3121 = sshll.u32 [#allocation8], 4
      %s3122 = int_to_ptr.vmem [resolvable:$true] %s3121
      %s3123 = sshll.u32 %s7, 4
      %s3124 = int_to_ptr.hbm [resolvable:$true] %s3123
      %3129 = dma.vmem_to_hbm [thread:$0]  %s3122, 256, %s3124, [#allocation9], 128, 128, 8
    $region102: #{_forward.3} parent=1 // pred_fallthru
      _
    // Predicated region
    $region103: #{_forward.3} parent=1 // pred_check
      _
    $region104: #{_forward.3} parent=1 // pred_check_branch
      %3131 = sbr.rel (0) target = $region106
    $region105: #{_forward.3} parent=1 // pred_region
      %3133 = vsyncadd [#allocation11], 0
      %s3134 = sshll.u32 [#allocation10], 4
      %s3135 = int_to_ptr.vmem [resolvable:$true] %s3134
      %s3136 = sshll.u32 %s8, 4
      %s3137 = int_to_ptr.hbm [resolvable:$true] %s3136
      %3142 = dma.vmem_to_hbm [thread:$0]  %s3135, 256, %s3137, [#allocation11], 128, 128, 8
    $region106: #{_forward.3} parent=1 // pred_fallthru
      _
    // Predicated region
    $region107: #{_forward.3} parent=1 // pred_check
      _
    $region108: #{_forward.3} parent=1 // pred_check_branch
      %3144 = sbr.rel (0) target = $region110
    $region109: #{_forward.3} parent=1 // pred_region
      _
    $region110: #{_forward.3} parent=1 // pred_fallthru
      _
    // Predicated region
    $region111: #{_forward.3} parent=1 // pred_check
      _
    $region112: #{_forward.3} parent=1 // pred_check_branch
      %3146 = sbr.rel (0) target = $region114
    $region113: #{_forward.3} parent=1 // pred_region
      %s3147 = ssub.s32 0, 0
      %s3148 = smul.u32 8, %s3147
      %p3149 = scmp.lt.s32.totalorder %s3148, 7
      %s3150 = scalar_select %p3149, %s3148, 7
      %s3151 = smul.addr %s3150, 8
      %s3152 = scalar_lea.vmem %s6, %s3151
    $region114: #{_forward.3} parent=1 // pred_fallthru
      _
    // Predicated region
    $region115: #{_forward.3} parent=1 // pred_check
      _
    $region116: #{_forward.3} parent=1 // pred_check_branch
      %3154 = sbr.rel (0) target = $region118
    $region117: #{_forward.3} parent=1 // pred_region
      %3156 = dma.done [#allocation9], 256
    $region118: #{_forward.3} parent=1 // pred_fallthru
      _
    // Predicated region
    $region119: #{_forward.3} parent=1 // pred_check
      _
    $region120: #{_forward.3} parent=1 // pred_check_branch
      %3158 = sbr.rel (0) target = $region122
    $region121: #{_forward.3} parent=1 // pred_region
      %3160 = dma.done [#allocation11], 256
    $region122: #{_forward.3} parent=1 // pred_fallthru
      _
    %3161 = vsyncpa [#allocation9], 1
    %3162 = vsyncpa [#allocation11], 1
  %3163 = vsyncmov [#allocation3]
  %s3164 = vpop.sfrf %3163
  %p3165 = scmp.eq.s32.totalorder %s3164, 0
  %p3166 = pneg %p3165
  %3168 = shalt.err (%p3166)

</llo_original>
